<compile_context>
chip_gen: v7x
topology: tpu7x:2x2x1
jax: 0.10.0
libtpu: 0.0.40
codegen_flags: <defaults>
</compile_context>

<pallas_src>
import functools

import jax
import jax.numpy as jnp
from jax.experimental import pallas as pl
from jax.experimental.pallas import tpu as pltpu


def _round_up(x, m):
    return (x + m - 1) // m * m


# ----------------------------- Pallas kernels -----------------------------

def _mm_leaky_kernel(x_ref, w_ref, o_ref, *, leaky):
    """(TILE_M, Kp) @ (Kp, Cout) in one deep-K MXU pass, fused LeakyReLU(0.1)."""
    acc = jnp.dot(x_ref[...], w_ref[...], preferred_element_type=jnp.float32)
    if leaky:
        acc = jnp.where(acc > 0, acc, 0.1 * acc)
    o_ref[...] = acc.astype(o_ref.dtype)


def matmul_leaky_pallas(x2d, w, *, leaky, out_dtype, tile_m=256):
    """x2d: (Mp, Kp) bf16, w: (Kp, Cout) bf16 (bias folded) -> (Mp, Cout)."""
    mp, kp = x2d.shape
    cout = w.shape[1]
    tm = tile_m if mp >= tile_m else mp
    assert mp % tm == 0
    kern = functools.partial(_mm_leaky_kernel, leaky=leaky)
    return pl.pallas_call(
        kern,
        out_shape=jax.ShapeDtypeStruct((mp, cout), out_dtype),
        grid_spec=pltpu.PrefetchScalarGridSpec(
            num_scalar_prefetch=0,
            grid=(mp // tm,),
            in_specs=[
                pl.BlockSpec((tm, kp), lambda i: (i, 0)),
                pl.BlockSpec((kp, cout), lambda i: (0, 0)),
            ],
            out_specs=pl.BlockSpec((tm, cout), lambda i: (i, 0)),
        ),
        compiler_params=pltpu.CompilerParams(
            dimension_semantics=("parallel",)),
    )(x2d, w)


def _head_kernel(x_ref, w1_ref, w2_ref, b2_ref, o_ref):
    """Fused 4-head classifier tail: leaky(x@W1) then block-diagonal @W2 + b2."""
    h = jnp.dot(x_ref[...], w1_ref[...], preferred_element_type=jnp.float32)
    h = jnp.where(h > 0, h, 0.1 * h)
    y = jnp.dot(h.astype(w2_ref.dtype), w2_ref[...],
                preferred_element_type=jnp.float32)
    o_ref[...] = (y + b2_ref[...]).astype(o_ref.dtype)


def fused_heads_pallas(x2d, w1, w2, b2, *, tile_m=256):
    """x2d: (Mp, Kp) bf16, w1: (Kp, 256) bf16, w2: (256, 4) bf16, b2: (1,4) f32."""
    mp, kp = x2d.shape
    c_mid = w1.shape[1]
    c_out = w2.shape[1]
    tm = tile_m if mp >= tile_m else mp
    assert mp % tm == 0
    return pl.pallas_call(
        _head_kernel,
        out_shape=jax.ShapeDtypeStruct((mp, c_out), jnp.float32),
        grid_spec=pltpu.PrefetchScalarGridSpec(
            num_scalar_prefetch=0,
            grid=(mp // tm,),
            in_specs=[
                pl.BlockSpec((tm, kp), lambda i: (i, 0)),
                pl.BlockSpec((kp, c_mid), lambda i: (0, 0)),
                pl.BlockSpec((c_mid, c_out), lambda i: (0, 0)),
                pl.BlockSpec((1, c_out), lambda i: (0, 0)),
            ],
            out_specs=pl.BlockSpec((tm, c_out), lambda i: (i, 0)),
        ),
        compiler_params=pltpu.CompilerParams(
            dimension_semantics=("parallel",)),
    )(x2d, w1, w2, b2)


# ----------------------------- layer glue -----------------------------

def conv2d_layer(x, w_packed, *, k, stride, pad, tile_m=256):
    """x: (N,H,W,Cin) bf16, w_packed: (Kp, Cout) bf16 with bias as extra row.

    Returns LeakyReLU(conv(x) + b) as (N,Ho,Wo,Cout) bf16.
    """
    n, h, wdt, c = x.shape
    kp, cout = w_packed.shape
    ho = (h + 2 * pad - k) // stride + 1
    wo = (wdt + 2 * pad - k) // stride + 1
    m = n * ho * wo
    kk = k * k * c

    if k == 1 and stride == 1 and pad == 0:
        xc = x.reshape(m, c)
    else:
        # TODO(synk): im2col is still materialized in HBM (lane-dense layout);
        # a fully in-kernel window gather would cut early-layer HBM traffic ~9x.
        xp = jnp.pad(x, ((0, 0), (pad, pad), (pad, pad), (0, 0)))
        cols = []
        for kh in range(k):
            for kw in range(k):
                sl = jax.lax.slice(
                    xp,
                    (0, kh, kw, 0),
                    (n, kh + stride * (ho - 1) + 1,
                     kw + stride * (wo - 1) + 1, c),
                    (1, stride, stride, 1))
                cols.append(sl)
        # (N, Ho, Wo, k*k, Cin) -> (N*Ho*Wo, k*k*Cin): row order matches weights
        xc = jnp.stack(cols, axis=3).reshape(m, kk)

    mp = _round_up(m, tile_m) if m >= tile_m else _round_up(m, 16)
    ones = jnp.ones((m, 1), xc.dtype)                       # bias column
    xc = jnp.concatenate([xc, ones], axis=1)                # (M, kk+1)
    xc = jnp.pad(xc, ((0, mp - m), (0, kp - (kk + 1))))     # (Mp, Kp)

    out = matmul_leaky_pallas(xc, w_packed, leaky=True,
                              out_dtype=jnp.bfloat16, tile_m=tile_m)
    return out[:m].reshape(n, ho, wo, cout)


def heads_forward(x_nhwc, head_params, *, tile_m=256):
    """Fused dir_x/dir_y/dir_z/int heads on the (N,H,W,256) classifier output."""
    w1, w2, b2 = head_params
    n, h, wdt, c = x_nhwc.shape
    kp = w1.shape[0]
    m = n * h * wdt
    xc = x_nhwc.reshape(m, c)
    mp = _round_up(m, tile_m) if m >= tile_m else _round_up(m, 16)
    ones = jnp.ones((m, 1), xc.dtype)
    xc = jnp.concatenate([xc, ones], axis=1)
    xc = jnp.pad(xc, ((0, mp - m), (0, kp - (c + 1))))
    y = fused_heads_pallas(xc, w1, w2, b2, tile_m=tile_m)   # (Mp, 4) f32
    return y[:m].reshape(n, h, wdt, 4)


# ----------------------------- parameters -----------------------------

# (name, cin, cout, k, stride, pad) — FeatExtractor then Classifier trunk.
_FE_CL_SPECS = [
    ("fe1", 3, 64, 3, 2, 1), ("fe2", 64, 128, 3, 2, 1),
    ("fe3", 128, 128, 3, 1, 1), ("fe4", 128, 128, 3, 2, 1),
    ("fe5", 128, 128, 3, 1, 1), ("fe6", 128, 256, 3, 2, 1),
    ("fe7", 256, 256, 3, 1, 1),
    ("cl1", 256, 256, 3, 1, 1), ("cl2", 256, 256, 3, 2, 1),
    ("cl3", 256, 256, 3, 2, 1), ("cl4", 256, 256, 3, 2, 1),
]
_HEAD1 = ["dx1", "dy1", "dz1", "it1"]   # 4x conv 256->64 (1x1) + LeakyReLU
_HEAD2 = ["dx2", "dy2", "dz2", "it2"]   # 4x outputConv 64->1 (1x1)


def _kaiming_conv(key, cin, cout, k):
    """kaiming_normal_ defaults: fan_in, gain sqrt(2); bias zero."""
    fan_in = cin * k * k
    std = (2.0 / fan_in) ** 0.5
    w = jax.random.normal(key, (cout, cin, k, k), jnp.float32) * std
    b = jnp.zeros((cout,), jnp.float32)
    return w, b


def _pack_conv(w, b, dtype=jnp.bfloat16):
    """(Cout,Cin,k,k)+(Cout,) -> (Kp, Cout): im2col row order, bias row, 128-pad K."""
    cout, cin, k, _ = w.shape
    kk = k * k * cin
    wm = jnp.transpose(w, (2, 3, 1, 0)).reshape(kk, cout)   # (kh,kw,cin) -> rows
    kp = _round_up(kk + 1, 128)
    wp = jnp.concatenate(
        [wm, b[None, :], jnp.zeros((kp - kk - 1, cout), jnp.float32)], axis=0)
    return wp.astype(dtype)


def init_lnet_params(key, c_in=3):
    assert c_in == 3
    names = [s[0] for s in _FE_CL_SPECS] + _HEAD1 + _HEAD2
    keys = dict(zip(names, jax.random.split(key, len(names))))

    packed = {}
    for name, cin, cout, k, _, _ in _FE_CL_SPECS:
        w, b = _kaiming_conv(keys[name], cin, cout, k)
        packed[name] = _pack_conv(w, b)

    # Fused head stage 1: concat four 1x1 convs 256->64 along Cout -> (256,256).
    w1s, b1s = [], []
    for name in _HEAD1:
        w, b = _kaiming_conv(keys[name], 256, 64, 1)
        w1s.append(w[:, :, 0, 0].T)          # (256, 64)
        b1s.append(b)
    w1 = jnp.concatenate(w1s, axis=1)        # (256, 256)
    b1 = jnp.concatenate(b1s)                # (256,)
    kp1 = _round_up(256 + 1, 128)            # 384
    w1p = jnp.concatenate(
        [w1, b1[None, :], jnp.zeros((kp1 - 257, 256), jnp.float32)],
        axis=0).astype(jnp.bfloat16)

    # Fused head stage 2: block-diagonal (256, 4) for the four 64->1 convs.
    w2 = jnp.zeros((256, 4), jnp.float32)
    b2 = jnp.zeros((1, 4), jnp.float32)
    for j, name in enumerate(_HEAD2):
        w, b = _kaiming_conv(keys[name], 64, 1, 1)
        w2 = w2.at[j * 64:(j + 1) * 64, j].set(w[0, :, 0, 0])
        b2 = b2.at[0, j].set(b[0])
    packed["heads"] = (w1p, w2.astype(jnp.bfloat16), b2)
    return packed


# ----------------------------- forward -----------------------------

def lnet_forward(params, x_nchw):
    x = jnp.transpose(x_nchw, (0, 2, 3, 1)).astype(jnp.bfloat16)  # NCHW->NHWC

    out = x
    for name, _, _, k, s, p in _FE_CL_SPECS:
        out = conv2d_layer(out, params[name], k=k, stride=s, pad=p)

    # TODO(synk): fe6..heads could be fused further into one VMEM-resident
    # kernel once spatial <= 2x2; kept as tiled per-layer calls here.
    y = heads_forward(out, params["heads"])          # (N,H,W,4) f32
    dir_x = y[..., 0:1]
    dir_y = y[..., 1:2]
    dir_z = -jnp.abs(y[..., 2:3])
    ints = jnp.abs(y[..., 3:4])

    dir_est = jnp.concatenate([dir_x, dir_y, dir_z], axis=-1)     # (N,H,W,3)
    # F.normalize(p=2, dim=channel, eps=1e-12)
    norm = jnp.sqrt(jnp.sum(dir_est * dir_est, axis=-1, keepdims=True))
    dirs = dir_est / jnp.maximum(norm, 1e-12)

    # back to NCHW to match the PyTorch module's output convention
    return {
        "dirs": jnp.transpose(dirs, (0, 3, 1, 2)),
        "ints": jnp.transpose(ints, (0, 3, 1, 2)),
    }
    # TODO(synk): the `inputs is None` ray-repeat path and get_all_lights()
    # depend on stateful set_images(); only the standard forward is implemented.


if __name__ == "__main__":
    key = jax.random.PRNGKey(0)
    pkey, xkey = jax.random.split(key)
    params = init_lnet_params(pkey, c_in=3)
    x = jax.random.normal(xkey, (2, 3, 32, 32), jnp.float32)  # NCHW

    out = jax.jit(lnet_forward)(params, x)
    out = jax.block_until_ready(out)

    assert out["dirs"].shape == (2, 3, 1, 1)
    assert out["ints"].shape == (2, 1, 1, 1)
    assert bool(jnp.all(jnp.isfinite(out["dirs"])))
    assert bool(jnp.all(jnp.isfinite(out["ints"])))
    assert bool(jnp.all(out["ints"] >= 0))
    norms = jnp.sqrt(jnp.sum(out["dirs"] ** 2, axis=1))
    assert bool(jnp.all(jnp.abs(norms - 1.0) < 1e-2))
    print("KERNEL_OK")
</pallas_src>

<mosaic_0001>
module attributes {stable_mosaic.version = 11 : i64} {
  func.func @_mm_leaky_kernel(%arg0: i32, %arg1: memref<256x128xbf16, #tpu.memory_space<vmem>>, %arg2: memref<128x64xbf16, #tpu.memory_space<vmem>>, %arg3: memref<256x64xbf16, #tpu.memory_space<vmem>>) attributes {dimension_semantics = [#tpu.dimension_semantics<parallel>], iteration_bounds = array<i64: 2>, scalar_prefetch = 0 : i64, scratch_operands = 0 : i64, tpu.core_type = #tpu.core_type<tc>, window_params = [{transform_indices = @transform_0, window_bounds = array<i64: 256, 128>}, {pipeline_mode = #tpu.pipeline_mode<synchronous>, transform_indices = @transform_1, window_bounds = array<i64: 128, 64>}, {transform_indices = @transform_2, window_bounds = array<i64: 256, 64>}]} {
    %c0 = arith.constant 0 : index
    %c0_0 = arith.constant 0 : index
    %0 = vector.load %arg1[%c0, %c0_0] : memref<256x128xbf16, #tpu.memory_space<vmem>>, vector<256x128xbf16>
    %c0_1 = arith.constant 0 : index
    %c0_2 = arith.constant 0 : index
    %1 = vector.load %arg2[%c0_1, %c0_2] : memref<128x64xbf16, #tpu.memory_space<vmem>>, vector<128x64xbf16>
    %cst = arith.constant dense<0.000000e+00> : vector<256x64xf32>
    %2 = tpu.matmul %0, %1, %cst {dimension_numbers = #tpu.dot_dimension_numbers<[1], [0], [0], [1], [0, 0, 1, 1], [], []>} : vector<256x128xbf16>, vector<128x64xbf16>, vector<256x64xf32> -> vector<256x64xf32>
    %cst_3 = arith.constant 0.000000e+00 : f32
    %3 = vector.broadcast %cst_3 : f32 to vector<256x64xf32>
    %4 = arith.cmpf ogt, %2, %3 : vector<256x64xf32>
    %cst_4 = arith.constant 1.000000e-01 : f32
    %5 = vector.broadcast %cst_4 : f32 to vector<256x64xf32>
    %6 = arith.mulf %5, %2 : vector<256x64xf32>
    %7 = arith.select %4, %2, %6 : vector<256x64xi1>, vector<256x64xf32>
    %8 = arith.truncf %7 : vector<256x64xf32> to vector<256x64xbf16>
    %c0_5 = arith.constant 0 : index
    %c0_6 = arith.constant 0 : index
    %9 = vector.load %arg3[%c0_5, %c0_6] : memref<256x64xbf16, #tpu.memory_space<vmem>>, vector<256x64xbf16>
    tpu.vector_store %arg3[%c0_5, %c0_6], %8 {strides = array<i32>} : memref<256x64xbf16, #tpu.memory_space<vmem>>, vector<256x64xbf16>,
    return
  }
  func.func @transform_0(%arg0: i32) -> (i32, i32) {
    %c0_i32 = arith.constant 0 : i32
    %c0_i32_0 = arith.constant 0 : i32
    return %arg0, %c0_i32 : i32, i32
  }
  func.func @transform_1(%arg0: i32) -> (i32, i32) {
    %c0_i32 = arith.constant 0 : i32
    %c0_i32_0 = arith.constant 0 : i32
    %c0_i32_1 = arith.constant 0 : i32
    return %c0_i32, %c0_i32_0 : i32, i32
  }
  func.func @transform_2(%arg0: i32) -> (i32, i32) {
    %c0_i32 = arith.constant 0 : i32
    %c0_i32_0 = arith.constant 0 : i32
    return %arg0, %c0_i32 : i32, i32
  }
}

module attributes {stable_mosaic.version = 11 : i64} {
  func.func @_mm_leaky_kernel(%arg0: i32, %arg1: memref<128x640xbf16, #tpu.memory_space<vmem>>, %arg2: memref<640x128xbf16, #tpu.memory_space<vmem>>, %arg3: memref<128x128xbf16, #tpu.memory_space<vmem>>) attributes {dimension_semantics = [#tpu.dimension_semantics<parallel>], iteration_bounds = array<i64: 1>, scalar_prefetch = 0 : i64, scratch_operands = 0 : i64, tpu.core_type = #tpu.core_type<tc>, window_params = [{transform_indices = @transform_0, window_bounds = array<i64: 128, 640>}, {pipeline_mode = #tpu.pipeline_mode<synchronous>, transform_indices = @transform_1, window_bounds = array<i64: 640, 128>}, {transform_indices = @transform_2, window_bounds = array<i64: 128, 128>}]} {
    %c0 = arith.constant 0 : index
    %c0_0 = arith.constant 0 : index
    %0 = vector.load %arg1[%c0, %c0_0] : memref<128x640xbf16, #tpu.memory_space<vmem>>, vector<128x640xbf16>
    %c0_1 = arith.constant 0 : index
    %c0_2 = arith.constant 0 : index
    %1 = vector.load %arg2[%c0_1, %c0_2] : memref<640x128xbf16, #tpu.memory_space<vmem>>, vector<640x128xbf16>
    %cst = arith.constant dense<0.000000e+00> : vector<128x128xf32>
    %2 = tpu.matmul %0, %1, %cst {dimension_numbers = #tpu.dot_dimension_numbers<[1], [0], [0], [1], [0, 0, 1, 1], [], []>} : vector<128x640xbf16>, vector<640x128xbf16>, vector<128x128xf32> -> vector<128x128xf32>
    %cst_3 = arith.constant 0.000000e+00 : f32
    %3 = vector.broadcast %cst_3 : f32 to vector<128x128xf32>
    %4 = arith.cmpf ogt, %2, %3 : vector<128x128xf32>
    %cst_4 = arith.constant 1.000000e-01 : f32
    %5 = vector.broadcast %cst_4 : f32 to vector<128x128xf32>
    %6 = arith.mulf %5, %2 : vector<128x128xf32>
    %7 = arith.select %4, %2, %6 : vector<128x128xi1>, vector<128x128xf32>
    %8 = arith.truncf %7 : vector<128x128xf32> to vector<128x128xbf16>
    %c0_5 = arith.constant 0 : index
    %c0_6 = arith.constant 0 : index
    %9 = vector.load %arg3[%c0_5, %c0_6] : memref<128x128xbf16, #tpu.memory_space<vmem>>, vector<128x128xbf16>
    tpu.vector_store %arg3[%c0_5, %c0_6], %8 {strides = array<i32>} : memref<128x128xbf16, #tpu.memory_space<vmem>>, vector<128x128xbf16>,
    return
  }
  func.func @transform_0(%arg0: i32) -> (i32, i32) {
    %c0_i32 = arith.constant 0 : i32
    %c0_i32_0 = arith.constant 0 : i32
    return %arg0, %c0_i32 : i32, i32
  }
  func.func @transform_1(%arg0: i32) -> (i32, i32) {
    %c0_i32 = arith.constant 0 : i32
    %c0_i32_0 = arith.constant 0 : i32
    %c0_i32_1 = arith.constant 0 : i32
    return %c0_i32, %c0_i32_0 : i32, i32
  }
  func.func @transform_2(%arg0: i32) -> (i32, i32) {
    %c0_i32 = arith.constant 0 : i32
    %c0_i32_0 = arith.constant 0 : i32
    return %arg0, %c0_i32 : i32, i32
  }
}

module attributes {stable_mosaic.version = 11 : i64} {
  func.func @_mm_leaky_kernel(%arg0: i32, %arg1: memref<128x1280xbf16, #tpu.memory_space<vmem>>, %arg2: memref<1280x128xbf16, #tpu.memory_space<vmem>>, %arg3: memref<128x128xbf16, #tpu.memory_space<vmem>>) attributes {dimension_semantics = [#tpu.dimension_semantics<parallel>], iteration_bounds = array<i64: 1>, scalar_prefetch = 0 : i64, scratch_operands = 0 : i64, tpu.core_type = #tpu.core_type<tc>, window_params = [{transform_indices = @transform_0, window_bounds = array<i64: 128, 1280>}, {pipeline_mode = #tpu.pipeline_mode<synchronous>, transform_indices = @transform_1, window_bounds = array<i64: 1280, 128>}, {transform_indices = @transform_2, window_bounds = array<i64: 128, 128>}]} {
    %c0 = arith.constant 0 : index
    %c0_0 = arith.constant 0 : index
    %0 = vector.load %arg1[%c0, %c0_0] : memref<128x1280xbf16, #tpu.memory_space<vmem>>, vector<128x1280xbf16>
    %c0_1 = arith.constant 0 : index
    %c0_2 = arith.constant 0 : index
    %1 = vector.load %arg2[%c0_1, %c0_2] : memref<1280x128xbf16, #tpu.memory_space<vmem>>, vector<1280x128xbf16>
    %cst = arith.constant dense<0.000000e+00> : vector<128x128xf32>
    %2 = tpu.matmul %0, %1, %cst {dimension_numbers = #tpu.dot_dimension_numbers<[1], [0], [0], [1], [0, 0, 1, 1], [], []>} : vector<128x1280xbf16>, vector<1280x128xbf16>, vector<128x128xf32> -> vector<128x128xf32>
    %cst_3 = arith.constant 0.000000e+00 : f32
    %3 = vector.broadcast %cst_3 : f32 to vector<128x128xf32>
    %4 = arith.cmpf ogt, %2, %3 : vector<128x128xf32>
    %cst_4 = arith.constant 1.000000e-01 : f32
    %5 = vector.broadcast %cst_4 : f32 to vector<128x128xf32>
    %6 = arith.mulf %5, %2 : vector<128x128xf32>
    %7 = arith.select %4, %2, %6 : vector<128x128xi1>, vector<128x128xf32>
    %8 = arith.truncf %7 : vector<128x128xf32> to vector<128x128xbf16>
    %c0_5 = arith.constant 0 : index
    %c0_6 = arith.constant 0 : index
    %9 = vector.load %arg3[%c0_5, %c0_6] : memref<128x128xbf16, #tpu.memory_space<vmem>>, vector<128x128xbf16>
    tpu.vector_store %arg3[%c0_5, %c0_6], %8 {strides = array<i32>} : memref<128x128xbf16, #tpu.memory_space<vmem>>, vector<128x128xbf16>,
    return
  }
  func.func @transform_0(%arg0: i32) -> (i32, i32) {
    %c0_i32 = arith.constant 0 : i32
    %c0_i32_0 = arith.constant 0 : i32
    return %arg0, %c0_i32 : i32, i32
  }
  func.func @transform_1(%arg0: i32) -> (i32, i32) {
    %c0_i32 = arith.constant 0 : i32
    %c0_i32_0 = arith.constant 0 : i32
    %c0_i32_1 = arith.constant 0 : i32
    return %c0_i32, %c0_i32_0 : i32, i32
  }
  func.func @transform_2(%arg0: i32) -> (i32, i32) {
    %c0_i32 = arith.constant 0 : i32
    %c0_i32_0 = arith.constant 0 : i32
    return %arg0, %c0_i32 : i32, i32
  }
}

module attributes {stable_mosaic.version = 11 : i64} {
  func.func @_mm_leaky_kernel(%arg0: i32, %arg1: memref<32x1280xbf16, #tpu.memory_space<vmem>>, %arg2: memref<1280x128xbf16, #tpu.memory_space<vmem>>, %arg3: memref<32x128xbf16, #tpu.memory_space<vmem>>) attributes {dimension_semantics = [#tpu.dimension_semantics<parallel>], iteration_bounds = array<i64: 1>, scalar_prefetch = 0 : i64, scratch_operands = 0 : i64, tpu.core_type = #tpu.core_type<tc>, window_params = [{transform_indices = @transform_0, window_bounds = array<i64: 32, 1280>}, {pipeline_mode = #tpu.pipeline_mode<synchronous>, transform_indices = @transform_1, window_bounds = array<i64: 1280, 128>}, {transform_indices = @transform_2, window_bounds = array<i64: 32, 128>}]} {
    %c0 = arith.constant 0 : index
    %c0_0 = arith.constant 0 : index
    %0 = vector.load %arg1[%c0, %c0_0] : memref<32x1280xbf16, #tpu.memory_space<vmem>>, vector<32x1280xbf16>
    %c0_1 = arith.constant 0 : index
    %c0_2 = arith.constant 0 : index
    %1 = vector.load %arg2[%c0_1, %c0_2] : memref<1280x128xbf16, #tpu.memory_space<vmem>>, vector<1280x128xbf16>
    %cst = arith.constant dense<0.000000e+00> : vector<32x128xf32>
    %2 = tpu.matmul %0, %1, %cst {dimension_numbers = #tpu.dot_dimension_numbers<[1], [0], [0], [1], [0, 0, 1, 1], [], []>} : vector<32x1280xbf16>, vector<1280x128xbf16>, vector<32x128xf32> -> vector<32x128xf32>
    %cst_3 = arith.constant 0.000000e+00 : f32
    %3 = vector.broadcast %cst_3 : f32 to vector<32x128xf32>
    %4 = arith.cmpf ogt, %2, %3 : vector<32x128xf32>
    %cst_4 = arith.constant 1.000000e-01 : f32
    %5 = vector.broadcast %cst_4 : f32 to vector<32x128xf32>
    %6 = arith.mulf %5, %2 : vector<32x128xf32>
    %7 = arith.select %4, %2, %6 : vector<32x128xi1>, vector<32x128xf32>
    %8 = arith.truncf %7 : vector<32x128xf32> to vector<32x128xbf16>
    %c0_5 = arith.constant 0 : index
    %c0_6 = arith.constant 0 : index
    %9 = vector.load %arg3[%c0_5, %c0_6] : memref<32x128xbf16, #tpu.memory_space<vmem>>, vector<32x128xbf16>
    tpu.vector_store %arg3[%c0_5, %c0_6], %8 {strides = array<i32>} : memref<32x128xbf16, #tpu.memory_space<vmem>>, vector<32x128xbf16>,
    return
  }
  func.func @transform_0(%arg0: i32) -> (i32, i32) {
    %c0_i32 = arith.constant 0 : i32
    %c0_i32_0 = arith.constant 0 : i32
    return %arg0, %c0_i32 : i32, i32
  }
  func.func @transform_1(%arg0: i32) -> (i32, i32) {
    %c0_i32 = arith.constant 0 : i32
    %c0_i32_0 = arith.constant 0 : i32
    %c0_i32_1 = arith.constant 0 : i32
    return %c0_i32, %c0_i32_0 : i32, i32
  }
  func.func @transform_2(%arg0: i32) -> (i32, i32) {
    %c0_i32 = arith.constant 0 : i32
    %c0_i32_0 = arith.constant 0 : i32
    return %arg0, %c0_i32 : i32, i32
  }
}

module attributes {stable_mosaic.version = 11 : i64} {
  func.func @_mm_leaky_kernel(%arg0: i32, %arg1: memref<16x1280xbf16, #tpu.memory_space<vmem>>, %arg2: memref<1280x256xbf16, #tpu.memory_space<vmem>>, %arg3: memref<16x256xbf16, #tpu.memory_space<vmem>>) attributes {dimension_semantics = [#tpu.dimension_semantics<parallel>], iteration_bounds = array<i64: 1>, scalar_prefetch = 0 : i64, scratch_operands = 0 : i64, tpu.core_type = #tpu.core_type<tc>, window_params = [{transform_indices = @transform_0, window_bounds = array<i64: 16, 1280>}, {pipeline_mode = #tpu.pipeline_mode<synchronous>, transform_indices = @transform_1, window_bounds = array<i64: 1280, 256>}, {transform_indices = @transform_2, window_bounds = array<i64: 16, 256>}]} {
    %c0 = arith.constant 0 : index
    %c0_0 = arith.constant 0 : index
    %0 = vector.load %arg1[%c0, %c0_0] : memref<16x1280xbf16, #tpu.memory_space<vmem>>, vector<16x1280xbf16>
    %c0_1 = arith.constant 0 : index
    %c0_2 = arith.constant 0 : index
    %1 = vector.load %arg2[%c0_1, %c0_2] : memref<1280x256xbf16, #tpu.memory_space<vmem>>, vector<1280x256xbf16>
    %cst = arith.constant dense<0.000000e+00> : vector<16x256xf32>
    %2 = tpu.matmul %0, %1, %cst {dimension_numbers = #tpu.dot_dimension_numbers<[1], [0], [0], [1], [0, 0, 1, 1], [], []>} : vector<16x1280xbf16>, vector<1280x256xbf16>, vector<16x256xf32> -> vector<16x256xf32>
    %cst_3 = arith.constant 0.000000e+00 : f32
    %3 = vector.broadcast %cst_3 : f32 to vector<16x256xf32>
    %4 = arith.cmpf ogt, %2, %3 : vector<16x256xf32>
    %cst_4 = arith.constant 1.000000e-01 : f32
    %5 = vector.broadcast %cst_4 : f32 to vector<16x256xf32>
    %6 = arith.mulf %5, %2 : vector<16x256xf32>
    %7 = arith.select %4, %2, %6 : vector<16x256xi1>, vector<16x256xf32>
    %8 = arith.truncf %7 : vector<16x256xf32> to vector<16x256xbf16>
    %c0_5 = arith.constant 0 : index
    %c0_6 = arith.constant 0 : index
    %9 = vector.load %arg3[%c0_5, %c0_6] : memref<16x256xbf16, #tpu.memory_space<vmem>>, vector<16x256xbf16>
    tpu.vector_store %arg3[%c0_5, %c0_6], %8 {strides = array<i32>} : memref<16x256xbf16, #tpu.memory_space<vmem>>, vector<16x256xbf16>,
    return
  }
  func.func @transform_0(%arg0: i32) -> (i32, i32) {
    %c0_i32 = arith.constant 0 : i32
    %c0_i32_0 = arith.constant 0 : i32
    return %arg0, %c0_i32 : i32, i32
  }
  func.func @transform_1(%arg0: i32) -> (i32, i32) {
    %c0_i32 = arith.constant 0 : i32
    %c0_i32_0 = arith.constant 0 : i32
    %c0_i32_1 = arith.constant 0 : i32
    return %c0_i32, %c0_i32_0 : i32, i32
  }
  func.func @transform_2(%arg0: i32) -> (i32, i32) {
    %c0_i32 = arith.constant 0 : i32
    %c0_i32_0 = arith.constant 0 : i32
    return %arg0, %c0_i32 : i32, i32
  }
}

module attributes {stable_mosaic.version = 11 : i64} {
  func.func @_mm_leaky_kernel(%arg0: i32, %arg1: memref<16x2432xbf16, #tpu.memory_space<vmem>>, %arg2: memref<2432x256xbf16, #tpu.memory_space<vmem>>, %arg3: memref<16x256xbf16, #tpu.memory_space<vmem>>) attributes {dimension_semantics = [#tpu.dimension_semantics<parallel>], iteration_bounds = array<i64: 1>, scalar_prefetch = 0 : i64, scratch_operands = 0 : i64, tpu.core_type = #tpu.core_type<tc>, window_params = [{transform_indices = @transform_0, window_bounds = array<i64: 16, 2432>}, {pipeline_mode = #tpu.pipeline_mode<synchronous>, transform_indices = @transform_1, window_bounds = array<i64: 2432, 256>}, {transform_indices = @transform_2, window_bounds = array<i64: 16, 256>}]} {
    %c0 = arith.constant 0 : index
    %c0_0 = arith.constant 0 : index
    %0 = vector.load %arg1[%c0, %c0_0] : memref<16x2432xbf16, #tpu.memory_space<vmem>>, vector<16x2432xbf16>
    %c0_1 = arith.constant 0 : index
    %c0_2 = arith.constant 0 : index
    %1 = vector.load %arg2[%c0_1, %c0_2] : memref<2432x256xbf16, #tpu.memory_space<vmem>>, vector<2432x256xbf16>
    %cst = arith.constant dense<0.000000e+00> : vector<16x256xf32>
    %2 = tpu.matmul %0, %1, %cst {dimension_numbers = #tpu.dot_dimension_numbers<[1], [0], [0], [1], [0, 0, 1, 1], [], []>} : vector<16x2432xbf16>, vector<2432x256xbf16>, vector<16x256xf32> -> vector<16x256xf32>
    %cst_3 = arith.constant 0.000000e+00 : f32
    %3 = vector.broadcast %cst_3 : f32 to vector<16x256xf32>
    %4 = arith.cmpf ogt, %2, %3 : vector<16x256xf32>
    %cst_4 = arith.constant 1.000000e-01 : f32
    %5 = vector.broadcast %cst_4 : f32 to vector<16x256xf32>
    %6 = arith.mulf %5, %2 : vector<16x256xf32>
    %7 = arith.select %4, %2, %6 : vector<16x256xi1>, vector<16x256xf32>
    %8 = arith.truncf %7 : vector<16x256xf32> to vector<16x256xbf16>
    %c0_5 = arith.constant 0 : index
    %c0_6 = arith.constant 0 : index
    %9 = vector.load %arg3[%c0_5, %c0_6] : memref<16x256xbf16, #tpu.memory_space<vmem>>, vector<16x256xbf16>
    tpu.vector_store %arg3[%c0_5, %c0_6], %8 {strides = array<i32>} : memref<16x256xbf16, #tpu.memory_space<vmem>>, vector<16x256xbf16>,
    return
  }
  func.func @transform_0(%arg0: i32) -> (i32, i32) {
    %c0_i32 = arith.constant 0 : i32
    %c0_i32_0 = arith.constant 0 : i32
    return %arg0, %c0_i32 : i32, i32
  }
  func.func @transform_1(%arg0: i32) -> (i32, i32) {
    %c0_i32 = arith.constant 0 : i32
    %c0_i32_0 = arith.constant 0 : i32
    %c0_i32_1 = arith.constant 0 : i32
    return %c0_i32, %c0_i32_0 : i32, i32
  }
  func.func @transform_2(%arg0: i32) -> (i32, i32) {
    %c0_i32 = arith.constant 0 : i32
    %c0_i32_0 = arith.constant 0 : i32
    return %arg0, %c0_i32 : i32, i32
  }
}

module attributes {stable_mosaic.version = 11 : i64} {
  func.func @_head_kernel(%arg0: i32, %arg1: memref<16x384xbf16, #tpu.memory_space<vmem>>, %arg2: memref<384x256xbf16, #tpu.memory_space<vmem>>, %arg3: memref<256x4xbf16, #tpu.memory_space<vmem>>, %arg4: memref<1x4xf32, #tpu.memory_space<vmem>>, %arg5: memref<16x4xf32, #tpu.memory_space<vmem>>) attributes {dimension_semantics = [#tpu.dimension_semantics<parallel>], iteration_bounds = array<i64: 1>, scalar_prefetch = 0 : i64, scratch_operands = 0 : i64, tpu.core_type = #tpu.core_type<tc>, window_params = [{transform_indices = @transform_0, window_bounds = array<i64: 16, 384>}, {pipeline_mode = #tpu.pipeline_mode<synchronous>, transform_indices = @transform_1, window_bounds = array<i64: 384, 256>}, {pipeline_mode = #tpu.pipeline_mode<synchronous>, transform_indices = @transform_2, window_bounds = array<i64: 256, 4>}, {pipeline_mode = #tpu.pipeline_mode<synchronous>, transform_indices = @transform_3, window_bounds = array<i64: 1, 4>}, {transform_indices = @transform_4, window_bounds = array<i64: 16, 4>}]} {
    %c0 = arith.constant 0 : index
    %c0_0 = arith.constant 0 : index
    %0 = vector.load %arg1[%c0, %c0_0] : memref<16x384xbf16, #tpu.memory_space<vmem>>, vector<16x384xbf16>
    %c0_1 = arith.constant 0 : index
    %c0_2 = arith.constant 0 : index
    %1 = vector.load %arg2[%c0_1, %c0_2] : memref<384x256xbf16, #tpu.memory_space<vmem>>, vector<384x256xbf16>
    %cst = arith.constant dense<0.000000e+00> : vector<16x256xf32>
    %2 = tpu.matmul %0, %1, %cst {dimension_numbers = #tpu.dot_dimension_numbers<[1], [0], [0], [1], [0, 0, 1, 1], [], []>} : vector<16x384xbf16>, vector<384x256xbf16>, vector<16x256xf32> -> vector<16x256xf32>
    %cst_3 = arith.constant 0.000000e+00 : f32
    %3 = vector.broadcast %cst_3 : f32 to vector<16x256xf32>
    %4 = arith.cmpf ogt, %2, %3 : vector<16x256xf32>
    %cst_4 = arith.constant 1.000000e-01 : f32
    %5 = vector.broadcast %cst_4 : f32 to vector<16x256xf32>
    %6 = arith.mulf %5, %2 : vector<16x256xf32>
    %7 = arith.select %4, %2, %6 : vector<16x256xi1>, vector<16x256xf32>
    %8 = arith.truncf %7 : vector<16x256xf32> to vector<16x256xbf16>
    %c0_5 = arith.constant 0 : index
    %c0_6 = arith.constant 0 : index
    %9 = vector.load %arg3[%c0_5, %c0_6] : memref<256x4xbf16, #tpu.memory_space<vmem>>, vector<256x4xbf16>
    %cst_7 = arith.constant dense<0.000000e+00> : vector<16x4xf32>
    %10 = tpu.matmul %8, %9, %cst_7 {dimension_numbers = #tpu.dot_dimension_numbers<[1], [0], [0], [1], [0, 0, 1, 1], [], []>} : vector<16x256xbf16>, vector<256x4xbf16>, vector<16x4xf32> -> vector<16x4xf32>
    %c0_8 = arith.constant 0 : index
    %c0_9 = arith.constant 0 : index
    %11 = vector.load %arg4[%c0_8, %c0_9] : memref<1x4xf32, #tpu.memory_space<vmem>>, vector<1x4xf32>
    %12 = vector.broadcast %11 : vector<1x4xf32> to vector<16x4xf32>
    %13 = arith.addf %10, %12 : vector<16x4xf32>
    %c0_10 = arith.constant 0 : index
    %c0_11 = arith.constant 0 : index
    %14 = vector.load %arg5[%c0_10, %c0_11] : memref<16x4xf32, #tpu.memory_space<vmem>>, vector<16x4xf32>
    tpu.vector_store %arg5[%c0_10, %c0_11], %13 {strides = array<i32>} : memref<16x4xf32, #tpu.memory_space<vmem>>, vector<16x4xf32>,
    return
  }
  func.func @transform_0(%arg0: i32) -> (i32, i32) {
    %c0_i32 = arith.constant 0 : i32
    %c0_i32_0 = arith.constant 0 : i32
    return %arg0, %c0_i32 : i32, i32
  }
  func.func @transform_1(%arg0: i32) -> (i32, i32) {
    %c0_i32 = arith.constant 0 : i32
    %c0_i32_0 = arith.constant 0 : i32
    %c0_i32_1 = arith.constant 0 : i32
    return %c0_i32, %c0_i32_0 : i32, i32
  }
  func.func @transform_2(%arg0: i32) -> (i32, i32) {
    %c0_i32 = arith.constant 0 : i32
    %c0_i32_0 = arith.constant 0 : i32
    %c0_i32_1 = arith.constant 0 : i32
    return %c0_i32, %c0_i32_0 : i32, i32
  }
  func.func @transform_3(%arg0: i32) -> (i32, i32) {
    %c0_i32 = arith.constant 0 : i32
    %c0_i32_0 = arith.constant 0 : i32
    %c0_i32_1 = arith.constant 0 : i32
    return %c0_i32, %c0_i32_0 : i32, i32
  }
  func.func @transform_4(%arg0: i32) -> (i32, i32) {
    %c0_i32 = arith.constant 0 : i32
    %c0_i32_0 = arith.constant 0 : i32
    return %arg0, %c0_i32 : i32, i32
  }
}

</mosaic_0001>

<llo_original>
// kernel: lnet_forward.12
$region0: #{lnet_forward.12}
  #allocation0 [shape = 'u32[]', space=smem, size = 0x4, offset = 0x4, fixed_abs, tag = 'smem constant byte address 0x4 - core index']
  #allocation1 [shape = 'u32[144,128]{1,0:T(1,128)}', space=vmem, size = 0x12000, scoped, tag = 'internal scratch']
  %s0 = inlined_call_operand.vmem [shape: bf16[512,128], index: 0, kind: input, shape index: {}]
  %s1 = inlined_call_operand.vmem [shape: bf16[128,64], index: 1, kind: input, shape index: {}]
  %s2 = inlined_call_operand.vmem [shape: bf16[512,64], index: 2, kind: output, shape index: {}]
  %s3 = sld [smem:[#allocation0]]
  $region41: #{lnet_forward.12} parent=0
    _
  %s5 = ssub.s32 1, %s3
  %s6 = scalar_select 0, %s5, %s3
  loop: start=0, step=1, limit=4
  $region2: #{lnet_forward.12} parent=0 // loop_pre_header
    _
  $region3: #{lnet_forward.12} parent=0 // loop_header
    %s8 = sphi 0, %s12
    %p9 = scmp.ge.s32.totalorder %s8, 4
    %s18 = sphi 0, %s20
    %s21 = sphi 0, %s18
    %s22 = sphi 0, %s21
    %s38 = sphi 0, %s22
    %s42 = sphi 0, %s42
    %s44 = sphi 0, %s42
    %s45 = sphi 0, %s44
    %s59 = sphi 0, %s45
    %s65 = sphi 0, %s67
    %s68 = sphi 0, %s65
    %s69 = sphi 0, %s68
    %s85 = sphi 0, %s69
  $region4: #{lnet_forward.12} parent=0 // loop_header_branch
    %11 = sbr.rel (%p9) target = $region8
  $region5: #{lnet_forward.12} parent=0 // loop_body
    %s13 = ssub.s32 %s8, 1
    %s14 = ssub.s32 %s8, 2
    %s15 = sadd.s32 %s8, 1
    %s16 = ssub.s32 %s8, %s15
    %p17 = scmp.eq.s32.totalorder %s16, 0
    %s19 = sadd.s32 %s18, 1
    %s20 = scalar_select %p17, %s18, %s19
    %p23 = pneg %p17
    %p24 = scmp.eq.s32.totalorder %s8, 1
    %p25 = por %p23, %p24
    %p26 = scmp.ne.s32.totalorder %s18, %s21
    %p27 = scmp.eq.s32.totalorder %s8, 0
    %p28 = por %p26, %p27
    %p29 = scmp.ne.s32.totalorder %s18, %s21
    %p30 = scmp.eq.s32.totalorder %s13, 1
    %p31 = por %p29, %p30
    %p32 = scmp.ne.s32.totalorder %s21, %s22
    %p33 = scmp.eq.s32.totalorder %s13, 0
    %p34 = por %p32, %p33
    %p35 = scmp.ne.s32.totalorder %s21, %s22
    %p36 = scmp.eq.s32.totalorder %s14, 1
    %p37 = por %p35, %p36
    %p39 = scmp.ne.s32.totalorder %s22, %s38
    %p40 = scmp.eq.s32.totalorder %s14, 0
    %p41 = por %p39, %p40
    %s43 = sadd.s32 %s42, 1
    %p46 = scmp.eq.s32.totalorder %s8, 1
    %p47 = scmp.ne.s32.totalorder %s42, %s44
    %p48 = scmp.eq.s32.totalorder %s8, 0
    %p49 = por %p47, %p48
    %p50 = scmp.ne.s32.totalorder %s42, %s44
    %p51 = scmp.eq.s32.totalorder %s13, 1
    %p52 = por %p50, %p51
    %p53 = scmp.ne.s32.totalorder %s44, %s45
    %p54 = scmp.eq.s32.totalorder %s13, 0
    %p55 = por %p53, %p54
    %p56 = scmp.ne.s32.totalorder %s44, %s45
    %p57 = scmp.eq.s32.totalorder %s14, 1
    %p58 = por %p56, %p57
    %p60 = scmp.ne.s32.totalorder %s45, %s59
    %p61 = scmp.eq.s32.totalorder %s14, 0
    %p62 = por %p60, %p61
    %s63 = ssub.s32 %s8, %s15
    %p64 = scmp.eq.s32.totalorder %s63, 0
    %s66 = sadd.s32 %s65, 1
    %s67 = scalar_select %p64, %s65, %s66
    %p70 = pneg %p64
    %p71 = scmp.eq.s32.totalorder %s8, 1
    %p72 = por %p70, %p71
    %p73 = scmp.ne.s32.totalorder %s65, %s68
    %p74 = scmp.eq.s32.totalorder %s8, 0
    %p75 = por %p73, %p74
    %p76 = scmp.ne.s32.totalorder %s65, %s68
    %p77 = scmp.eq.s32.totalorder %s13, 1
    %p78 = por %p76, %p77
    %p79 = scmp.ne.s32.totalorder %s68, %s69
    %p80 = scmp.eq.s32.totalorder %s13, 0
    %p81 = por %p79, %p80
    %p82 = scmp.ne.s32.totalorder %s68, %s69
    %p83 = scmp.eq.s32.totalorder %s14, 1
    %p84 = por %p82, %p83
    %p86 = scmp.ne.s32.totalorder %s69, %s85
    %p87 = scmp.eq.s32.totalorder %s14, 0
    %p88 = por %p86, %p87
    %p89 = scmp.le.s32.totalorder 1, %s8
    %p90 = scmp.lt.s32.totalorder %s8, 3
    %p91 = pnand %p89, %p90
    %p92 = pneg %p91
    // Predicated region
    $region9: #{lnet_forward.12} parent=5 // pred_check
      _
    $region10: #{lnet_forward.12} parent=5 // pred_check_branch
      %94 = sbr.rel (%p91) target = $region12
    $region11: #{lnet_forward.12} parent=5 // pred_region
      %s95 = ssub.s32 %s8, 1
      // Predicated region
      $region13: #{lnet_forward.12} parent=11 // pred_check
        %p96 = pneg %p55
      $region14: #{lnet_forward.12} parent=11 // pred_check_branch
        %98 = sbr.rel (%p96) target = $region16
      $region15: #{lnet_forward.12} parent=11 // pred_region
        _
      $region16: #{lnet_forward.12} parent=11 // pred_fallthru
        _
    $region12: #{lnet_forward.12} parent=5 // pred_fallthru
      _
    %p99 = scmp.lt.s32.totalorder %s8, 2
    // Predicated region
    $region17: #{lnet_forward.12} parent=5 // pred_check
      %p100 = pneg %p99
    $region18: #{lnet_forward.12} parent=5 // pred_check_branch
      %102 = sbr.rel (%p100) target = $region20
    $region19: #{lnet_forward.12} parent=5 // pred_region
      // Predicated region
      $region21: #{lnet_forward.12} parent=19 // pred_check
        %p103 = pneg %p28
      $region22: #{lnet_forward.12} parent=19 // pred_check_branch
        %105 = sbr.rel (%p103) target = $region24
      $region23: #{lnet_forward.12} parent=19 // pred_region
        %s106 = smul.u32 32, %s8
        %p107 = scmp.lt.s32.totalorder %s106, 63
        %s108 = scalar_select %p107, %s106, 63
        %s109 = smul.addr %s108, 4
        %s110 = scalar_lea.vmem %s0, %s109
        %s111 = smul.u32 32, %s8
      $region24: #{lnet_forward.12} parent=19 // pred_fallthru
        _
    $region20: #{lnet_forward.12} parent=5 // pred_fallthru
      _
    %p112 = scmp.le.s32.totalorder 1, %s8
    %p113 = scmp.lt.s32.totalorder %s8, 3
    %p114 = pnand %p112, %p113
    %p115 = pneg %p114
    // Predicated region
    $region25: #{lnet_forward.12} parent=5 // pred_check
      _
    $region26: #{lnet_forward.12} parent=5 // pred_check_branch
      %117 = sbr.rel (%p114) target = $region28
    $region27: #{lnet_forward.12} parent=5 // pred_region
      %s118 = ssub.s32 %s8, 1
      %s119 = smul.u32 32, %s13
      %p120 = scmp.lt.s32.totalorder %s119, 63
      %s121 = scalar_select %p120, %s119, 63
      %s122 = smul.addr %s121, 4
      %s123 = scalar_lea.vmem %s0, %s122
      %p124 = pneg %p34
      %p125 = pneg %p31
      %p126 = pneg %p55
      %p127 = pneg %p52
      %p128 = pneg %p81
      %p129 = pneg %p78
      %s130 = smul.u32 32, %s13
      %p131 = scmp.lt.s32.totalorder %s130, 63
      %s132 = scalar_select %p131, %s130, 63
      %s133 = smul.addr %s132, 4
      %s134 = scalar_lea.vmem %s2, %s133
      %s135 = smul.u32 32, %s13
      %p136 = scmp.lt.s32.totalorder %s135, 63
      %s137 = scalar_select %p136, %s135, 63
      %s138 = smul.addr %s137, 4
      %s139 = scalar_lea.vmem %s0, %s138
      %s140 = smul.u32 32, %s13
      %s141 = smul.u32 32, %s13
      %p142 = scmp.lt.s32.totalorder %s141, 63
      %s143 = scalar_select %p142, %s141, 63
      %s144 = smul.addr %s143, 4
      %s145 = scalar_lea.vmem %s2, %s144
      %s146 = smul.u32 32, %s13
      %v148 = vld [vmem:[%s139] sm:$0xf]
      %v149 = vld [vmem:[%s139 + $0x4] sm:$0xf]
      %v150 = vld [vmem:[%s139 + $0x8] sm:$0xf]
      %v151 = vld [vmem:[%s139 + $0xc] sm:$0xf]
      %v152 = vld [vmem:[%s139 + $0x10] sm:$0xf]
      %v153 = vld [vmem:[%s139 + $0x14] sm:$0xf]
      %v154 = vld [vmem:[%s139 + $0x18] sm:$0xf]
      %v155 = vld [vmem:[%s139 + $0x1c] sm:$0xf]
      %v156 = vld [vmem:[%s139 + $0x20] sm:$0xf]
      %v157 = vld [vmem:[%s139 + $0x24] sm:$0xf]
      %v158 = vld [vmem:[%s139 + $0x28] sm:$0xf]
      %v159 = vld [vmem:[%s139 + $0x2c] sm:$0xf]
      %v160 = vld [vmem:[%s139 + $0x30] sm:$0xf]
      %v161 = vld [vmem:[%s139 + $0x34] sm:$0xf]
      %v162 = vld [vmem:[%s139 + $0x38] sm:$0xf]
      %v163 = vld [vmem:[%s139 + $0x3c] sm:$0xf]
      %v164 = vld [vmem:[%s139 + $0x40] sm:$0xf]
      %v165 = vld [vmem:[%s139 + $0x44] sm:$0xf]
      %v166 = vld [vmem:[%s139 + $0x48] sm:$0xf]
      %v167 = vld [vmem:[%s139 + $0x4c] sm:$0xf]
      %v168 = vld [vmem:[%s139 + $0x50] sm:$0xf]
      %v169 = vld [vmem:[%s139 + $0x54] sm:$0xf]
      %v170 = vld [vmem:[%s139 + $0x58] sm:$0xf]
      %v171 = vld [vmem:[%s139 + $0x5c] sm:$0xf]
      %v172 = vld [vmem:[%s139 + $0x60] sm:$0xf]
      %v173 = vld [vmem:[%s139 + $0x64] sm:$0xf]
      %v174 = vld [vmem:[%s139 + $0x68] sm:$0xf]
      %v175 = vld [vmem:[%s139 + $0x6c] sm:$0xf]
      %v176 = vld [vmem:[%s139 + $0x70] sm:$0xf]
      %v177 = vld [vmem:[%s139 + $0x74] sm:$0xf]
      %v178 = vld [vmem:[%s139 + $0x78] sm:$0xf]
      %v179 = vld [vmem:[%s139 + $0x7c] sm:$0xf]
      %v180 = vld [vmem:[%s1] sm:$0xf]
      %v181 = vld [vmem:[%s1 + $0x4] sm:$0xf]
      %v182 = vld [vmem:[%s1 + $0x8] sm:$0xf]
      %v183 = vld [vmem:[%s1 + $0xc] sm:$0xf]
      %v184 = vld [vmem:[%s1 + $0x10] sm:$0xf]
      %v185 = vld [vmem:[%s1 + $0x14] sm:$0xf]
      %v186 = vld [vmem:[%s1 + $0x18] sm:$0xf]
      %v187 = vld [vmem:[%s1 + $0x1c] sm:$0xf]
      %v188 = vld [vmem:[%s1 + $0x20] sm:$0xf]
      %v189 = vld [vmem:[%s1 + $0x24] sm:$0xf]
      %v190 = vld [vmem:[%s1 + $0x28] sm:$0xf]
      %v191 = vld [vmem:[%s1 + $0x2c] sm:$0xf]
      %v192 = vld [vmem:[%s1 + $0x30] sm:$0xf]
      %v193 = vld [vmem:[%s1 + $0x34] sm:$0xf]
      %v194 = vld [vmem:[%s1 + $0x38] sm:$0xf]
      %v195 = vld [vmem:[%s1 + $0x3c] sm:$0xf]
      %v228 = vunpack.c.l.b16 %v148
      %v229 = vunpack.c.l.b16 %v149
      %v230 = vunpack.c.l.b16 %v150
      %v231 = vunpack.c.l.b16 %v151
      %v232 = vunpack.c.l.b16 %v152
      %v233 = vunpack.c.l.b16 %v153
      %v234 = vunpack.c.l.b16 %v154
      %v235 = vunpack.c.l.b16 %v155
      %v236 = vunpack.c.l.b16 %v156
      %v237 = vunpack.c.l.b16 %v157
      %v238 = vunpack.c.l.b16 %v158
      %v239 = vunpack.c.l.b16 %v159
      %v240 = vunpack.c.l.b16 %v160
      %v241 = vunpack.c.l.b16 %v161
      %v242 = vunpack.c.l.b16 %v162
      %v243 = vunpack.c.l.b16 %v163
      %v244 = vunpack.c.l.b16 %v164
      %v245 = vunpack.c.l.b16 %v165
      %v246 = vunpack.c.l.b16 %v166
      %v247 = vunpack.c.l.b16 %v167
      %v248 = vunpack.c.l.b16 %v168
      %v249 = vunpack.c.l.b16 %v169
      %v250 = vunpack.c.l.b16 %v170
      %v251 = vunpack.c.l.b16 %v171
      %v252 = vunpack.c.l.b16 %v172
      %v253 = vunpack.c.l.b16 %v173
      %v254 = vunpack.c.l.b16 %v174
      %v255 = vunpack.c.l.b16 %v175
      %v256 = vunpack.c.l.b16 %v176
      %v257 = vunpack.c.l.b16 %v177
      %v258 = vunpack.c.l.b16 %v178
      %v259 = vunpack.c.l.b16 %v179
      %v260 = vpack.c.b16 %v229, %v228
      %v261 = vpack.c.b16 %v231, %v230
      %v262 = vpack.c.b16 %v233, %v232
      %v263 = vpack.c.b16 %v235, %v234
      %v264 = vpack.c.b16 %v237, %v236
      %v265 = vpack.c.b16 %v239, %v238
      %v266 = vpack.c.b16 %v241, %v240
      %v267 = vpack.c.b16 %v243, %v242
      %v268 = vpack.c.b16 %v245, %v244
      %v269 = vpack.c.b16 %v247, %v246
      %v270 = vpack.c.b16 %v249, %v248
      %v271 = vpack.c.b16 %v251, %v250
      %v272 = vpack.c.b16 %v253, %v252
      %v273 = vpack.c.b16 %v255, %v254
      %v274 = vpack.c.b16 %v257, %v256
      %v275 = vpack.c.b16 %v259, %v258
      %v308 = vunpack.c.l.b16 %v180
      %v309 = vunpack.c.l.b16 %v181
      %v310 = vunpack.c.l.b16 %v182
      %v311 = vunpack.c.l.b16 %v183
      %v312 = vunpack.c.l.b16 %v184
      %v313 = vunpack.c.l.b16 %v185
      %v314 = vunpack.c.l.b16 %v186
      %v315 = vunpack.c.l.b16 %v187
      %v316 = vunpack.c.l.b16 %v188
      %v317 = vunpack.c.l.b16 %v189
      %v318 = vunpack.c.l.b16 %v190
      %v319 = vunpack.c.l.b16 %v191
      %v320 = vunpack.c.l.b16 %v192
      %v321 = vunpack.c.l.b16 %v193
      %v322 = vunpack.c.l.b16 %v194
      %v323 = vunpack.c.l.b16 %v195
      %v324 = vpack.c.b16 %v309, %v308
      %v325 = vpack.c.b16 %v311, %v310
      %v326 = vpack.c.b16 %v313, %v312
      %v327 = vpack.c.b16 %v315, %v314
      %v328 = vpack.c.b16 %v317, %v316
      %v329 = vpack.c.b16 %v319, %v318
      %v330 = vpack.c.b16 %v321, %v320
      %v331 = vpack.c.b16 %v323, %v322
      %340 = vmatprep.subr.bf16.mxu0 0
      %341 = vmatpush1.bf16.msra.mxu0 %v324
      %342 = vmatprep.subr.bf16.mxu0 0
      %343 = vmatpush1.bf16.msra.mxu0 %v325
      %344 = vmatprep.subr.bf16.mxu0 0
      %345 = vmatpush1.bf16.msra.mxu0 %v326
      %346 = vmatprep.subr.bf16.mxu0 0
      %347 = vmatpush1.bf16.msra.mxu0 %v327
      %348 = vmatprep.subr.bf16.mxu0 0
      %349 = vmatpush1.bf16.msra.mxu0 %v328
      %350 = vmatprep.subr.bf16.mxu0 0
      %351 = vmatpush1.bf16.msra.mxu0 %v329
      %352 = vmatprep.subr.bf16.mxu0 0
      %353 = vmatpush1.bf16.msra.mxu0 %v330
      %354 = vmatprep.subr.bf16.mxu0 0
      %355 = vmatpush1.bf16.msra.mxu0 %v331
      %356 = vmatprep.subr.bf16.mxu0 0
      %357 = vmatpush1.bf16.msra.mxu0 0
      %358 = vmatprep.subr.bf16.mxu0 0
      %359 = vmatpush1.bf16.msra.mxu0 0
      %360 = vmatprep.subr.bf16.mxu0 0
      %361 = vmatpush1.bf16.msra.mxu0 0
      %362 = vmatprep.subr.bf16.mxu0 0
      %363 = vmatpush1.bf16.msra.mxu0 0
      %364 = vmatprep.subr.bf16.mxu0 0
      %365 = vmatpush1.bf16.msra.mxu0 0
      %366 = vmatprep.subr.bf16.mxu0 0
      %367 = vmatpush1.bf16.msra.mxu0 0
      %368 = vmatprep.subr.bf16.mxu0 0
      %369 = vmatpush1.bf16.msra.mxu0 0
      %370 = vmatprep.subr.bf16.mxu0 0
      %371 = vmatpush1.bf16.msra.mxu0 0
      %372 = vmatprep.mubr.bf16.mxu0 0
      %373 = vmatmul.mubr.bf16.gmra.mrb[0].mxu0 %v260
      %v374 = vpop.f32.mrb[0].mxu0
      %v375 = vadd.f32 0.0, %v374
      %v376 = vpop.f32.mrb[0].mxu0
      %v377 = vpop.f32.mrb[0].mxu0
      %v378 = vadd.f32 0.0, %v377
      %v379 = vpop.f32.mrb[0].mxu0
      %380 = vmatprep.mubr.bf16.mxu0 0
      %381 = vmatmul.mubr.bf16.gmra.mrb[0].mxu0 %v261
      %v382 = vpop.f32.mrb[0].mxu0
      %v383 = vadd.f32 0.0, %v382
      %v384 = vpop.f32.mrb[0].mxu0
      %v385 = vpop.f32.mrb[0].mxu0
      %v386 = vadd.f32 0.0, %v385
      %v387 = vpop.f32.mrb[0].mxu0
      %388 = vmatprep.mubr.bf16.mxu0 0
      %389 = vmatmul.mubr.bf16.gmra.mrb[0].mxu0 %v262
      %v390 = vpop.f32.mrb[0].mxu0
      %v391 = vadd.f32 0.0, %v390
      %v392 = vpop.f32.mrb[0].mxu0
      %v393 = vpop.f32.mrb[0].mxu0
      %v394 = vadd.f32 0.0, %v393
      %v395 = vpop.f32.mrb[0].mxu0
      %396 = vmatprep.mubr.bf16.mxu0 0
      %397 = vmatmul.mubr.bf16.gmra.mrb[0].mxu0 %v263
      %v398 = vpop.f32.mrb[0].mxu0
      %v399 = vadd.f32 0.0, %v398
      %v400 = vpop.f32.mrb[0].mxu0
      %v401 = vpop.f32.mrb[0].mxu0
      %v402 = vadd.f32 0.0, %v401
      %v403 = vpop.f32.mrb[0].mxu0
      %404 = vmatprep.mubr.bf16.mxu0 0
      %405 = vmatmul.mubr.bf16.gmra.mrb[0].mxu0 %v264
      %v406 = vpop.f32.mrb[0].mxu0
      %v407 = vadd.f32 0.0, %v406
      %v408 = vpop.f32.mrb[0].mxu0
      %v409 = vpop.f32.mrb[0].mxu0
      %v410 = vadd.f32 0.0, %v409
      %v411 = vpop.f32.mrb[0].mxu0
      %412 = vmatprep.mubr.bf16.mxu0 0
      %413 = vmatmul.mubr.bf16.gmra.mrb[0].mxu0 %v265
      %v414 = vpop.f32.mrb[0].mxu0
      %v415 = vadd.f32 0.0, %v414
      %v416 = vpop.f32.mrb[0].mxu0
      %v417 = vpop.f32.mrb[0].mxu0
      %v418 = vadd.f32 0.0, %v417
      %v419 = vpop.f32.mrb[0].mxu0
      %420 = vmatprep.mubr.bf16.mxu0 0
      %421 = vmatmul.mubr.bf16.gmra.mrb[0].mxu0 %v266
      %v422 = vpop.f32.mrb[0].mxu0
      %v423 = vadd.f32 0.0, %v422
      %v424 = vpop.f32.mrb[0].mxu0
      %v425 = vpop.f32.mrb[0].mxu0
      %v426 = vadd.f32 0.0, %v425
      %v427 = vpop.f32.mrb[0].mxu0
      %428 = vmatprep.mubr.bf16.mxu0 0
      %429 = vmatmul.mubr.bf16.gmra.mrb[0].mxu0 %v267
      %v430 = vpop.f32.mrb[0].mxu0
      %v431 = vadd.f32 0.0, %v430
      %v432 = vpop.f32.mrb[0].mxu0
      %v433 = vpop.f32.mrb[0].mxu0
      %v434 = vadd.f32 0.0, %v433
      %v435 = vpop.f32.mrb[0].mxu0
      %436 = vmatprep.mubr.bf16.mxu0 0
      %437 = vmatmul.mubr.bf16.gmra.mrb[0].mxu0 %v268
      %v438 = vpop.f32.mrb[0].mxu0
      %v439 = vadd.f32 0.0, %v438
      %v440 = vpop.f32.mrb[0].mxu0
      %v441 = vpop.f32.mrb[0].mxu0
      %v442 = vadd.f32 0.0, %v441
      %v443 = vpop.f32.mrb[0].mxu0
      %444 = vmatprep.mubr.bf16.mxu0 0
      %445 = vmatmul.mubr.bf16.gmra.mrb[0].mxu0 %v269
      %v446 = vpop.f32.mrb[0].mxu0
      %v447 = vadd.f32 0.0, %v446
      %v448 = vpop.f32.mrb[0].mxu0
      %v449 = vpop.f32.mrb[0].mxu0
      %v450 = vadd.f32 0.0, %v449
      %v451 = vpop.f32.mrb[0].mxu0
      %452 = vmatprep.mubr.bf16.mxu0 0
      %453 = vmatmul.mubr.bf16.gmra.mrb[0].mxu0 %v270
      %v454 = vpop.f32.mrb[0].mxu0
      %v455 = vadd.f32 0.0, %v454
      %v456 = vpop.f32.mrb[0].mxu0
      %v457 = vpop.f32.mrb[0].mxu0
      %v458 = vadd.f32 0.0, %v457
      %v459 = vpop.f32.mrb[0].mxu0
      %460 = vmatprep.mubr.bf16.mxu0 0
      %461 = vmatmul.mubr.bf16.gmra.mrb[0].mxu0 %v271
      %v462 = vpop.f32.mrb[0].mxu0
      %v463 = vadd.f32 0.0, %v462
      %v464 = vpop.f32.mrb[0].mxu0
      %v465 = vpop.f32.mrb[0].mxu0
      %v466 = vadd.f32 0.0, %v465
      %v467 = vpop.f32.mrb[0].mxu0
      %468 = vmatprep.mubr.bf16.mxu0 0
      %469 = vmatmul.mubr.bf16.gmra.mrb[0].mxu0 %v272
      %v470 = vpop.f32.mrb[0].mxu0
      %v471 = vadd.f32 0.0, %v470
      %v472 = vpop.f32.mrb[0].mxu0
      %v473 = vpop.f32.mrb[0].mxu0
      %v474 = vadd.f32 0.0, %v473
      %v475 = vpop.f32.mrb[0].mxu0
      %476 = vmatprep.mubr.bf16.mxu0 0
      %477 = vmatmul.mubr.bf16.gmra.mrb[0].mxu0 %v273
      %v478 = vpop.f32.mrb[0].mxu0
      %v479 = vadd.f32 0.0, %v478
      %v480 = vpop.f32.mrb[0].mxu0
      %v481 = vpop.f32.mrb[0].mxu0
      %v482 = vadd.f32 0.0, %v481
      %v483 = vpop.f32.mrb[0].mxu0
      %484 = vmatprep.mubr.bf16.mxu0 0
      %485 = vmatmul.mubr.bf16.gmra.mrb[0].mxu0 %v274
      %v486 = vpop.f32.mrb[0].mxu0
      %v487 = vadd.f32 0.0, %v486
      %v488 = vpop.f32.mrb[0].mxu0
      %v489 = vpop.f32.mrb[0].mxu0
      %v490 = vadd.f32 0.0, %v489
      %v491 = vpop.f32.mrb[0].mxu0
      %492 = vmatprep.mubr.bf16.mxu0 0
      %493 = vmatmul.mubr.bf16.gmra.mrb[0].mxu0 %v275
      %v494 = vpop.f32.mrb[0].mxu0
      %v495 = vadd.f32 0.0, %v494
      %v496 = vpop.f32.mrb[0].mxu0
      %v497 = vpop.f32.mrb[0].mxu0
      %v498 = vadd.f32 0.0, %v497
      %v499 = vpop.f32.mrb[0].mxu0
      %500 = vdwg.mxu0
      %vm501 = vcmp.gt.f32.partialorder %v375, 0.0
      %vm502 = vcmp.gt.f32.partialorder %v378, 0.0
      %vm503 = vcmp.gt.f32.partialorder %v383, 0.0
      %vm504 = vcmp.gt.f32.partialorder %v386, 0.0
      %vm505 = vcmp.gt.f32.partialorder %v391, 0.0
      %vm506 = vcmp.gt.f32.partialorder %v394, 0.0
      %vm507 = vcmp.gt.f32.partialorder %v399, 0.0
      %vm508 = vcmp.gt.f32.partialorder %v402, 0.0
      %vm509 = vcmp.gt.f32.partialorder %v407, 0.0
      %vm510 = vcmp.gt.f32.partialorder %v410, 0.0
      %vm511 = vcmp.gt.f32.partialorder %v415, 0.0
      %vm512 = vcmp.gt.f32.partialorder %v418, 0.0
      %vm513 = vcmp.gt.f32.partialorder %v423, 0.0
      %vm514 = vcmp.gt.f32.partialorder %v426, 0.0
      %vm515 = vcmp.gt.f32.partialorder %v431, 0.0
      %vm516 = vcmp.gt.f32.partialorder %v434, 0.0
      %vm517 = vcmp.gt.f32.partialorder %v439, 0.0
      %vm518 = vcmp.gt.f32.partialorder %v442, 0.0
      %vm519 = vcmp.gt.f32.partialorder %v447, 0.0
      %vm520 = vcmp.gt.f32.partialorder %v450, 0.0
      %vm521 = vcmp.gt.f32.partialorder %v455, 0.0
      %vm522 = vcmp.gt.f32.partialorder %v458, 0.0
      %vm523 = vcmp.gt.f32.partialorder %v463, 0.0
      %vm524 = vcmp.gt.f32.partialorder %v466, 0.0
      %vm525 = vcmp.gt.f32.partialorder %v471, 0.0
      %vm526 = vcmp.gt.f32.partialorder %v474, 0.0
      %vm527 = vcmp.gt.f32.partialorder %v479, 0.0
      %vm528 = vcmp.gt.f32.partialorder %v482, 0.0
      %vm529 = vcmp.gt.f32.partialorder %v487, 0.0
      %vm530 = vcmp.gt.f32.partialorder %v490, 0.0
      %vm531 = vcmp.gt.f32.partialorder %v495, 0.0
      %vm532 = vcmp.gt.f32.partialorder %v498, 0.0
      %v533 = vmul.f32 %v375, 0.1
      %v534 = vmul.f32 %v378, 0.1
      %v535 = vmul.f32 %v383, 0.1
      %v536 = vmul.f32 %v386, 0.1
      %v537 = vmul.f32 %v391, 0.1
      %v538 = vmul.f32 %v394, 0.1
      %v539 = vmul.f32 %v399, 0.1
      %v540 = vmul.f32 %v402, 0.1
      %v541 = vmul.f32 %v407, 0.1
      %v542 = vmul.f32 %v410, 0.1
      %v543 = vmul.f32 %v415, 0.1
      %v544 = vmul.f32 %v418, 0.1
      %v545 = vmul.f32 %v423, 0.1
      %v546 = vmul.f32 %v426, 0.1
      %v547 = vmul.f32 %v431, 0.1
      %v548 = vmul.f32 %v434, 0.1
      %v549 = vmul.f32 %v439, 0.1
      %v550 = vmul.f32 %v442, 0.1
      %v551 = vmul.f32 %v447, 0.1
      %v552 = vmul.f32 %v450, 0.1
      %v553 = vmul.f32 %v455, 0.1
      %v554 = vmul.f32 %v458, 0.1
      %v555 = vmul.f32 %v463, 0.1
      %v556 = vmul.f32 %v466, 0.1
      %v557 = vmul.f32 %v471, 0.1
      %v558 = vmul.f32 %v474, 0.1
      %v559 = vmul.f32 %v479, 0.1
      %v560 = vmul.f32 %v482, 0.1
      %v561 = vmul.f32 %v487, 0.1
      %v562 = vmul.f32 %v490, 0.1
      %v563 = vmul.f32 %v495, 0.1
      %v564 = vmul.f32 %v498, 0.1
      %v565 = vsel %vm501, %v375, %v533
      %v566 = vsel %vm502, %v378, %v534
      %v567 = vsel %vm503, %v383, %v535
      %v568 = vsel %vm504, %v386, %v536
      %v569 = vsel %vm505, %v391, %v537
      %v570 = vsel %vm506, %v394, %v538
      %v571 = vsel %vm507, %v399, %v539
      %v572 = vsel %vm508, %v402, %v540
      %v573 = vsel %vm509, %v407, %v541
      %v574 = vsel %vm510, %v410, %v542
      %v575 = vsel %vm511, %v415, %v543
      %v576 = vsel %vm512, %v418, %v544
      %v577 = vsel %vm513, %v423, %v545
      %v578 = vsel %vm514, %v426, %v546
      %v579 = vsel %vm515, %v431, %v547
      %v580 = vsel %vm516, %v434, %v548
      %v581 = vsel %vm517, %v439, %v549
      %v582 = vsel %vm518, %v442, %v550
      %v583 = vsel %vm519, %v447, %v551
      %v584 = vsel %vm520, %v450, %v552
      %v585 = vsel %vm521, %v455, %v553
      %v586 = vsel %vm522, %v458, %v554
      %v587 = vsel %vm523, %v463, %v555
      %v588 = vsel %vm524, %v466, %v556
      %v589 = vsel %vm525, %v471, %v557
      %v590 = vsel %vm526, %v474, %v558
      %v591 = vsel %vm527, %v479, %v559
      %v592 = vsel %vm528, %v482, %v560
      %v593 = vsel %vm529, %v487, %v561
      %v594 = vsel %vm530, %v490, %v562
      %v595 = vsel %vm531, %v495, %v563
      %v596 = vsel %vm532, %v498, %v564
      %v597 = vpack.c.bf16 %v566, %v565
      %v598 = vpack.c.bf16 %v568, %v567
      %v599 = vpack.c.bf16 %v570, %v569
      %v600 = vpack.c.bf16 %v572, %v571
      %v601 = vpack.c.bf16 %v574, %v573
      %v602 = vpack.c.bf16 %v576, %v575
      %v603 = vpack.c.bf16 %v578, %v577
      %v604 = vpack.c.bf16 %v580, %v579
      %v605 = vpack.c.bf16 %v582, %v581
      %v606 = vpack.c.bf16 %v584, %v583
      %v607 = vpack.c.bf16 %v586, %v585
      %v608 = vpack.c.bf16 %v588, %v587
      %v609 = vpack.c.bf16 %v590, %v589
      %v610 = vpack.c.bf16 %v592, %v591
      %v611 = vpack.c.bf16 %v594, %v593
      %v612 = vpack.c.bf16 %v596, %v595
      %v629 = vunpack.c.l.b16 %v597
      %v630 = vunpack.c.h.b16 %v597
      %v631 = vunpack.c.l.b16 %v598
      %v632 = vunpack.c.h.b16 %v598
      %v633 = vunpack.c.l.b16 %v599
      %v634 = vunpack.c.h.b16 %v599
      %v635 = vunpack.c.l.b16 %v600
      %v636 = vunpack.c.h.b16 %v600
      %v637 = vunpack.c.l.b16 %v601
      %v638 = vunpack.c.h.b16 %v601
      %v639 = vunpack.c.l.b16 %v602
      %v640 = vunpack.c.h.b16 %v602
      %v641 = vunpack.c.l.b16 %v603
      %v642 = vunpack.c.h.b16 %v603
      %v643 = vunpack.c.l.b16 %v604
      %v644 = vunpack.c.h.b16 %v604
      %v645 = vunpack.c.l.b16 %v605
      %v646 = vunpack.c.h.b16 %v605
      %v647 = vunpack.c.l.b16 %v606
      %v648 = vunpack.c.h.b16 %v606
      %v649 = vunpack.c.l.b16 %v607
      %v650 = vunpack.c.h.b16 %v607
      %v651 = vunpack.c.l.b16 %v608
      %v652 = vunpack.c.h.b16 %v608
      %v653 = vunpack.c.l.b16 %v609
      %v654 = vunpack.c.h.b16 %v609
      %v655 = vunpack.c.l.b16 %v610
      %v656 = vunpack.c.h.b16 %v610
      %v657 = vunpack.c.l.b16 %v611
      %v658 = vunpack.c.h.b16 %v611
      %v659 = vunpack.c.l.b16 %v612
      %v660 = vunpack.c.h.b16 %v612
      %v661 = vpack.c.b16 %v629, %v629
      %v662 = vpack.c.b16 %v630, %v630
      %v663 = vpack.c.b16 %v631, %v631
      %v664 = vpack.c.b16 %v632, %v632
      %v665 = vpack.c.b16 %v633, %v633
      %v666 = vpack.c.b16 %v634, %v634
      %v667 = vpack.c.b16 %v635, %v635
      %v668 = vpack.c.b16 %v636, %v636
      %v669 = vpack.c.b16 %v637, %v637
      %v670 = vpack.c.b16 %v638, %v638
      %v671 = vpack.c.b16 %v639, %v639
      %v672 = vpack.c.b16 %v640, %v640
      %v673 = vpack.c.b16 %v641, %v641
      %v674 = vpack.c.b16 %v642, %v642
      %v675 = vpack.c.b16 %v643, %v643
      %v676 = vpack.c.b16 %v644, %v644
      %v677 = vpack.c.b16 %v645, %v645
      %v678 = vpack.c.b16 %v646, %v646
      %v679 = vpack.c.b16 %v647, %v647
      %v680 = vpack.c.b16 %v648, %v648
      %v681 = vpack.c.b16 %v649, %v649
      %v682 = vpack.c.b16 %v650, %v650
      %v683 = vpack.c.b16 %v651, %v651
      %v684 = vpack.c.b16 %v652, %v652
      %v685 = vpack.c.b16 %v653, %v653
      %v686 = vpack.c.b16 %v654, %v654
      %v687 = vpack.c.b16 %v655, %v655
      %v688 = vpack.c.b16 %v656, %v656
      %v689 = vpack.c.b16 %v657, %v657
      %v690 = vpack.c.b16 %v658, %v658
      %v691 = vpack.c.b16 %v659, %v659
      %v692 = vpack.c.b16 %v660, %v660
      %vm725 = vcmask 519168
      %726 = vst.msk [vmem:[%s145] sm:$0xf] %vm725, %v661
      %727 = vst.msk [vmem:[%s145 + $0x4] sm:$0xf] %vm725, %v662
      %728 = vst.msk [vmem:[%s145 + $0x8] sm:$0xf] %vm725, %v663
      %729 = vst.msk [vmem:[%s145 + $0xc] sm:$0xf] %vm725, %v664
      %730 = vst.msk [vmem:[%s145 + $0x10] sm:$0xf] %vm725, %v665
      %731 = vst.msk [vmem:[%s145 + $0x14] sm:$0xf] %vm725, %v666
      %732 = vst.msk [vmem:[%s145 + $0x18] sm:$0xf] %vm725, %v667
      %733 = vst.msk [vmem:[%s145 + $0x1c] sm:$0xf] %vm725, %v668
      %734 = vst.msk [vmem:[%s145 + $0x20] sm:$0xf] %vm725, %v669
      %735 = vst.msk [vmem:[%s145 + $0x24] sm:$0xf] %vm725, %v670
      %736 = vst.msk [vmem:[%s145 + $0x28] sm:$0xf] %vm725, %v671
      %737 = vst.msk [vmem:[%s145 + $0x2c] sm:$0xf] %vm725, %v672
      %738 = vst.msk [vmem:[%s145 + $0x30] sm:$0xf] %vm725, %v673
      %739 = vst.msk [vmem:[%s145 + $0x34] sm:$0xf] %vm725, %v674
      %740 = vst.msk [vmem:[%s145 + $0x38] sm:$0xf] %vm725, %v675
      %741 = vst.msk [vmem:[%s145 + $0x3c] sm:$0xf] %vm725, %v676
      %742 = vst.msk [vmem:[%s145 + $0x40] sm:$0xf] %vm725, %v677
      %743 = vst.msk [vmem:[%s145 + $0x44] sm:$0xf] %vm725, %v678
      %744 = vst.msk [vmem:[%s145 + $0x48] sm:$0xf] %vm725, %v679
      %745 = vst.msk [vmem:[%s145 + $0x4c] sm:$0xf] %vm725, %v680
      %746 = vst.msk [vmem:[%s145 + $0x50] sm:$0xf] %vm725, %v681
      %747 = vst.msk [vmem:[%s145 + $0x54] sm:$0xf] %vm725, %v682
      %748 = vst.msk [vmem:[%s145 + $0x58] sm:$0xf] %vm725, %v683
      %749 = vst.msk [vmem:[%s145 + $0x5c] sm:$0xf] %vm725, %v684
      %750 = vst.msk [vmem:[%s145 + $0x60] sm:$0xf] %vm725, %v685
      %751 = vst.msk [vmem:[%s145 + $0x64] sm:$0xf] %vm725, %v686
      %752 = vst.msk [vmem:[%s145 + $0x68] sm:$0xf] %vm725, %v687
      %753 = vst.msk [vmem:[%s145 + $0x6c] sm:$0xf] %vm725, %v688
      %754 = vst.msk [vmem:[%s145 + $0x70] sm:$0xf] %vm725, %v689
      %755 = vst.msk [vmem:[%s145 + $0x74] sm:$0xf] %vm725, %v690
      %756 = vst.msk [vmem:[%s145 + $0x78] sm:$0xf] %vm725, %v691
      %757 = vst.msk [vmem:[%s145 + $0x7c] sm:$0xf] %vm725, %v692
      %s758 = smul.u32 32, %s13
      %p759 = scmp.lt.s32.totalorder %s758, 63
      %s760 = scalar_select %p759, %s758, 63
      %s761 = smul.addr %s760, 4
      %s762 = scalar_lea.vmem %s2, %s761
      // Predicated region
      $region29: #{lnet_forward.12} parent=27 // pred_check
        %p763 = pneg %p78
      $region30: #{lnet_forward.12} parent=27 // pred_check_branch
        %765 = sbr.rel (%p763) target = $region32
      $region31: #{lnet_forward.12} parent=27 // pred_region
        %s766 = smul.u32 32, %s13
      $region32: #{lnet_forward.12} parent=27 // pred_fallthru
        _
    $region28: #{lnet_forward.12} parent=5 // pred_fallthru
      _
    %p767 = scmp.le.s32.totalorder 2, %s8
    // Predicated region
    $region33: #{lnet_forward.12} parent=5 // pred_check
      %p768 = pneg %p767
    $region34: #{lnet_forward.12} parent=5 // pred_check_branch
      %770 = sbr.rel (%p768) target = $region36
    $region35: #{lnet_forward.12} parent=5 // pred_region
      %s771 = ssub.s32 %s8, 2
      // Predicated region
      $region37: #{lnet_forward.12} parent=35 // pred_check
        %p772 = pneg %p84
      $region38: #{lnet_forward.12} parent=35 // pred_check_branch
        %774 = sbr.rel (%p772) target = $region40
      $region39: #{lnet_forward.12} parent=35 // pred_region
        %s775 = smul.u32 32, %s14
        %p776 = scmp.lt.s32.totalorder %s775, 63
        %s777 = scalar_select %p776, %s775, 63
        %s778 = smul.addr %s777, 4
        %s779 = scalar_lea.vmem %s2, %s778
      $region40: #{lnet_forward.12} parent=35 // pred_fallthru
        _
    $region36: #{lnet_forward.12} parent=5 // pred_fallthru
      _
  $region6: #{lnet_forward.12} parent=0 // loop_footer
    %s12 = sadd.s32 1, %s8
  $region7: #{lnet_forward.12} parent=0 // loop_footer_branch
    %7 = sbr.rel target = $region3
  $region8: #{lnet_forward.12} parent=0 // loop_exit
    _

// kernel: lnet_forward.13
$region0: #{lnet_forward.13}
  #allocation0 [shape = 'u32[]', space=smem, size = 0x4, offset = 0x4, fixed_abs, tag = 'smem constant byte address 0x4 - core index']
  #allocation1 [shape = 'u32[144,128]{1,0:T(1,128)}', space=vmem, size = 0x12000, scoped, tag = 'internal scratch']
  %s0 = inlined_call_operand.vmem [shape: bf16[128,640], index: 0, kind: input, shape index: {}]
  %s1 = inlined_call_operand.vmem [shape: bf16[640,128], index: 1, kind: input, shape index: {}]
  %s2 = inlined_call_operand.vmem [shape: bf16[128,128], index: 2, kind: output, shape index: {}]
  %s3 = sld [smem:[#allocation0]]
  $region18: #{lnet_forward.13} parent=0
    _
  %s5 = ssub.s32 1, %s3
  %s6 = scalar_select 0, %s5, %s3
  // Predicated region
  $region2: #{lnet_forward.13} parent=0 // pred_check
    _
  $region3: #{lnet_forward.13} parent=0 // pred_check_branch
    %8 = sbr.rel (0) target = $region5
  $region4: #{lnet_forward.13} parent=0 // pred_region
    _
  $region5: #{lnet_forward.13} parent=0 // pred_fallthru
    _
  // Predicated region
  $region6: #{lnet_forward.13} parent=0 // pred_check
    _
  $region7: #{lnet_forward.13} parent=0 // pred_check_branch
    %10 = sbr.rel (0) target = $region9
  $region8: #{lnet_forward.13} parent=0 // pred_region
    _
  $region9: #{lnet_forward.13} parent=0 // pred_fallthru
    _
  %v12 = vld [vmem:[%s0] sm:$0xff]
  %v13 = vld [vmem:[%s0 + $0x8] sm:$0xff]
  %v14 = vld [vmem:[%s0 + $0x10] sm:$0xf]
  %v15 = vld [vmem:[%s0 + $0x14] sm:$0xff]
  %v16 = vld [vmem:[%s0 + $0x1c] sm:$0xff]
  %v17 = vld [vmem:[%s0 + $0x24] sm:$0xf]
  %v18 = vld [vmem:[%s0 + $0x28] sm:$0xff]
  %v19 = vld [vmem:[%s0 + $0x30] sm:$0xff]
  %v20 = vld [vmem:[%s0 + $0x38] sm:$0xf]
  %v21 = vld [vmem:[%s0 + $0x3c] sm:$0xff]
  %v22 = vld [vmem:[%s0 + $0x44] sm:$0xff]
  %v23 = vld [vmem:[%s0 + $0x4c] sm:$0xf]
  %v24 = vld [vmem:[%s0 + $0x50] sm:$0xff]
  %v25 = vld [vmem:[%s0 + $0x58] sm:$0xff]
  %v26 = vld [vmem:[%s0 + $0x60] sm:$0xf]
  %v27 = vld [vmem:[%s0 + $0x64] sm:$0xff]
  %v28 = vld [vmem:[%s0 + $0x6c] sm:$0xff]
  %v29 = vld [vmem:[%s0 + $0x74] sm:$0xf]
  %v30 = vld [vmem:[%s0 + $0x78] sm:$0xff]
  %v31 = vld [vmem:[%s0 + $0x80] sm:$0xff]
  %v32 = vld [vmem:[%s0 + $0x88] sm:$0xf]
  %v33 = vld [vmem:[%s0 + $0x8c] sm:$0xff]
  %v34 = vld [vmem:[%s0 + $0x94] sm:$0xff]
  %v35 = vld [vmem:[%s0 + $0x9c] sm:$0xf]
  %v36 = vld [vmem:[%s0 + $0xa0] sm:$0xff]
  %v37 = vld [vmem:[%s0 + $0xa8] sm:$0xff]
  %v38 = vld [vmem:[%s0 + $0xb0] sm:$0xf]
  %v39 = vld [vmem:[%s0 + $0xb4] sm:$0xff]
  %v40 = vld [vmem:[%s0 + $0xbc] sm:$0xff]
  %v41 = vld [vmem:[%s0 + $0xc4] sm:$0xf]
  %v42 = vld [vmem:[%s0 + $0xc8] sm:$0xff]
  %v43 = vld [vmem:[%s0 + $0xd0] sm:$0xff]
  %v44 = vld [vmem:[%s0 + $0xd8] sm:$0xf]
  %v45 = vld [vmem:[%s0 + $0xdc] sm:$0xff]
  %v46 = vld [vmem:[%s0 + $0xe4] sm:$0xff]
  %v47 = vld [vmem:[%s0 + $0xec] sm:$0xf]
  %v48 = vld [vmem:[%s0 + $0xf0] sm:$0xff]
  %v49 = vld [vmem:[%s0 + $0xf8] sm:$0xff]
  %v50 = vld [vmem:[%s0 + $0x100] sm:$0xf]
  %v51 = vld [vmem:[%s0 + $0x104] sm:$0xff]
  %v52 = vld [vmem:[%s0 + $0x10c] sm:$0xff]
  %v53 = vld [vmem:[%s0 + $0x114] sm:$0xf]
  %v54 = vld [vmem:[%s0 + $0x118] sm:$0xff]
  %v55 = vld [vmem:[%s0 + $0x120] sm:$0xff]
  %v56 = vld [vmem:[%s0 + $0x128] sm:$0xf]
  %v57 = vld [vmem:[%s0 + $0x12c] sm:$0xff]
  %v58 = vld [vmem:[%s0 + $0x134] sm:$0xff]
  %v59 = vld [vmem:[%s0 + $0x13c] sm:$0xf]
  %v60 = vld [vmem:[%s1] sm:$0xf]
  %v61 = vld [vmem:[%s1 + $0x4] sm:$0xf]
  %v62 = vld [vmem:[%s1 + $0x8] sm:$0xf]
  %v63 = vld [vmem:[%s1 + $0xc] sm:$0xf]
  %v64 = vld [vmem:[%s1 + $0x10] sm:$0xf]
  %v65 = vld [vmem:[%s1 + $0x14] sm:$0xf]
  %v66 = vld [vmem:[%s1 + $0x18] sm:$0xf]
  %v67 = vld [vmem:[%s1 + $0x1c] sm:$0xf]
  %v68 = vld [vmem:[%s1 + $0x20] sm:$0xf]
  %v69 = vld [vmem:[%s1 + $0x24] sm:$0xf]
  %v70 = vld [vmem:[%s1 + $0x28] sm:$0xf]
  %v71 = vld [vmem:[%s1 + $0x2c] sm:$0xf]
  %v72 = vld [vmem:[%s1 + $0x30] sm:$0xf]
  %v73 = vld [vmem:[%s1 + $0x34] sm:$0xf]
  %v74 = vld [vmem:[%s1 + $0x38] sm:$0xf]
  %v75 = vld [vmem:[%s1 + $0x3c] sm:$0xf]
  %v76 = vld [vmem:[%s1 + $0x40] sm:$0xf]
  %v77 = vld [vmem:[%s1 + $0x44] sm:$0xf]
  %v78 = vld [vmem:[%s1 + $0x48] sm:$0xf]
  %v79 = vld [vmem:[%s1 + $0x4c] sm:$0xf]
  %v80 = vld [vmem:[%s1 + $0x50] sm:$0xf]
  %v81 = vld [vmem:[%s1 + $0x54] sm:$0xf]
  %v82 = vld [vmem:[%s1 + $0x58] sm:$0xf]
  %v83 = vld [vmem:[%s1 + $0x5c] sm:$0xf]
  %v84 = vld [vmem:[%s1 + $0x60] sm:$0xf]
  %v85 = vld [vmem:[%s1 + $0x64] sm:$0xf]
  %v86 = vld [vmem:[%s1 + $0x68] sm:$0xf]
  %v87 = vld [vmem:[%s1 + $0x6c] sm:$0xf]
  %v88 = vld [vmem:[%s1 + $0x70] sm:$0xf]
  %v89 = vld [vmem:[%s1 + $0x74] sm:$0xf]
  %v90 = vld [vmem:[%s1 + $0x78] sm:$0xf]
  %v91 = vld [vmem:[%s1 + $0x7c] sm:$0xf]
  %v92 = vld [vmem:[%s1 + $0x80] sm:$0xf]
  %v93 = vld [vmem:[%s1 + $0x84] sm:$0xf]
  %v94 = vld [vmem:[%s1 + $0x88] sm:$0xf]
  %v95 = vld [vmem:[%s1 + $0x8c] sm:$0xf]
  %v96 = vld [vmem:[%s1 + $0x90] sm:$0xf]
  %v97 = vld [vmem:[%s1 + $0x94] sm:$0xf]
  %v98 = vld [vmem:[%s1 + $0x98] sm:$0xf]
  %v99 = vld [vmem:[%s1 + $0x9c] sm:$0xf]
  %v100 = vld [vmem:[%s1 + $0xa0] sm:$0xf]
  %v101 = vld [vmem:[%s1 + $0xa4] sm:$0xf]
  %v102 = vld [vmem:[%s1 + $0xa8] sm:$0xf]
  %v103 = vld [vmem:[%s1 + $0xac] sm:$0xf]
  %v104 = vld [vmem:[%s1 + $0xb0] sm:$0xf]
  %v105 = vld [vmem:[%s1 + $0xb4] sm:$0xf]
  %v106 = vld [vmem:[%s1 + $0xb8] sm:$0xf]
  %v107 = vld [vmem:[%s1 + $0xbc] sm:$0xf]
  %v108 = vld [vmem:[%s1 + $0xc0] sm:$0xf]
  %v109 = vld [vmem:[%s1 + $0xc4] sm:$0xf]
  %v110 = vld [vmem:[%s1 + $0xc8] sm:$0xf]
  %v111 = vld [vmem:[%s1 + $0xcc] sm:$0xf]
  %v112 = vld [vmem:[%s1 + $0xd0] sm:$0xf]
  %v113 = vld [vmem:[%s1 + $0xd4] sm:$0xf]
  %v114 = vld [vmem:[%s1 + $0xd8] sm:$0xf]
  %v115 = vld [vmem:[%s1 + $0xdc] sm:$0xf]
  %v116 = vld [vmem:[%s1 + $0xe0] sm:$0xf]
  %v117 = vld [vmem:[%s1 + $0xe4] sm:$0xf]
  %v118 = vld [vmem:[%s1 + $0xe8] sm:$0xf]
  %v119 = vld [vmem:[%s1 + $0xec] sm:$0xf]
  %v120 = vld [vmem:[%s1 + $0xf0] sm:$0xf]
  %v121 = vld [vmem:[%s1 + $0xf4] sm:$0xf]
  %v122 = vld [vmem:[%s1 + $0xf8] sm:$0xf]
  %v123 = vld [vmem:[%s1 + $0xfc] sm:$0xf]
  %v124 = vld [vmem:[%s1 + $0x100] sm:$0xf]
  %v125 = vld [vmem:[%s1 + $0x104] sm:$0xf]
  %v126 = vld [vmem:[%s1 + $0x108] sm:$0xf]
  %v127 = vld [vmem:[%s1 + $0x10c] sm:$0xf]
  %v128 = vld [vmem:[%s1 + $0x110] sm:$0xf]
  %v129 = vld [vmem:[%s1 + $0x114] sm:$0xf]
  %v130 = vld [vmem:[%s1 + $0x118] sm:$0xf]
  %v131 = vld [vmem:[%s1 + $0x11c] sm:$0xf]
  %v132 = vld [vmem:[%s1 + $0x120] sm:$0xf]
  %v133 = vld [vmem:[%s1 + $0x124] sm:$0xf]
  %v134 = vld [vmem:[%s1 + $0x128] sm:$0xf]
  %v135 = vld [vmem:[%s1 + $0x12c] sm:$0xf]
  %v136 = vld [vmem:[%s1 + $0x130] sm:$0xf]
  %v137 = vld [vmem:[%s1 + $0x134] sm:$0xf]
  %v138 = vld [vmem:[%s1 + $0x138] sm:$0xf]
  %v139 = vld [vmem:[%s1 + $0x13c] sm:$0xf]
  %v188 = vunpack.c.l.b16 %v12
  %v189 = vunpack.c.h.b16 %v12
  %v190 = vunpack.c.l.b16 %v13
  %v191 = vunpack.c.h.b16 %v13
  %v192 = vunpack.c.l.b16 %v14
  %v193 = vunpack.c.l.b16 %v15
  %v194 = vunpack.c.h.b16 %v15
  %v195 = vunpack.c.l.b16 %v16
  %v196 = vunpack.c.h.b16 %v16
  %v197 = vunpack.c.l.b16 %v17
  %v198 = vunpack.c.l.b16 %v18
  %v199 = vunpack.c.h.b16 %v18
  %v200 = vunpack.c.l.b16 %v19
  %v201 = vunpack.c.h.b16 %v19
  %v202 = vunpack.c.l.b16 %v20
  %v203 = vunpack.c.l.b16 %v21
  %v204 = vunpack.c.h.b16 %v21
  %v205 = vunpack.c.l.b16 %v22
  %v206 = vunpack.c.h.b16 %v22
  %v207 = vunpack.c.l.b16 %v23
  %v208 = vunpack.c.l.b16 %v24
  %v209 = vunpack.c.h.b16 %v24
  %v210 = vunpack.c.l.b16 %v25
  %v211 = vunpack.c.h.b16 %v25
  %v212 = vunpack.c.l.b16 %v26
  %v213 = vunpack.c.l.b16 %v27
  %v214 = vunpack.c.h.b16 %v27
  %v215 = vunpack.c.l.b16 %v28
  %v216 = vunpack.c.h.b16 %v28
  %v217 = vunpack.c.l.b16 %v29
  %v218 = vunpack.c.l.b16 %v30
  %v219 = vunpack.c.h.b16 %v30
  %v220 = vunpack.c.l.b16 %v31
  %v221 = vunpack.c.h.b16 %v31
  %v222 = vunpack.c.l.b16 %v32
  %v223 = vunpack.c.l.b16 %v33
  %v224 = vunpack.c.h.b16 %v33
  %v225 = vunpack.c.l.b16 %v34
  %v226 = vunpack.c.h.b16 %v34
  %v227 = vunpack.c.l.b16 %v35
  %v228 = vunpack.c.l.b16 %v36
  %v229 = vunpack.c.h.b16 %v36
  %v230 = vunpack.c.l.b16 %v37
  %v231 = vunpack.c.h.b16 %v37
  %v232 = vunpack.c.l.b16 %v38
  %v233 = vunpack.c.l.b16 %v39
  %v234 = vunpack.c.h.b16 %v39
  %v235 = vunpack.c.l.b16 %v40
  %v236 = vunpack.c.h.b16 %v40
  %v237 = vunpack.c.l.b16 %v41
  %v238 = vunpack.c.l.b16 %v42
  %v239 = vunpack.c.h.b16 %v42
  %v240 = vunpack.c.l.b16 %v43
  %v241 = vunpack.c.h.b16 %v43
  %v242 = vunpack.c.l.b16 %v44
  %v243 = vunpack.c.l.b16 %v45
  %v244 = vunpack.c.h.b16 %v45
  %v245 = vunpack.c.l.b16 %v46
  %v246 = vunpack.c.h.b16 %v46
  %v247 = vunpack.c.l.b16 %v47
  %v248 = vunpack.c.l.b16 %v48
  %v249 = vunpack.c.h.b16 %v48
  %v250 = vunpack.c.l.b16 %v49
  %v251 = vunpack.c.h.b16 %v49
  %v252 = vunpack.c.l.b16 %v50
  %v253 = vunpack.c.l.b16 %v51
  %v254 = vunpack.c.h.b16 %v51
  %v255 = vunpack.c.l.b16 %v52
  %v256 = vunpack.c.h.b16 %v52
  %v257 = vunpack.c.l.b16 %v53
  %v258 = vunpack.c.l.b16 %v54
  %v259 = vunpack.c.h.b16 %v54
  %v260 = vunpack.c.l.b16 %v55
  %v261 = vunpack.c.h.b16 %v55
  %v262 = vunpack.c.l.b16 %v56
  %v263 = vunpack.c.l.b16 %v57
  %v264 = vunpack.c.h.b16 %v57
  %v265 = vunpack.c.l.b16 %v58
  %v266 = vunpack.c.h.b16 %v58
  %v267 = vunpack.c.l.b16 %v59
  %v268 = vpack.c.b16 %v193, %v188
  %v269 = vpack.c.b16 %v194, %v189
  %v270 = vpack.c.b16 %v195, %v190
  %v271 = vpack.c.b16 %v196, %v191
  %v272 = vpack.c.b16 %v197, %v192
  %v273 = vpack.c.b16 %v203, %v198
  %v274 = vpack.c.b16 %v204, %v199
  %v275 = vpack.c.b16 %v205, %v200
  %v276 = vpack.c.b16 %v206, %v201
  %v277 = vpack.c.b16 %v207, %v202
  %v278 = vpack.c.b16 %v213, %v208
  %v279 = vpack.c.b16 %v214, %v209
  %v280 = vpack.c.b16 %v215, %v210
  %v281 = vpack.c.b16 %v216, %v211
  %v282 = vpack.c.b16 %v217, %v212
  %v283 = vpack.c.b16 %v223, %v218
  %v284 = vpack.c.b16 %v224, %v219
  %v285 = vpack.c.b16 %v225, %v220
  %v286 = vpack.c.b16 %v226, %v221
  %v287 = vpack.c.b16 %v227, %v222
  %v288 = vpack.c.b16 %v233, %v228
  %v289 = vpack.c.b16 %v234, %v229
  %v290 = vpack.c.b16 %v235, %v230
  %v291 = vpack.c.b16 %v236, %v231
  %v292 = vpack.c.b16 %v237, %v232
  %v293 = vpack.c.b16 %v243, %v238
  %v294 = vpack.c.b16 %v244, %v239
  %v295 = vpack.c.b16 %v245, %v240
  %v296 = vpack.c.b16 %v246, %v241
  %v297 = vpack.c.b16 %v247, %v242
  %v298 = vpack.c.b16 %v253, %v248
  %v299 = vpack.c.b16 %v254, %v249
  %v300 = vpack.c.b16 %v255, %v250
  %v301 = vpack.c.b16 %v256, %v251
  %v302 = vpack.c.b16 %v257, %v252
  %v303 = vpack.c.b16 %v263, %v258
  %v304 = vpack.c.b16 %v264, %v259
  %v305 = vpack.c.b16 %v265, %v260
  %v306 = vpack.c.b16 %v266, %v261
  %v307 = vpack.c.b16 %v267, %v262
  %v428 = vunpack.c.l.b16 %v60
  %v429 = vunpack.c.l.b16 %v61
  %v430 = vunpack.c.l.b16 %v62
  %v431 = vunpack.c.l.b16 %v63
  %v432 = vunpack.c.l.b16 %v64
  %v433 = vunpack.c.l.b16 %v65
  %v434 = vunpack.c.l.b16 %v66
  %v435 = vunpack.c.l.b16 %v67
  %v436 = vunpack.c.l.b16 %v68
  %v437 = vunpack.c.l.b16 %v69
  %v438 = vunpack.c.l.b16 %v70
  %v439 = vunpack.c.l.b16 %v71
  %v440 = vunpack.c.l.b16 %v72
  %v441 = vunpack.c.l.b16 %v73
  %v442 = vunpack.c.l.b16 %v74
  %v443 = vunpack.c.l.b16 %v75
  %v444 = vunpack.c.l.b16 %v76
  %v445 = vunpack.c.l.b16 %v77
  %v446 = vunpack.c.l.b16 %v78
  %v447 = vunpack.c.l.b16 %v79
  %v448 = vunpack.c.l.b16 %v80
  %v449 = vunpack.c.l.b16 %v81
  %v450 = vunpack.c.l.b16 %v82
  %v451 = vunpack.c.l.b16 %v83
  %v452 = vunpack.c.l.b16 %v84
  %v453 = vunpack.c.l.b16 %v85
  %v454 = vunpack.c.l.b16 %v86
  %v455 = vunpack.c.l.b16 %v87
  %v456 = vunpack.c.l.b16 %v88
  %v457 = vunpack.c.l.b16 %v89
  %v458 = vunpack.c.l.b16 %v90
  %v459 = vunpack.c.l.b16 %v91
  %v460 = vunpack.c.l.b16 %v92
  %v461 = vunpack.c.l.b16 %v93
  %v462 = vunpack.c.l.b16 %v94
  %v463 = vunpack.c.l.b16 %v95
  %v464 = vunpack.c.l.b16 %v96
  %v465 = vunpack.c.l.b16 %v97
  %v466 = vunpack.c.l.b16 %v98
  %v467 = vunpack.c.l.b16 %v99
  %v468 = vunpack.c.l.b16 %v100
  %v469 = vunpack.c.l.b16 %v101
  %v470 = vunpack.c.l.b16 %v102
  %v471 = vunpack.c.l.b16 %v103
  %v472 = vunpack.c.l.b16 %v104
  %v473 = vunpack.c.l.b16 %v105
  %v474 = vunpack.c.l.b16 %v106
  %v475 = vunpack.c.l.b16 %v107
  %v476 = vunpack.c.l.b16 %v108
  %v477 = vunpack.c.l.b16 %v109
  %v478 = vunpack.c.l.b16 %v110
  %v479 = vunpack.c.l.b16 %v111
  %v480 = vunpack.c.l.b16 %v112
  %v481 = vunpack.c.l.b16 %v113
  %v482 = vunpack.c.l.b16 %v114
  %v483 = vunpack.c.l.b16 %v115
  %v484 = vunpack.c.l.b16 %v116
  %v485 = vunpack.c.l.b16 %v117
  %v486 = vunpack.c.l.b16 %v118
  %v487 = vunpack.c.l.b16 %v119
  %v488 = vunpack.c.l.b16 %v120
  %v489 = vunpack.c.l.b16 %v121
  %v490 = vunpack.c.l.b16 %v122
  %v491 = vunpack.c.l.b16 %v123
  %v492 = vunpack.c.l.b16 %v124
  %v493 = vunpack.c.l.b16 %v125
  %v494 = vunpack.c.l.b16 %v126
  %v495 = vunpack.c.l.b16 %v127
  %v496 = vunpack.c.l.b16 %v128
  %v497 = vunpack.c.l.b16 %v129
  %v498 = vunpack.c.l.b16 %v130
  %v499 = vunpack.c.l.b16 %v131
  %v500 = vunpack.c.l.b16 %v132
  %v501 = vunpack.c.l.b16 %v133
  %v502 = vunpack.c.l.b16 %v134
  %v503 = vunpack.c.l.b16 %v135
  %v504 = vunpack.c.l.b16 %v136
  %v505 = vunpack.c.l.b16 %v137
  %v506 = vunpack.c.l.b16 %v138
  %v507 = vunpack.c.l.b16 %v139
  %v508 = vpack.c.b16 %v429, %v428
  %v509 = vpack.c.b16 %v431, %v430
  %v510 = vpack.c.b16 %v433, %v432
  %v511 = vpack.c.b16 %v435, %v434
  %v512 = vpack.c.b16 %v437, %v436
  %v513 = vpack.c.b16 %v439, %v438
  %v514 = vpack.c.b16 %v441, %v440
  %v515 = vpack.c.b16 %v443, %v442
  %v516 = vpack.c.b16 %v445, %v444
  %v517 = vpack.c.b16 %v447, %v446
  %v518 = vpack.c.b16 %v449, %v448
  %v519 = vpack.c.b16 %v451, %v450
  %v520 = vpack.c.b16 %v453, %v452
  %v521 = vpack.c.b16 %v455, %v454
  %v522 = vpack.c.b16 %v457, %v456
  %v523 = vpack.c.b16 %v459, %v458
  %v524 = vpack.c.b16 %v461, %v460
  %v525 = vpack.c.b16 %v463, %v462
  %v526 = vpack.c.b16 %v465, %v464
  %v527 = vpack.c.b16 %v467, %v466
  %v528 = vpack.c.b16 %v469, %v468
  %v529 = vpack.c.b16 %v471, %v470
  %v530 = vpack.c.b16 %v473, %v472
  %v531 = vpack.c.b16 %v475, %v474
  %v532 = vpack.c.b16 %v477, %v476
  %v533 = vpack.c.b16 %v479, %v478
  %v534 = vpack.c.b16 %v481, %v480
  %v535 = vpack.c.b16 %v483, %v482
  %v536 = vpack.c.b16 %v485, %v484
  %v537 = vpack.c.b16 %v487, %v486
  %v538 = vpack.c.b16 %v489, %v488
  %v539 = vpack.c.b16 %v491, %v490
  %v540 = vpack.c.b16 %v493, %v492
  %v541 = vpack.c.b16 %v495, %v494
  %v542 = vpack.c.b16 %v497, %v496
  %v543 = vpack.c.b16 %v499, %v498
  %v544 = vpack.c.b16 %v501, %v500
  %v545 = vpack.c.b16 %v503, %v502
  %v546 = vpack.c.b16 %v505, %v504
  %v547 = vpack.c.b16 %v507, %v506
  %588 = vmatprep.subr.bf16.mxu0 0
  %589 = vmatpush1.bf16.msra.mxu0 %v508
  %590 = vmatprep.subr.bf16.mxu0 0
  %591 = vmatpush1.bf16.msra.mxu0 %v509
  %592 = vmatprep.subr.bf16.mxu0 0
  %593 = vmatpush1.bf16.msra.mxu0 %v510
  %594 = vmatprep.subr.bf16.mxu0 0
  %595 = vmatpush1.bf16.msra.mxu0 %v511
  %596 = vmatprep.subr.bf16.mxu0 0
  %597 = vmatpush1.bf16.msra.mxu0 %v512
  %598 = vmatprep.subr.bf16.mxu0 0
  %599 = vmatpush1.bf16.msra.mxu0 %v513
  %600 = vmatprep.subr.bf16.mxu0 0
  %601 = vmatpush1.bf16.msra.mxu0 %v514
  %602 = vmatprep.subr.bf16.mxu0 0
  %603 = vmatpush1.bf16.msra.mxu0 %v515
  %604 = vmatprep.subr.bf16.mxu0 0
  %605 = vmatpush1.bf16.msra.mxu0 %v516
  %606 = vmatprep.subr.bf16.mxu0 0
  %607 = vmatpush1.bf16.msra.mxu0 %v517
  %608 = vmatprep.subr.bf16.mxu0 0
  %609 = vmatpush1.bf16.msra.mxu0 %v518
  %610 = vmatprep.subr.bf16.mxu0 0
  %611 = vmatpush1.bf16.msra.mxu0 %v519
  %612 = vmatprep.subr.bf16.mxu0 0
  %613 = vmatpush1.bf16.msra.mxu0 %v520
  %614 = vmatprep.subr.bf16.mxu0 0
  %615 = vmatpush1.bf16.msra.mxu0 %v521
  %616 = vmatprep.subr.bf16.mxu0 0
  %617 = vmatpush1.bf16.msra.mxu0 %v522
  %618 = vmatprep.subr.bf16.mxu0 0
  %619 = vmatpush1.bf16.msra.mxu0 %v523
  %620 = vmatprep.mubr.bf16.mxu0 %v269
  %621 = vmatmul.mubr.bf16.gmra.mrb[0].mxu0 %v268
  %v622 = vpop.f32.mrb[0].mxu0
  %v623 = vadd.f32 0.0, %v622
  %v624 = vpop.f32.mrb[0].mxu0
  %v625 = vpop.f32.mrb[0].mxu0
  %v626 = vadd.f32 0.0, %v625
  %v627 = vpop.f32.mrb[0].mxu0
  %628 = vmatprep.mubr.bf16.mxu0 %v274
  %629 = vmatmul.mubr.bf16.gmra.mrb[0].mxu0 %v273
  %v630 = vpop.f32.mrb[0].mxu0
  %v631 = vadd.f32 0.0, %v630
  %v632 = vpop.f32.mrb[0].mxu0
  %v633 = vpop.f32.mrb[0].mxu0
  %v634 = vadd.f32 0.0, %v633
  %v635 = vpop.f32.mrb[0].mxu0
  %636 = vmatprep.mubr.bf16.mxu0 %v279
  %637 = vmatmul.mubr.bf16.gmra.mrb[0].mxu0 %v278
  %v638 = vpop.f32.mrb[0].mxu0
  %v639 = vadd.f32 0.0, %v638
  %v640 = vpop.f32.mrb[0].mxu0
  %v641 = vpop.f32.mrb[0].mxu0
  %v642 = vadd.f32 0.0, %v641
  %v643 = vpop.f32.mrb[0].mxu0
  %644 = vmatprep.mubr.bf16.mxu0 %v284
  %645 = vmatmul.mubr.bf16.gmra.mrb[0].mxu0 %v283
  %v646 = vpop.f32.mrb[0].mxu0
  %v647 = vadd.f32 0.0, %v646
  %v648 = vpop.f32.mrb[0].mxu0
  %v649 = vpop.f32.mrb[0].mxu0
  %v650 = vadd.f32 0.0, %v649
  %v651 = vpop.f32.mrb[0].mxu0
  %652 = vmatprep.mubr.bf16.mxu0 %v289
  %653 = vmatmul.mubr.bf16.gmra.mrb[0].mxu0 %v288
  %v654 = vpop.f32.mrb[0].mxu0
  %v655 = vadd.f32 0.0, %v654
  %v656 = vpop.f32.mrb[0].mxu0
  %v657 = vpop.f32.mrb[0].mxu0
  %v658 = vadd.f32 0.0, %v657
  %v659 = vpop.f32.mrb[0].mxu0
  %660 = vmatprep.mubr.bf16.mxu0 %v294
  %661 = vmatmul.mubr.bf16.gmra.mrb[0].mxu0 %v293
  %v662 = vpop.f32.mrb[0].mxu0
  %v663 = vadd.f32 0.0, %v662
  %v664 = vpop.f32.mrb[0].mxu0
  %v665 = vpop.f32.mrb[0].mxu0
  %v666 = vadd.f32 0.0, %v665
  %v667 = vpop.f32.mrb[0].mxu0
  %668 = vmatprep.mubr.bf16.mxu0 %v299
  %669 = vmatmul.mubr.bf16.gmra.mrb[0].mxu0 %v298
  %v670 = vpop.f32.mrb[0].mxu0
  %v671 = vadd.f32 0.0, %v670
  %v672 = vpop.f32.mrb[0].mxu0
  %v673 = vpop.f32.mrb[0].mxu0
  %v674 = vadd.f32 0.0, %v673
  %v675 = vpop.f32.mrb[0].mxu0
  %676 = vmatprep.mubr.bf16.mxu0 %v304
  %677 = vmatmul.mubr.bf16.gmra.mrb[0].mxu0 %v303
  %v678 = vpop.f32.mrb[0].mxu0
  %v679 = vadd.f32 0.0, %v678
  %v680 = vpop.f32.mrb[0].mxu0
  %v681 = vpop.f32.mrb[0].mxu0
  %v682 = vadd.f32 0.0, %v681
  %v683 = vpop.f32.mrb[0].mxu0
  %684 = vdwg.mxu0
  %685 = vmatprep.subr.bf16.mxu0 0
  %686 = vmatpush1.bf16.msra.mxu0 %v524
  %687 = vmatprep.subr.bf16.mxu0 0
  %688 = vmatpush1.bf16.msra.mxu0 %v525
  %689 = vmatprep.subr.bf16.mxu0 0
  %690 = vmatpush1.bf16.msra.mxu0 %v526
  %691 = vmatprep.subr.bf16.mxu0 0
  %692 = vmatpush1.bf16.msra.mxu0 %v527
  %693 = vmatprep.subr.bf16.mxu0 0
  %694 = vmatpush1.bf16.msra.mxu0 %v528
  %695 = vmatprep.subr.bf16.mxu0 0
  %696 = vmatpush1.bf16.msra.mxu0 %v529
  %697 = vmatprep.subr.bf16.mxu0 0
  %698 = vmatpush1.bf16.msra.mxu0 %v530
  %699 = vmatprep.subr.bf16.mxu0 0
  %700 = vmatpush1.bf16.msra.mxu0 %v531
  %701 = vmatprep.subr.bf16.mxu0 0
  %702 = vmatpush1.bf16.msra.mxu0 %v532
  %703 = vmatprep.subr.bf16.mxu0 0
  %704 = vmatpush1.bf16.msra.mxu0 %v533
  %705 = vmatprep.subr.bf16.mxu0 0
  %706 = vmatpush1.bf16.msra.mxu0 %v534
  %707 = vmatprep.subr.bf16.mxu0 0
  %708 = vmatpush1.bf16.msra.mxu0 %v535
  %709 = vmatprep.subr.bf16.mxu0 0
  %710 = vmatpush1.bf16.msra.mxu0 %v536
  %711 = vmatprep.subr.bf16.mxu0 0
  %712 = vmatpush1.bf16.msra.mxu0 %v537
  %713 = vmatprep.subr.bf16.mxu0 0
  %714 = vmatpush1.bf16.msra.mxu0 %v538
  %715 = vmatprep.subr.bf16.mxu0 0
  %716 = vmatpush1.bf16.msra.mxu0 %v539
  %717 = vmatprep.mubr.bf16.mxu0 %v271
  %718 = vmatmul.mubr.bf16.gmra.mrb[0].mxu0 %v270
  %v719 = vpop.f32.mrb[0].mxu0
  %v720 = vadd.f32 %v623, %v719
  %v721 = vpop.f32.mrb[0].mxu0
  %v722 = vpop.f32.mrb[0].mxu0
  %v723 = vadd.f32 %v626, %v722
  %v724 = vpop.f32.mrb[0].mxu0
  %725 = vmatprep.mubr.bf16.mxu0 %v276
  %726 = vmatmul.mubr.bf16.gmra.mrb[0].mxu0 %v275
  %v727 = vpop.f32.mrb[0].mxu0
  %v728 = vadd.f32 %v631, %v727
  %v729 = vpop.f32.mrb[0].mxu0
  %v730 = vpop.f32.mrb[0].mxu0
  %v731 = vadd.f32 %v634, %v730
  %v732 = vpop.f32.mrb[0].mxu0
  %733 = vmatprep.mubr.bf16.mxu0 %v281
  %734 = vmatmul.mubr.bf16.gmra.mrb[0].mxu0 %v280
  %v735 = vpop.f32.mrb[0].mxu0
  %v736 = vadd.f32 %v639, %v735
  %v737 = vpop.f32.mrb[0].mxu0
  %v738 = vpop.f32.mrb[0].mxu0
  %v739 = vadd.f32 %v642, %v738
  %v740 = vpop.f32.mrb[0].mxu0
  %741 = vmatprep.mubr.bf16.mxu0 %v286
  %742 = vmatmul.mubr.bf16.gmra.mrb[0].mxu0 %v285
  %v743 = vpop.f32.mrb[0].mxu0
  %v744 = vadd.f32 %v647, %v743
  %v745 = vpop.f32.mrb[0].mxu0
  %v746 = vpop.f32.mrb[0].mxu0
  %v747 = vadd.f32 %v650, %v746
  %v748 = vpop.f32.mrb[0].mxu0
  %749 = vmatprep.mubr.bf16.mxu0 %v291
  %750 = vmatmul.mubr.bf16.gmra.mrb[0].mxu0 %v290
  %v751 = vpop.f32.mrb[0].mxu0
  %v752 = vadd.f32 %v655, %v751
  %v753 = vpop.f32.mrb[0].mxu0
  %v754 = vpop.f32.mrb[0].mxu0
  %v755 = vadd.f32 %v658, %v754
  %v756 = vpop.f32.mrb[0].mxu0
  %757 = vmatprep.mubr.bf16.mxu0 %v296
  %758 = vmatmul.mubr.bf16.gmra.mrb[0].mxu0 %v295
  %v759 = vpop.f32.mrb[0].mxu0
  %v760 = vadd.f32 %v663, %v759
  %v761 = vpop.f32.mrb[0].mxu0
  %v762 = vpop.f32.mrb[0].mxu0
  %v763 = vadd.f32 %v666, %v762
  %v764 = vpop.f32.mrb[0].mxu0
  %765 = vmatprep.mubr.bf16.mxu0 %v301
  %766 = vmatmul.mubr.bf16.gmra.mrb[0].mxu0 %v300
  %v767 = vpop.f32.mrb[0].mxu0
  %v768 = vadd.f32 %v671, %v767
  %v769 = vpop.f32.mrb[0].mxu0
  %v770 = vpop.f32.mrb[0].mxu0
  %v771 = vadd.f32 %v674, %v770
  %v772 = vpop.f32.mrb[0].mxu0
  %773 = vmatprep.mubr.bf16.mxu0 %v306
  %774 = vmatmul.mubr.bf16.gmra.mrb[0].mxu0 %v305
  %v775 = vpop.f32.mrb[0].mxu0
  %v776 = vadd.f32 %v679, %v775
  %v777 = vpop.f32.mrb[0].mxu0
  %v778 = vpop.f32.mrb[0].mxu0
  %v779 = vadd.f32 %v682, %v778
  %v780 = vpop.f32.mrb[0].mxu0
  %781 = vdwg.mxu0
  %782 = vmatprep.subr.bf16.mxu0 0
  %783 = vmatpush1.bf16.msra.mxu0 %v540
  %784 = vmatprep.subr.bf16.mxu0 0
  %785 = vmatpush1.bf16.msra.mxu0 %v541
  %786 = vmatprep.subr.bf16.mxu0 0
  %787 = vmatpush1.bf16.msra.mxu0 %v542
  %788 = vmatprep.subr.bf16.mxu0 0
  %789 = vmatpush1.bf16.msra.mxu0 %v543
  %790 = vmatprep.subr.bf16.mxu0 0
  %791 = vmatpush1.bf16.msra.mxu0 %v544
  %792 = vmatprep.subr.bf16.mxu0 0
  %793 = vmatpush1.bf16.msra.mxu0 %v545
  %794 = vmatprep.subr.bf16.mxu0 0
  %795 = vmatpush1.bf16.msra.mxu0 %v546
  %796 = vmatprep.subr.bf16.mxu0 0
  %797 = vmatpush1.bf16.msra.mxu0 %v547
  %798 = vmatprep.subr.bf16.mxu0 0
  %799 = vmatpush1.bf16.msra.mxu0 0
  %800 = vmatprep.subr.bf16.mxu0 0
  %801 = vmatpush1.bf16.msra.mxu0 0
  %802 = vmatprep.subr.bf16.mxu0 0
  %803 = vmatpush1.bf16.msra.mxu0 0
  %804 = vmatprep.subr.bf16.mxu0 0
  %805 = vmatpush1.bf16.msra.mxu0 0
  %806 = vmatprep.subr.bf16.mxu0 0
  %807 = vmatpush1.bf16.msra.mxu0 0
  %808 = vmatprep.subr.bf16.mxu0 0
  %809 = vmatpush1.bf16.msra.mxu0 0
  %810 = vmatprep.subr.bf16.mxu0 0
  %811 = vmatpush1.bf16.msra.mxu0 0
  %812 = vmatprep.subr.bf16.mxu0 0
  %813 = vmatpush1.bf16.msra.mxu0 0
  %814 = vmatprep.mubr.bf16.mxu0 0
  %815 = vmatmul.mubr.bf16.gmra.mrb[0].mxu0 %v272
  %v816 = vpop.f32.mrb[0].mxu0
  %v817 = vadd.f32 %v720, %v816
  %v818 = vpop.f32.mrb[0].mxu0
  %v819 = vpop.f32.mrb[0].mxu0
  %v820 = vadd.f32 %v723, %v819
  %v821 = vpop.f32.mrb[0].mxu0
  %822 = vmatprep.mubr.bf16.mxu0 0
  %823 = vmatmul.mubr.bf16.gmra.mrb[0].mxu0 %v277
  %v824 = vpop.f32.mrb[0].mxu0
  %v825 = vadd.f32 %v728, %v824
  %v826 = vpop.f32.mrb[0].mxu0
  %v827 = vpop.f32.mrb[0].mxu0
  %v828 = vadd.f32 %v731, %v827
  %v829 = vpop.f32.mrb[0].mxu0
  %830 = vmatprep.mubr.bf16.mxu0 0
  %831 = vmatmul.mubr.bf16.gmra.mrb[0].mxu0 %v282
  %v832 = vpop.f32.mrb[0].mxu0
  %v833 = vadd.f32 %v736, %v832
  %v834 = vpop.f32.mrb[0].mxu0
  %v835 = vpop.f32.mrb[0].mxu0
  %v836 = vadd.f32 %v739, %v835
  %v837 = vpop.f32.mrb[0].mxu0
  %838 = vmatprep.mubr.bf16.mxu0 0
  %839 = vmatmul.mubr.bf16.gmra.mrb[0].mxu0 %v287
  %v840 = vpop.f32.mrb[0].mxu0
  %v841 = vadd.f32 %v744, %v840
  %v842 = vpop.f32.mrb[0].mxu0
  %v843 = vpop.f32.mrb[0].mxu0
  %v844 = vadd.f32 %v747, %v843
  %v845 = vpop.f32.mrb[0].mxu0
  %846 = vmatprep.mubr.bf16.mxu0 0
  %847 = vmatmul.mubr.bf16.gmra.mrb[0].mxu0 %v292
  %v848 = vpop.f32.mrb[0].mxu0
  %v849 = vadd.f32 %v752, %v848
  %v850 = vpop.f32.mrb[0].mxu0
  %v851 = vpop.f32.mrb[0].mxu0
  %v852 = vadd.f32 %v755, %v851
  %v853 = vpop.f32.mrb[0].mxu0
  %854 = vmatprep.mubr.bf16.mxu0 0
  %855 = vmatmul.mubr.bf16.gmra.mrb[0].mxu0 %v297
  %v856 = vpop.f32.mrb[0].mxu0
  %v857 = vadd.f32 %v760, %v856
  %v858 = vpop.f32.mrb[0].mxu0
  %v859 = vpop.f32.mrb[0].mxu0
  %v860 = vadd.f32 %v763, %v859
  %v861 = vpop.f32.mrb[0].mxu0
  %862 = vmatprep.mubr.bf16.mxu0 0
  %863 = vmatmul.mubr.bf16.gmra.mrb[0].mxu0 %v302
  %v864 = vpop.f32.mrb[0].mxu0
  %v865 = vadd.f32 %v768, %v864
  %v866 = vpop.f32.mrb[0].mxu0
  %v867 = vpop.f32.mrb[0].mxu0
  %v868 = vadd.f32 %v771, %v867
  %v869 = vpop.f32.mrb[0].mxu0
  %870 = vmatprep.mubr.bf16.mxu0 0
  %871 = vmatmul.mubr.bf16.gmra.mrb[0].mxu0 %v307
  %v872 = vpop.f32.mrb[0].mxu0
  %v873 = vadd.f32 %v776, %v872
  %v874 = vpop.f32.mrb[0].mxu0
  %v875 = vpop.f32.mrb[0].mxu0
  %v876 = vadd.f32 %v779, %v875
  %v877 = vpop.f32.mrb[0].mxu0
  %878 = vdwg.mxu0
  %vm879 = vcmp.gt.f32.partialorder %v817, 0.0
  %vm880 = vcmp.gt.f32.partialorder %v820, 0.0
  %vm881 = vcmp.gt.f32.partialorder %v825, 0.0
  %vm882 = vcmp.gt.f32.partialorder %v828, 0.0
  %vm883 = vcmp.gt.f32.partialorder %v833, 0.0
  %vm884 = vcmp.gt.f32.partialorder %v836, 0.0
  %vm885 = vcmp.gt.f32.partialorder %v841, 0.0
  %vm886 = vcmp.gt.f32.partialorder %v844, 0.0
  %vm887 = vcmp.gt.f32.partialorder %v849, 0.0
  %vm888 = vcmp.gt.f32.partialorder %v852, 0.0
  %vm889 = vcmp.gt.f32.partialorder %v857, 0.0
  %vm890 = vcmp.gt.f32.partialorder %v860, 0.0
  %vm891 = vcmp.gt.f32.partialorder %v865, 0.0
  %vm892 = vcmp.gt.f32.partialorder %v868, 0.0
  %vm893 = vcmp.gt.f32.partialorder %v873, 0.0
  %vm894 = vcmp.gt.f32.partialorder %v876, 0.0
  %v895 = vmul.f32 %v817, 0.1
  %v896 = vmul.f32 %v820, 0.1
  %v897 = vmul.f32 %v825, 0.1
  %v898 = vmul.f32 %v828, 0.1
  %v899 = vmul.f32 %v833, 0.1
  %v900 = vmul.f32 %v836, 0.1
  %v901 = vmul.f32 %v841, 0.1
  %v902 = vmul.f32 %v844, 0.1
  %v903 = vmul.f32 %v849, 0.1
  %v904 = vmul.f32 %v852, 0.1
  %v905 = vmul.f32 %v857, 0.1
  %v906 = vmul.f32 %v860, 0.1
  %v907 = vmul.f32 %v865, 0.1
  %v908 = vmul.f32 %v868, 0.1
  %v909 = vmul.f32 %v873, 0.1
  %v910 = vmul.f32 %v876, 0.1
  %v911 = vsel %vm879, %v817, %v895
  %v912 = vsel %vm880, %v820, %v896
  %v913 = vsel %vm881, %v825, %v897
  %v914 = vsel %vm882, %v828, %v898
  %v915 = vsel %vm883, %v833, %v899
  %v916 = vsel %vm884, %v836, %v900
  %v917 = vsel %vm885, %v841, %v901
  %v918 = vsel %vm886, %v844, %v902
  %v919 = vsel %vm887, %v849, %v903
  %v920 = vsel %vm888, %v852, %v904
  %v921 = vsel %vm889, %v857, %v905
  %v922 = vsel %vm890, %v860, %v906
  %v923 = vsel %vm891, %v865, %v907
  %v924 = vsel %vm892, %v868, %v908
  %v925 = vsel %vm893, %v873, %v909
  %v926 = vsel %vm894, %v876, %v910
  %v927 = vpack.c.bf16 %v912, %v911
  %v928 = vpack.c.bf16 %v914, %v913
  %v929 = vpack.c.bf16 %v916, %v915
  %v930 = vpack.c.bf16 %v918, %v917
  %v931 = vpack.c.bf16 %v920, %v919
  %v932 = vpack.c.bf16 %v922, %v921
  %v933 = vpack.c.bf16 %v924, %v923
  %v934 = vpack.c.bf16 %v926, %v925
  %v943 = vunpack.c.l.b16 %v927
  %v944 = vunpack.c.h.b16 %v927
  %v945 = vunpack.c.l.b16 %v928
  %v946 = vunpack.c.h.b16 %v928
  %v947 = vunpack.c.l.b16 %v929
  %v948 = vunpack.c.h.b16 %v929
  %v949 = vunpack.c.l.b16 %v930
  %v950 = vunpack.c.h.b16 %v930
  %v951 = vunpack.c.l.b16 %v931
  %v952 = vunpack.c.h.b16 %v931
  %v953 = vunpack.c.l.b16 %v932
  %v954 = vunpack.c.h.b16 %v932
  %v955 = vunpack.c.l.b16 %v933
  %v956 = vunpack.c.h.b16 %v933
  %v957 = vunpack.c.l.b16 %v934
  %v958 = vunpack.c.h.b16 %v934
  %v959 = vpack.c.b16 %v943, %v943
  %v960 = vpack.c.b16 %v944, %v944
  %v961 = vpack.c.b16 %v945, %v945
  %v962 = vpack.c.b16 %v946, %v946
  %v963 = vpack.c.b16 %v947, %v947
  %v964 = vpack.c.b16 %v948, %v948
  %v965 = vpack.c.b16 %v949, %v949
  %v966 = vpack.c.b16 %v950, %v950
  %v967 = vpack.c.b16 %v951, %v951
  %v968 = vpack.c.b16 %v952, %v952
  %v969 = vpack.c.b16 %v953, %v953
  %v970 = vpack.c.b16 %v954, %v954
  %v971 = vpack.c.b16 %v955, %v955
  %v972 = vpack.c.b16 %v956, %v956
  %v973 = vpack.c.b16 %v957, %v957
  %v974 = vpack.c.b16 %v958, %v958
  %991 = vst [vmem:[%s2] sm:$0xf] %v959
  %992 = vst [vmem:[%s2 + $0x4] sm:$0xf] %v960
  %993 = vst [vmem:[%s2 + $0x8] sm:$0xf] %v961
  %994 = vst [vmem:[%s2 + $0xc] sm:$0xf] %v962
  %995 = vst [vmem:[%s2 + $0x10] sm:$0xf] %v963
  %996 = vst [vmem:[%s2 + $0x14] sm:$0xf] %v964
  %997 = vst [vmem:[%s2 + $0x18] sm:$0xf] %v965
  %998 = vst [vmem:[%s2 + $0x1c] sm:$0xf] %v966
  %999 = vst [vmem:[%s2 + $0x20] sm:$0xf] %v967
  %1000 = vst [vmem:[%s2 + $0x24] sm:$0xf] %v968
  %1001 = vst [vmem:[%s2 + $0x28] sm:$0xf] %v969
  %1002 = vst [vmem:[%s2 + $0x2c] sm:$0xf] %v970
  %1003 = vst [vmem:[%s2 + $0x30] sm:$0xf] %v971
  %1004 = vst [vmem:[%s2 + $0x34] sm:$0xf] %v972
  %1005 = vst [vmem:[%s2 + $0x38] sm:$0xf] %v973
  %1006 = vst [vmem:[%s2 + $0x3c] sm:$0xf] %v974
  // Predicated region
  $region10: #{lnet_forward.13} parent=0 // pred_check
    _
  $region11: #{lnet_forward.13} parent=0 // pred_check_branch
    %1008 = sbr.rel (0) target = $region13
  $region12: #{lnet_forward.13} parent=0 // pred_region
    _
  $region13: #{lnet_forward.13} parent=0 // pred_fallthru
    _
  // Predicated region
  $region14: #{lnet_forward.13} parent=0 // pred_check
    _
  $region15: #{lnet_forward.13} parent=0 // pred_check_branch
    %1010 = sbr.rel (0) target = $region17
  $region16: #{lnet_forward.13} parent=0 // pred_region
    _
  $region17: #{lnet_forward.13} parent=0 // pred_fallthru
    _

// kernel: lnet_forward.14
$region0: #{lnet_forward.14}
  #allocation0 [shape = 'u32[]', space=smem, size = 0x4, offset = 0x4, fixed_abs, tag = 'smem constant byte address 0x4 - core index']
  #allocation1 [shape = 'u32[144,128]{1,0:T(1,128)}', space=vmem, size = 0x12000, scoped, tag = 'internal scratch']
  %s0 = inlined_call_operand.vmem [shape: bf16[128,1280], index: 0, kind: input, shape index: {}]
  %s1 = inlined_call_operand.vmem [shape: bf16[1280,128], index: 1, kind: input, shape index: {}]
  %s2 = inlined_call_operand.vmem [shape: bf16[128,128], index: 2, kind: output, shape index: {}]
  %s3 = sld [smem:[#allocation0]]
  $region18: #{lnet_forward.14} parent=0
    _
  %s5 = ssub.s32 1, %s3
  %s6 = scalar_select 0, %s5, %s3
  // Predicated region
  $region2: #{lnet_forward.14} parent=0 // pred_check
    _
  $region3: #{lnet_forward.14} parent=0 // pred_check_branch
    %8 = sbr.rel (0) target = $region5
  $region4: #{lnet_forward.14} parent=0 // pred_region
    _
  $region5: #{lnet_forward.14} parent=0 // pred_fallthru
    _
  // Predicated region
  $region6: #{lnet_forward.14} parent=0 // pred_check
    _
  $region7: #{lnet_forward.14} parent=0 // pred_check_branch
    %10 = sbr.rel (0) target = $region9
  $region8: #{lnet_forward.14} parent=0 // pred_region
    _
  $region9: #{lnet_forward.14} parent=0 // pred_fallthru
    _
  %v12 = vld [vmem:[%s0] sm:$0xff]
  %v13 = vld [vmem:[%s0 + $0x8] sm:$0xff]
  %v14 = vld [vmem:[%s0 + $0x10] sm:$0xff]
  %v15 = vld [vmem:[%s0 + $0x18] sm:$0xff]
  %v16 = vld [vmem:[%s0 + $0x20] sm:$0xff]
  %v17 = vld [vmem:[%s0 + $0x28] sm:$0xff]
  %v18 = vld [vmem:[%s0 + $0x30] sm:$0xff]
  %v19 = vld [vmem:[%s0 + $0x38] sm:$0xff]
  %v20 = vld [vmem:[%s0 + $0x40] sm:$0xff]
  %v21 = vld [vmem:[%s0 + $0x48] sm:$0xff]
  %v22 = vld [vmem:[%s0 + $0x50] sm:$0xff]
  %v23 = vld [vmem:[%s0 + $0x58] sm:$0xff]
  %v24 = vld [vmem:[%s0 + $0x60] sm:$0xff]
  %v25 = vld [vmem:[%s0 + $0x68] sm:$0xff]
  %v26 = vld [vmem:[%s0 + $0x70] sm:$0xff]
  %v27 = vld [vmem:[%s0 + $0x78] sm:$0xff]
  %v28 = vld [vmem:[%s0 + $0x80] sm:$0xff]
  %v29 = vld [vmem:[%s0 + $0x88] sm:$0xff]
  %v30 = vld [vmem:[%s0 + $0x90] sm:$0xff]
  %v31 = vld [vmem:[%s0 + $0x98] sm:$0xff]
  %v32 = vld [vmem:[%s0 + $0xa0] sm:$0xff]
  %v33 = vld [vmem:[%s0 + $0xa8] sm:$0xff]
  %v34 = vld [vmem:[%s0 + $0xb0] sm:$0xff]
  %v35 = vld [vmem:[%s0 + $0xb8] sm:$0xff]
  %v36 = vld [vmem:[%s0 + $0xc0] sm:$0xff]
  %v37 = vld [vmem:[%s0 + $0xc8] sm:$0xff]
  %v38 = vld [vmem:[%s0 + $0xd0] sm:$0xff]
  %v39 = vld [vmem:[%s0 + $0xd8] sm:$0xff]
  %v40 = vld [vmem:[%s0 + $0xe0] sm:$0xff]
  %v41 = vld [vmem:[%s0 + $0xe8] sm:$0xff]
  %v42 = vld [vmem:[%s0 + $0xf0] sm:$0xff]
  %v43 = vld [vmem:[%s0 + $0xf8] sm:$0xff]
  %v44 = vld [vmem:[%s0 + $0x100] sm:$0xff]
  %v45 = vld [vmem:[%s0 + $0x108] sm:$0xff]
  %v46 = vld [vmem:[%s0 + $0x110] sm:$0xff]
  %v47 = vld [vmem:[%s0 + $0x118] sm:$0xff]
  %v48 = vld [vmem:[%s0 + $0x120] sm:$0xff]
  %v49 = vld [vmem:[%s0 + $0x128] sm:$0xff]
  %v50 = vld [vmem:[%s0 + $0x130] sm:$0xff]
  %v51 = vld [vmem:[%s0 + $0x138] sm:$0xff]
  %v52 = vld [vmem:[%s0 + $0x140] sm:$0xff]
  %v53 = vld [vmem:[%s0 + $0x148] sm:$0xff]
  %v54 = vld [vmem:[%s0 + $0x150] sm:$0xff]
  %v55 = vld [vmem:[%s0 + $0x158] sm:$0xff]
  %v56 = vld [vmem:[%s0 + $0x160] sm:$0xff]
  %v57 = vld [vmem:[%s0 + $0x168] sm:$0xff]
  %v58 = vld [vmem:[%s0 + $0x170] sm:$0xff]
  %v59 = vld [vmem:[%s0 + $0x178] sm:$0xff]
  %v60 = vld [vmem:[%s0 + $0x180] sm:$0xff]
  %v61 = vld [vmem:[%s0 + $0x188] sm:$0xff]
  %v62 = vld [vmem:[%s0 + $0x190] sm:$0xff]
  %v63 = vld [vmem:[%s0 + $0x198] sm:$0xff]
  %v64 = vld [vmem:[%s0 + $0x1a0] sm:$0xff]
  %v65 = vld [vmem:[%s0 + $0x1a8] sm:$0xff]
  %v66 = vld [vmem:[%s0 + $0x1b0] sm:$0xff]
  %v67 = vld [vmem:[%s0 + $0x1b8] sm:$0xff]
  %v68 = vld [vmem:[%s0 + $0x1c0] sm:$0xff]
  %v69 = vld [vmem:[%s0 + $0x1c8] sm:$0xff]
  %v70 = vld [vmem:[%s0 + $0x1d0] sm:$0xff]
  %v71 = vld [vmem:[%s0 + $0x1d8] sm:$0xff]
  %v72 = vld [vmem:[%s0 + $0x1e0] sm:$0xff]
  %v73 = vld [vmem:[%s0 + $0x1e8] sm:$0xff]
  %v74 = vld [vmem:[%s0 + $0x1f0] sm:$0xff]
  %v75 = vld [vmem:[%s0 + $0x1f8] sm:$0xff]
  %v76 = vld [vmem:[%s0 + $0x200] sm:$0xff]
  %v77 = vld [vmem:[%s0 + $0x208] sm:$0xff]
  %v78 = vld [vmem:[%s0 + $0x210] sm:$0xff]
  %v79 = vld [vmem:[%s0 + $0x218] sm:$0xff]
  %v80 = vld [vmem:[%s0 + $0x220] sm:$0xff]
  %v81 = vld [vmem:[%s0 + $0x228] sm:$0xff]
  %v82 = vld [vmem:[%s0 + $0x230] sm:$0xff]
  %v83 = vld [vmem:[%s0 + $0x238] sm:$0xff]
  %v84 = vld [vmem:[%s0 + $0x240] sm:$0xff]
  %v85 = vld [vmem:[%s0 + $0x248] sm:$0xff]
  %v86 = vld [vmem:[%s0 + $0x250] sm:$0xff]
  %v87 = vld [vmem:[%s0 + $0x258] sm:$0xff]
  %v88 = vld [vmem:[%s0 + $0x260] sm:$0xff]
  %v89 = vld [vmem:[%s0 + $0x268] sm:$0xff]
  %v90 = vld [vmem:[%s0 + $0x270] sm:$0xff]
  %v91 = vld [vmem:[%s0 + $0x278] sm:$0xff]
  %v92 = vld [vmem:[%s1] sm:$0xf]
  %v93 = vld [vmem:[%s1 + $0x4] sm:$0xf]
  %v94 = vld [vmem:[%s1 + $0x8] sm:$0xf]
  %v95 = vld [vmem:[%s1 + $0xc] sm:$0xf]
  %v96 = vld [vmem:[%s1 + $0x10] sm:$0xf]
  %v97 = vld [vmem:[%s1 + $0x14] sm:$0xf]
  %v98 = vld [vmem:[%s1 + $0x18] sm:$0xf]
  %v99 = vld [vmem:[%s1 + $0x1c] sm:$0xf]
  %v100 = vld [vmem:[%s1 + $0x20] sm:$0xf]
  %v101 = vld [vmem:[%s1 + $0x24] sm:$0xf]
  %v102 = vld [vmem:[%s1 + $0x28] sm:$0xf]
  %v103 = vld [vmem:[%s1 + $0x2c] sm:$0xf]
  %v104 = vld [vmem:[%s1 + $0x30] sm:$0xf]
  %v105 = vld [vmem:[%s1 + $0x34] sm:$0xf]
  %v106 = vld [vmem:[%s1 + $0x38] sm:$0xf]
  %v107 = vld [vmem:[%s1 + $0x3c] sm:$0xf]
  %v108 = vld [vmem:[%s1 + $0x40] sm:$0xf]
  %v109 = vld [vmem:[%s1 + $0x44] sm:$0xf]
  %v110 = vld [vmem:[%s1 + $0x48] sm:$0xf]
  %v111 = vld [vmem:[%s1 + $0x4c] sm:$0xf]
  %v112 = vld [vmem:[%s1 + $0x50] sm:$0xf]
  %v113 = vld [vmem:[%s1 + $0x54] sm:$0xf]
  %v114 = vld [vmem:[%s1 + $0x58] sm:$0xf]
  %v115 = vld [vmem:[%s1 + $0x5c] sm:$0xf]
  %v116 = vld [vmem:[%s1 + $0x60] sm:$0xf]
  %v117 = vld [vmem:[%s1 + $0x64] sm:$0xf]
  %v118 = vld [vmem:[%s1 + $0x68] sm:$0xf]
  %v119 = vld [vmem:[%s1 + $0x6c] sm:$0xf]
  %v120 = vld [vmem:[%s1 + $0x70] sm:$0xf]
  %v121 = vld [vmem:[%s1 + $0x74] sm:$0xf]
  %v122 = vld [vmem:[%s1 + $0x78] sm:$0xf]
  %v123 = vld [vmem:[%s1 + $0x7c] sm:$0xf]
  %v124 = vld [vmem:[%s1 + $0x80] sm:$0xf]
  %v125 = vld [vmem:[%s1 + $0x84] sm:$0xf]
  %v126 = vld [vmem:[%s1 + $0x88] sm:$0xf]
  %v127 = vld [vmem:[%s1 + $0x8c] sm:$0xf]
  %v128 = vld [vmem:[%s1 + $0x90] sm:$0xf]
  %v129 = vld [vmem:[%s1 + $0x94] sm:$0xf]
  %v130 = vld [vmem:[%s1 + $0x98] sm:$0xf]
  %v131 = vld [vmem:[%s1 + $0x9c] sm:$0xf]
  %v132 = vld [vmem:[%s1 + $0xa0] sm:$0xf]
  %v133 = vld [vmem:[%s1 + $0xa4] sm:$0xf]
  %v134 = vld [vmem:[%s1 + $0xa8] sm:$0xf]
  %v135 = vld [vmem:[%s1 + $0xac] sm:$0xf]
  %v136 = vld [vmem:[%s1 + $0xb0] sm:$0xf]
  %v137 = vld [vmem:[%s1 + $0xb4] sm:$0xf]
  %v138 = vld [vmem:[%s1 + $0xb8] sm:$0xf]
  %v139 = vld [vmem:[%s1 + $0xbc] sm:$0xf]
  %v140 = vld [vmem:[%s1 + $0xc0] sm:$0xf]
  %v141 = vld [vmem:[%s1 + $0xc4] sm:$0xf]
  %v142 = vld [vmem:[%s1 + $0xc8] sm:$0xf]
  %v143 = vld [vmem:[%s1 + $0xcc] sm:$0xf]
  %v144 = vld [vmem:[%s1 + $0xd0] sm:$0xf]
  %v145 = vld [vmem:[%s1 + $0xd4] sm:$0xf]
  %v146 = vld [vmem:[%s1 + $0xd8] sm:$0xf]
  %v147 = vld [vmem:[%s1 + $0xdc] sm:$0xf]
  %v148 = vld [vmem:[%s1 + $0xe0] sm:$0xf]
  %v149 = vld [vmem:[%s1 + $0xe4] sm:$0xf]
  %v150 = vld [vmem:[%s1 + $0xe8] sm:$0xf]
  %v151 = vld [vmem:[%s1 + $0xec] sm:$0xf]
  %v152 = vld [vmem:[%s1 + $0xf0] sm:$0xf]
  %v153 = vld [vmem:[%s1 + $0xf4] sm:$0xf]
  %v154 = vld [vmem:[%s1 + $0xf8] sm:$0xf]
  %v155 = vld [vmem:[%s1 + $0xfc] sm:$0xf]
  %v156 = vld [vmem:[%s1 + $0x100] sm:$0xf]
  %v157 = vld [vmem:[%s1 + $0x104] sm:$0xf]
  %v158 = vld [vmem:[%s1 + $0x108] sm:$0xf]
  %v159 = vld [vmem:[%s1 + $0x10c] sm:$0xf]
  %v160 = vld [vmem:[%s1 + $0x110] sm:$0xf]
  %v161 = vld [vmem:[%s1 + $0x114] sm:$0xf]
  %v162 = vld [vmem:[%s1 + $0x118] sm:$0xf]
  %v163 = vld [vmem:[%s1 + $0x11c] sm:$0xf]
  %v164 = vld [vmem:[%s1 + $0x120] sm:$0xf]
  %v165 = vld [vmem:[%s1 + $0x124] sm:$0xf]
  %v166 = vld [vmem:[%s1 + $0x128] sm:$0xf]
  %v167 = vld [vmem:[%s1 + $0x12c] sm:$0xf]
  %v168 = vld [vmem:[%s1 + $0x130] sm:$0xf]
  %v169 = vld [vmem:[%s1 + $0x134] sm:$0xf]
  %v170 = vld [vmem:[%s1 + $0x138] sm:$0xf]
  %v171 = vld [vmem:[%s1 + $0x13c] sm:$0xf]
  %v172 = vld [vmem:[%s1 + $0x140] sm:$0xf]
  %v173 = vld [vmem:[%s1 + $0x144] sm:$0xf]
  %v174 = vld [vmem:[%s1 + $0x148] sm:$0xf]
  %v175 = vld [vmem:[%s1 + $0x14c] sm:$0xf]
  %v176 = vld [vmem:[%s1 + $0x150] sm:$0xf]
  %v177 = vld [vmem:[%s1 + $0x154] sm:$0xf]
  %v178 = vld [vmem:[%s1 + $0x158] sm:$0xf]
  %v179 = vld [vmem:[%s1 + $0x15c] sm:$0xf]
  %v180 = vld [vmem:[%s1 + $0x160] sm:$0xf]
  %v181 = vld [vmem:[%s1 + $0x164] sm:$0xf]
  %v182 = vld [vmem:[%s1 + $0x168] sm:$0xf]
  %v183 = vld [vmem:[%s1 + $0x16c] sm:$0xf]
  %v184 = vld [vmem:[%s1 + $0x170] sm:$0xf]
  %v185 = vld [vmem:[%s1 + $0x174] sm:$0xf]
  %v186 = vld [vmem:[%s1 + $0x178] sm:$0xf]
  %v187 = vld [vmem:[%s1 + $0x17c] sm:$0xf]
  %v188 = vld [vmem:[%s1 + $0x180] sm:$0xf]
  %v189 = vld [vmem:[%s1 + $0x184] sm:$0xf]
  %v190 = vld [vmem:[%s1 + $0x188] sm:$0xf]
  %v191 = vld [vmem:[%s1 + $0x18c] sm:$0xf]
  %v192 = vld [vmem:[%s1 + $0x190] sm:$0xf]
  %v193 = vld [vmem:[%s1 + $0x194] sm:$0xf]
  %v194 = vld [vmem:[%s1 + $0x198] sm:$0xf]
  %v195 = vld [vmem:[%s1 + $0x19c] sm:$0xf]
  %v196 = vld [vmem:[%s1 + $0x1a0] sm:$0xf]
  %v197 = vld [vmem:[%s1 + $0x1a4] sm:$0xf]
  %v198 = vld [vmem:[%s1 + $0x1a8] sm:$0xf]
  %v199 = vld [vmem:[%s1 + $0x1ac] sm:$0xf]
  %v200 = vld [vmem:[%s1 + $0x1b0] sm:$0xf]
  %v201 = vld [vmem:[%s1 + $0x1b4] sm:$0xf]
  %v202 = vld [vmem:[%s1 + $0x1b8] sm:$0xf]
  %v203 = vld [vmem:[%s1 + $0x1bc] sm:$0xf]
  %v204 = vld [vmem:[%s1 + $0x1c0] sm:$0xf]
  %v205 = vld [vmem:[%s1 + $0x1c4] sm:$0xf]
  %v206 = vld [vmem:[%s1 + $0x1c8] sm:$0xf]
  %v207 = vld [vmem:[%s1 + $0x1cc] sm:$0xf]
  %v208 = vld [vmem:[%s1 + $0x1d0] sm:$0xf]
  %v209 = vld [vmem:[%s1 + $0x1d4] sm:$0xf]
  %v210 = vld [vmem:[%s1 + $0x1d8] sm:$0xf]
  %v211 = vld [vmem:[%s1 + $0x1dc] sm:$0xf]
  %v212 = vld [vmem:[%s1 + $0x1e0] sm:$0xf]
  %v213 = vld [vmem:[%s1 + $0x1e4] sm:$0xf]
  %v214 = vld [vmem:[%s1 + $0x1e8] sm:$0xf]
  %v215 = vld [vmem:[%s1 + $0x1ec] sm:$0xf]
  %v216 = vld [vmem:[%s1 + $0x1f0] sm:$0xf]
  %v217 = vld [vmem:[%s1 + $0x1f4] sm:$0xf]
  %v218 = vld [vmem:[%s1 + $0x1f8] sm:$0xf]
  %v219 = vld [vmem:[%s1 + $0x1fc] sm:$0xf]
  %v220 = vld [vmem:[%s1 + $0x200] sm:$0xf]
  %v221 = vld [vmem:[%s1 + $0x204] sm:$0xf]
  %v222 = vld [vmem:[%s1 + $0x208] sm:$0xf]
  %v223 = vld [vmem:[%s1 + $0x20c] sm:$0xf]
  %v224 = vld [vmem:[%s1 + $0x210] sm:$0xf]
  %v225 = vld [vmem:[%s1 + $0x214] sm:$0xf]
  %v226 = vld [vmem:[%s1 + $0x218] sm:$0xf]
  %v227 = vld [vmem:[%s1 + $0x21c] sm:$0xf]
  %v228 = vld [vmem:[%s1 + $0x220] sm:$0xf]
  %v229 = vld [vmem:[%s1 + $0x224] sm:$0xf]
  %v230 = vld [vmem:[%s1 + $0x228] sm:$0xf]
  %v231 = vld [vmem:[%s1 + $0x22c] sm:$0xf]
  %v232 = vld [vmem:[%s1 + $0x230] sm:$0xf]
  %v233 = vld [vmem:[%s1 + $0x234] sm:$0xf]
  %v234 = vld [vmem:[%s1 + $0x238] sm:$0xf]
  %v235 = vld [vmem:[%s1 + $0x23c] sm:$0xf]
  %v236 = vld [vmem:[%s1 + $0x240] sm:$0xf]
  %v237 = vld [vmem:[%s1 + $0x244] sm:$0xf]
  %v238 = vld [vmem:[%s1 + $0x248] sm:$0xf]
  %v239 = vld [vmem:[%s1 + $0x24c] sm:$0xf]
  %v240 = vld [vmem:[%s1 + $0x250] sm:$0xf]
  %v241 = vld [vmem:[%s1 + $0x254] sm:$0xf]
  %v242 = vld [vmem:[%s1 + $0x258] sm:$0xf]
  %v243 = vld [vmem:[%s1 + $0x25c] sm:$0xf]
  %v244 = vld [vmem:[%s1 + $0x260] sm:$0xf]
  %v245 = vld [vmem:[%s1 + $0x264] sm:$0xf]
  %v246 = vld [vmem:[%s1 + $0x268] sm:$0xf]
  %v247 = vld [vmem:[%s1 + $0x26c] sm:$0xf]
  %v248 = vld [vmem:[%s1 + $0x270] sm:$0xf]
  %v249 = vld [vmem:[%s1 + $0x274] sm:$0xf]
  %v250 = vld [vmem:[%s1 + $0x278] sm:$0xf]
  %v251 = vld [vmem:[%s1 + $0x27c] sm:$0xf]
  %v332 = vunpack.c.l.b16 %v12
  %v333 = vunpack.c.h.b16 %v12
  %v334 = vunpack.c.l.b16 %v13
  %v335 = vunpack.c.h.b16 %v13
  %v336 = vunpack.c.l.b16 %v14
  %v337 = vunpack.c.h.b16 %v14
  %v338 = vunpack.c.l.b16 %v15
  %v339 = vunpack.c.h.b16 %v15
  %v340 = vunpack.c.l.b16 %v16
  %v341 = vunpack.c.h.b16 %v16
  %v342 = vunpack.c.l.b16 %v17
  %v343 = vunpack.c.h.b16 %v17
  %v344 = vunpack.c.l.b16 %v18
  %v345 = vunpack.c.h.b16 %v18
  %v346 = vunpack.c.l.b16 %v19
  %v347 = vunpack.c.h.b16 %v19
  %v348 = vunpack.c.l.b16 %v20
  %v349 = vunpack.c.h.b16 %v20
  %v350 = vunpack.c.l.b16 %v21
  %v351 = vunpack.c.h.b16 %v21
  %v352 = vunpack.c.l.b16 %v22
  %v353 = vunpack.c.h.b16 %v22
  %v354 = vunpack.c.l.b16 %v23
  %v355 = vunpack.c.h.b16 %v23
  %v356 = vunpack.c.l.b16 %v24
  %v357 = vunpack.c.h.b16 %v24
  %v358 = vunpack.c.l.b16 %v25
  %v359 = vunpack.c.h.b16 %v25
  %v360 = vunpack.c.l.b16 %v26
  %v361 = vunpack.c.h.b16 %v26
  %v362 = vunpack.c.l.b16 %v27
  %v363 = vunpack.c.h.b16 %v27
  %v364 = vunpack.c.l.b16 %v28
  %v365 = vunpack.c.h.b16 %v28
  %v366 = vunpack.c.l.b16 %v29
  %v367 = vunpack.c.h.b16 %v29
  %v368 = vunpack.c.l.b16 %v30
  %v369 = vunpack.c.h.b16 %v30
  %v370 = vunpack.c.l.b16 %v31
  %v371 = vunpack.c.h.b16 %v31
  %v372 = vunpack.c.l.b16 %v32
  %v373 = vunpack.c.h.b16 %v32
  %v374 = vunpack.c.l.b16 %v33
  %v375 = vunpack.c.h.b16 %v33
  %v376 = vunpack.c.l.b16 %v34
  %v377 = vunpack.c.h.b16 %v34
  %v378 = vunpack.c.l.b16 %v35
  %v379 = vunpack.c.h.b16 %v35
  %v380 = vunpack.c.l.b16 %v36
  %v381 = vunpack.c.h.b16 %v36
  %v382 = vunpack.c.l.b16 %v37
  %v383 = vunpack.c.h.b16 %v37
  %v384 = vunpack.c.l.b16 %v38
  %v385 = vunpack.c.h.b16 %v38
  %v386 = vunpack.c.l.b16 %v39
  %v387 = vunpack.c.h.b16 %v39
  %v388 = vunpack.c.l.b16 %v40
  %v389 = vunpack.c.h.b16 %v40
  %v390 = vunpack.c.l.b16 %v41
  %v391 = vunpack.c.h.b16 %v41
  %v392 = vunpack.c.l.b16 %v42
  %v393 = vunpack.c.h.b16 %v42
  %v394 = vunpack.c.l.b16 %v43
  %v395 = vunpack.c.h.b16 %v43
  %v396 = vunpack.c.l.b16 %v44
  %v397 = vunpack.c.h.b16 %v44
  %v398 = vunpack.c.l.b16 %v45
  %v399 = vunpack.c.h.b16 %v45
  %v400 = vunpack.c.l.b16 %v46
  %v401 = vunpack.c.h.b16 %v46
  %v402 = vunpack.c.l.b16 %v47
  %v403 = vunpack.c.h.b16 %v47
  %v404 = vunpack.c.l.b16 %v48
  %v405 = vunpack.c.h.b16 %v48
  %v406 = vunpack.c.l.b16 %v49
  %v407 = vunpack.c.h.b16 %v49
  %v408 = vunpack.c.l.b16 %v50
  %v409 = vunpack.c.h.b16 %v50
  %v410 = vunpack.c.l.b16 %v51
  %v411 = vunpack.c.h.b16 %v51
  %v412 = vunpack.c.l.b16 %v52
  %v413 = vunpack.c.h.b16 %v52
  %v414 = vunpack.c.l.b16 %v53
  %v415 = vunpack.c.h.b16 %v53
  %v416 = vunpack.c.l.b16 %v54
  %v417 = vunpack.c.h.b16 %v54
  %v418 = vunpack.c.l.b16 %v55
  %v419 = vunpack.c.h.b16 %v55
  %v420 = vunpack.c.l.b16 %v56
  %v421 = vunpack.c.h.b16 %v56
  %v422 = vunpack.c.l.b16 %v57
  %v423 = vunpack.c.h.b16 %v57
  %v424 = vunpack.c.l.b16 %v58
  %v425 = vunpack.c.h.b16 %v58
  %v426 = vunpack.c.l.b16 %v59
  %v427 = vunpack.c.h.b16 %v59
  %v428 = vunpack.c.l.b16 %v60
  %v429 = vunpack.c.h.b16 %v60
  %v430 = vunpack.c.l.b16 %v61
  %v431 = vunpack.c.h.b16 %v61
  %v432 = vunpack.c.l.b16 %v62
  %v433 = vunpack.c.h.b16 %v62
  %v434 = vunpack.c.l.b16 %v63
  %v435 = vunpack.c.h.b16 %v63
  %v436 = vunpack.c.l.b16 %v64
  %v437 = vunpack.c.h.b16 %v64
  %v438 = vunpack.c.l.b16 %v65
  %v439 = vunpack.c.h.b16 %v65
  %v440 = vunpack.c.l.b16 %v66
  %v441 = vunpack.c.h.b16 %v66
  %v442 = vunpack.c.l.b16 %v67
  %v443 = vunpack.c.h.b16 %v67
  %v444 = vunpack.c.l.b16 %v68
  %v445 = vunpack.c.h.b16 %v68
  %v446 = vunpack.c.l.b16 %v69
  %v447 = vunpack.c.h.b16 %v69
  %v448 = vunpack.c.l.b16 %v70
  %v449 = vunpack.c.h.b16 %v70
  %v450 = vunpack.c.l.b16 %v71
  %v451 = vunpack.c.h.b16 %v71
  %v452 = vunpack.c.l.b16 %v72
  %v453 = vunpack.c.h.b16 %v72
  %v454 = vunpack.c.l.b16 %v73
  %v455 = vunpack.c.h.b16 %v73
  %v456 = vunpack.c.l.b16 %v74
  %v457 = vunpack.c.h.b16 %v74
  %v458 = vunpack.c.l.b16 %v75
  %v459 = vunpack.c.h.b16 %v75
  %v460 = vunpack.c.l.b16 %v76
  %v461 = vunpack.c.h.b16 %v76
  %v462 = vunpack.c.l.b16 %v77
  %v463 = vunpack.c.h.b16 %v77
  %v464 = vunpack.c.l.b16 %v78
  %v465 = vunpack.c.h.b16 %v78
  %v466 = vunpack.c.l.b16 %v79
  %v467 = vunpack.c.h.b16 %v79
  %v468 = vunpack.c.l.b16 %v80
  %v469 = vunpack.c.h.b16 %v80
  %v470 = vunpack.c.l.b16 %v81
  %v471 = vunpack.c.h.b16 %v81
  %v472 = vunpack.c.l.b16 %v82
  %v473 = vunpack.c.h.b16 %v82
  %v474 = vunpack.c.l.b16 %v83
  %v475 = vunpack.c.h.b16 %v83
  %v476 = vunpack.c.l.b16 %v84
  %v477 = vunpack.c.h.b16 %v84
  %v478 = vunpack.c.l.b16 %v85
  %v479 = vunpack.c.h.b16 %v85
  %v480 = vunpack.c.l.b16 %v86
  %v481 = vunpack.c.h.b16 %v86
  %v482 = vunpack.c.l.b16 %v87
  %v483 = vunpack.c.h.b16 %v87
  %v484 = vunpack.c.l.b16 %v88
  %v485 = vunpack.c.h.b16 %v88
  %v486 = vunpack.c.l.b16 %v89
  %v487 = vunpack.c.h.b16 %v89
  %v488 = vunpack.c.l.b16 %v90
  %v489 = vunpack.c.h.b16 %v90
  %v490 = vunpack.c.l.b16 %v91
  %v491 = vunpack.c.h.b16 %v91
  %v492 = vpack.c.b16 %v342, %v332
  %v493 = vpack.c.b16 %v343, %v333
  %v494 = vpack.c.b16 %v344, %v334
  %v495 = vpack.c.b16 %v345, %v335
  %v496 = vpack.c.b16 %v346, %v336
  %v497 = vpack.c.b16 %v347, %v337
  %v498 = vpack.c.b16 %v348, %v338
  %v499 = vpack.c.b16 %v349, %v339
  %v500 = vpack.c.b16 %v350, %v340
  %v501 = vpack.c.b16 %v351, %v341
  %v502 = vpack.c.b16 %v362, %v352
  %v503 = vpack.c.b16 %v363, %v353
  %v504 = vpack.c.b16 %v364, %v354
  %v505 = vpack.c.b16 %v365, %v355
  %v506 = vpack.c.b16 %v366, %v356
  %v507 = vpack.c.b16 %v367, %v357
  %v508 = vpack.c.b16 %v368, %v358
  %v509 = vpack.c.b16 %v369, %v359
  %v510 = vpack.c.b16 %v370, %v360
  %v511 = vpack.c.b16 %v371, %v361
  %v512 = vpack.c.b16 %v382, %v372
  %v513 = vpack.c.b16 %v383, %v373
  %v514 = vpack.c.b16 %v384, %v374
  %v515 = vpack.c.b16 %v385, %v375
  %v516 = vpack.c.b16 %v386, %v376
  %v517 = vpack.c.b16 %v387, %v377
  %v518 = vpack.c.b16 %v388, %v378
  %v519 = vpack.c.b16 %v389, %v379
  %v520 = vpack.c.b16 %v390, %v380
  %v521 = vpack.c.b16 %v391, %v381
  %v522 = vpack.c.b16 %v402, %v392
  %v523 = vpack.c.b16 %v403, %v393
  %v524 = vpack.c.b16 %v404, %v394
  %v525 = vpack.c.b16 %v405, %v395
  %v526 = vpack.c.b16 %v406, %v396
  %v527 = vpack.c.b16 %v407, %v397
  %v528 = vpack.c.b16 %v408, %v398
  %v529 = vpack.c.b16 %v409, %v399
  %v530 = vpack.c.b16 %v410, %v400
  %v531 = vpack.c.b16 %v411, %v401
  %v532 = vpack.c.b16 %v422, %v412
  %v533 = vpack.c.b16 %v423, %v413
  %v534 = vpack.c.b16 %v424, %v414
  %v535 = vpack.c.b16 %v425, %v415
  %v536 = vpack.c.b16 %v426, %v416
  %v537 = vpack.c.b16 %v427, %v417
  %v538 = vpack.c.b16 %v428, %v418
  %v539 = vpack.c.b16 %v429, %v419
  %v540 = vpack.c.b16 %v430, %v420
  %v541 = vpack.c.b16 %v431, %v421
  %v542 = vpack.c.b16 %v442, %v432
  %v543 = vpack.c.b16 %v443, %v433
  %v544 = vpack.c.b16 %v444, %v434
  %v545 = vpack.c.b16 %v445, %v435
  %v546 = vpack.c.b16 %v446, %v436
  %v547 = vpack.c.b16 %v447, %v437
  %v548 = vpack.c.b16 %v448, %v438
  %v549 = vpack.c.b16 %v449, %v439
  %v550 = vpack.c.b16 %v450, %v440
  %v551 = vpack.c.b16 %v451, %v441
  %v552 = vpack.c.b16 %v462, %v452
  %v553 = vpack.c.b16 %v463, %v453
  %v554 = vpack.c.b16 %v464, %v454
  %v555 = vpack.c.b16 %v465, %v455
  %v556 = vpack.c.b16 %v466, %v456
  %v557 = vpack.c.b16 %v467, %v457
  %v558 = vpack.c.b16 %v468, %v458
  %v559 = vpack.c.b16 %v469, %v459
  %v560 = vpack.c.b16 %v470, %v460
  %v561 = vpack.c.b16 %v471, %v461
  %v562 = vpack.c.b16 %v482, %v472
  %v563 = vpack.c.b16 %v483, %v473
  %v564 = vpack.c.b16 %v484, %v474
  %v565 = vpack.c.b16 %v485, %v475
  %v566 = vpack.c.b16 %v486, %v476
  %v567 = vpack.c.b16 %v487, %v477
  %v568 = vpack.c.b16 %v488, %v478
  %v569 = vpack.c.b16 %v489, %v479
  %v570 = vpack.c.b16 %v490, %v480
  %v571 = vpack.c.b16 %v491, %v481
  %v812 = vunpack.c.l.b16 %v92
  %v813 = vunpack.c.l.b16 %v93
  %v814 = vunpack.c.l.b16 %v94
  %v815 = vunpack.c.l.b16 %v95
  %v816 = vunpack.c.l.b16 %v96
  %v817 = vunpack.c.l.b16 %v97
  %v818 = vunpack.c.l.b16 %v98
  %v819 = vunpack.c.l.b16 %v99
  %v820 = vunpack.c.l.b16 %v100
  %v821 = vunpack.c.l.b16 %v101
  %v822 = vunpack.c.l.b16 %v102
  %v823 = vunpack.c.l.b16 %v103
  %v824 = vunpack.c.l.b16 %v104
  %v825 = vunpack.c.l.b16 %v105
  %v826 = vunpack.c.l.b16 %v106
  %v827 = vunpack.c.l.b16 %v107
  %v828 = vunpack.c.l.b16 %v108
  %v829 = vunpack.c.l.b16 %v109
  %v830 = vunpack.c.l.b16 %v110
  %v831 = vunpack.c.l.b16 %v111
  %v832 = vunpack.c.l.b16 %v112
  %v833 = vunpack.c.l.b16 %v113
  %v834 = vunpack.c.l.b16 %v114
  %v835 = vunpack.c.l.b16 %v115
  %v836 = vunpack.c.l.b16 %v116
  %v837 = vunpack.c.l.b16 %v117
  %v838 = vunpack.c.l.b16 %v118
  %v839 = vunpack.c.l.b16 %v119
  %v840 = vunpack.c.l.b16 %v120
  %v841 = vunpack.c.l.b16 %v121
  %v842 = vunpack.c.l.b16 %v122
  %v843 = vunpack.c.l.b16 %v123
  %v844 = vunpack.c.l.b16 %v124
  %v845 = vunpack.c.l.b16 %v125
  %v846 = vunpack.c.l.b16 %v126
  %v847 = vunpack.c.l.b16 %v127
  %v848 = vunpack.c.l.b16 %v128
  %v849 = vunpack.c.l.b16 %v129
  %v850 = vunpack.c.l.b16 %v130
  %v851 = vunpack.c.l.b16 %v131
  %v852 = vunpack.c.l.b16 %v132
  %v853 = vunpack.c.l.b16 %v133
  %v854 = vunpack.c.l.b16 %v134
  %v855 = vunpack.c.l.b16 %v135
  %v856 = vunpack.c.l.b16 %v136
  %v857 = vunpack.c.l.b16 %v137
  %v858 = vunpack.c.l.b16 %v138
  %v859 = vunpack.c.l.b16 %v139
  %v860 = vunpack.c.l.b16 %v140
  %v861 = vunpack.c.l.b16 %v141
  %v862 = vunpack.c.l.b16 %v142
  %v863 = vunpack.c.l.b16 %v143
  %v864 = vunpack.c.l.b16 %v144
  %v865 = vunpack.c.l.b16 %v145
  %v866 = vunpack.c.l.b16 %v146
  %v867 = vunpack.c.l.b16 %v147
  %v868 = vunpack.c.l.b16 %v148
  %v869 = vunpack.c.l.b16 %v149
  %v870 = vunpack.c.l.b16 %v150
  %v871 = vunpack.c.l.b16 %v151
  %v872 = vunpack.c.l.b16 %v152
  %v873 = vunpack.c.l.b16 %v153
  %v874 = vunpack.c.l.b16 %v154
  %v875 = vunpack.c.l.b16 %v155
  %v876 = vunpack.c.l.b16 %v156
  %v877 = vunpack.c.l.b16 %v157
  %v878 = vunpack.c.l.b16 %v158
  %v879 = vunpack.c.l.b16 %v159
  %v880 = vunpack.c.l.b16 %v160
  %v881 = vunpack.c.l.b16 %v161
  %v882 = vunpack.c.l.b16 %v162
  %v883 = vunpack.c.l.b16 %v163
  %v884 = vunpack.c.l.b16 %v164
  %v885 = vunpack.c.l.b16 %v165
  %v886 = vunpack.c.l.b16 %v166
  %v887 = vunpack.c.l.b16 %v167
  %v888 = vunpack.c.l.b16 %v168
  %v889 = vunpack.c.l.b16 %v169
  %v890 = vunpack.c.l.b16 %v170
  %v891 = vunpack.c.l.b16 %v171
  %v892 = vunpack.c.l.b16 %v172
  %v893 = vunpack.c.l.b16 %v173
  %v894 = vunpack.c.l.b16 %v174
  %v895 = vunpack.c.l.b16 %v175
  %v896 = vunpack.c.l.b16 %v176
  %v897 = vunpack.c.l.b16 %v177
  %v898 = vunpack.c.l.b16 %v178
  %v899 = vunpack.c.l.b16 %v179
  %v900 = vunpack.c.l.b16 %v180
  %v901 = vunpack.c.l.b16 %v181
  %v902 = vunpack.c.l.b16 %v182
  %v903 = vunpack.c.l.b16 %v183
  %v904 = vunpack.c.l.b16 %v184
  %v905 = vunpack.c.l.b16 %v185
  %v906 = vunpack.c.l.b16 %v186
  %v907 = vunpack.c.l.b16 %v187
  %v908 = vunpack.c.l.b16 %v188
  %v909 = vunpack.c.l.b16 %v189
  %v910 = vunpack.c.l.b16 %v190
  %v911 = vunpack.c.l.b16 %v191
  %v912 = vunpack.c.l.b16 %v192
  %v913 = vunpack.c.l.b16 %v193
  %v914 = vunpack.c.l.b16 %v194
  %v915 = vunpack.c.l.b16 %v195
  %v916 = vunpack.c.l.b16 %v196
  %v917 = vunpack.c.l.b16 %v197
  %v918 = vunpack.c.l.b16 %v198
  %v919 = vunpack.c.l.b16 %v199
  %v920 = vunpack.c.l.b16 %v200
  %v921 = vunpack.c.l.b16 %v201
  %v922 = vunpack.c.l.b16 %v202
  %v923 = vunpack.c.l.b16 %v203
  %v924 = vunpack.c.l.b16 %v204
  %v925 = vunpack.c.l.b16 %v205
  %v926 = vunpack.c.l.b16 %v206
  %v927 = vunpack.c.l.b16 %v207
  %v928 = vunpack.c.l.b16 %v208
  %v929 = vunpack.c.l.b16 %v209
  %v930 = vunpack.c.l.b16 %v210
  %v931 = vunpack.c.l.b16 %v211
  %v932 = vunpack.c.l.b16 %v212
  %v933 = vunpack.c.l.b16 %v213
  %v934 = vunpack.c.l.b16 %v214
  %v935 = vunpack.c.l.b16 %v215
  %v936 = vunpack.c.l.b16 %v216
  %v937 = vunpack.c.l.b16 %v217
  %v938 = vunpack.c.l.b16 %v218
  %v939 = vunpack.c.l.b16 %v219
  %v940 = vunpack.c.l.b16 %v220
  %v941 = vunpack.c.l.b16 %v221
  %v942 = vunpack.c.l.b16 %v222
  %v943 = vunpack.c.l.b16 %v223
  %v944 = vunpack.c.l.b16 %v224
  %v945 = vunpack.c.l.b16 %v225
  %v946 = vunpack.c.l.b16 %v226
  %v947 = vunpack.c.l.b16 %v227
  %v948 = vunpack.c.l.b16 %v228
  %v949 = vunpack.c.l.b16 %v229
  %v950 = vunpack.c.l.b16 %v230
  %v951 = vunpack.c.l.b16 %v231
  %v952 = vunpack.c.l.b16 %v232
  %v953 = vunpack.c.l.b16 %v233
  %v954 = vunpack.c.l.b16 %v234
  %v955 = vunpack.c.l.b16 %v235
  %v956 = vunpack.c.l.b16 %v236
  %v957 = vunpack.c.l.b16 %v237
  %v958 = vunpack.c.l.b16 %v238
  %v959 = vunpack.c.l.b16 %v239
  %v960 = vunpack.c.l.b16 %v240
  %v961 = vunpack.c.l.b16 %v241
  %v962 = vunpack.c.l.b16 %v242
  %v963 = vunpack.c.l.b16 %v243
  %v964 = vunpack.c.l.b16 %v244
  %v965 = vunpack.c.l.b16 %v245
  %v966 = vunpack.c.l.b16 %v246
  %v967 = vunpack.c.l.b16 %v247
  %v968 = vunpack.c.l.b16 %v248
  %v969 = vunpack.c.l.b16 %v249
  %v970 = vunpack.c.l.b16 %v250
  %v971 = vunpack.c.l.b16 %v251
  %v972 = vpack.c.b16 %v813, %v812
  %v973 = vpack.c.b16 %v815, %v814
  %v974 = vpack.c.b16 %v817, %v816
  %v975 = vpack.c.b16 %v819, %v818
  %v976 = vpack.c.b16 %v821, %v820
  %v977 = vpack.c.b16 %v823, %v822
  %v978 = vpack.c.b16 %v825, %v824
  %v979 = vpack.c.b16 %v827, %v826
  %v980 = vpack.c.b16 %v829, %v828
  %v981 = vpack.c.b16 %v831, %v830
  %v982 = vpack.c.b16 %v833, %v832
  %v983 = vpack.c.b16 %v835, %v834
  %v984 = vpack.c.b16 %v837, %v836
  %v985 = vpack.c.b16 %v839, %v838
  %v986 = vpack.c.b16 %v841, %v840
  %v987 = vpack.c.b16 %v843, %v842
  %v988 = vpack.c.b16 %v845, %v844
  %v989 = vpack.c.b16 %v847, %v846
  %v990 = vpack.c.b16 %v849, %v848
  %v991 = vpack.c.b16 %v851, %v850
  %v992 = vpack.c.b16 %v853, %v852
  %v993 = vpack.c.b16 %v855, %v854
  %v994 = vpack.c.b16 %v857, %v856
  %v995 = vpack.c.b16 %v859, %v858
  %v996 = vpack.c.b16 %v861, %v860
  %v997 = vpack.c.b16 %v863, %v862
  %v998 = vpack.c.b16 %v865, %v864
  %v999 = vpack.c.b16 %v867, %v866
  %v1000 = vpack.c.b16 %v869, %v868
  %v1001 = vpack.c.b16 %v871, %v870
  %v1002 = vpack.c.b16 %v873, %v872
  %v1003 = vpack.c.b16 %v875, %v874
  %v1004 = vpack.c.b16 %v877, %v876
  %v1005 = vpack.c.b16 %v879, %v878
  %v1006 = vpack.c.b16 %v881, %v880
  %v1007 = vpack.c.b16 %v883, %v882
  %v1008 = vpack.c.b16 %v885, %v884
  %v1009 = vpack.c.b16 %v887, %v886
  %v1010 = vpack.c.b16 %v889, %v888
  %v1011 = vpack.c.b16 %v891, %v890
  %v1012 = vpack.c.b16 %v893, %v892
  %v1013 = vpack.c.b16 %v895, %v894
  %v1014 = vpack.c.b16 %v897, %v896
  %v1015 = vpack.c.b16 %v899, %v898
  %v1016 = vpack.c.b16 %v901, %v900
  %v1017 = vpack.c.b16 %v903, %v902
  %v1018 = vpack.c.b16 %v905, %v904
  %v1019 = vpack.c.b16 %v907, %v906
  %v1020 = vpack.c.b16 %v909, %v908
  %v1021 = vpack.c.b16 %v911, %v910
  %v1022 = vpack.c.b16 %v913, %v912
  %v1023 = vpack.c.b16 %v915, %v914
  %v1024 = vpack.c.b16 %v917, %v916
  %v1025 = vpack.c.b16 %v919, %v918
  %v1026 = vpack.c.b16 %v921, %v920
  %v1027 = vpack.c.b16 %v923, %v922
  %v1028 = vpack.c.b16 %v925, %v924
  %v1029 = vpack.c.b16 %v927, %v926
  %v1030 = vpack.c.b16 %v929, %v928
  %v1031 = vpack.c.b16 %v931, %v930
  %v1032 = vpack.c.b16 %v933, %v932
  %v1033 = vpack.c.b16 %v935, %v934
  %v1034 = vpack.c.b16 %v937, %v936
  %v1035 = vpack.c.b16 %v939, %v938
  %v1036 = vpack.c.b16 %v941, %v940
  %v1037 = vpack.c.b16 %v943, %v942
  %v1038 = vpack.c.b16 %v945, %v944
  %v1039 = vpack.c.b16 %v947, %v946
  %v1040 = vpack.c.b16 %v949, %v948
  %v1041 = vpack.c.b16 %v951, %v950
  %v1042 = vpack.c.b16 %v953, %v952
  %v1043 = vpack.c.b16 %v955, %v954
  %v1044 = vpack.c.b16 %v957, %v956
  %v1045 = vpack.c.b16 %v959, %v958
  %v1046 = vpack.c.b16 %v961, %v960
  %v1047 = vpack.c.b16 %v963, %v962
  %v1048 = vpack.c.b16 %v965, %v964
  %v1049 = vpack.c.b16 %v967, %v966
  %v1050 = vpack.c.b16 %v969, %v968
  %v1051 = vpack.c.b16 %v971, %v970
  %1132 = vmatprep.subr.bf16.mxu0 0
  %1133 = vmatpush1.bf16.msra.mxu0 %v972
  %1134 = vmatprep.subr.bf16.mxu0 0
  %1135 = vmatpush1.bf16.msra.mxu0 %v973
  %1136 = vmatprep.subr.bf16.mxu0 0
  %1137 = vmatpush1.bf16.msra.mxu0 %v974
  %1138 = vmatprep.subr.bf16.mxu0 0
  %1139 = vmatpush1.bf16.msra.mxu0 %v975
  %1140 = vmatprep.subr.bf16.mxu0 0
  %1141 = vmatpush1.bf16.msra.mxu0 %v976
  %1142 = vmatprep.subr.bf16.mxu0 0
  %1143 = vmatpush1.bf16.msra.mxu0 %v977
  %1144 = vmatprep.subr.bf16.mxu0 0
  %1145 = vmatpush1.bf16.msra.mxu0 %v978
  %1146 = vmatprep.subr.bf16.mxu0 0
  %1147 = vmatpush1.bf16.msra.mxu0 %v979
  %1148 = vmatprep.subr.bf16.mxu0 0
  %1149 = vmatpush1.bf16.msra.mxu0 %v980
  %1150 = vmatprep.subr.bf16.mxu0 0
  %1151 = vmatpush1.bf16.msra.mxu0 %v981
  %1152 = vmatprep.subr.bf16.mxu0 0
  %1153 = vmatpush1.bf16.msra.mxu0 %v982
  %1154 = vmatprep.subr.bf16.mxu0 0
  %1155 = vmatpush1.bf16.msra.mxu0 %v983
  %1156 = vmatprep.subr.bf16.mxu0 0
  %1157 = vmatpush1.bf16.msra.mxu0 %v984
  %1158 = vmatprep.subr.bf16.mxu0 0
  %1159 = vmatpush1.bf16.msra.mxu0 %v985
  %1160 = vmatprep.subr.bf16.mxu0 0
  %1161 = vmatpush1.bf16.msra.mxu0 %v986
  %1162 = vmatprep.subr.bf16.mxu0 0
  %1163 = vmatpush1.bf16.msra.mxu0 %v987
  %1164 = vmatprep.mubr.bf16.mxu0 %v493
  %1165 = vmatmul.mubr.bf16.gmra.mrb[0].mxu0 %v492
  %v1166 = vpop.f32.mrb[0].mxu0
  %v1167 = vadd.f32 0.0, %v1166
  %v1168 = vpop.f32.mrb[0].mxu0
  %v1169 = vpop.f32.mrb[0].mxu0
  %v1170 = vadd.f32 0.0, %v1169
  %v1171 = vpop.f32.mrb[0].mxu0
  %1172 = vmatprep.mubr.bf16.mxu0 %v503
  %1173 = vmatmul.mubr.bf16.gmra.mrb[0].mxu0 %v502
  %v1174 = vpop.f32.mrb[0].mxu0
  %v1175 = vadd.f32 0.0, %v1174
  %v1176 = vpop.f32.mrb[0].mxu0
  %v1177 = vpop.f32.mrb[0].mxu0
  %v1178 = vadd.f32 0.0, %v1177
  %v1179 = vpop.f32.mrb[0].mxu0
  %1180 = vmatprep.mubr.bf16.mxu0 %v513
  %1181 = vmatmul.mubr.bf16.gmra.mrb[0].mxu0 %v512
  %v1182 = vpop.f32.mrb[0].mxu0
  %v1183 = vadd.f32 0.0, %v1182
  %v1184 = vpop.f32.mrb[0].mxu0
  %v1185 = vpop.f32.mrb[0].mxu0
  %v1186 = vadd.f32 0.0, %v1185
  %v1187 = vpop.f32.mrb[0].mxu0
  %1188 = vmatprep.mubr.bf16.mxu0 %v523
  %1189 = vmatmul.mubr.bf16.gmra.mrb[0].mxu0 %v522
  %v1190 = vpop.f32.mrb[0].mxu0
  %v1191 = vadd.f32 0.0, %v1190
  %v1192 = vpop.f32.mrb[0].mxu0
  %v1193 = vpop.f32.mrb[0].mxu0
  %v1194 = vadd.f32 0.0, %v1193
  %v1195 = vpop.f32.mrb[0].mxu0
  %1196 = vmatprep.mubr.bf16.mxu0 %v533
  %1197 = vmatmul.mubr.bf16.gmra.mrb[0].mxu0 %v532
  %v1198 = vpop.f32.mrb[0].mxu0
  %v1199 = vadd.f32 0.0, %v1198
  %v1200 = vpop.f32.mrb[0].mxu0
  %v1201 = vpop.f32.mrb[0].mxu0
  %v1202 = vadd.f32 0.0, %v1201
  %v1203 = vpop.f32.mrb[0].mxu0
  %1204 = vmatprep.mubr.bf16.mxu0 %v543
  %1205 = vmatmul.mubr.bf16.gmra.mrb[0].mxu0 %v542
  %v1206 = vpop.f32.mrb[0].mxu0
  %v1207 = vadd.f32 0.0, %v1206
  %v1208 = vpop.f32.mrb[0].mxu0
  %v1209 = vpop.f32.mrb[0].mxu0
  %v1210 = vadd.f32 0.0, %v1209
  %v1211 = vpop.f32.mrb[0].mxu0
  %1212 = vmatprep.mubr.bf16.mxu0 %v553
  %1213 = vmatmul.mubr.bf16.gmra.mrb[0].mxu0 %v552
  %v1214 = vpop.f32.mrb[0].mxu0
  %v1215 = vadd.f32 0.0, %v1214
  %v1216 = vpop.f32.mrb[0].mxu0
  %v1217 = vpop.f32.mrb[0].mxu0
  %v1218 = vadd.f32 0.0, %v1217
  %v1219 = vpop.f32.mrb[0].mxu0
  %1220 = vmatprep.mubr.bf16.mxu0 %v563
  %1221 = vmatmul.mubr.bf16.gmra.mrb[0].mxu0 %v562
  %v1222 = vpop.f32.mrb[0].mxu0
  %v1223 = vadd.f32 0.0, %v1222
  %v1224 = vpop.f32.mrb[0].mxu0
  %v1225 = vpop.f32.mrb[0].mxu0
  %v1226 = vadd.f32 0.0, %v1225
  %v1227 = vpop.f32.mrb[0].mxu0
  %1228 = vdwg.mxu0
  %1229 = vmatprep.subr.bf16.mxu0 0
  %1230 = vmatpush1.bf16.msra.mxu0 %v988
  %1231 = vmatprep.subr.bf16.mxu0 0
  %1232 = vmatpush1.bf16.msra.mxu0 %v989
  %1233 = vmatprep.subr.bf16.mxu0 0
  %1234 = vmatpush1.bf16.msra.mxu0 %v990
  %1235 = vmatprep.subr.bf16.mxu0 0
  %1236 = vmatpush1.bf16.msra.mxu0 %v991
  %1237 = vmatprep.subr.bf16.mxu0 0
  %1238 = vmatpush1.bf16.msra.mxu0 %v992
  %1239 = vmatprep.subr.bf16.mxu0 0
  %1240 = vmatpush1.bf16.msra.mxu0 %v993
  %1241 = vmatprep.subr.bf16.mxu0 0
  %1242 = vmatpush1.bf16.msra.mxu0 %v994
  %1243 = vmatprep.subr.bf16.mxu0 0
  %1244 = vmatpush1.bf16.msra.mxu0 %v995
  %1245 = vmatprep.subr.bf16.mxu0 0
  %1246 = vmatpush1.bf16.msra.mxu0 %v996
  %1247 = vmatprep.subr.bf16.mxu0 0
  %1248 = vmatpush1.bf16.msra.mxu0 %v997
  %1249 = vmatprep.subr.bf16.mxu0 0
  %1250 = vmatpush1.bf16.msra.mxu0 %v998
  %1251 = vmatprep.subr.bf16.mxu0 0
  %1252 = vmatpush1.bf16.msra.mxu0 %v999
  %1253 = vmatprep.subr.bf16.mxu0 0
  %1254 = vmatpush1.bf16.msra.mxu0 %v1000
  %1255 = vmatprep.subr.bf16.mxu0 0
  %1256 = vmatpush1.bf16.msra.mxu0 %v1001
  %1257 = vmatprep.subr.bf16.mxu0 0
  %1258 = vmatpush1.bf16.msra.mxu0 %v1002
  %1259 = vmatprep.subr.bf16.mxu0 0
  %1260 = vmatpush1.bf16.msra.mxu0 %v1003
  %1261 = vmatprep.mubr.bf16.mxu0 %v495
  %1262 = vmatmul.mubr.bf16.gmra.mrb[0].mxu0 %v494
  %v1263 = vpop.f32.mrb[0].mxu0
  %v1264 = vadd.f32 %v1167, %v1263
  %v1265 = vpop.f32.mrb[0].mxu0
  %v1266 = vpop.f32.mrb[0].mxu0
  %v1267 = vadd.f32 %v1170, %v1266
  %v1268 = vpop.f32.mrb[0].mxu0
  %1269 = vmatprep.mubr.bf16.mxu0 %v505
  %1270 = vmatmul.mubr.bf16.gmra.mrb[0].mxu0 %v504
  %v1271 = vpop.f32.mrb[0].mxu0
  %v1272 = vadd.f32 %v1175, %v1271
  %v1273 = vpop.f32.mrb[0].mxu0
  %v1274 = vpop.f32.mrb[0].mxu0
  %v1275 = vadd.f32 %v1178, %v1274
  %v1276 = vpop.f32.mrb[0].mxu0
  %1277 = vmatprep.mubr.bf16.mxu0 %v515
  %1278 = vmatmul.mubr.bf16.gmra.mrb[0].mxu0 %v514
  %v1279 = vpop.f32.mrb[0].mxu0
  %v1280 = vadd.f32 %v1183, %v1279
  %v1281 = vpop.f32.mrb[0].mxu0
  %v1282 = vpop.f32.mrb[0].mxu0
  %v1283 = vadd.f32 %v1186, %v1282
  %v1284 = vpop.f32.mrb[0].mxu0
  %1285 = vmatprep.mubr.bf16.mxu0 %v525
  %1286 = vmatmul.mubr.bf16.gmra.mrb[0].mxu0 %v524
  %v1287 = vpop.f32.mrb[0].mxu0
  %v1288 = vadd.f32 %v1191, %v1287
  %v1289 = vpop.f32.mrb[0].mxu0
  %v1290 = vpop.f32.mrb[0].mxu0
  %v1291 = vadd.f32 %v1194, %v1290
  %v1292 = vpop.f32.mrb[0].mxu0
  %1293 = vmatprep.mubr.bf16.mxu0 %v535
  %1294 = vmatmul.mubr.bf16.gmra.mrb[0].mxu0 %v534
  %v1295 = vpop.f32.mrb[0].mxu0
  %v1296 = vadd.f32 %v1199, %v1295
  %v1297 = vpop.f32.mrb[0].mxu0
  %v1298 = vpop.f32.mrb[0].mxu0
  %v1299 = vadd.f32 %v1202, %v1298
  %v1300 = vpop.f32.mrb[0].mxu0
  %1301 = vmatprep.mubr.bf16.mxu0 %v545
  %1302 = vmatmul.mubr.bf16.gmra.mrb[0].mxu0 %v544
  %v1303 = vpop.f32.mrb[0].mxu0
  %v1304 = vadd.f32 %v1207, %v1303
  %v1305 = vpop.f32.mrb[0].mxu0
  %v1306 = vpop.f32.mrb[0].mxu0
  %v1307 = vadd.f32 %v1210, %v1306
  %v1308 = vpop.f32.mrb[0].mxu0
  %1309 = vmatprep.mubr.bf16.mxu0 %v555
  %1310 = vmatmul.mubr.bf16.gmra.mrb[0].mxu0 %v554
  %v1311 = vpop.f32.mrb[0].mxu0
  %v1312 = vadd.f32 %v1215, %v1311
  %v1313 = vpop.f32.mrb[0].mxu0
  %v1314 = vpop.f32.mrb[0].mxu0
  %v1315 = vadd.f32 %v1218, %v1314
  %v1316 = vpop.f32.mrb[0].mxu0
  %1317 = vmatprep.mubr.bf16.mxu0 %v565
  %1318 = vmatmul.mubr.bf16.gmra.mrb[0].mxu0 %v564
  %v1319 = vpop.f32.mrb[0].mxu0
  %v1320 = vadd.f32 %v1223, %v1319
  %v1321 = vpop.f32.mrb[0].mxu0
  %v1322 = vpop.f32.mrb[0].mxu0
  %v1323 = vadd.f32 %v1226, %v1322
  %v1324 = vpop.f32.mrb[0].mxu0
  %1325 = vdwg.mxu0
  %1326 = vmatprep.subr.bf16.mxu0 0
  %1327 = vmatpush1.bf16.msra.mxu0 %v1004
  %1328 = vmatprep.subr.bf16.mxu0 0
  %1329 = vmatpush1.bf16.msra.mxu0 %v1005
  %1330 = vmatprep.subr.bf16.mxu0 0
  %1331 = vmatpush1.bf16.msra.mxu0 %v1006
  %1332 = vmatprep.subr.bf16.mxu0 0
  %1333 = vmatpush1.bf16.msra.mxu0 %v1007
  %1334 = vmatprep.subr.bf16.mxu0 0
  %1335 = vmatpush1.bf16.msra.mxu0 %v1008
  %1336 = vmatprep.subr.bf16.mxu0 0
  %1337 = vmatpush1.bf16.msra.mxu0 %v1009
  %1338 = vmatprep.subr.bf16.mxu0 0
  %1339 = vmatpush1.bf16.msra.mxu0 %v1010
  %1340 = vmatprep.subr.bf16.mxu0 0
  %1341 = vmatpush1.bf16.msra.mxu0 %v1011
  %1342 = vmatprep.subr.bf16.mxu0 0
  %1343 = vmatpush1.bf16.msra.mxu0 %v1012
  %1344 = vmatprep.subr.bf16.mxu0 0
  %1345 = vmatpush1.bf16.msra.mxu0 %v1013
  %1346 = vmatprep.subr.bf16.mxu0 0
  %1347 = vmatpush1.bf16.msra.mxu0 %v1014
  %1348 = vmatprep.subr.bf16.mxu0 0
  %1349 = vmatpush1.bf16.msra.mxu0 %v1015
  %1350 = vmatprep.subr.bf16.mxu0 0
  %1351 = vmatpush1.bf16.msra.mxu0 %v1016
  %1352 = vmatprep.subr.bf16.mxu0 0
  %1353 = vmatpush1.bf16.msra.mxu0 %v1017
  %1354 = vmatprep.subr.bf16.mxu0 0
  %1355 = vmatpush1.bf16.msra.mxu0 %v1018
  %1356 = vmatprep.subr.bf16.mxu0 0
  %1357 = vmatpush1.bf16.msra.mxu0 %v1019
  %1358 = vmatprep.mubr.bf16.mxu0 %v497
  %1359 = vmatmul.mubr.bf16.gmra.mrb[0].mxu0 %v496
  %v1360 = vpop.f32.mrb[0].mxu0
  %v1361 = vadd.f32 %v1264, %v1360
  %v1362 = vpop.f32.mrb[0].mxu0
  %v1363 = vpop.f32.mrb[0].mxu0
  %v1364 = vadd.f32 %v1267, %v1363
  %v1365 = vpop.f32.mrb[0].mxu0
  %1366 = vmatprep.mubr.bf16.mxu0 %v507
  %1367 = vmatmul.mubr.bf16.gmra.mrb[0].mxu0 %v506
  %v1368 = vpop.f32.mrb[0].mxu0
  %v1369 = vadd.f32 %v1272, %v1368
  %v1370 = vpop.f32.mrb[0].mxu0
  %v1371 = vpop.f32.mrb[0].mxu0
  %v1372 = vadd.f32 %v1275, %v1371
  %v1373 = vpop.f32.mrb[0].mxu0
  %1374 = vmatprep.mubr.bf16.mxu0 %v517
  %1375 = vmatmul.mubr.bf16.gmra.mrb[0].mxu0 %v516
  %v1376 = vpop.f32.mrb[0].mxu0
  %v1377 = vadd.f32 %v1280, %v1376
  %v1378 = vpop.f32.mrb[0].mxu0
  %v1379 = vpop.f32.mrb[0].mxu0
  %v1380 = vadd.f32 %v1283, %v1379
  %v1381 = vpop.f32.mrb[0].mxu0
  %1382 = vmatprep.mubr.bf16.mxu0 %v527
  %1383 = vmatmul.mubr.bf16.gmra.mrb[0].mxu0 %v526
  %v1384 = vpop.f32.mrb[0].mxu0
  %v1385 = vadd.f32 %v1288, %v1384
  %v1386 = vpop.f32.mrb[0].mxu0
  %v1387 = vpop.f32.mrb[0].mxu0
  %v1388 = vadd.f32 %v1291, %v1387
  %v1389 = vpop.f32.mrb[0].mxu0
  %1390 = vmatprep.mubr.bf16.mxu0 %v537
  %1391 = vmatmul.mubr.bf16.gmra.mrb[0].mxu0 %v536
  %v1392 = vpop.f32.mrb[0].mxu0
  %v1393 = vadd.f32 %v1296, %v1392
  %v1394 = vpop.f32.mrb[0].mxu0
  %v1395 = vpop.f32.mrb[0].mxu0
  %v1396 = vadd.f32 %v1299, %v1395
  %v1397 = vpop.f32.mrb[0].mxu0
  %1398 = vmatprep.mubr.bf16.mxu0 %v547
  %1399 = vmatmul.mubr.bf16.gmra.mrb[0].mxu0 %v546
  %v1400 = vpop.f32.mrb[0].mxu0
  %v1401 = vadd.f32 %v1304, %v1400
  %v1402 = vpop.f32.mrb[0].mxu0
  %v1403 = vpop.f32.mrb[0].mxu0
  %v1404 = vadd.f32 %v1307, %v1403
  %v1405 = vpop.f32.mrb[0].mxu0
  %1406 = vmatprep.mubr.bf16.mxu0 %v557
  %1407 = vmatmul.mubr.bf16.gmra.mrb[0].mxu0 %v556
  %v1408 = vpop.f32.mrb[0].mxu0
  %v1409 = vadd.f32 %v1312, %v1408
  %v1410 = vpop.f32.mrb[0].mxu0
  %v1411 = vpop.f32.mrb[0].mxu0
  %v1412 = vadd.f32 %v1315, %v1411
  %v1413 = vpop.f32.mrb[0].mxu0
  %1414 = vmatprep.mubr.bf16.mxu0 %v567
  %1415 = vmatmul.mubr.bf16.gmra.mrb[0].mxu0 %v566
  %v1416 = vpop.f32.mrb[0].mxu0
  %v1417 = vadd.f32 %v1320, %v1416
  %v1418 = vpop.f32.mrb[0].mxu0
  %v1419 = vpop.f32.mrb[0].mxu0
  %v1420 = vadd.f32 %v1323, %v1419
  %v1421 = vpop.f32.mrb[0].mxu0
  %1422 = vdwg.mxu0
  %1423 = vmatprep.subr.bf16.mxu0 0
  %1424 = vmatpush1.bf16.msra.mxu0 %v1020
  %1425 = vmatprep.subr.bf16.mxu0 0
  %1426 = vmatpush1.bf16.msra.mxu0 %v1021
  %1427 = vmatprep.subr.bf16.mxu0 0
  %1428 = vmatpush1.bf16.msra.mxu0 %v1022
  %1429 = vmatprep.subr.bf16.mxu0 0
  %1430 = vmatpush1.bf16.msra.mxu0 %v1023
  %1431 = vmatprep.subr.bf16.mxu0 0
  %1432 = vmatpush1.bf16.msra.mxu0 %v1024
  %1433 = vmatprep.subr.bf16.mxu0 0
  %1434 = vmatpush1.bf16.msra.mxu0 %v1025
  %1435 = vmatprep.subr.bf16.mxu0 0
  %1436 = vmatpush1.bf16.msra.mxu0 %v1026
  %1437 = vmatprep.subr.bf16.mxu0 0
  %1438 = vmatpush1.bf16.msra.mxu0 %v1027
  %1439 = vmatprep.subr.bf16.mxu0 0
  %1440 = vmatpush1.bf16.msra.mxu0 %v1028
  %1441 = vmatprep.subr.bf16.mxu0 0
  %1442 = vmatpush1.bf16.msra.mxu0 %v1029
  %1443 = vmatprep.subr.bf16.mxu0 0
  %1444 = vmatpush1.bf16.msra.mxu0 %v1030
  %1445 = vmatprep.subr.bf16.mxu0 0
  %1446 = vmatpush1.bf16.msra.mxu0 %v1031
  %1447 = vmatprep.subr.bf16.mxu0 0
  %1448 = vmatpush1.bf16.msra.mxu0 %v1032
  %1449 = vmatprep.subr.bf16.mxu0 0
  %1450 = vmatpush1.bf16.msra.mxu0 %v1033
  %1451 = vmatprep.subr.bf16.mxu0 0
  %1452 = vmatpush1.bf16.msra.mxu0 %v1034
  %1453 = vmatprep.subr.bf16.mxu0 0
  %1454 = vmatpush1.bf16.msra.mxu0 %v1035
  %1455 = vmatprep.mubr.bf16.mxu0 %v499
  %1456 = vmatmul.mubr.bf16.gmra.mrb[0].mxu0 %v498
  %v1457 = vpop.f32.mrb[0].mxu0
  %v1458 = vadd.f32 %v1361, %v1457
  %v1459 = vpop.f32.mrb[0].mxu0
  %v1460 = vpop.f32.mrb[0].mxu0
  %v1461 = vadd.f32 %v1364, %v1460
  %v1462 = vpop.f32.mrb[0].mxu0
  %1463 = vmatprep.mubr.bf16.mxu0 %v509
  %1464 = vmatmul.mubr.bf16.gmra.mrb[0].mxu0 %v508
  %v1465 = vpop.f32.mrb[0].mxu0
  %v1466 = vadd.f32 %v1369, %v1465
  %v1467 = vpop.f32.mrb[0].mxu0
  %v1468 = vpop.f32.mrb[0].mxu0
  %v1469 = vadd.f32 %v1372, %v1468
  %v1470 = vpop.f32.mrb[0].mxu0
  %1471 = vmatprep.mubr.bf16.mxu0 %v519
  %1472 = vmatmul.mubr.bf16.gmra.mrb[0].mxu0 %v518
  %v1473 = vpop.f32.mrb[0].mxu0
  %v1474 = vadd.f32 %v1377, %v1473
  %v1475 = vpop.f32.mrb[0].mxu0
  %v1476 = vpop.f32.mrb[0].mxu0
  %v1477 = vadd.f32 %v1380, %v1476
  %v1478 = vpop.f32.mrb[0].mxu0
  %1479 = vmatprep.mubr.bf16.mxu0 %v529
  %1480 = vmatmul.mubr.bf16.gmra.mrb[0].mxu0 %v528
  %v1481 = vpop.f32.mrb[0].mxu0
  %v1482 = vadd.f32 %v1385, %v1481
  %v1483 = vpop.f32.mrb[0].mxu0
  %v1484 = vpop.f32.mrb[0].mxu0
  %v1485 = vadd.f32 %v1388, %v1484
  %v1486 = vpop.f32.mrb[0].mxu0
  %1487 = vmatprep.mubr.bf16.mxu0 %v539
  %1488 = vmatmul.mubr.bf16.gmra.mrb[0].mxu0 %v538
  %v1489 = vpop.f32.mrb[0].mxu0
  %v1490 = vadd.f32 %v1393, %v1489
  %v1491 = vpop.f32.mrb[0].mxu0
  %v1492 = vpop.f32.mrb[0].mxu0
  %v1493 = vadd.f32 %v1396, %v1492
  %v1494 = vpop.f32.mrb[0].mxu0
  %1495 = vmatprep.mubr.bf16.mxu0 %v549
  %1496 = vmatmul.mubr.bf16.gmra.mrb[0].mxu0 %v548
  %v1497 = vpop.f32.mrb[0].mxu0
  %v1498 = vadd.f32 %v1401, %v1497
  %v1499 = vpop.f32.mrb[0].mxu0
  %v1500 = vpop.f32.mrb[0].mxu0
  %v1501 = vadd.f32 %v1404, %v1500
  %v1502 = vpop.f32.mrb[0].mxu0
  %1503 = vmatprep.mubr.bf16.mxu0 %v559
  %1504 = vmatmul.mubr.bf16.gmra.mrb[0].mxu0 %v558
  %v1505 = vpop.f32.mrb[0].mxu0
  %v1506 = vadd.f32 %v1409, %v1505
  %v1507 = vpop.f32.mrb[0].mxu0
  %v1508 = vpop.f32.mrb[0].mxu0
  %v1509 = vadd.f32 %v1412, %v1508
  %v1510 = vpop.f32.mrb[0].mxu0
  %1511 = vmatprep.mubr.bf16.mxu0 %v569
  %1512 = vmatmul.mubr.bf16.gmra.mrb[0].mxu0 %v568
  %v1513 = vpop.f32.mrb[0].mxu0
  %v1514 = vadd.f32 %v1417, %v1513
  %v1515 = vpop.f32.mrb[0].mxu0
  %v1516 = vpop.f32.mrb[0].mxu0
  %v1517 = vadd.f32 %v1420, %v1516
  %v1518 = vpop.f32.mrb[0].mxu0
  %1519 = vdwg.mxu0
  %1520 = vmatprep.subr.bf16.mxu0 0
  %1521 = vmatpush1.bf16.msra.mxu0 %v1036
  %1522 = vmatprep.subr.bf16.mxu0 0
  %1523 = vmatpush1.bf16.msra.mxu0 %v1037
  %1524 = vmatprep.subr.bf16.mxu0 0
  %1525 = vmatpush1.bf16.msra.mxu0 %v1038
  %1526 = vmatprep.subr.bf16.mxu0 0
  %1527 = vmatpush1.bf16.msra.mxu0 %v1039
  %1528 = vmatprep.subr.bf16.mxu0 0
  %1529 = vmatpush1.bf16.msra.mxu0 %v1040
  %1530 = vmatprep.subr.bf16.mxu0 0
  %1531 = vmatpush1.bf16.msra.mxu0 %v1041
  %1532 = vmatprep.subr.bf16.mxu0 0
  %1533 = vmatpush1.bf16.msra.mxu0 %v1042
  %1534 = vmatprep.subr.bf16.mxu0 0
  %1535 = vmatpush1.bf16.msra.mxu0 %v1043
  %1536 = vmatprep.subr.bf16.mxu0 0
  %1537 = vmatpush1.bf16.msra.mxu0 %v1044
  %1538 = vmatprep.subr.bf16.mxu0 0
  %1539 = vmatpush1.bf16.msra.mxu0 %v1045
  %1540 = vmatprep.subr.bf16.mxu0 0
  %1541 = vmatpush1.bf16.msra.mxu0 %v1046
  %1542 = vmatprep.subr.bf16.mxu0 0
  %1543 = vmatpush1.bf16.msra.mxu0 %v1047
  %1544 = vmatprep.subr.bf16.mxu0 0
  %1545 = vmatpush1.bf16.msra.mxu0 %v1048
  %1546 = vmatprep.subr.bf16.mxu0 0
  %1547 = vmatpush1.bf16.msra.mxu0 %v1049
  %1548 = vmatprep.subr.bf16.mxu0 0
  %1549 = vmatpush1.bf16.msra.mxu0 %v1050
  %1550 = vmatprep.subr.bf16.mxu0 0
  %1551 = vmatpush1.bf16.msra.mxu0 %v1051
  %1552 = vmatprep.mubr.bf16.mxu0 %v501
  %1553 = vmatmul.mubr.bf16.gmra.mrb[0].mxu0 %v500
  %v1554 = vpop.f32.mrb[0].mxu0
  %v1555 = vadd.f32 %v1458, %v1554
  %v1556 = vpop.f32.mrb[0].mxu0
  %v1557 = vpop.f32.mrb[0].mxu0
  %v1558 = vadd.f32 %v1461, %v1557
  %v1559 = vpop.f32.mrb[0].mxu0
  %1560 = vmatprep.mubr.bf16.mxu0 %v511
  %1561 = vmatmul.mubr.bf16.gmra.mrb[0].mxu0 %v510
  %v1562 = vpop.f32.mrb[0].mxu0
  %v1563 = vadd.f32 %v1466, %v1562
  %v1564 = vpop.f32.mrb[0].mxu0
  %v1565 = vpop.f32.mrb[0].mxu0
  %v1566 = vadd.f32 %v1469, %v1565
  %v1567 = vpop.f32.mrb[0].mxu0
  %1568 = vmatprep.mubr.bf16.mxu0 %v521
  %1569 = vmatmul.mubr.bf16.gmra.mrb[0].mxu0 %v520
  %v1570 = vpop.f32.mrb[0].mxu0
  %v1571 = vadd.f32 %v1474, %v1570
  %v1572 = vpop.f32.mrb[0].mxu0
  %v1573 = vpop.f32.mrb[0].mxu0
  %v1574 = vadd.f32 %v1477, %v1573
  %v1575 = vpop.f32.mrb[0].mxu0
  %1576 = vmatprep.mubr.bf16.mxu0 %v531
  %1577 = vmatmul.mubr.bf16.gmra.mrb[0].mxu0 %v530
  %v1578 = vpop.f32.mrb[0].mxu0
  %v1579 = vadd.f32 %v1482, %v1578
  %v1580 = vpop.f32.mrb[0].mxu0
  %v1581 = vpop.f32.mrb[0].mxu0
  %v1582 = vadd.f32 %v1485, %v1581
  %v1583 = vpop.f32.mrb[0].mxu0
  %1584 = vmatprep.mubr.bf16.mxu0 %v541
  %1585 = vmatmul.mubr.bf16.gmra.mrb[0].mxu0 %v540
  %v1586 = vpop.f32.mrb[0].mxu0
  %v1587 = vadd.f32 %v1490, %v1586
  %v1588 = vpop.f32.mrb[0].mxu0
  %v1589 = vpop.f32.mrb[0].mxu0
  %v1590 = vadd.f32 %v1493, %v1589
  %v1591 = vpop.f32.mrb[0].mxu0
  %1592 = vmatprep.mubr.bf16.mxu0 %v551
  %1593 = vmatmul.mubr.bf16.gmra.mrb[0].mxu0 %v550
  %v1594 = vpop.f32.mrb[0].mxu0
  %v1595 = vadd.f32 %v1498, %v1594
  %v1596 = vpop.f32.mrb[0].mxu0
  %v1597 = vpop.f32.mrb[0].mxu0
  %v1598 = vadd.f32 %v1501, %v1597
  %v1599 = vpop.f32.mrb[0].mxu0
  %1600 = vmatprep.mubr.bf16.mxu0 %v561
  %1601 = vmatmul.mubr.bf16.gmra.mrb[0].mxu0 %v560
  %v1602 = vpop.f32.mrb[0].mxu0
  %v1603 = vadd.f32 %v1506, %v1602
  %v1604 = vpop.f32.mrb[0].mxu0
  %v1605 = vpop.f32.mrb[0].mxu0
  %v1606 = vadd.f32 %v1509, %v1605
  %v1607 = vpop.f32.mrb[0].mxu0
  %1608 = vmatprep.mubr.bf16.mxu0 %v571
  %1609 = vmatmul.mubr.bf16.gmra.mrb[0].mxu0 %v570
  %v1610 = vpop.f32.mrb[0].mxu0
  %v1611 = vadd.f32 %v1514, %v1610
  %v1612 = vpop.f32.mrb[0].mxu0
  %v1613 = vpop.f32.mrb[0].mxu0
  %v1614 = vadd.f32 %v1517, %v1613
  %v1615 = vpop.f32.mrb[0].mxu0
  %1616 = vdwg.mxu0
  %vm1617 = vcmp.gt.f32.partialorder %v1555, 0.0
  %vm1618 = vcmp.gt.f32.partialorder %v1558, 0.0
  %vm1619 = vcmp.gt.f32.partialorder %v1563, 0.0
  %vm1620 = vcmp.gt.f32.partialorder %v1566, 0.0
  %vm1621 = vcmp.gt.f32.partialorder %v1571, 0.0
  %vm1622 = vcmp.gt.f32.partialorder %v1574, 0.0
  %vm1623 = vcmp.gt.f32.partialorder %v1579, 0.0
  %vm1624 = vcmp.gt.f32.partialorder %v1582, 0.0
  %vm1625 = vcmp.gt.f32.partialorder %v1587, 0.0
  %vm1626 = vcmp.gt.f32.partialorder %v1590, 0.0
  %vm1627 = vcmp.gt.f32.partialorder %v1595, 0.0
  %vm1628 = vcmp.gt.f32.partialorder %v1598, 0.0
  %vm1629 = vcmp.gt.f32.partialorder %v1603, 0.0
  %vm1630 = vcmp.gt.f32.partialorder %v1606, 0.0
  %vm1631 = vcmp.gt.f32.partialorder %v1611, 0.0
  %vm1632 = vcmp.gt.f32.partialorder %v1614, 0.0
  %v1633 = vmul.f32 %v1555, 0.1
  %v1634 = vmul.f32 %v1558, 0.1
  %v1635 = vmul.f32 %v1563, 0.1
  %v1636 = vmul.f32 %v1566, 0.1
  %v1637 = vmul.f32 %v1571, 0.1
  %v1638 = vmul.f32 %v1574, 0.1
  %v1639 = vmul.f32 %v1579, 0.1
  %v1640 = vmul.f32 %v1582, 0.1
  %v1641 = vmul.f32 %v1587, 0.1
  %v1642 = vmul.f32 %v1590, 0.1
  %v1643 = vmul.f32 %v1595, 0.1
  %v1644 = vmul.f32 %v1598, 0.1
  %v1645 = vmul.f32 %v1603, 0.1
  %v1646 = vmul.f32 %v1606, 0.1
  %v1647 = vmul.f32 %v1611, 0.1
  %v1648 = vmul.f32 %v1614, 0.1
  %v1649 = vsel %vm1617, %v1555, %v1633
  %v1650 = vsel %vm1618, %v1558, %v1634
  %v1651 = vsel %vm1619, %v1563, %v1635
  %v1652 = vsel %vm1620, %v1566, %v1636
  %v1653 = vsel %vm1621, %v1571, %v1637
  %v1654 = vsel %vm1622, %v1574, %v1638
  %v1655 = vsel %vm1623, %v1579, %v1639
  %v1656 = vsel %vm1624, %v1582, %v1640
  %v1657 = vsel %vm1625, %v1587, %v1641
  %v1658 = vsel %vm1626, %v1590, %v1642
  %v1659 = vsel %vm1627, %v1595, %v1643
  %v1660 = vsel %vm1628, %v1598, %v1644
  %v1661 = vsel %vm1629, %v1603, %v1645
  %v1662 = vsel %vm1630, %v1606, %v1646
  %v1663 = vsel %vm1631, %v1611, %v1647
  %v1664 = vsel %vm1632, %v1614, %v1648
  %v1665 = vpack.c.bf16 %v1650, %v1649
  %v1666 = vpack.c.bf16 %v1652, %v1651
  %v1667 = vpack.c.bf16 %v1654, %v1653
  %v1668 = vpack.c.bf16 %v1656, %v1655
  %v1669 = vpack.c.bf16 %v1658, %v1657
  %v1670 = vpack.c.bf16 %v1660, %v1659
  %v1671 = vpack.c.bf16 %v1662, %v1661
  %v1672 = vpack.c.bf16 %v1664, %v1663
  %v1681 = vunpack.c.l.b16 %v1665
  %v1682 = vunpack.c.h.b16 %v1665
  %v1683 = vunpack.c.l.b16 %v1666
  %v1684 = vunpack.c.h.b16 %v1666
  %v1685 = vunpack.c.l.b16 %v1667
  %v1686 = vunpack.c.h.b16 %v1667
  %v1687 = vunpack.c.l.b16 %v1668
  %v1688 = vunpack.c.h.b16 %v1668
  %v1689 = vunpack.c.l.b16 %v1669
  %v1690 = vunpack.c.h.b16 %v1669
  %v1691 = vunpack.c.l.b16 %v1670
  %v1692 = vunpack.c.h.b16 %v1670
  %v1693 = vunpack.c.l.b16 %v1671
  %v1694 = vunpack.c.h.b16 %v1671
  %v1695 = vunpack.c.l.b16 %v1672
  %v1696 = vunpack.c.h.b16 %v1672
  %v1697 = vpack.c.b16 %v1681, %v1681
  %v1698 = vpack.c.b16 %v1682, %v1682
  %v1699 = vpack.c.b16 %v1683, %v1683
  %v1700 = vpack.c.b16 %v1684, %v1684
  %v1701 = vpack.c.b16 %v1685, %v1685
  %v1702 = vpack.c.b16 %v1686, %v1686
  %v1703 = vpack.c.b16 %v1687, %v1687
  %v1704 = vpack.c.b16 %v1688, %v1688
  %v1705 = vpack.c.b16 %v1689, %v1689
  %v1706 = vpack.c.b16 %v1690, %v1690
  %v1707 = vpack.c.b16 %v1691, %v1691
  %v1708 = vpack.c.b16 %v1692, %v1692
  %v1709 = vpack.c.b16 %v1693, %v1693
  %v1710 = vpack.c.b16 %v1694, %v1694
  %v1711 = vpack.c.b16 %v1695, %v1695
  %v1712 = vpack.c.b16 %v1696, %v1696
  %1729 = vst [vmem:[%s2] sm:$0xf] %v1697
  %1730 = vst [vmem:[%s2 + $0x4] sm:$0xf] %v1698
  %1731 = vst [vmem:[%s2 + $0x8] sm:$0xf] %v1699
  %1732 = vst [vmem:[%s2 + $0xc] sm:$0xf] %v1700
  %1733 = vst [vmem:[%s2 + $0x10] sm:$0xf] %v1701
  %1734 = vst [vmem:[%s2 + $0x14] sm:$0xf] %v1702
  %1735 = vst [vmem:[%s2 + $0x18] sm:$0xf] %v1703
  %1736 = vst [vmem:[%s2 + $0x1c] sm:$0xf] %v1704
  %1737 = vst [vmem:[%s2 + $0x20] sm:$0xf] %v1705
  %1738 = vst [vmem:[%s2 + $0x24] sm:$0xf] %v1706
  %1739 = vst [vmem:[%s2 + $0x28] sm:$0xf] %v1707
  %1740 = vst [vmem:[%s2 + $0x2c] sm:$0xf] %v1708
  %1741 = vst [vmem:[%s2 + $0x30] sm:$0xf] %v1709
  %1742 = vst [vmem:[%s2 + $0x34] sm:$0xf] %v1710
  %1743 = vst [vmem:[%s2 + $0x38] sm:$0xf] %v1711
  %1744 = vst [vmem:[%s2 + $0x3c] sm:$0xf] %v1712
  // Predicated region
  $region10: #{lnet_forward.14} parent=0 // pred_check
    _
  $region11: #{lnet_forward.14} parent=0 // pred_check_branch
    %1746 = sbr.rel (0) target = $region13
  $region12: #{lnet_forward.14} parent=0 // pred_region
    _
  $region13: #{lnet_forward.14} parent=0 // pred_fallthru
    _
  // Predicated region
  $region14: #{lnet_forward.14} parent=0 // pred_check
    _
  $region15: #{lnet_forward.14} parent=0 // pred_check_branch
    %1748 = sbr.rel (0) target = $region17
  $region16: #{lnet_forward.14} parent=0 // pred_region
    _
  $region17: #{lnet_forward.14} parent=0 // pred_fallthru
    _

// kernel: lnet_forward.15
$region0: #{lnet_forward.15}
  #allocation0 [shape = 'u32[]', space=smem, size = 0x4, offset = 0x4, fixed_abs, tag = 'smem constant byte address 0x4 - core index']
  #allocation1 [shape = 'u32[144,128]{1,0:T(1,128)}', space=vmem, size = 0x12000, scoped, tag = 'internal scratch']
  %s0 = inlined_call_operand.vmem [shape: bf16[32,1280], index: 0, kind: input, shape index: {}]
  %s1 = inlined_call_operand.vmem [shape: bf16[1280,128], index: 1, kind: input, shape index: {}]
  %s2 = inlined_call_operand.vmem [shape: bf16[32,128], index: 2, kind: output, shape index: {}]
  %s3 = sld [smem:[#allocation0]]
  $region18: #{lnet_forward.15} parent=0
    _
  %s5 = ssub.s32 1, %s3
  %s6 = scalar_select 0, %s5, %s3
  // Predicated region
  $region2: #{lnet_forward.15} parent=0 // pred_check
    _
  $region3: #{lnet_forward.15} parent=0 // pred_check_branch
    %8 = sbr.rel (0) target = $region5
  $region4: #{lnet_forward.15} parent=0 // pred_region
    _
  $region5: #{lnet_forward.15} parent=0 // pred_fallthru
    _
  // Predicated region
  $region6: #{lnet_forward.15} parent=0 // pred_check
    _
  $region7: #{lnet_forward.15} parent=0 // pred_check_branch
    %10 = sbr.rel (0) target = $region9
  $region8: #{lnet_forward.15} parent=0 // pred_region
    _
  $region9: #{lnet_forward.15} parent=0 // pred_fallthru
    _
  %v12 = vld [vmem:[%s0] sm:$0xff]
  %v13 = vld [vmem:[%s0 + $0x8] sm:$0xff]
  %v14 = vld [vmem:[%s0 + $0x10] sm:$0xff]
  %v15 = vld [vmem:[%s0 + $0x18] sm:$0xff]
  %v16 = vld [vmem:[%s0 + $0x20] sm:$0xff]
  %v17 = vld [vmem:[%s0 + $0x28] sm:$0xff]
  %v18 = vld [vmem:[%s0 + $0x30] sm:$0xff]
  %v19 = vld [vmem:[%s0 + $0x38] sm:$0xff]
  %v20 = vld [vmem:[%s0 + $0x40] sm:$0xff]
  %v21 = vld [vmem:[%s0 + $0x48] sm:$0xff]
  %v22 = vld [vmem:[%s0 + $0x50] sm:$0xff]
  %v23 = vld [vmem:[%s0 + $0x58] sm:$0xff]
  %v24 = vld [vmem:[%s0 + $0x60] sm:$0xff]
  %v25 = vld [vmem:[%s0 + $0x68] sm:$0xff]
  %v26 = vld [vmem:[%s0 + $0x70] sm:$0xff]
  %v27 = vld [vmem:[%s0 + $0x78] sm:$0xff]
  %v28 = vld [vmem:[%s0 + $0x80] sm:$0xff]
  %v29 = vld [vmem:[%s0 + $0x88] sm:$0xff]
  %v30 = vld [vmem:[%s0 + $0x90] sm:$0xff]
  %v31 = vld [vmem:[%s0 + $0x98] sm:$0xff]
  %v32 = vld [vmem:[%s1] sm:$0xf]
  %v33 = vld [vmem:[%s1 + $0x4] sm:$0xf]
  %v34 = vld [vmem:[%s1 + $0x8] sm:$0xf]
  %v35 = vld [vmem:[%s1 + $0xc] sm:$0xf]
  %v36 = vld [vmem:[%s1 + $0x10] sm:$0xf]
  %v37 = vld [vmem:[%s1 + $0x14] sm:$0xf]
  %v38 = vld [vmem:[%s1 + $0x18] sm:$0xf]
  %v39 = vld [vmem:[%s1 + $0x1c] sm:$0xf]
  %v40 = vld [vmem:[%s1 + $0x20] sm:$0xf]
  %v41 = vld [vmem:[%s1 + $0x24] sm:$0xf]
  %v42 = vld [vmem:[%s1 + $0x28] sm:$0xf]
  %v43 = vld [vmem:[%s1 + $0x2c] sm:$0xf]
  %v44 = vld [vmem:[%s1 + $0x30] sm:$0xf]
  %v45 = vld [vmem:[%s1 + $0x34] sm:$0xf]
  %v46 = vld [vmem:[%s1 + $0x38] sm:$0xf]
  %v47 = vld [vmem:[%s1 + $0x3c] sm:$0xf]
  %v48 = vld [vmem:[%s1 + $0x40] sm:$0xf]
  %v49 = vld [vmem:[%s1 + $0x44] sm:$0xf]
  %v50 = vld [vmem:[%s1 + $0x48] sm:$0xf]
  %v51 = vld [vmem:[%s1 + $0x4c] sm:$0xf]
  %v52 = vld [vmem:[%s1 + $0x50] sm:$0xf]
  %v53 = vld [vmem:[%s1 + $0x54] sm:$0xf]
  %v54 = vld [vmem:[%s1 + $0x58] sm:$0xf]
  %v55 = vld [vmem:[%s1 + $0x5c] sm:$0xf]
  %v56 = vld [vmem:[%s1 + $0x60] sm:$0xf]
  %v57 = vld [vmem:[%s1 + $0x64] sm:$0xf]
  %v58 = vld [vmem:[%s1 + $0x68] sm:$0xf]
  %v59 = vld [vmem:[%s1 + $0x6c] sm:$0xf]
  %v60 = vld [vmem:[%s1 + $0x70] sm:$0xf]
  %v61 = vld [vmem:[%s1 + $0x74] sm:$0xf]
  %v62 = vld [vmem:[%s1 + $0x78] sm:$0xf]
  %v63 = vld [vmem:[%s1 + $0x7c] sm:$0xf]
  %v64 = vld [vmem:[%s1 + $0x80] sm:$0xf]
  %v65 = vld [vmem:[%s1 + $0x84] sm:$0xf]
  %v66 = vld [vmem:[%s1 + $0x88] sm:$0xf]
  %v67 = vld [vmem:[%s1 + $0x8c] sm:$0xf]
  %v68 = vld [vmem:[%s1 + $0x90] sm:$0xf]
  %v69 = vld [vmem:[%s1 + $0x94] sm:$0xf]
  %v70 = vld [vmem:[%s1 + $0x98] sm:$0xf]
  %v71 = vld [vmem:[%s1 + $0x9c] sm:$0xf]
  %v72 = vld [vmem:[%s1 + $0xa0] sm:$0xf]
  %v73 = vld [vmem:[%s1 + $0xa4] sm:$0xf]
  %v74 = vld [vmem:[%s1 + $0xa8] sm:$0xf]
  %v75 = vld [vmem:[%s1 + $0xac] sm:$0xf]
  %v76 = vld [vmem:[%s1 + $0xb0] sm:$0xf]
  %v77 = vld [vmem:[%s1 + $0xb4] sm:$0xf]
  %v78 = vld [vmem:[%s1 + $0xb8] sm:$0xf]
  %v79 = vld [vmem:[%s1 + $0xbc] sm:$0xf]
  %v80 = vld [vmem:[%s1 + $0xc0] sm:$0xf]
  %v81 = vld [vmem:[%s1 + $0xc4] sm:$0xf]
  %v82 = vld [vmem:[%s1 + $0xc8] sm:$0xf]
  %v83 = vld [vmem:[%s1 + $0xcc] sm:$0xf]
  %v84 = vld [vmem:[%s1 + $0xd0] sm:$0xf]
  %v85 = vld [vmem:[%s1 + $0xd4] sm:$0xf]
  %v86 = vld [vmem:[%s1 + $0xd8] sm:$0xf]
  %v87 = vld [vmem:[%s1 + $0xdc] sm:$0xf]
  %v88 = vld [vmem:[%s1 + $0xe0] sm:$0xf]
  %v89 = vld [vmem:[%s1 + $0xe4] sm:$0xf]
  %v90 = vld [vmem:[%s1 + $0xe8] sm:$0xf]
  %v91 = vld [vmem:[%s1 + $0xec] sm:$0xf]
  %v92 = vld [vmem:[%s1 + $0xf0] sm:$0xf]
  %v93 = vld [vmem:[%s1 + $0xf4] sm:$0xf]
  %v94 = vld [vmem:[%s1 + $0xf8] sm:$0xf]
  %v95 = vld [vmem:[%s1 + $0xfc] sm:$0xf]
  %v96 = vld [vmem:[%s1 + $0x100] sm:$0xf]
  %v97 = vld [vmem:[%s1 + $0x104] sm:$0xf]
  %v98 = vld [vmem:[%s1 + $0x108] sm:$0xf]
  %v99 = vld [vmem:[%s1 + $0x10c] sm:$0xf]
  %v100 = vld [vmem:[%s1 + $0x110] sm:$0xf]
  %v101 = vld [vmem:[%s1 + $0x114] sm:$0xf]
  %v102 = vld [vmem:[%s1 + $0x118] sm:$0xf]
  %v103 = vld [vmem:[%s1 + $0x11c] sm:$0xf]
  %v104 = vld [vmem:[%s1 + $0x120] sm:$0xf]
  %v105 = vld [vmem:[%s1 + $0x124] sm:$0xf]
  %v106 = vld [vmem:[%s1 + $0x128] sm:$0xf]
  %v107 = vld [vmem:[%s1 + $0x12c] sm:$0xf]
  %v108 = vld [vmem:[%s1 + $0x130] sm:$0xf]
  %v109 = vld [vmem:[%s1 + $0x134] sm:$0xf]
  %v110 = vld [vmem:[%s1 + $0x138] sm:$0xf]
  %v111 = vld [vmem:[%s1 + $0x13c] sm:$0xf]
  %v112 = vld [vmem:[%s1 + $0x140] sm:$0xf]
  %v113 = vld [vmem:[%s1 + $0x144] sm:$0xf]
  %v114 = vld [vmem:[%s1 + $0x148] sm:$0xf]
  %v115 = vld [vmem:[%s1 + $0x14c] sm:$0xf]
  %v116 = vld [vmem:[%s1 + $0x150] sm:$0xf]
  %v117 = vld [vmem:[%s1 + $0x154] sm:$0xf]
  %v118 = vld [vmem:[%s1 + $0x158] sm:$0xf]
  %v119 = vld [vmem:[%s1 + $0x15c] sm:$0xf]
  %v120 = vld [vmem:[%s1 + $0x160] sm:$0xf]
  %v121 = vld [vmem:[%s1 + $0x164] sm:$0xf]
  %v122 = vld [vmem:[%s1 + $0x168] sm:$0xf]
  %v123 = vld [vmem:[%s1 + $0x16c] sm:$0xf]
  %v124 = vld [vmem:[%s1 + $0x170] sm:$0xf]
  %v125 = vld [vmem:[%s1 + $0x174] sm:$0xf]
  %v126 = vld [vmem:[%s1 + $0x178] sm:$0xf]
  %v127 = vld [vmem:[%s1 + $0x17c] sm:$0xf]
  %v128 = vld [vmem:[%s1 + $0x180] sm:$0xf]
  %v129 = vld [vmem:[%s1 + $0x184] sm:$0xf]
  %v130 = vld [vmem:[%s1 + $0x188] sm:$0xf]
  %v131 = vld [vmem:[%s1 + $0x18c] sm:$0xf]
  %v132 = vld [vmem:[%s1 + $0x190] sm:$0xf]
  %v133 = vld [vmem:[%s1 + $0x194] sm:$0xf]
  %v134 = vld [vmem:[%s1 + $0x198] sm:$0xf]
  %v135 = vld [vmem:[%s1 + $0x19c] sm:$0xf]
  %v136 = vld [vmem:[%s1 + $0x1a0] sm:$0xf]
  %v137 = vld [vmem:[%s1 + $0x1a4] sm:$0xf]
  %v138 = vld [vmem:[%s1 + $0x1a8] sm:$0xf]
  %v139 = vld [vmem:[%s1 + $0x1ac] sm:$0xf]
  %v140 = vld [vmem:[%s1 + $0x1b0] sm:$0xf]
  %v141 = vld [vmem:[%s1 + $0x1b4] sm:$0xf]
  %v142 = vld [vmem:[%s1 + $0x1b8] sm:$0xf]
  %v143 = vld [vmem:[%s1 + $0x1bc] sm:$0xf]
  %v144 = vld [vmem:[%s1 + $0x1c0] sm:$0xf]
  %v145 = vld [vmem:[%s1 + $0x1c4] sm:$0xf]
  %v146 = vld [vmem:[%s1 + $0x1c8] sm:$0xf]
  %v147 = vld [vmem:[%s1 + $0x1cc] sm:$0xf]
  %v148 = vld [vmem:[%s1 + $0x1d0] sm:$0xf]
  %v149 = vld [vmem:[%s1 + $0x1d4] sm:$0xf]
  %v150 = vld [vmem:[%s1 + $0x1d8] sm:$0xf]
  %v151 = vld [vmem:[%s1 + $0x1dc] sm:$0xf]
  %v152 = vld [vmem:[%s1 + $0x1e0] sm:$0xf]
  %v153 = vld [vmem:[%s1 + $0x1e4] sm:$0xf]
  %v154 = vld [vmem:[%s1 + $0x1e8] sm:$0xf]
  %v155 = vld [vmem:[%s1 + $0x1ec] sm:$0xf]
  %v156 = vld [vmem:[%s1 + $0x1f0] sm:$0xf]
  %v157 = vld [vmem:[%s1 + $0x1f4] sm:$0xf]
  %v158 = vld [vmem:[%s1 + $0x1f8] sm:$0xf]
  %v159 = vld [vmem:[%s1 + $0x1fc] sm:$0xf]
  %v160 = vld [vmem:[%s1 + $0x200] sm:$0xf]
  %v161 = vld [vmem:[%s1 + $0x204] sm:$0xf]
  %v162 = vld [vmem:[%s1 + $0x208] sm:$0xf]
  %v163 = vld [vmem:[%s1 + $0x20c] sm:$0xf]
  %v164 = vld [vmem:[%s1 + $0x210] sm:$0xf]
  %v165 = vld [vmem:[%s1 + $0x214] sm:$0xf]
  %v166 = vld [vmem:[%s1 + $0x218] sm:$0xf]
  %v167 = vld [vmem:[%s1 + $0x21c] sm:$0xf]
  %v168 = vld [vmem:[%s1 + $0x220] sm:$0xf]
  %v169 = vld [vmem:[%s1 + $0x224] sm:$0xf]
  %v170 = vld [vmem:[%s1 + $0x228] sm:$0xf]
  %v171 = vld [vmem:[%s1 + $0x22c] sm:$0xf]
  %v172 = vld [vmem:[%s1 + $0x230] sm:$0xf]
  %v173 = vld [vmem:[%s1 + $0x234] sm:$0xf]
  %v174 = vld [vmem:[%s1 + $0x238] sm:$0xf]
  %v175 = vld [vmem:[%s1 + $0x23c] sm:$0xf]
  %v176 = vld [vmem:[%s1 + $0x240] sm:$0xf]
  %v177 = vld [vmem:[%s1 + $0x244] sm:$0xf]
  %v178 = vld [vmem:[%s1 + $0x248] sm:$0xf]
  %v179 = vld [vmem:[%s1 + $0x24c] sm:$0xf]
  %v180 = vld [vmem:[%s1 + $0x250] sm:$0xf]
  %v181 = vld [vmem:[%s1 + $0x254] sm:$0xf]
  %v182 = vld [vmem:[%s1 + $0x258] sm:$0xf]
  %v183 = vld [vmem:[%s1 + $0x25c] sm:$0xf]
  %v184 = vld [vmem:[%s1 + $0x260] sm:$0xf]
  %v185 = vld [vmem:[%s1 + $0x264] sm:$0xf]
  %v186 = vld [vmem:[%s1 + $0x268] sm:$0xf]
  %v187 = vld [vmem:[%s1 + $0x26c] sm:$0xf]
  %v188 = vld [vmem:[%s1 + $0x270] sm:$0xf]
  %v189 = vld [vmem:[%s1 + $0x274] sm:$0xf]
  %v190 = vld [vmem:[%s1 + $0x278] sm:$0xf]
  %v191 = vld [vmem:[%s1 + $0x27c] sm:$0xf]
  %v212 = vunpack.c.l.b16 %v12
  %v213 = vunpack.c.h.b16 %v12
  %v214 = vunpack.c.l.b16 %v13
  %v215 = vunpack.c.h.b16 %v13
  %v216 = vunpack.c.l.b16 %v14
  %v217 = vunpack.c.h.b16 %v14
  %v218 = vunpack.c.l.b16 %v15
  %v219 = vunpack.c.h.b16 %v15
  %v220 = vunpack.c.l.b16 %v16
  %v221 = vunpack.c.h.b16 %v16
  %v222 = vunpack.c.l.b16 %v17
  %v223 = vunpack.c.h.b16 %v17
  %v224 = vunpack.c.l.b16 %v18
  %v225 = vunpack.c.h.b16 %v18
  %v226 = vunpack.c.l.b16 %v19
  %v227 = vunpack.c.h.b16 %v19
  %v228 = vunpack.c.l.b16 %v20
  %v229 = vunpack.c.h.b16 %v20
  %v230 = vunpack.c.l.b16 %v21
  %v231 = vunpack.c.h.b16 %v21
  %v232 = vunpack.c.l.b16 %v22
  %v233 = vunpack.c.h.b16 %v22
  %v234 = vunpack.c.l.b16 %v23
  %v235 = vunpack.c.h.b16 %v23
  %v236 = vunpack.c.l.b16 %v24
  %v237 = vunpack.c.h.b16 %v24
  %v238 = vunpack.c.l.b16 %v25
  %v239 = vunpack.c.h.b16 %v25
  %v240 = vunpack.c.l.b16 %v26
  %v241 = vunpack.c.h.b16 %v26
  %v242 = vunpack.c.l.b16 %v27
  %v243 = vunpack.c.h.b16 %v27
  %v244 = vunpack.c.l.b16 %v28
  %v245 = vunpack.c.h.b16 %v28
  %v246 = vunpack.c.l.b16 %v29
  %v247 = vunpack.c.h.b16 %v29
  %v248 = vunpack.c.l.b16 %v30
  %v249 = vunpack.c.h.b16 %v30
  %v250 = vunpack.c.l.b16 %v31
  %v251 = vunpack.c.h.b16 %v31
  %v252 = vpack.c.b16 %v222, %v212
  %v253 = vpack.c.b16 %v223, %v213
  %v254 = vpack.c.b16 %v224, %v214
  %v255 = vpack.c.b16 %v225, %v215
  %v256 = vpack.c.b16 %v226, %v216
  %v257 = vpack.c.b16 %v227, %v217
  %v258 = vpack.c.b16 %v228, %v218
  %v259 = vpack.c.b16 %v229, %v219
  %v260 = vpack.c.b16 %v230, %v220
  %v261 = vpack.c.b16 %v231, %v221
  %v262 = vpack.c.b16 %v242, %v232
  %v263 = vpack.c.b16 %v243, %v233
  %v264 = vpack.c.b16 %v244, %v234
  %v265 = vpack.c.b16 %v245, %v235
  %v266 = vpack.c.b16 %v246, %v236
  %v267 = vpack.c.b16 %v247, %v237
  %v268 = vpack.c.b16 %v248, %v238
  %v269 = vpack.c.b16 %v249, %v239
  %v270 = vpack.c.b16 %v250, %v240
  %v271 = vpack.c.b16 %v251, %v241
  %v452 = vunpack.c.l.b16 %v32
  %v453 = vunpack.c.l.b16 %v33
  %v454 = vunpack.c.l.b16 %v34
  %v455 = vunpack.c.l.b16 %v35
  %v456 = vunpack.c.l.b16 %v36
  %v457 = vunpack.c.l.b16 %v37
  %v458 = vunpack.c.l.b16 %v38
  %v459 = vunpack.c.l.b16 %v39
  %v460 = vunpack.c.l.b16 %v40
  %v461 = vunpack.c.l.b16 %v41
  %v462 = vunpack.c.l.b16 %v42
  %v463 = vunpack.c.l.b16 %v43
  %v464 = vunpack.c.l.b16 %v44
  %v465 = vunpack.c.l.b16 %v45
  %v466 = vunpack.c.l.b16 %v46
  %v467 = vunpack.c.l.b16 %v47
  %v468 = vunpack.c.l.b16 %v48
  %v469 = vunpack.c.l.b16 %v49
  %v470 = vunpack.c.l.b16 %v50
  %v471 = vunpack.c.l.b16 %v51
  %v472 = vunpack.c.l.b16 %v52
  %v473 = vunpack.c.l.b16 %v53
  %v474 = vunpack.c.l.b16 %v54
  %v475 = vunpack.c.l.b16 %v55
  %v476 = vunpack.c.l.b16 %v56
  %v477 = vunpack.c.l.b16 %v57
  %v478 = vunpack.c.l.b16 %v58
  %v479 = vunpack.c.l.b16 %v59
  %v480 = vunpack.c.l.b16 %v60
  %v481 = vunpack.c.l.b16 %v61
  %v482 = vunpack.c.l.b16 %v62
  %v483 = vunpack.c.l.b16 %v63
  %v484 = vunpack.c.l.b16 %v64
  %v485 = vunpack.c.l.b16 %v65
  %v486 = vunpack.c.l.b16 %v66
  %v487 = vunpack.c.l.b16 %v67
  %v488 = vunpack.c.l.b16 %v68
  %v489 = vunpack.c.l.b16 %v69
  %v490 = vunpack.c.l.b16 %v70
  %v491 = vunpack.c.l.b16 %v71
  %v492 = vunpack.c.l.b16 %v72
  %v493 = vunpack.c.l.b16 %v73
  %v494 = vunpack.c.l.b16 %v74
  %v495 = vunpack.c.l.b16 %v75
  %v496 = vunpack.c.l.b16 %v76
  %v497 = vunpack.c.l.b16 %v77
  %v498 = vunpack.c.l.b16 %v78
  %v499 = vunpack.c.l.b16 %v79
  %v500 = vunpack.c.l.b16 %v80
  %v501 = vunpack.c.l.b16 %v81
  %v502 = vunpack.c.l.b16 %v82
  %v503 = vunpack.c.l.b16 %v83
  %v504 = vunpack.c.l.b16 %v84
  %v505 = vunpack.c.l.b16 %v85
  %v506 = vunpack.c.l.b16 %v86
  %v507 = vunpack.c.l.b16 %v87
  %v508 = vunpack.c.l.b16 %v88
  %v509 = vunpack.c.l.b16 %v89
  %v510 = vunpack.c.l.b16 %v90
  %v511 = vunpack.c.l.b16 %v91
  %v512 = vunpack.c.l.b16 %v92
  %v513 = vunpack.c.l.b16 %v93
  %v514 = vunpack.c.l.b16 %v94
  %v515 = vunpack.c.l.b16 %v95
  %v516 = vunpack.c.l.b16 %v96
  %v517 = vunpack.c.l.b16 %v97
  %v518 = vunpack.c.l.b16 %v98
  %v519 = vunpack.c.l.b16 %v99
  %v520 = vunpack.c.l.b16 %v100
  %v521 = vunpack.c.l.b16 %v101
  %v522 = vunpack.c.l.b16 %v102
  %v523 = vunpack.c.l.b16 %v103
  %v524 = vunpack.c.l.b16 %v104
  %v525 = vunpack.c.l.b16 %v105
  %v526 = vunpack.c.l.b16 %v106
  %v527 = vunpack.c.l.b16 %v107
  %v528 = vunpack.c.l.b16 %v108
  %v529 = vunpack.c.l.b16 %v109
  %v530 = vunpack.c.l.b16 %v110
  %v531 = vunpack.c.l.b16 %v111
  %v532 = vunpack.c.l.b16 %v112
  %v533 = vunpack.c.l.b16 %v113
  %v534 = vunpack.c.l.b16 %v114
  %v535 = vunpack.c.l.b16 %v115
  %v536 = vunpack.c.l.b16 %v116
  %v537 = vunpack.c.l.b16 %v117
  %v538 = vunpack.c.l.b16 %v118
  %v539 = vunpack.c.l.b16 %v119
  %v540 = vunpack.c.l.b16 %v120
  %v541 = vunpack.c.l.b16 %v121
  %v542 = vunpack.c.l.b16 %v122
  %v543 = vunpack.c.l.b16 %v123
  %v544 = vunpack.c.l.b16 %v124
  %v545 = vunpack.c.l.b16 %v125
  %v546 = vunpack.c.l.b16 %v126
  %v547 = vunpack.c.l.b16 %v127
  %v548 = vunpack.c.l.b16 %v128
  %v549 = vunpack.c.l.b16 %v129
  %v550 = vunpack.c.l.b16 %v130
  %v551 = vunpack.c.l.b16 %v131
  %v552 = vunpack.c.l.b16 %v132
  %v553 = vunpack.c.l.b16 %v133
  %v554 = vunpack.c.l.b16 %v134
  %v555 = vunpack.c.l.b16 %v135
  %v556 = vunpack.c.l.b16 %v136
  %v557 = vunpack.c.l.b16 %v137
  %v558 = vunpack.c.l.b16 %v138
  %v559 = vunpack.c.l.b16 %v139
  %v560 = vunpack.c.l.b16 %v140
  %v561 = vunpack.c.l.b16 %v141
  %v562 = vunpack.c.l.b16 %v142
  %v563 = vunpack.c.l.b16 %v143
  %v564 = vunpack.c.l.b16 %v144
  %v565 = vunpack.c.l.b16 %v145
  %v566 = vunpack.c.l.b16 %v146
  %v567 = vunpack.c.l.b16 %v147
  %v568 = vunpack.c.l.b16 %v148
  %v569 = vunpack.c.l.b16 %v149
  %v570 = vunpack.c.l.b16 %v150
  %v571 = vunpack.c.l.b16 %v151
  %v572 = vunpack.c.l.b16 %v152
  %v573 = vunpack.c.l.b16 %v153
  %v574 = vunpack.c.l.b16 %v154
  %v575 = vunpack.c.l.b16 %v155
  %v576 = vunpack.c.l.b16 %v156
  %v577 = vunpack.c.l.b16 %v157
  %v578 = vunpack.c.l.b16 %v158
  %v579 = vunpack.c.l.b16 %v159
  %v580 = vunpack.c.l.b16 %v160
  %v581 = vunpack.c.l.b16 %v161
  %v582 = vunpack.c.l.b16 %v162
  %v583 = vunpack.c.l.b16 %v163
  %v584 = vunpack.c.l.b16 %v164
  %v585 = vunpack.c.l.b16 %v165
  %v586 = vunpack.c.l.b16 %v166
  %v587 = vunpack.c.l.b16 %v167
  %v588 = vunpack.c.l.b16 %v168
  %v589 = vunpack.c.l.b16 %v169
  %v590 = vunpack.c.l.b16 %v170
  %v591 = vunpack.c.l.b16 %v171
  %v592 = vunpack.c.l.b16 %v172
  %v593 = vunpack.c.l.b16 %v173
  %v594 = vunpack.c.l.b16 %v174
  %v595 = vunpack.c.l.b16 %v175
  %v596 = vunpack.c.l.b16 %v176
  %v597 = vunpack.c.l.b16 %v177
  %v598 = vunpack.c.l.b16 %v178
  %v599 = vunpack.c.l.b16 %v179
  %v600 = vunpack.c.l.b16 %v180
  %v601 = vunpack.c.l.b16 %v181
  %v602 = vunpack.c.l.b16 %v182
  %v603 = vunpack.c.l.b16 %v183
  %v604 = vunpack.c.l.b16 %v184
  %v605 = vunpack.c.l.b16 %v185
  %v606 = vunpack.c.l.b16 %v186
  %v607 = vunpack.c.l.b16 %v187
  %v608 = vunpack.c.l.b16 %v188
  %v609 = vunpack.c.l.b16 %v189
  %v610 = vunpack.c.l.b16 %v190
  %v611 = vunpack.c.l.b16 %v191
  %v612 = vpack.c.b16 %v453, %v452
  %v613 = vpack.c.b16 %v455, %v454
  %v614 = vpack.c.b16 %v457, %v456
  %v615 = vpack.c.b16 %v459, %v458
  %v616 = vpack.c.b16 %v461, %v460
  %v617 = vpack.c.b16 %v463, %v462
  %v618 = vpack.c.b16 %v465, %v464
  %v619 = vpack.c.b16 %v467, %v466
  %v620 = vpack.c.b16 %v469, %v468
  %v621 = vpack.c.b16 %v471, %v470
  %v622 = vpack.c.b16 %v473, %v472
  %v623 = vpack.c.b16 %v475, %v474
  %v624 = vpack.c.b16 %v477, %v476
  %v625 = vpack.c.b16 %v479, %v478
  %v626 = vpack.c.b16 %v481, %v480
  %v627 = vpack.c.b16 %v483, %v482
  %v628 = vpack.c.b16 %v485, %v484
  %v629 = vpack.c.b16 %v487, %v486
  %v630 = vpack.c.b16 %v489, %v488
  %v631 = vpack.c.b16 %v491, %v490
  %v632 = vpack.c.b16 %v493, %v492
  %v633 = vpack.c.b16 %v495, %v494
  %v634 = vpack.c.b16 %v497, %v496
  %v635 = vpack.c.b16 %v499, %v498
  %v636 = vpack.c.b16 %v501, %v500
  %v637 = vpack.c.b16 %v503, %v502
  %v638 = vpack.c.b16 %v505, %v504
  %v639 = vpack.c.b16 %v507, %v506
  %v640 = vpack.c.b16 %v509, %v508
  %v641 = vpack.c.b16 %v511, %v510
  %v642 = vpack.c.b16 %v513, %v512
  %v643 = vpack.c.b16 %v515, %v514
  %v644 = vpack.c.b16 %v517, %v516
  %v645 = vpack.c.b16 %v519, %v518
  %v646 = vpack.c.b16 %v521, %v520
  %v647 = vpack.c.b16 %v523, %v522
  %v648 = vpack.c.b16 %v525, %v524
  %v649 = vpack.c.b16 %v527, %v526
  %v650 = vpack.c.b16 %v529, %v528
  %v651 = vpack.c.b16 %v531, %v530
  %v652 = vpack.c.b16 %v533, %v532
  %v653 = vpack.c.b16 %v535, %v534
  %v654 = vpack.c.b16 %v537, %v536
  %v655 = vpack.c.b16 %v539, %v538
  %v656 = vpack.c.b16 %v541, %v540
  %v657 = vpack.c.b16 %v543, %v542
  %v658 = vpack.c.b16 %v545, %v544
  %v659 = vpack.c.b16 %v547, %v546
  %v660 = vpack.c.b16 %v549, %v548
  %v661 = vpack.c.b16 %v551, %v550
  %v662 = vpack.c.b16 %v553, %v552
  %v663 = vpack.c.b16 %v555, %v554
  %v664 = vpack.c.b16 %v557, %v556
  %v665 = vpack.c.b16 %v559, %v558
  %v666 = vpack.c.b16 %v561, %v560
  %v667 = vpack.c.b16 %v563, %v562
  %v668 = vpack.c.b16 %v565, %v564
  %v669 = vpack.c.b16 %v567, %v566
  %v670 = vpack.c.b16 %v569, %v568
  %v671 = vpack.c.b16 %v571, %v570
  %v672 = vpack.c.b16 %v573, %v572
  %v673 = vpack.c.b16 %v575, %v574
  %v674 = vpack.c.b16 %v577, %v576
  %v675 = vpack.c.b16 %v579, %v578
  %v676 = vpack.c.b16 %v581, %v580
  %v677 = vpack.c.b16 %v583, %v582
  %v678 = vpack.c.b16 %v585, %v584
  %v679 = vpack.c.b16 %v587, %v586
  %v680 = vpack.c.b16 %v589, %v588
  %v681 = vpack.c.b16 %v591, %v590
  %v682 = vpack.c.b16 %v593, %v592
  %v683 = vpack.c.b16 %v595, %v594
  %v684 = vpack.c.b16 %v597, %v596
  %v685 = vpack.c.b16 %v599, %v598
  %v686 = vpack.c.b16 %v601, %v600
  %v687 = vpack.c.b16 %v603, %v602
  %v688 = vpack.c.b16 %v605, %v604
  %v689 = vpack.c.b16 %v607, %v606
  %v690 = vpack.c.b16 %v609, %v608
  %v691 = vpack.c.b16 %v611, %v610
  %772 = vmatprep.subr.bf16.mxu0 0
  %773 = vmatpush1.bf16.msra.mxu0 %v612
  %774 = vmatprep.subr.bf16.mxu0 0
  %775 = vmatpush1.bf16.msra.mxu0 %v613
  %776 = vmatprep.subr.bf16.mxu0 0
  %777 = vmatpush1.bf16.msra.mxu0 %v614
  %778 = vmatprep.subr.bf16.mxu0 0
  %779 = vmatpush1.bf16.msra.mxu0 %v615
  %780 = vmatprep.subr.bf16.mxu0 0
  %781 = vmatpush1.bf16.msra.mxu0 %v616
  %782 = vmatprep.subr.bf16.mxu0 0
  %783 = vmatpush1.bf16.msra.mxu0 %v617
  %784 = vmatprep.subr.bf16.mxu0 0
  %785 = vmatpush1.bf16.msra.mxu0 %v618
  %786 = vmatprep.subr.bf16.mxu0 0
  %787 = vmatpush1.bf16.msra.mxu0 %v619
  %788 = vmatprep.subr.bf16.mxu0 0
  %789 = vmatpush1.bf16.msra.mxu0 %v620
  %790 = vmatprep.subr.bf16.mxu0 0
  %791 = vmatpush1.bf16.msra.mxu0 %v621
  %792 = vmatprep.subr.bf16.mxu0 0
  %793 = vmatpush1.bf16.msra.mxu0 %v622
  %794 = vmatprep.subr.bf16.mxu0 0
  %795 = vmatpush1.bf16.msra.mxu0 %v623
  %796 = vmatprep.subr.bf16.mxu0 0
  %797 = vmatpush1.bf16.msra.mxu0 %v624
  %798 = vmatprep.subr.bf16.mxu0 0
  %799 = vmatpush1.bf16.msra.mxu0 %v625
  %800 = vmatprep.subr.bf16.mxu0 0
  %801 = vmatpush1.bf16.msra.mxu0 %v626
  %802 = vmatprep.subr.bf16.mxu0 0
  %803 = vmatpush1.bf16.msra.mxu0 %v627
  %804 = vmatprep.mubr.bf16.mxu0 %v253
  %805 = vmatmul.mubr.bf16.gmra.mrb[0].mxu0 %v252
  %v806 = vpop.f32.mrb[0].mxu0
  %v807 = vadd.f32 0.0, %v806
  %v808 = vpop.f32.mrb[0].mxu0
  %v809 = vpop.f32.mrb[0].mxu0
  %v810 = vadd.f32 0.0, %v809
  %v811 = vpop.f32.mrb[0].mxu0
  %812 = vmatprep.mubr.bf16.mxu0 %v263
  %813 = vmatmul.mubr.bf16.gmra.mrb[0].mxu0 %v262
  %v814 = vpop.f32.mrb[0].mxu0
  %v815 = vadd.f32 0.0, %v814
  %v816 = vpop.f32.mrb[0].mxu0
  %v817 = vpop.f32.mrb[0].mxu0
  %v818 = vadd.f32 0.0, %v817
  %v819 = vpop.f32.mrb[0].mxu0
  %820 = vdwg.mxu0
  %821 = vmatprep.subr.bf16.mxu0 0
  %822 = vmatpush1.bf16.msra.mxu0 %v628
  %823 = vmatprep.subr.bf16.mxu0 0
  %824 = vmatpush1.bf16.msra.mxu0 %v629
  %825 = vmatprep.subr.bf16.mxu0 0
  %826 = vmatpush1.bf16.msra.mxu0 %v630
  %827 = vmatprep.subr.bf16.mxu0 0
  %828 = vmatpush1.bf16.msra.mxu0 %v631
  %829 = vmatprep.subr.bf16.mxu0 0
  %830 = vmatpush1.bf16.msra.mxu0 %v632
  %831 = vmatprep.subr.bf16.mxu0 0
  %832 = vmatpush1.bf16.msra.mxu0 %v633
  %833 = vmatprep.subr.bf16.mxu0 0
  %834 = vmatpush1.bf16.msra.mxu0 %v634
  %835 = vmatprep.subr.bf16.mxu0 0
  %836 = vmatpush1.bf16.msra.mxu0 %v635
  %837 = vmatprep.subr.bf16.mxu0 0
  %838 = vmatpush1.bf16.msra.mxu0 %v636
  %839 = vmatprep.subr.bf16.mxu0 0
  %840 = vmatpush1.bf16.msra.mxu0 %v637
  %841 = vmatprep.subr.bf16.mxu0 0
  %842 = vmatpush1.bf16.msra.mxu0 %v638
  %843 = vmatprep.subr.bf16.mxu0 0
  %844 = vmatpush1.bf16.msra.mxu0 %v639
  %845 = vmatprep.subr.bf16.mxu0 0
  %846 = vmatpush1.bf16.msra.mxu0 %v640
  %847 = vmatprep.subr.bf16.mxu0 0
  %848 = vmatpush1.bf16.msra.mxu0 %v641
  %849 = vmatprep.subr.bf16.mxu0 0
  %850 = vmatpush1.bf16.msra.mxu0 %v642
  %851 = vmatprep.subr.bf16.mxu0 0
  %852 = vmatpush1.bf16.msra.mxu0 %v643
  %853 = vmatprep.mubr.bf16.mxu0 %v255
  %854 = vmatmul.mubr.bf16.gmra.mrb[0].mxu0 %v254
  %v855 = vpop.f32.mrb[0].mxu0
  %v856 = vadd.f32 %v807, %v855
  %v857 = vpop.f32.mrb[0].mxu0
  %v858 = vpop.f32.mrb[0].mxu0
  %v859 = vadd.f32 %v810, %v858
  %v860 = vpop.f32.mrb[0].mxu0
  %861 = vmatprep.mubr.bf16.mxu0 %v265
  %862 = vmatmul.mubr.bf16.gmra.mrb[0].mxu0 %v264
  %v863 = vpop.f32.mrb[0].mxu0
  %v864 = vadd.f32 %v815, %v863
  %v865 = vpop.f32.mrb[0].mxu0
  %v866 = vpop.f32.mrb[0].mxu0
  %v867 = vadd.f32 %v818, %v866
  %v868 = vpop.f32.mrb[0].mxu0
  %869 = vdwg.mxu0
  %870 = vmatprep.subr.bf16.mxu0 0
  %871 = vmatpush1.bf16.msra.mxu0 %v644
  %872 = vmatprep.subr.bf16.mxu0 0
  %873 = vmatpush1.bf16.msra.mxu0 %v645
  %874 = vmatprep.subr.bf16.mxu0 0
  %875 = vmatpush1.bf16.msra.mxu0 %v646
  %876 = vmatprep.subr.bf16.mxu0 0
  %877 = vmatpush1.bf16.msra.mxu0 %v647
  %878 = vmatprep.subr.bf16.mxu0 0
  %879 = vmatpush1.bf16.msra.mxu0 %v648
  %880 = vmatprep.subr.bf16.mxu0 0
  %881 = vmatpush1.bf16.msra.mxu0 %v649
  %882 = vmatprep.subr.bf16.mxu0 0
  %883 = vmatpush1.bf16.msra.mxu0 %v650
  %884 = vmatprep.subr.bf16.mxu0 0
  %885 = vmatpush1.bf16.msra.mxu0 %v651
  %886 = vmatprep.subr.bf16.mxu0 0
  %887 = vmatpush1.bf16.msra.mxu0 %v652
  %888 = vmatprep.subr.bf16.mxu0 0
  %889 = vmatpush1.bf16.msra.mxu0 %v653
  %890 = vmatprep.subr.bf16.mxu0 0
  %891 = vmatpush1.bf16.msra.mxu0 %v654
  %892 = vmatprep.subr.bf16.mxu0 0
  %893 = vmatpush1.bf16.msra.mxu0 %v655
  %894 = vmatprep.subr.bf16.mxu0 0
  %895 = vmatpush1.bf16.msra.mxu0 %v656
  %896 = vmatprep.subr.bf16.mxu0 0
  %897 = vmatpush1.bf16.msra.mxu0 %v657
  %898 = vmatprep.subr.bf16.mxu0 0
  %899 = vmatpush1.bf16.msra.mxu0 %v658
  %900 = vmatprep.subr.bf16.mxu0 0
  %901 = vmatpush1.bf16.msra.mxu0 %v659
  %902 = vmatprep.mubr.bf16.mxu0 %v257
  %903 = vmatmul.mubr.bf16.gmra.mrb[0].mxu0 %v256
  %v904 = vpop.f32.mrb[0].mxu0
  %v905 = vadd.f32 %v856, %v904
  %v906 = vpop.f32.mrb[0].mxu0
  %v907 = vpop.f32.mrb[0].mxu0
  %v908 = vadd.f32 %v859, %v907
  %v909 = vpop.f32.mrb[0].mxu0
  %910 = vmatprep.mubr.bf16.mxu0 %v267
  %911 = vmatmul.mubr.bf16.gmra.mrb[0].mxu0 %v266
  %v912 = vpop.f32.mrb[0].mxu0
  %v913 = vadd.f32 %v864, %v912
  %v914 = vpop.f32.mrb[0].mxu0
  %v915 = vpop.f32.mrb[0].mxu0
  %v916 = vadd.f32 %v867, %v915
  %v917 = vpop.f32.mrb[0].mxu0
  %918 = vdwg.mxu0
  %919 = vmatprep.subr.bf16.mxu0 0
  %920 = vmatpush1.bf16.msra.mxu0 %v660
  %921 = vmatprep.subr.bf16.mxu0 0
  %922 = vmatpush1.bf16.msra.mxu0 %v661
  %923 = vmatprep.subr.bf16.mxu0 0
  %924 = vmatpush1.bf16.msra.mxu0 %v662
  %925 = vmatprep.subr.bf16.mxu0 0
  %926 = vmatpush1.bf16.msra.mxu0 %v663
  %927 = vmatprep.subr.bf16.mxu0 0
  %928 = vmatpush1.bf16.msra.mxu0 %v664
  %929 = vmatprep.subr.bf16.mxu0 0
  %930 = vmatpush1.bf16.msra.mxu0 %v665
  %931 = vmatprep.subr.bf16.mxu0 0
  %932 = vmatpush1.bf16.msra.mxu0 %v666
  %933 = vmatprep.subr.bf16.mxu0 0
  %934 = vmatpush1.bf16.msra.mxu0 %v667
  %935 = vmatprep.subr.bf16.mxu0 0
  %936 = vmatpush1.bf16.msra.mxu0 %v668
  %937 = vmatprep.subr.bf16.mxu0 0
  %938 = vmatpush1.bf16.msra.mxu0 %v669
  %939 = vmatprep.subr.bf16.mxu0 0
  %940 = vmatpush1.bf16.msra.mxu0 %v670
  %941 = vmatprep.subr.bf16.mxu0 0
  %942 = vmatpush1.bf16.msra.mxu0 %v671
  %943 = vmatprep.subr.bf16.mxu0 0
  %944 = vmatpush1.bf16.msra.mxu0 %v672
  %945 = vmatprep.subr.bf16.mxu0 0
  %946 = vmatpush1.bf16.msra.mxu0 %v673
  %947 = vmatprep.subr.bf16.mxu0 0
  %948 = vmatpush1.bf16.msra.mxu0 %v674
  %949 = vmatprep.subr.bf16.mxu0 0
  %950 = vmatpush1.bf16.msra.mxu0 %v675
  %951 = vmatprep.mubr.bf16.mxu0 %v259
  %952 = vmatmul.mubr.bf16.gmra.mrb[0].mxu0 %v258
  %v953 = vpop.f32.mrb[0].mxu0
  %v954 = vadd.f32 %v905, %v953
  %v955 = vpop.f32.mrb[0].mxu0
  %v956 = vpop.f32.mrb[0].mxu0
  %v957 = vadd.f32 %v908, %v956
  %v958 = vpop.f32.mrb[0].mxu0
  %959 = vmatprep.mubr.bf16.mxu0 %v269
  %960 = vmatmul.mubr.bf16.gmra.mrb[0].mxu0 %v268
  %v961 = vpop.f32.mrb[0].mxu0
  %v962 = vadd.f32 %v913, %v961
  %v963 = vpop.f32.mrb[0].mxu0
  %v964 = vpop.f32.mrb[0].mxu0
  %v965 = vadd.f32 %v916, %v964
  %v966 = vpop.f32.mrb[0].mxu0
  %967 = vdwg.mxu0
  %968 = vmatprep.subr.bf16.mxu0 0
  %969 = vmatpush1.bf16.msra.mxu0 %v676
  %970 = vmatprep.subr.bf16.mxu0 0
  %971 = vmatpush1.bf16.msra.mxu0 %v677
  %972 = vmatprep.subr.bf16.mxu0 0
  %973 = vmatpush1.bf16.msra.mxu0 %v678
  %974 = vmatprep.subr.bf16.mxu0 0
  %975 = vmatpush1.bf16.msra.mxu0 %v679
  %976 = vmatprep.subr.bf16.mxu0 0
  %977 = vmatpush1.bf16.msra.mxu0 %v680
  %978 = vmatprep.subr.bf16.mxu0 0
  %979 = vmatpush1.bf16.msra.mxu0 %v681
  %980 = vmatprep.subr.bf16.mxu0 0
  %981 = vmatpush1.bf16.msra.mxu0 %v682
  %982 = vmatprep.subr.bf16.mxu0 0
  %983 = vmatpush1.bf16.msra.mxu0 %v683
  %984 = vmatprep.subr.bf16.mxu0 0
  %985 = vmatpush1.bf16.msra.mxu0 %v684
  %986 = vmatprep.subr.bf16.mxu0 0
  %987 = vmatpush1.bf16.msra.mxu0 %v685
  %988 = vmatprep.subr.bf16.mxu0 0
  %989 = vmatpush1.bf16.msra.mxu0 %v686
  %990 = vmatprep.subr.bf16.mxu0 0
  %991 = vmatpush1.bf16.msra.mxu0 %v687
  %992 = vmatprep.subr.bf16.mxu0 0
  %993 = vmatpush1.bf16.msra.mxu0 %v688
  %994 = vmatprep.subr.bf16.mxu0 0
  %995 = vmatpush1.bf16.msra.mxu0 %v689
  %996 = vmatprep.subr.bf16.mxu0 0
  %997 = vmatpush1.bf16.msra.mxu0 %v690
  %998 = vmatprep.subr.bf16.mxu0 0
  %999 = vmatpush1.bf16.msra.mxu0 %v691
  %1000 = vmatprep.mubr.bf16.mxu0 %v261
  %1001 = vmatmul.mubr.bf16.gmra.mrb[0].mxu0 %v260
  %v1002 = vpop.f32.mrb[0].mxu0
  %v1003 = vadd.f32 %v954, %v1002
  %v1004 = vpop.f32.mrb[0].mxu0
  %v1005 = vpop.f32.mrb[0].mxu0
  %v1006 = vadd.f32 %v957, %v1005
  %v1007 = vpop.f32.mrb[0].mxu0
  %1008 = vmatprep.mubr.bf16.mxu0 %v271
  %1009 = vmatmul.mubr.bf16.gmra.mrb[0].mxu0 %v270
  %v1010 = vpop.f32.mrb[0].mxu0
  %v1011 = vadd.f32 %v962, %v1010
  %v1012 = vpop.f32.mrb[0].mxu0
  %v1013 = vpop.f32.mrb[0].mxu0
  %v1014 = vadd.f32 %v965, %v1013
  %v1015 = vpop.f32.mrb[0].mxu0
  %1016 = vdwg.mxu0
  %vm1017 = vcmp.gt.f32.partialorder %v1003, 0.0
  %vm1018 = vcmp.gt.f32.partialorder %v1006, 0.0
  %vm1019 = vcmp.gt.f32.partialorder %v1011, 0.0
  %vm1020 = vcmp.gt.f32.partialorder %v1014, 0.0
  %v1021 = vmul.f32 %v1003, 0.1
  %v1022 = vmul.f32 %v1006, 0.1
  %v1023 = vmul.f32 %v1011, 0.1
  %v1024 = vmul.f32 %v1014, 0.1
  %v1025 = vsel %vm1017, %v1003, %v1021
  %v1026 = vsel %vm1018, %v1006, %v1022
  %v1027 = vsel %vm1019, %v1011, %v1023
  %v1028 = vsel %vm1020, %v1014, %v1024
  %v1029 = vpack.c.bf16 %v1026, %v1025
  %v1030 = vpack.c.bf16 %v1028, %v1027
  %v1033 = vunpack.c.l.b16 %v1029
  %v1034 = vunpack.c.h.b16 %v1029
  %v1035 = vunpack.c.l.b16 %v1030
  %v1036 = vunpack.c.h.b16 %v1030
  %v1037 = vpack.c.b16 %v1033, %v1033
  %v1038 = vpack.c.b16 %v1034, %v1034
  %v1039 = vpack.c.b16 %v1035, %v1035
  %v1040 = vpack.c.b16 %v1036, %v1036
  %1045 = vst [vmem:[%s2] sm:$0xf] %v1037
  %1046 = vst [vmem:[%s2 + $0x4] sm:$0xf] %v1038
  %1047 = vst [vmem:[%s2 + $0x8] sm:$0xf] %v1039
  %1048 = vst [vmem:[%s2 + $0xc] sm:$0xf] %v1040
  // Predicated region
  $region10: #{lnet_forward.15} parent=0 // pred_check
    _
  $region11: #{lnet_forward.15} parent=0 // pred_check_branch
    %1050 = sbr.rel (0) target = $region13
  $region12: #{lnet_forward.15} parent=0 // pred_region
    _
  $region13: #{lnet_forward.15} parent=0 // pred_fallthru
    _
  // Predicated region
  $region14: #{lnet_forward.15} parent=0 // pred_check
    _
  $region15: #{lnet_forward.15} parent=0 // pred_check_branch
    %1052 = sbr.rel (0) target = $region17
  $region16: #{lnet_forward.15} parent=0 // pred_region
    _
  $region17: #{lnet_forward.15} parent=0 // pred_fallthru
    _

// kernel: lnet_forward.17
$region0: #{lnet_forward.17}
  #allocation0 [shape = 'u32[]', space=smem, size = 0x4, offset = 0x4, fixed_abs, tag = 'smem constant byte address 0x4 - core index']
  #allocation1 [shape = 'u32[144,128]{1,0:T(1,128)}', space=vmem, size = 0x12000, scoped, tag = 'internal scratch']
  %s0 = inlined_call_operand.vmem [shape: bf16[16,1280], index: 0, kind: input, shape index: {}]
  %s1 = inlined_call_operand.vmem [shape: bf16[1280,256], index: 1, kind: input, shape index: {}]
  %s2 = inlined_call_operand.vmem [shape: bf16[16,256], index: 2, kind: output, shape index: {}]
  %s3 = sld [smem:[#allocation0]]
  $region18: #{lnet_forward.17} parent=0
    _
  %s5 = ssub.s32 1, %s3
  %s6 = scalar_select 0, %s5, %s3
  // Predicated region
  $region2: #{lnet_forward.17} parent=0 // pred_check
    _
  $region3: #{lnet_forward.17} parent=0 // pred_check_branch
    %8 = sbr.rel (0) target = $region5
  $region4: #{lnet_forward.17} parent=0 // pred_region
    _
  $region5: #{lnet_forward.17} parent=0 // pred_fallthru
    _
  // Predicated region
  $region6: #{lnet_forward.17} parent=0 // pred_check
    _
  $region7: #{lnet_forward.17} parent=0 // pred_check_branch
    %10 = sbr.rel (0) target = $region9
  $region8: #{lnet_forward.17} parent=0 // pred_region
    _
  $region9: #{lnet_forward.17} parent=0 // pred_fallthru
    _
  %v11 = vld [vmem:[%s0] sm:$0xff]
  %v12 = vld [vmem:[%s0 + $0x8] sm:$0xff]
  %v13 = vld [vmem:[%s0 + $0x10] sm:$0xff]
  %v14 = vld [vmem:[%s0 + $0x18] sm:$0xff]
  %v15 = vld [vmem:[%s0 + $0x20] sm:$0xff]
  %v16 = vld [vmem:[%s0 + $0x28] sm:$0xff]
  %v17 = vld [vmem:[%s0 + $0x30] sm:$0xff]
  %v18 = vld [vmem:[%s0 + $0x38] sm:$0xff]
  %v19 = vld [vmem:[%s0 + $0x40] sm:$0xff]
  %v20 = vld [vmem:[%s0 + $0x48] sm:$0xff]
  %v21 = vld [vmem:[%s1] sm:$0xff]
  %v22 = vld [vmem:[%s1 + $0x8] sm:$0xff]
  %v23 = vld [vmem:[%s1 + $0x10] sm:$0xff]
  %v24 = vld [vmem:[%s1 + $0x18] sm:$0xff]
  %v25 = vld [vmem:[%s1 + $0x20] sm:$0xff]
  %v26 = vld [vmem:[%s1 + $0x28] sm:$0xff]
  %v27 = vld [vmem:[%s1 + $0x30] sm:$0xff]
  %v28 = vld [vmem:[%s1 + $0x38] sm:$0xff]
  %v29 = vld [vmem:[%s1 + $0x40] sm:$0xff]
  %v30 = vld [vmem:[%s1 + $0x48] sm:$0xff]
  %v31 = vld [vmem:[%s1 + $0x50] sm:$0xff]
  %v32 = vld [vmem:[%s1 + $0x58] sm:$0xff]
  %v33 = vld [vmem:[%s1 + $0x60] sm:$0xff]
  %v34 = vld [vmem:[%s1 + $0x68] sm:$0xff]
  %v35 = vld [vmem:[%s1 + $0x70] sm:$0xff]
  %v36 = vld [vmem:[%s1 + $0x78] sm:$0xff]
  %v37 = vld [vmem:[%s1 + $0x80] sm:$0xff]
  %v38 = vld [vmem:[%s1 + $0x88] sm:$0xff]
  %v39 = vld [vmem:[%s1 + $0x90] sm:$0xff]
  %v40 = vld [vmem:[%s1 + $0x98] sm:$0xff]
  %v41 = vld [vmem:[%s1 + $0xa0] sm:$0xff]
  %v42 = vld [vmem:[%s1 + $0xa8] sm:$0xff]
  %v43 = vld [vmem:[%s1 + $0xb0] sm:$0xff]
  %v44 = vld [vmem:[%s1 + $0xb8] sm:$0xff]
  %v45 = vld [vmem:[%s1 + $0xc0] sm:$0xff]
  %v46 = vld [vmem:[%s1 + $0xc8] sm:$0xff]
  %v47 = vld [vmem:[%s1 + $0xd0] sm:$0xff]
  %v48 = vld [vmem:[%s1 + $0xd8] sm:$0xff]
  %v49 = vld [vmem:[%s1 + $0xe0] sm:$0xff]
  %v50 = vld [vmem:[%s1 + $0xe8] sm:$0xff]
  %v51 = vld [vmem:[%s1 + $0xf0] sm:$0xff]
  %v52 = vld [vmem:[%s1 + $0xf8] sm:$0xff]
  %v53 = vld [vmem:[%s1 + $0x100] sm:$0xff]
  %v54 = vld [vmem:[%s1 + $0x108] sm:$0xff]
  %v55 = vld [vmem:[%s1 + $0x110] sm:$0xff]
  %v56 = vld [vmem:[%s1 + $0x118] sm:$0xff]
  %v57 = vld [vmem:[%s1 + $0x120] sm:$0xff]
  %v58 = vld [vmem:[%s1 + $0x128] sm:$0xff]
  %v59 = vld [vmem:[%s1 + $0x130] sm:$0xff]
  %v60 = vld [vmem:[%s1 + $0x138] sm:$0xff]
  %v61 = vld [vmem:[%s1 + $0x140] sm:$0xff]
  %v62 = vld [vmem:[%s1 + $0x148] sm:$0xff]
  %v63 = vld [vmem:[%s1 + $0x150] sm:$0xff]
  %v64 = vld [vmem:[%s1 + $0x158] sm:$0xff]
  %v65 = vld [vmem:[%s1 + $0x160] sm:$0xff]
  %v66 = vld [vmem:[%s1 + $0x168] sm:$0xff]
  %v67 = vld [vmem:[%s1 + $0x170] sm:$0xff]
  %v68 = vld [vmem:[%s1 + $0x178] sm:$0xff]
  %v69 = vld [vmem:[%s1 + $0x180] sm:$0xff]
  %v70 = vld [vmem:[%s1 + $0x188] sm:$0xff]
  %v71 = vld [vmem:[%s1 + $0x190] sm:$0xff]
  %v72 = vld [vmem:[%s1 + $0x198] sm:$0xff]
  %v73 = vld [vmem:[%s1 + $0x1a0] sm:$0xff]
  %v74 = vld [vmem:[%s1 + $0x1a8] sm:$0xff]
  %v75 = vld [vmem:[%s1 + $0x1b0] sm:$0xff]
  %v76 = vld [vmem:[%s1 + $0x1b8] sm:$0xff]
  %v77 = vld [vmem:[%s1 + $0x1c0] sm:$0xff]
  %v78 = vld [vmem:[%s1 + $0x1c8] sm:$0xff]
  %v79 = vld [vmem:[%s1 + $0x1d0] sm:$0xff]
  %v80 = vld [vmem:[%s1 + $0x1d8] sm:$0xff]
  %v81 = vld [vmem:[%s1 + $0x1e0] sm:$0xff]
  %v82 = vld [vmem:[%s1 + $0x1e8] sm:$0xff]
  %v83 = vld [vmem:[%s1 + $0x1f0] sm:$0xff]
  %v84 = vld [vmem:[%s1 + $0x1f8] sm:$0xff]
  %v85 = vld [vmem:[%s1 + $0x200] sm:$0xff]
  %v86 = vld [vmem:[%s1 + $0x208] sm:$0xff]
  %v87 = vld [vmem:[%s1 + $0x210] sm:$0xff]
  %v88 = vld [vmem:[%s1 + $0x218] sm:$0xff]
  %v89 = vld [vmem:[%s1 + $0x220] sm:$0xff]
  %v90 = vld [vmem:[%s1 + $0x228] sm:$0xff]
  %v91 = vld [vmem:[%s1 + $0x230] sm:$0xff]
  %v92 = vld [vmem:[%s1 + $0x238] sm:$0xff]
  %v93 = vld [vmem:[%s1 + $0x240] sm:$0xff]
  %v94 = vld [vmem:[%s1 + $0x248] sm:$0xff]
  %v95 = vld [vmem:[%s1 + $0x250] sm:$0xff]
  %v96 = vld [vmem:[%s1 + $0x258] sm:$0xff]
  %v97 = vld [vmem:[%s1 + $0x260] sm:$0xff]
  %v98 = vld [vmem:[%s1 + $0x268] sm:$0xff]
  %v99 = vld [vmem:[%s1 + $0x270] sm:$0xff]
  %v100 = vld [vmem:[%s1 + $0x278] sm:$0xff]
  %v101 = vld [vmem:[%s1 + $0x280] sm:$0xff]
  %v102 = vld [vmem:[%s1 + $0x288] sm:$0xff]
  %v103 = vld [vmem:[%s1 + $0x290] sm:$0xff]
  %v104 = vld [vmem:[%s1 + $0x298] sm:$0xff]
  %v105 = vld [vmem:[%s1 + $0x2a0] sm:$0xff]
  %v106 = vld [vmem:[%s1 + $0x2a8] sm:$0xff]
  %v107 = vld [vmem:[%s1 + $0x2b0] sm:$0xff]
  %v108 = vld [vmem:[%s1 + $0x2b8] sm:$0xff]
  %v109 = vld [vmem:[%s1 + $0x2c0] sm:$0xff]
  %v110 = vld [vmem:[%s1 + $0x2c8] sm:$0xff]
  %v111 = vld [vmem:[%s1 + $0x2d0] sm:$0xff]
  %v112 = vld [vmem:[%s1 + $0x2d8] sm:$0xff]
  %v113 = vld [vmem:[%s1 + $0x2e0] sm:$0xff]
  %v114 = vld [vmem:[%s1 + $0x2e8] sm:$0xff]
  %v115 = vld [vmem:[%s1 + $0x2f0] sm:$0xff]
  %v116 = vld [vmem:[%s1 + $0x2f8] sm:$0xff]
  %v117 = vld [vmem:[%s1 + $0x300] sm:$0xff]
  %v118 = vld [vmem:[%s1 + $0x308] sm:$0xff]
  %v119 = vld [vmem:[%s1 + $0x310] sm:$0xff]
  %v120 = vld [vmem:[%s1 + $0x318] sm:$0xff]
  %v121 = vld [vmem:[%s1 + $0x320] sm:$0xff]
  %v122 = vld [vmem:[%s1 + $0x328] sm:$0xff]
  %v123 = vld [vmem:[%s1 + $0x330] sm:$0xff]
  %v124 = vld [vmem:[%s1 + $0x338] sm:$0xff]
  %v125 = vld [vmem:[%s1 + $0x340] sm:$0xff]
  %v126 = vld [vmem:[%s1 + $0x348] sm:$0xff]
  %v127 = vld [vmem:[%s1 + $0x350] sm:$0xff]
  %v128 = vld [vmem:[%s1 + $0x358] sm:$0xff]
  %v129 = vld [vmem:[%s1 + $0x360] sm:$0xff]
  %v130 = vld [vmem:[%s1 + $0x368] sm:$0xff]
  %v131 = vld [vmem:[%s1 + $0x370] sm:$0xff]
  %v132 = vld [vmem:[%s1 + $0x378] sm:$0xff]
  %v133 = vld [vmem:[%s1 + $0x380] sm:$0xff]
  %v134 = vld [vmem:[%s1 + $0x388] sm:$0xff]
  %v135 = vld [vmem:[%s1 + $0x390] sm:$0xff]
  %v136 = vld [vmem:[%s1 + $0x398] sm:$0xff]
  %v137 = vld [vmem:[%s1 + $0x3a0] sm:$0xff]
  %v138 = vld [vmem:[%s1 + $0x3a8] sm:$0xff]
  %v139 = vld [vmem:[%s1 + $0x3b0] sm:$0xff]
  %v140 = vld [vmem:[%s1 + $0x3b8] sm:$0xff]
  %v141 = vld [vmem:[%s1 + $0x3c0] sm:$0xff]
  %v142 = vld [vmem:[%s1 + $0x3c8] sm:$0xff]
  %v143 = vld [vmem:[%s1 + $0x3d0] sm:$0xff]
  %v144 = vld [vmem:[%s1 + $0x3d8] sm:$0xff]
  %v145 = vld [vmem:[%s1 + $0x3e0] sm:$0xff]
  %v146 = vld [vmem:[%s1 + $0x3e8] sm:$0xff]
  %v147 = vld [vmem:[%s1 + $0x3f0] sm:$0xff]
  %v148 = vld [vmem:[%s1 + $0x3f8] sm:$0xff]
  %v149 = vld [vmem:[%s1 + $0x400] sm:$0xff]
  %v150 = vld [vmem:[%s1 + $0x408] sm:$0xff]
  %v151 = vld [vmem:[%s1 + $0x410] sm:$0xff]
  %v152 = vld [vmem:[%s1 + $0x418] sm:$0xff]
  %v153 = vld [vmem:[%s1 + $0x420] sm:$0xff]
  %v154 = vld [vmem:[%s1 + $0x428] sm:$0xff]
  %v155 = vld [vmem:[%s1 + $0x430] sm:$0xff]
  %v156 = vld [vmem:[%s1 + $0x438] sm:$0xff]
  %v157 = vld [vmem:[%s1 + $0x440] sm:$0xff]
  %v158 = vld [vmem:[%s1 + $0x448] sm:$0xff]
  %v159 = vld [vmem:[%s1 + $0x450] sm:$0xff]
  %v160 = vld [vmem:[%s1 + $0x458] sm:$0xff]
  %v161 = vld [vmem:[%s1 + $0x460] sm:$0xff]
  %v162 = vld [vmem:[%s1 + $0x468] sm:$0xff]
  %v163 = vld [vmem:[%s1 + $0x470] sm:$0xff]
  %v164 = vld [vmem:[%s1 + $0x478] sm:$0xff]
  %v165 = vld [vmem:[%s1 + $0x480] sm:$0xff]
  %v166 = vld [vmem:[%s1 + $0x488] sm:$0xff]
  %v167 = vld [vmem:[%s1 + $0x490] sm:$0xff]
  %v168 = vld [vmem:[%s1 + $0x498] sm:$0xff]
  %v169 = vld [vmem:[%s1 + $0x4a0] sm:$0xff]
  %v170 = vld [vmem:[%s1 + $0x4a8] sm:$0xff]
  %v171 = vld [vmem:[%s1 + $0x4b0] sm:$0xff]
  %v172 = vld [vmem:[%s1 + $0x4b8] sm:$0xff]
  %v173 = vld [vmem:[%s1 + $0x4c0] sm:$0xff]
  %v174 = vld [vmem:[%s1 + $0x4c8] sm:$0xff]
  %v175 = vld [vmem:[%s1 + $0x4d0] sm:$0xff]
  %v176 = vld [vmem:[%s1 + $0x4d8] sm:$0xff]
  %v177 = vld [vmem:[%s1 + $0x4e0] sm:$0xff]
  %v178 = vld [vmem:[%s1 + $0x4e8] sm:$0xff]
  %v179 = vld [vmem:[%s1 + $0x4f0] sm:$0xff]
  %v180 = vld [vmem:[%s1 + $0x4f8] sm:$0xff]
  %v191 = vunpack.c.l.b16 %v11
  %v192 = vunpack.c.h.b16 %v11
  %v193 = vunpack.c.l.b16 %v12
  %v194 = vunpack.c.h.b16 %v12
  %v195 = vunpack.c.l.b16 %v13
  %v196 = vunpack.c.h.b16 %v13
  %v197 = vunpack.c.l.b16 %v14
  %v198 = vunpack.c.h.b16 %v14
  %v199 = vunpack.c.l.b16 %v15
  %v200 = vunpack.c.h.b16 %v15
  %v201 = vunpack.c.l.b16 %v16
  %v202 = vunpack.c.h.b16 %v16
  %v203 = vunpack.c.l.b16 %v17
  %v204 = vunpack.c.h.b16 %v17
  %v205 = vunpack.c.l.b16 %v18
  %v206 = vunpack.c.h.b16 %v18
  %v207 = vunpack.c.l.b16 %v19
  %v208 = vunpack.c.h.b16 %v19
  %v209 = vunpack.c.l.b16 %v20
  %v210 = vunpack.c.h.b16 %v20
  %v211 = vpack.c.b16 %v201, %v191
  %v212 = vpack.c.b16 %v202, %v192
  %v213 = vpack.c.b16 %v203, %v193
  %v214 = vpack.c.b16 %v204, %v194
  %v215 = vpack.c.b16 %v205, %v195
  %v216 = vpack.c.b16 %v206, %v196
  %v217 = vpack.c.b16 %v207, %v197
  %v218 = vpack.c.b16 %v208, %v198
  %v219 = vpack.c.b16 %v209, %v199
  %v220 = vpack.c.b16 %v210, %v200
  %v391 = vunpack.c.l.b16 %v21
  %v392 = vunpack.c.h.b16 %v21
  %v393 = vunpack.c.l.b16 %v22
  %v394 = vunpack.c.h.b16 %v22
  %v395 = vunpack.c.l.b16 %v23
  %v396 = vunpack.c.h.b16 %v23
  %v397 = vunpack.c.l.b16 %v24
  %v398 = vunpack.c.h.b16 %v24
  %v399 = vunpack.c.l.b16 %v25
  %v400 = vunpack.c.h.b16 %v25
  %v401 = vunpack.c.l.b16 %v26
  %v402 = vunpack.c.h.b16 %v26
  %v403 = vunpack.c.l.b16 %v27
  %v404 = vunpack.c.h.b16 %v27
  %v405 = vunpack.c.l.b16 %v28
  %v406 = vunpack.c.h.b16 %v28
  %v407 = vunpack.c.l.b16 %v29
  %v408 = vunpack.c.h.b16 %v29
  %v409 = vunpack.c.l.b16 %v30
  %v410 = vunpack.c.h.b16 %v30
  %v411 = vunpack.c.l.b16 %v31
  %v412 = vunpack.c.h.b16 %v31
  %v413 = vunpack.c.l.b16 %v32
  %v414 = vunpack.c.h.b16 %v32
  %v415 = vunpack.c.l.b16 %v33
  %v416 = vunpack.c.h.b16 %v33
  %v417 = vunpack.c.l.b16 %v34
  %v418 = vunpack.c.h.b16 %v34
  %v419 = vunpack.c.l.b16 %v35
  %v420 = vunpack.c.h.b16 %v35
  %v421 = vunpack.c.l.b16 %v36
  %v422 = vunpack.c.h.b16 %v36
  %v423 = vunpack.c.l.b16 %v37
  %v424 = vunpack.c.h.b16 %v37
  %v425 = vunpack.c.l.b16 %v38
  %v426 = vunpack.c.h.b16 %v38
  %v427 = vunpack.c.l.b16 %v39
  %v428 = vunpack.c.h.b16 %v39
  %v429 = vunpack.c.l.b16 %v40
  %v430 = vunpack.c.h.b16 %v40
  %v431 = vunpack.c.l.b16 %v41
  %v432 = vunpack.c.h.b16 %v41
  %v433 = vunpack.c.l.b16 %v42
  %v434 = vunpack.c.h.b16 %v42
  %v435 = vunpack.c.l.b16 %v43
  %v436 = vunpack.c.h.b16 %v43
  %v437 = vunpack.c.l.b16 %v44
  %v438 = vunpack.c.h.b16 %v44
  %v439 = vunpack.c.l.b16 %v45
  %v440 = vunpack.c.h.b16 %v45
  %v441 = vunpack.c.l.b16 %v46
  %v442 = vunpack.c.h.b16 %v46
  %v443 = vunpack.c.l.b16 %v47
  %v444 = vunpack.c.h.b16 %v47
  %v445 = vunpack.c.l.b16 %v48
  %v446 = vunpack.c.h.b16 %v48
  %v447 = vunpack.c.l.b16 %v49
  %v448 = vunpack.c.h.b16 %v49
  %v449 = vunpack.c.l.b16 %v50
  %v450 = vunpack.c.h.b16 %v50
  %v451 = vunpack.c.l.b16 %v51
  %v452 = vunpack.c.h.b16 %v51
  %v453 = vunpack.c.l.b16 %v52
  %v454 = vunpack.c.h.b16 %v52
  %v455 = vunpack.c.l.b16 %v53
  %v456 = vunpack.c.h.b16 %v53
  %v457 = vunpack.c.l.b16 %v54
  %v458 = vunpack.c.h.b16 %v54
  %v459 = vunpack.c.l.b16 %v55
  %v460 = vunpack.c.h.b16 %v55
  %v461 = vunpack.c.l.b16 %v56
  %v462 = vunpack.c.h.b16 %v56
  %v463 = vunpack.c.l.b16 %v57
  %v464 = vunpack.c.h.b16 %v57
  %v465 = vunpack.c.l.b16 %v58
  %v466 = vunpack.c.h.b16 %v58
  %v467 = vunpack.c.l.b16 %v59
  %v468 = vunpack.c.h.b16 %v59
  %v469 = vunpack.c.l.b16 %v60
  %v470 = vunpack.c.h.b16 %v60
  %v471 = vunpack.c.l.b16 %v61
  %v472 = vunpack.c.h.b16 %v61
  %v473 = vunpack.c.l.b16 %v62
  %v474 = vunpack.c.h.b16 %v62
  %v475 = vunpack.c.l.b16 %v63
  %v476 = vunpack.c.h.b16 %v63
  %v477 = vunpack.c.l.b16 %v64
  %v478 = vunpack.c.h.b16 %v64
  %v479 = vunpack.c.l.b16 %v65
  %v480 = vunpack.c.h.b16 %v65
  %v481 = vunpack.c.l.b16 %v66
  %v482 = vunpack.c.h.b16 %v66
  %v483 = vunpack.c.l.b16 %v67
  %v484 = vunpack.c.h.b16 %v67
  %v485 = vunpack.c.l.b16 %v68
  %v486 = vunpack.c.h.b16 %v68
  %v487 = vunpack.c.l.b16 %v69
  %v488 = vunpack.c.h.b16 %v69
  %v489 = vunpack.c.l.b16 %v70
  %v490 = vunpack.c.h.b16 %v70
  %v491 = vunpack.c.l.b16 %v71
  %v492 = vunpack.c.h.b16 %v71
  %v493 = vunpack.c.l.b16 %v72
  %v494 = vunpack.c.h.b16 %v72
  %v495 = vunpack.c.l.b16 %v73
  %v496 = vunpack.c.h.b16 %v73
  %v497 = vunpack.c.l.b16 %v74
  %v498 = vunpack.c.h.b16 %v74
  %v499 = vunpack.c.l.b16 %v75
  %v500 = vunpack.c.h.b16 %v75
  %v501 = vunpack.c.l.b16 %v76
  %v502 = vunpack.c.h.b16 %v76
  %v503 = vunpack.c.l.b16 %v77
  %v504 = vunpack.c.h.b16 %v77
  %v505 = vunpack.c.l.b16 %v78
  %v506 = vunpack.c.h.b16 %v78
  %v507 = vunpack.c.l.b16 %v79
  %v508 = vunpack.c.h.b16 %v79
  %v509 = vunpack.c.l.b16 %v80
  %v510 = vunpack.c.h.b16 %v80
  %v511 = vunpack.c.l.b16 %v81
  %v512 = vunpack.c.h.b16 %v81
  %v513 = vunpack.c.l.b16 %v82
  %v514 = vunpack.c.h.b16 %v82
  %v515 = vunpack.c.l.b16 %v83
  %v516 = vunpack.c.h.b16 %v83
  %v517 = vunpack.c.l.b16 %v84
  %v518 = vunpack.c.h.b16 %v84
  %v519 = vunpack.c.l.b16 %v85
  %v520 = vunpack.c.h.b16 %v85
  %v521 = vunpack.c.l.b16 %v86
  %v522 = vunpack.c.h.b16 %v86
  %v523 = vunpack.c.l.b16 %v87
  %v524 = vunpack.c.h.b16 %v87
  %v525 = vunpack.c.l.b16 %v88
  %v526 = vunpack.c.h.b16 %v88
  %v527 = vunpack.c.l.b16 %v89
  %v528 = vunpack.c.h.b16 %v89
  %v529 = vunpack.c.l.b16 %v90
  %v530 = vunpack.c.h.b16 %v90
  %v531 = vunpack.c.l.b16 %v91
  %v532 = vunpack.c.h.b16 %v91
  %v533 = vunpack.c.l.b16 %v92
  %v534 = vunpack.c.h.b16 %v92
  %v535 = vunpack.c.l.b16 %v93
  %v536 = vunpack.c.h.b16 %v93
  %v537 = vunpack.c.l.b16 %v94
  %v538 = vunpack.c.h.b16 %v94
  %v539 = vunpack.c.l.b16 %v95
  %v540 = vunpack.c.h.b16 %v95
  %v541 = vunpack.c.l.b16 %v96
  %v542 = vunpack.c.h.b16 %v96
  %v543 = vunpack.c.l.b16 %v97
  %v544 = vunpack.c.h.b16 %v97
  %v545 = vunpack.c.l.b16 %v98
  %v546 = vunpack.c.h.b16 %v98
  %v547 = vunpack.c.l.b16 %v99
  %v548 = vunpack.c.h.b16 %v99
  %v549 = vunpack.c.l.b16 %v100
  %v550 = vunpack.c.h.b16 %v100
  %v551 = vunpack.c.l.b16 %v101
  %v552 = vunpack.c.h.b16 %v101
  %v553 = vunpack.c.l.b16 %v102
  %v554 = vunpack.c.h.b16 %v102
  %v555 = vunpack.c.l.b16 %v103
  %v556 = vunpack.c.h.b16 %v103
  %v557 = vunpack.c.l.b16 %v104
  %v558 = vunpack.c.h.b16 %v104
  %v559 = vunpack.c.l.b16 %v105
  %v560 = vunpack.c.h.b16 %v105
  %v561 = vunpack.c.l.b16 %v106
  %v562 = vunpack.c.h.b16 %v106
  %v563 = vunpack.c.l.b16 %v107
  %v564 = vunpack.c.h.b16 %v107
  %v565 = vunpack.c.l.b16 %v108
  %v566 = vunpack.c.h.b16 %v108
  %v567 = vunpack.c.l.b16 %v109
  %v568 = vunpack.c.h.b16 %v109
  %v569 = vunpack.c.l.b16 %v110
  %v570 = vunpack.c.h.b16 %v110
  %v571 = vunpack.c.l.b16 %v111
  %v572 = vunpack.c.h.b16 %v111
  %v573 = vunpack.c.l.b16 %v112
  %v574 = vunpack.c.h.b16 %v112
  %v575 = vunpack.c.l.b16 %v113
  %v576 = vunpack.c.h.b16 %v113
  %v577 = vunpack.c.l.b16 %v114
  %v578 = vunpack.c.h.b16 %v114
  %v579 = vunpack.c.l.b16 %v115
  %v580 = vunpack.c.h.b16 %v115
  %v581 = vunpack.c.l.b16 %v116
  %v582 = vunpack.c.h.b16 %v116
  %v583 = vunpack.c.l.b16 %v117
  %v584 = vunpack.c.h.b16 %v117
  %v585 = vunpack.c.l.b16 %v118
  %v586 = vunpack.c.h.b16 %v118
  %v587 = vunpack.c.l.b16 %v119
  %v588 = vunpack.c.h.b16 %v119
  %v589 = vunpack.c.l.b16 %v120
  %v590 = vunpack.c.h.b16 %v120
  %v591 = vunpack.c.l.b16 %v121
  %v592 = vunpack.c.h.b16 %v121
  %v593 = vunpack.c.l.b16 %v122
  %v594 = vunpack.c.h.b16 %v122
  %v595 = vunpack.c.l.b16 %v123
  %v596 = vunpack.c.h.b16 %v123
  %v597 = vunpack.c.l.b16 %v124
  %v598 = vunpack.c.h.b16 %v124
  %v599 = vunpack.c.l.b16 %v125
  %v600 = vunpack.c.h.b16 %v125
  %v601 = vunpack.c.l.b16 %v126
  %v602 = vunpack.c.h.b16 %v126
  %v603 = vunpack.c.l.b16 %v127
  %v604 = vunpack.c.h.b16 %v127
  %v605 = vunpack.c.l.b16 %v128
  %v606 = vunpack.c.h.b16 %v128
  %v607 = vunpack.c.l.b16 %v129
  %v608 = vunpack.c.h.b16 %v129
  %v609 = vunpack.c.l.b16 %v130
  %v610 = vunpack.c.h.b16 %v130
  %v611 = vunpack.c.l.b16 %v131
  %v612 = vunpack.c.h.b16 %v131
  %v613 = vunpack.c.l.b16 %v132
  %v614 = vunpack.c.h.b16 %v132
  %v615 = vunpack.c.l.b16 %v133
  %v616 = vunpack.c.h.b16 %v133
  %v617 = vunpack.c.l.b16 %v134
  %v618 = vunpack.c.h.b16 %v134
  %v619 = vunpack.c.l.b16 %v135
  %v620 = vunpack.c.h.b16 %v135
  %v621 = vunpack.c.l.b16 %v136
  %v622 = vunpack.c.h.b16 %v136
  %v623 = vunpack.c.l.b16 %v137
  %v624 = vunpack.c.h.b16 %v137
  %v625 = vunpack.c.l.b16 %v138
  %v626 = vunpack.c.h.b16 %v138
  %v627 = vunpack.c.l.b16 %v139
  %v628 = vunpack.c.h.b16 %v139
  %v629 = vunpack.c.l.b16 %v140
  %v630 = vunpack.c.h.b16 %v140
  %v631 = vunpack.c.l.b16 %v141
  %v632 = vunpack.c.h.b16 %v141
  %v633 = vunpack.c.l.b16 %v142
  %v634 = vunpack.c.h.b16 %v142
  %v635 = vunpack.c.l.b16 %v143
  %v636 = vunpack.c.h.b16 %v143
  %v637 = vunpack.c.l.b16 %v144
  %v638 = vunpack.c.h.b16 %v144
  %v639 = vunpack.c.l.b16 %v145
  %v640 = vunpack.c.h.b16 %v145
  %v641 = vunpack.c.l.b16 %v146
  %v642 = vunpack.c.h.b16 %v146
  %v643 = vunpack.c.l.b16 %v147
  %v644 = vunpack.c.h.b16 %v147
  %v645 = vunpack.c.l.b16 %v148
  %v646 = vunpack.c.h.b16 %v148
  %v647 = vunpack.c.l.b16 %v149
  %v648 = vunpack.c.h.b16 %v149
  %v649 = vunpack.c.l.b16 %v150
  %v650 = vunpack.c.h.b16 %v150
  %v651 = vunpack.c.l.b16 %v151
  %v652 = vunpack.c.h.b16 %v151
  %v653 = vunpack.c.l.b16 %v152
  %v654 = vunpack.c.h.b16 %v152
  %v655 = vunpack.c.l.b16 %v153
  %v656 = vunpack.c.h.b16 %v153
  %v657 = vunpack.c.l.b16 %v154
  %v658 = vunpack.c.h.b16 %v154
  %v659 = vunpack.c.l.b16 %v155
  %v660 = vunpack.c.h.b16 %v155
  %v661 = vunpack.c.l.b16 %v156
  %v662 = vunpack.c.h.b16 %v156
  %v663 = vunpack.c.l.b16 %v157
  %v664 = vunpack.c.h.b16 %v157
  %v665 = vunpack.c.l.b16 %v158
  %v666 = vunpack.c.h.b16 %v158
  %v667 = vunpack.c.l.b16 %v159
  %v668 = vunpack.c.h.b16 %v159
  %v669 = vunpack.c.l.b16 %v160
  %v670 = vunpack.c.h.b16 %v160
  %v671 = vunpack.c.l.b16 %v161
  %v672 = vunpack.c.h.b16 %v161
  %v673 = vunpack.c.l.b16 %v162
  %v674 = vunpack.c.h.b16 %v162
  %v675 = vunpack.c.l.b16 %v163
  %v676 = vunpack.c.h.b16 %v163
  %v677 = vunpack.c.l.b16 %v164
  %v678 = vunpack.c.h.b16 %v164
  %v679 = vunpack.c.l.b16 %v165
  %v680 = vunpack.c.h.b16 %v165
  %v681 = vunpack.c.l.b16 %v166
  %v682 = vunpack.c.h.b16 %v166
  %v683 = vunpack.c.l.b16 %v167
  %v684 = vunpack.c.h.b16 %v167
  %v685 = vunpack.c.l.b16 %v168
  %v686 = vunpack.c.h.b16 %v168
  %v687 = vunpack.c.l.b16 %v169
  %v688 = vunpack.c.h.b16 %v169
  %v689 = vunpack.c.l.b16 %v170
  %v690 = vunpack.c.h.b16 %v170
  %v691 = vunpack.c.l.b16 %v171
  %v692 = vunpack.c.h.b16 %v171
  %v693 = vunpack.c.l.b16 %v172
  %v694 = vunpack.c.h.b16 %v172
  %v695 = vunpack.c.l.b16 %v173
  %v696 = vunpack.c.h.b16 %v173
  %v697 = vunpack.c.l.b16 %v174
  %v698 = vunpack.c.h.b16 %v174
  %v699 = vunpack.c.l.b16 %v175
  %v700 = vunpack.c.h.b16 %v175
  %v701 = vunpack.c.l.b16 %v176
  %v702 = vunpack.c.h.b16 %v176
  %v703 = vunpack.c.l.b16 %v177
  %v704 = vunpack.c.h.b16 %v177
  %v705 = vunpack.c.l.b16 %v178
  %v706 = vunpack.c.h.b16 %v178
  %v707 = vunpack.c.l.b16 %v179
  %v708 = vunpack.c.h.b16 %v179
  %v709 = vunpack.c.l.b16 %v180
  %v710 = vunpack.c.h.b16 %v180
  %v711 = vpack.c.b16 %v393, %v391
  %v712 = vpack.c.b16 %v394, %v392
  %v713 = vpack.c.b16 %v397, %v395
  %v714 = vpack.c.b16 %v398, %v396
  %v715 = vpack.c.b16 %v401, %v399
  %v716 = vpack.c.b16 %v402, %v400
  %v717 = vpack.c.b16 %v405, %v403
  %v718 = vpack.c.b16 %v406, %v404
  %v719 = vpack.c.b16 %v409, %v407
  %v720 = vpack.c.b16 %v410, %v408
  %v721 = vpack.c.b16 %v413, %v411
  %v722 = vpack.c.b16 %v414, %v412
  %v723 = vpack.c.b16 %v417, %v415
  %v724 = vpack.c.b16 %v418, %v416
  %v725 = vpack.c.b16 %v421, %v419
  %v726 = vpack.c.b16 %v422, %v420
  %v727 = vpack.c.b16 %v425, %v423
  %v728 = vpack.c.b16 %v426, %v424
  %v729 = vpack.c.b16 %v429, %v427
  %v730 = vpack.c.b16 %v430, %v428
  %v731 = vpack.c.b16 %v433, %v431
  %v732 = vpack.c.b16 %v434, %v432
  %v733 = vpack.c.b16 %v437, %v435
  %v734 = vpack.c.b16 %v438, %v436
  %v735 = vpack.c.b16 %v441, %v439
  %v736 = vpack.c.b16 %v442, %v440
  %v737 = vpack.c.b16 %v445, %v443
  %v738 = vpack.c.b16 %v446, %v444
  %v739 = vpack.c.b16 %v449, %v447
  %v740 = vpack.c.b16 %v450, %v448
  %v741 = vpack.c.b16 %v453, %v451
  %v742 = vpack.c.b16 %v454, %v452
  %v743 = vpack.c.b16 %v457, %v455
  %v744 = vpack.c.b16 %v458, %v456
  %v745 = vpack.c.b16 %v461, %v459
  %v746 = vpack.c.b16 %v462, %v460
  %v747 = vpack.c.b16 %v465, %v463
  %v748 = vpack.c.b16 %v466, %v464
  %v749 = vpack.c.b16 %v469, %v467
  %v750 = vpack.c.b16 %v470, %v468
  %v751 = vpack.c.b16 %v473, %v471
  %v752 = vpack.c.b16 %v474, %v472
  %v753 = vpack.c.b16 %v477, %v475
  %v754 = vpack.c.b16 %v478, %v476
  %v755 = vpack.c.b16 %v481, %v479
  %v756 = vpack.c.b16 %v482, %v480
  %v757 = vpack.c.b16 %v485, %v483
  %v758 = vpack.c.b16 %v486, %v484
  %v759 = vpack.c.b16 %v489, %v487
  %v760 = vpack.c.b16 %v490, %v488
  %v761 = vpack.c.b16 %v493, %v491
  %v762 = vpack.c.b16 %v494, %v492
  %v763 = vpack.c.b16 %v497, %v495
  %v764 = vpack.c.b16 %v498, %v496
  %v765 = vpack.c.b16 %v501, %v499
  %v766 = vpack.c.b16 %v502, %v500
  %v767 = vpack.c.b16 %v505, %v503
  %v768 = vpack.c.b16 %v506, %v504
  %v769 = vpack.c.b16 %v509, %v507
  %v770 = vpack.c.b16 %v510, %v508
  %v771 = vpack.c.b16 %v513, %v511
  %v772 = vpack.c.b16 %v514, %v512
  %v773 = vpack.c.b16 %v517, %v515
  %v774 = vpack.c.b16 %v518, %v516
  %v775 = vpack.c.b16 %v521, %v519
  %v776 = vpack.c.b16 %v522, %v520
  %v777 = vpack.c.b16 %v525, %v523
  %v778 = vpack.c.b16 %v526, %v524
  %v779 = vpack.c.b16 %v529, %v527
  %v780 = vpack.c.b16 %v530, %v528
  %v781 = vpack.c.b16 %v533, %v531
  %v782 = vpack.c.b16 %v534, %v532
  %v783 = vpack.c.b16 %v537, %v535
  %v784 = vpack.c.b16 %v538, %v536
  %v785 = vpack.c.b16 %v541, %v539
  %v786 = vpack.c.b16 %v542, %v540
  %v787 = vpack.c.b16 %v545, %v543
  %v788 = vpack.c.b16 %v546, %v544
  %v789 = vpack.c.b16 %v549, %v547
  %v790 = vpack.c.b16 %v550, %v548
  %v791 = vpack.c.b16 %v553, %v551
  %v792 = vpack.c.b16 %v554, %v552
  %v793 = vpack.c.b16 %v557, %v555
  %v794 = vpack.c.b16 %v558, %v556
  %v795 = vpack.c.b16 %v561, %v559
  %v796 = vpack.c.b16 %v562, %v560
  %v797 = vpack.c.b16 %v565, %v563
  %v798 = vpack.c.b16 %v566, %v564
  %v799 = vpack.c.b16 %v569, %v567
  %v800 = vpack.c.b16 %v570, %v568
  %v801 = vpack.c.b16 %v573, %v571
  %v802 = vpack.c.b16 %v574, %v572
  %v803 = vpack.c.b16 %v577, %v575
  %v804 = vpack.c.b16 %v578, %v576
  %v805 = vpack.c.b16 %v581, %v579
  %v806 = vpack.c.b16 %v582, %v580
  %v807 = vpack.c.b16 %v585, %v583
  %v808 = vpack.c.b16 %v586, %v584
  %v809 = vpack.c.b16 %v589, %v587
  %v810 = vpack.c.b16 %v590, %v588
  %v811 = vpack.c.b16 %v593, %v591
  %v812 = vpack.c.b16 %v594, %v592
  %v813 = vpack.c.b16 %v597, %v595
  %v814 = vpack.c.b16 %v598, %v596
  %v815 = vpack.c.b16 %v601, %v599
  %v816 = vpack.c.b16 %v602, %v600
  %v817 = vpack.c.b16 %v605, %v603
  %v818 = vpack.c.b16 %v606, %v604
  %v819 = vpack.c.b16 %v609, %v607
  %v820 = vpack.c.b16 %v610, %v608
  %v821 = vpack.c.b16 %v613, %v611
  %v822 = vpack.c.b16 %v614, %v612
  %v823 = vpack.c.b16 %v617, %v615
  %v824 = vpack.c.b16 %v618, %v616
  %v825 = vpack.c.b16 %v621, %v619
  %v826 = vpack.c.b16 %v622, %v620
  %v827 = vpack.c.b16 %v625, %v623
  %v828 = vpack.c.b16 %v626, %v624
  %v829 = vpack.c.b16 %v629, %v627
  %v830 = vpack.c.b16 %v630, %v628
  %v831 = vpack.c.b16 %v633, %v631
  %v832 = vpack.c.b16 %v634, %v632
  %v833 = vpack.c.b16 %v637, %v635
  %v834 = vpack.c.b16 %v638, %v636
  %v835 = vpack.c.b16 %v641, %v639
  %v836 = vpack.c.b16 %v642, %v640
  %v837 = vpack.c.b16 %v645, %v643
  %v838 = vpack.c.b16 %v646, %v644
  %v839 = vpack.c.b16 %v649, %v647
  %v840 = vpack.c.b16 %v650, %v648
  %v841 = vpack.c.b16 %v653, %v651
  %v842 = vpack.c.b16 %v654, %v652
  %v843 = vpack.c.b16 %v657, %v655
  %v844 = vpack.c.b16 %v658, %v656
  %v845 = vpack.c.b16 %v661, %v659
  %v846 = vpack.c.b16 %v662, %v660
  %v847 = vpack.c.b16 %v665, %v663
  %v848 = vpack.c.b16 %v666, %v664
  %v849 = vpack.c.b16 %v669, %v667
  %v850 = vpack.c.b16 %v670, %v668
  %v851 = vpack.c.b16 %v673, %v671
  %v852 = vpack.c.b16 %v674, %v672
  %v853 = vpack.c.b16 %v677, %v675
  %v854 = vpack.c.b16 %v678, %v676
  %v855 = vpack.c.b16 %v681, %v679
  %v856 = vpack.c.b16 %v682, %v680
  %v857 = vpack.c.b16 %v685, %v683
  %v858 = vpack.c.b16 %v686, %v684
  %v859 = vpack.c.b16 %v689, %v687
  %v860 = vpack.c.b16 %v690, %v688
  %v861 = vpack.c.b16 %v693, %v691
  %v862 = vpack.c.b16 %v694, %v692
  %v863 = vpack.c.b16 %v697, %v695
  %v864 = vpack.c.b16 %v698, %v696
  %v865 = vpack.c.b16 %v701, %v699
  %v866 = vpack.c.b16 %v702, %v700
  %v867 = vpack.c.b16 %v705, %v703
  %v868 = vpack.c.b16 %v706, %v704
  %v869 = vpack.c.b16 %v709, %v707
  %v870 = vpack.c.b16 %v710, %v708
  %1031 = vmatprep.subr.bf16.mxu0 %v712
  %1032 = vmatpush1.bf16.msra.mxu0 %v711
  %1033 = vmatprep.subr.bf16.mxu0 %v714
  %1034 = vmatpush1.bf16.msra.mxu0 %v713
  %1035 = vmatprep.subr.bf16.mxu0 %v716
  %1036 = vmatpush1.bf16.msra.mxu0 %v715
  %1037 = vmatprep.subr.bf16.mxu0 %v718
  %1038 = vmatpush1.bf16.msra.mxu0 %v717
  %1039 = vmatprep.subr.bf16.mxu0 %v720
  %1040 = vmatpush1.bf16.msra.mxu0 %v719
  %1041 = vmatprep.subr.bf16.mxu0 %v722
  %1042 = vmatpush1.bf16.msra.mxu0 %v721
  %1043 = vmatprep.subr.bf16.mxu0 %v724
  %1044 = vmatpush1.bf16.msra.mxu0 %v723
  %1045 = vmatprep.subr.bf16.mxu0 %v726
  %1046 = vmatpush1.bf16.msra.mxu0 %v725
  %1047 = vmatprep.subr.bf16.mxu0 %v728
  %1048 = vmatpush1.bf16.msra.mxu0 %v727
  %1049 = vmatprep.subr.bf16.mxu0 %v730
  %1050 = vmatpush1.bf16.msra.mxu0 %v729
  %1051 = vmatprep.subr.bf16.mxu0 %v732
  %1052 = vmatpush1.bf16.msra.mxu0 %v731
  %1053 = vmatprep.subr.bf16.mxu0 %v734
  %1054 = vmatpush1.bf16.msra.mxu0 %v733
  %1055 = vmatprep.subr.bf16.mxu0 %v736
  %1056 = vmatpush1.bf16.msra.mxu0 %v735
  %1057 = vmatprep.subr.bf16.mxu0 %v738
  %1058 = vmatpush1.bf16.msra.mxu0 %v737
  %1059 = vmatprep.subr.bf16.mxu0 %v740
  %1060 = vmatpush1.bf16.msra.mxu0 %v739
  %1061 = vmatprep.subr.bf16.mxu0 %v742
  %1062 = vmatpush1.bf16.msra.mxu0 %v741
  %1063 = vmatprep.mubr.bf16.mxu0 %v212
  %1064 = vmatmul.mubr.bf16.gmra.mrb[0].mxu0 %v211
  %v1065 = vpop.f32.mrb[0].mxu0
  %v1066 = vadd.f32 0.0, %v1065
  %v1067 = vpop.f32.mrb[0].mxu0
  %v1068 = vadd.f32 0.0, %v1067
  %v1069 = vpop.f32.mrb[0].mxu0
  %v1070 = vadd.f32 0.0, %v1069
  %v1071 = vpop.f32.mrb[0].mxu0
  %v1072 = vadd.f32 0.0, %v1071
  %1073 = vdwg.mxu0
  %1074 = vmatprep.subr.bf16.mxu0 %v744
  %1075 = vmatpush1.bf16.msra.mxu0 %v743
  %1076 = vmatprep.subr.bf16.mxu0 %v746
  %1077 = vmatpush1.bf16.msra.mxu0 %v745
  %1078 = vmatprep.subr.bf16.mxu0 %v748
  %1079 = vmatpush1.bf16.msra.mxu0 %v747
  %1080 = vmatprep.subr.bf16.mxu0 %v750
  %1081 = vmatpush1.bf16.msra.mxu0 %v749
  %1082 = vmatprep.subr.bf16.mxu0 %v752
  %1083 = vmatpush1.bf16.msra.mxu0 %v751
  %1084 = vmatprep.subr.bf16.mxu0 %v754
  %1085 = vmatpush1.bf16.msra.mxu0 %v753
  %1086 = vmatprep.subr.bf16.mxu0 %v756
  %1087 = vmatpush1.bf16.msra.mxu0 %v755
  %1088 = vmatprep.subr.bf16.mxu0 %v758
  %1089 = vmatpush1.bf16.msra.mxu0 %v757
  %1090 = vmatprep.subr.bf16.mxu0 %v760
  %1091 = vmatpush1.bf16.msra.mxu0 %v759
  %1092 = vmatprep.subr.bf16.mxu0 %v762
  %1093 = vmatpush1.bf16.msra.mxu0 %v761
  %1094 = vmatprep.subr.bf16.mxu0 %v764
  %1095 = vmatpush1.bf16.msra.mxu0 %v763
  %1096 = vmatprep.subr.bf16.mxu0 %v766
  %1097 = vmatpush1.bf16.msra.mxu0 %v765
  %1098 = vmatprep.subr.bf16.mxu0 %v768
  %1099 = vmatpush1.bf16.msra.mxu0 %v767
  %1100 = vmatprep.subr.bf16.mxu0 %v770
  %1101 = vmatpush1.bf16.msra.mxu0 %v769
  %1102 = vmatprep.subr.bf16.mxu0 %v772
  %1103 = vmatpush1.bf16.msra.mxu0 %v771
  %1104 = vmatprep.subr.bf16.mxu0 %v774
  %1105 = vmatpush1.bf16.msra.mxu0 %v773
  %1106 = vmatprep.mubr.bf16.mxu0 %v214
  %1107 = vmatmul.mubr.bf16.gmra.mrb[0].mxu0 %v213
  %v1108 = vpop.f32.mrb[0].mxu0
  %v1109 = vadd.f32 %v1066, %v1108
  %v1110 = vpop.f32.mrb[0].mxu0
  %v1111 = vadd.f32 %v1068, %v1110
  %v1112 = vpop.f32.mrb[0].mxu0
  %v1113 = vadd.f32 %v1070, %v1112
  %v1114 = vpop.f32.mrb[0].mxu0
  %v1115 = vadd.f32 %v1072, %v1114
  %1116 = vdwg.mxu0
  %1117 = vmatprep.subr.bf16.mxu0 %v776
  %1118 = vmatpush1.bf16.msra.mxu0 %v775
  %1119 = vmatprep.subr.bf16.mxu0 %v778
  %1120 = vmatpush1.bf16.msra.mxu0 %v777
  %1121 = vmatprep.subr.bf16.mxu0 %v780
  %1122 = vmatpush1.bf16.msra.mxu0 %v779
  %1123 = vmatprep.subr.bf16.mxu0 %v782
  %1124 = vmatpush1.bf16.msra.mxu0 %v781
  %1125 = vmatprep.subr.bf16.mxu0 %v784
  %1126 = vmatpush1.bf16.msra.mxu0 %v783
  %1127 = vmatprep.subr.bf16.mxu0 %v786
  %1128 = vmatpush1.bf16.msra.mxu0 %v785
  %1129 = vmatprep.subr.bf16.mxu0 %v788
  %1130 = vmatpush1.bf16.msra.mxu0 %v787
  %1131 = vmatprep.subr.bf16.mxu0 %v790
  %1132 = vmatpush1.bf16.msra.mxu0 %v789
  %1133 = vmatprep.subr.bf16.mxu0 %v792
  %1134 = vmatpush1.bf16.msra.mxu0 %v791
  %1135 = vmatprep.subr.bf16.mxu0 %v794
  %1136 = vmatpush1.bf16.msra.mxu0 %v793
  %1137 = vmatprep.subr.bf16.mxu0 %v796
  %1138 = vmatpush1.bf16.msra.mxu0 %v795
  %1139 = vmatprep.subr.bf16.mxu0 %v798
  %1140 = vmatpush1.bf16.msra.mxu0 %v797
  %1141 = vmatprep.subr.bf16.mxu0 %v800
  %1142 = vmatpush1.bf16.msra.mxu0 %v799
  %1143 = vmatprep.subr.bf16.mxu0 %v802
  %1144 = vmatpush1.bf16.msra.mxu0 %v801
  %1145 = vmatprep.subr.bf16.mxu0 %v804
  %1146 = vmatpush1.bf16.msra.mxu0 %v803
  %1147 = vmatprep.subr.bf16.mxu0 %v806
  %1148 = vmatpush1.bf16.msra.mxu0 %v805
  %1149 = vmatprep.mubr.bf16.mxu0 %v216
  %1150 = vmatmul.mubr.bf16.gmra.mrb[0].mxu0 %v215
  %v1151 = vpop.f32.mrb[0].mxu0
  %v1152 = vadd.f32 %v1109, %v1151
  %v1153 = vpop.f32.mrb[0].mxu0
  %v1154 = vadd.f32 %v1111, %v1153
  %v1155 = vpop.f32.mrb[0].mxu0
  %v1156 = vadd.f32 %v1113, %v1155
  %v1157 = vpop.f32.mrb[0].mxu0
  %v1158 = vadd.f32 %v1115, %v1157
  %1159 = vdwg.mxu0
  %1160 = vmatprep.subr.bf16.mxu0 %v808
  %1161 = vmatpush1.bf16.msra.mxu0 %v807
  %1162 = vmatprep.subr.bf16.mxu0 %v810
  %1163 = vmatpush1.bf16.msra.mxu0 %v809
  %1164 = vmatprep.subr.bf16.mxu0 %v812
  %1165 = vmatpush1.bf16.msra.mxu0 %v811
  %1166 = vmatprep.subr.bf16.mxu0 %v814
  %1167 = vmatpush1.bf16.msra.mxu0 %v813
  %1168 = vmatprep.subr.bf16.mxu0 %v816
  %1169 = vmatpush1.bf16.msra.mxu0 %v815
  %1170 = vmatprep.subr.bf16.mxu0 %v818
  %1171 = vmatpush1.bf16.msra.mxu0 %v817
  %1172 = vmatprep.subr.bf16.mxu0 %v820
  %1173 = vmatpush1.bf16.msra.mxu0 %v819
  %1174 = vmatprep.subr.bf16.mxu0 %v822
  %1175 = vmatpush1.bf16.msra.mxu0 %v821
  %1176 = vmatprep.subr.bf16.mxu0 %v824
  %1177 = vmatpush1.bf16.msra.mxu0 %v823
  %1178 = vmatprep.subr.bf16.mxu0 %v826
  %1179 = vmatpush1.bf16.msra.mxu0 %v825
  %1180 = vmatprep.subr.bf16.mxu0 %v828
  %1181 = vmatpush1.bf16.msra.mxu0 %v827
  %1182 = vmatprep.subr.bf16.mxu0 %v830
  %1183 = vmatpush1.bf16.msra.mxu0 %v829
  %1184 = vmatprep.subr.bf16.mxu0 %v832
  %1185 = vmatpush1.bf16.msra.mxu0 %v831
  %1186 = vmatprep.subr.bf16.mxu0 %v834
  %1187 = vmatpush1.bf16.msra.mxu0 %v833
  %1188 = vmatprep.subr.bf16.mxu0 %v836
  %1189 = vmatpush1.bf16.msra.mxu0 %v835
  %1190 = vmatprep.subr.bf16.mxu0 %v838
  %1191 = vmatpush1.bf16.msra.mxu0 %v837
  %1192 = vmatprep.mubr.bf16.mxu0 %v218
  %1193 = vmatmul.mubr.bf16.gmra.mrb[0].mxu0 %v217
  %v1194 = vpop.f32.mrb[0].mxu0
  %v1195 = vadd.f32 %v1152, %v1194
  %v1196 = vpop.f32.mrb[0].mxu0
  %v1197 = vadd.f32 %v1154, %v1196
  %v1198 = vpop.f32.mrb[0].mxu0
  %v1199 = vadd.f32 %v1156, %v1198
  %v1200 = vpop.f32.mrb[0].mxu0
  %v1201 = vadd.f32 %v1158, %v1200
  %1202 = vdwg.mxu0
  %1203 = vmatprep.subr.bf16.mxu0 %v840
  %1204 = vmatpush1.bf16.msra.mxu0 %v839
  %1205 = vmatprep.subr.bf16.mxu0 %v842
  %1206 = vmatpush1.bf16.msra.mxu0 %v841
  %1207 = vmatprep.subr.bf16.mxu0 %v844
  %1208 = vmatpush1.bf16.msra.mxu0 %v843
  %1209 = vmatprep.subr.bf16.mxu0 %v846
  %1210 = vmatpush1.bf16.msra.mxu0 %v845
  %1211 = vmatprep.subr.bf16.mxu0 %v848
  %1212 = vmatpush1.bf16.msra.mxu0 %v847
  %1213 = vmatprep.subr.bf16.mxu0 %v850
  %1214 = vmatpush1.bf16.msra.mxu0 %v849
  %1215 = vmatprep.subr.bf16.mxu0 %v852
  %1216 = vmatpush1.bf16.msra.mxu0 %v851
  %1217 = vmatprep.subr.bf16.mxu0 %v854
  %1218 = vmatpush1.bf16.msra.mxu0 %v853
  %1219 = vmatprep.subr.bf16.mxu0 %v856
  %1220 = vmatpush1.bf16.msra.mxu0 %v855
  %1221 = vmatprep.subr.bf16.mxu0 %v858
  %1222 = vmatpush1.bf16.msra.mxu0 %v857
  %1223 = vmatprep.subr.bf16.mxu0 %v860
  %1224 = vmatpush1.bf16.msra.mxu0 %v859
  %1225 = vmatprep.subr.bf16.mxu0 %v862
  %1226 = vmatpush1.bf16.msra.mxu0 %v861
  %1227 = vmatprep.subr.bf16.mxu0 %v864
  %1228 = vmatpush1.bf16.msra.mxu0 %v863
  %1229 = vmatprep.subr.bf16.mxu0 %v866
  %1230 = vmatpush1.bf16.msra.mxu0 %v865
  %1231 = vmatprep.subr.bf16.mxu0 %v868
  %1232 = vmatpush1.bf16.msra.mxu0 %v867
  %1233 = vmatprep.subr.bf16.mxu0 %v870
  %1234 = vmatpush1.bf16.msra.mxu0 %v869
  %1235 = vmatprep.mubr.bf16.mxu0 %v220
  %1236 = vmatmul.mubr.bf16.gmra.mrb[0].mxu0 %v219
  %v1237 = vpop.f32.mrb[0].mxu0
  %v1238 = vadd.f32 %v1195, %v1237
  %v1239 = vpop.f32.mrb[0].mxu0
  %v1240 = vadd.f32 %v1197, %v1239
  %v1241 = vpop.f32.mrb[0].mxu0
  %v1242 = vadd.f32 %v1199, %v1241
  %v1243 = vpop.f32.mrb[0].mxu0
  %v1244 = vadd.f32 %v1201, %v1243
  %1245 = vdwg.mxu0
  %vm1246 = vcmp.gt.f32.partialorder %v1238, 0.0
  %vm1247 = vcmp.gt.f32.partialorder %v1240, 0.0
  %vm1248 = vcmp.gt.f32.partialorder %v1242, 0.0
  %vm1249 = vcmp.gt.f32.partialorder %v1244, 0.0
  %v1250 = vmul.f32 %v1238, 0.1
  %v1251 = vmul.f32 %v1240, 0.1
  %v1252 = vmul.f32 %v1242, 0.1
  %v1253 = vmul.f32 %v1244, 0.1
  %v1254 = vsel %vm1246, %v1238, %v1250
  %v1255 = vsel %vm1247, %v1240, %v1251
  %v1256 = vsel %vm1248, %v1242, %v1252
  %v1257 = vsel %vm1249, %v1244, %v1253
  %v1258 = vpack.c.bf16 %v1256, %v1254
  %v1259 = vpack.c.bf16 %v1257, %v1255
  %v1262 = vunpack.c.l.b16 %v1258
  %v1263 = vunpack.c.l.b16 %v1259
  %v1264 = vunpack.c.h.b16 %v1258
  %v1265 = vunpack.c.h.b16 %v1259
  %v1266 = vpack.c.b16 %v1263, %v1262
  %v1267 = vpack.c.b16 %v1265, %v1264
  %1270 = vst [vmem:[%s2] sm:$0xff] %v1266
  %1271 = vst [vmem:[%s2 + $0x8] sm:$0xff] %v1267
  // Predicated region
  $region10: #{lnet_forward.17} parent=0 // pred_check
    _
  $region11: #{lnet_forward.17} parent=0 // pred_check_branch
    %1273 = sbr.rel (0) target = $region13
  $region12: #{lnet_forward.17} parent=0 // pred_region
    _
  $region13: #{lnet_forward.17} parent=0 // pred_fallthru
    _
  // Predicated region
  $region14: #{lnet_forward.17} parent=0 // pred_check
    _
  $region15: #{lnet_forward.17} parent=0 // pred_check_branch
    %1275 = sbr.rel (0) target = $region17
  $region16: #{lnet_forward.17} parent=0 // pred_region
    _
  $region17: #{lnet_forward.17} parent=0 // pred_fallthru
    _

// kernel: lnet_forward.23
$region0: #{lnet_forward.23}
  #allocation0 [shape = 'u32[]', space=smem, size = 0x4, offset = 0x4, fixed_abs, tag = 'smem constant byte address 0x4 - core index']
  #allocation1 [shape = 'u32[144,128]{1,0:T(1,128)}', space=vmem, size = 0x12000, scoped, tag = 'internal scratch']
  %s0 = inlined_call_operand.vmem [shape: bf16[16,384], index: 0, kind: input, shape index: {}]
  %s1 = inlined_call_operand.vmem [shape: bf16[384,256], index: 1, kind: input, shape index: {}]
  %s2 = inlined_call_operand.vmem [shape: bf16[256,4], index: 2, kind: input, shape index: {}]
  %s3 = inlined_call_operand.vmem [shape: f32[1,4], index: 3, kind: input, shape index: {}]
  %s4 = inlined_call_operand.vmem [shape: f32[16,4], index: 4, kind: output, shape index: {}]
  %s5 = sld [smem:[#allocation0]]
  $region26: #{lnet_forward.23} parent=0
    _
  %s7 = ssub.s32 1, %s5
  %s8 = scalar_select 0, %s7, %s5
  // Predicated region
  $region2: #{lnet_forward.23} parent=0 // pred_check
    _
  $region3: #{lnet_forward.23} parent=0 // pred_check_branch
    %10 = sbr.rel (0) target = $region5
  $region4: #{lnet_forward.23} parent=0 // pred_region
    _
  $region5: #{lnet_forward.23} parent=0 // pred_fallthru
    _
  // Predicated region
  $region6: #{lnet_forward.23} parent=0 // pred_check
    _
  $region7: #{lnet_forward.23} parent=0 // pred_check_branch
    %12 = sbr.rel (0) target = $region9
  $region8: #{lnet_forward.23} parent=0 // pred_region
    _
  $region9: #{lnet_forward.23} parent=0 // pred_fallthru
    _
  // Predicated region
  $region10: #{lnet_forward.23} parent=0 // pred_check
    _
  $region11: #{lnet_forward.23} parent=0 // pred_check_branch
    %14 = sbr.rel (0) target = $region13
  $region12: #{lnet_forward.23} parent=0 // pred_region
    _
  $region13: #{lnet_forward.23} parent=0 // pred_fallthru
    _
  // Predicated region
  $region14: #{lnet_forward.23} parent=0 // pred_check
    _
  $region15: #{lnet_forward.23} parent=0 // pred_check_branch
    %16 = sbr.rel (0) target = $region17
  $region16: #{lnet_forward.23} parent=0 // pred_region
    _
  $region17: #{lnet_forward.23} parent=0 // pred_fallthru
    _
  %v18 = vld [vmem:[%s0] sm:$0xff]
  %v19 = vld [vmem:[%s0 + $0x8] sm:$0xf]
  %v20 = vld [vmem:[%s0 + $0xc] sm:$0xff]
  %v21 = vld [vmem:[%s0 + $0x14] sm:$0xf]
  %v22 = vld [vmem:[%s1] sm:$0xff]
  %v23 = vld [vmem:[%s1 + $0x8] sm:$0xff]
  %v24 = vld [vmem:[%s1 + $0x10] sm:$0xff]
  %v25 = vld [vmem:[%s1 + $0x18] sm:$0xff]
  %v26 = vld [vmem:[%s1 + $0x20] sm:$0xff]
  %v27 = vld [vmem:[%s1 + $0x28] sm:$0xff]
  %v28 = vld [vmem:[%s1 + $0x30] sm:$0xff]
  %v29 = vld [vmem:[%s1 + $0x38] sm:$0xff]
  %v30 = vld [vmem:[%s1 + $0x40] sm:$0xff]
  %v31 = vld [vmem:[%s1 + $0x48] sm:$0xff]
  %v32 = vld [vmem:[%s1 + $0x50] sm:$0xff]
  %v33 = vld [vmem:[%s1 + $0x58] sm:$0xff]
  %v34 = vld [vmem:[%s1 + $0x60] sm:$0xff]
  %v35 = vld [vmem:[%s1 + $0x68] sm:$0xff]
  %v36 = vld [vmem:[%s1 + $0x70] sm:$0xff]
  %v37 = vld [vmem:[%s1 + $0x78] sm:$0xff]
  %v38 = vld [vmem:[%s1 + $0x80] sm:$0xff]
  %v39 = vld [vmem:[%s1 + $0x88] sm:$0xff]
  %v40 = vld [vmem:[%s1 + $0x90] sm:$0xff]
  %v41 = vld [vmem:[%s1 + $0x98] sm:$0xff]
  %v42 = vld [vmem:[%s1 + $0xa0] sm:$0xff]
  %v43 = vld [vmem:[%s1 + $0xa8] sm:$0xff]
  %v44 = vld [vmem:[%s1 + $0xb0] sm:$0xff]
  %v45 = vld [vmem:[%s1 + $0xb8] sm:$0xff]
  %v46 = vld [vmem:[%s1 + $0xc0] sm:$0xff]
  %v47 = vld [vmem:[%s1 + $0xc8] sm:$0xff]
  %v48 = vld [vmem:[%s1 + $0xd0] sm:$0xff]
  %v49 = vld [vmem:[%s1 + $0xd8] sm:$0xff]
  %v50 = vld [vmem:[%s1 + $0xe0] sm:$0xff]
  %v51 = vld [vmem:[%s1 + $0xe8] sm:$0xff]
  %v52 = vld [vmem:[%s1 + $0xf0] sm:$0xff]
  %v53 = vld [vmem:[%s1 + $0xf8] sm:$0xff]
  %v54 = vld [vmem:[%s1 + $0x100] sm:$0xff]
  %v55 = vld [vmem:[%s1 + $0x108] sm:$0xff]
  %v56 = vld [vmem:[%s1 + $0x110] sm:$0xff]
  %v57 = vld [vmem:[%s1 + $0x118] sm:$0xff]
  %v58 = vld [vmem:[%s1 + $0x120] sm:$0xff]
  %v59 = vld [vmem:[%s1 + $0x128] sm:$0xff]
  %v60 = vld [vmem:[%s1 + $0x130] sm:$0xff]
  %v61 = vld [vmem:[%s1 + $0x138] sm:$0xff]
  %v62 = vld [vmem:[%s1 + $0x140] sm:$0xff]
  %v63 = vld [vmem:[%s1 + $0x148] sm:$0xff]
  %v64 = vld [vmem:[%s1 + $0x150] sm:$0xff]
  %v65 = vld [vmem:[%s1 + $0x158] sm:$0xff]
  %v66 = vld [vmem:[%s1 + $0x160] sm:$0xff]
  %v67 = vld [vmem:[%s1 + $0x168] sm:$0xff]
  %v68 = vld [vmem:[%s1 + $0x170] sm:$0xff]
  %v69 = vld [vmem:[%s1 + $0x178] sm:$0xff]
  %v74 = vunpack.c.l.b16 %v18
  %v75 = vunpack.c.h.b16 %v18
  %v76 = vunpack.c.l.b16 %v19
  %v77 = vunpack.c.l.b16 %v20
  %v78 = vunpack.c.h.b16 %v20
  %v79 = vunpack.c.l.b16 %v21
  %v80 = vpack.c.b16 %v77, %v74
  %v81 = vpack.c.b16 %v78, %v75
  %v82 = vpack.c.b16 %v79, %v76
  %v134 = vunpack.c.l.b16 %v22
  %v135 = vunpack.c.h.b16 %v22
  %v136 = vunpack.c.l.b16 %v23
  %v137 = vunpack.c.h.b16 %v23
  %v138 = vunpack.c.l.b16 %v24
  %v139 = vunpack.c.h.b16 %v24
  %v140 = vunpack.c.l.b16 %v25
  %v141 = vunpack.c.h.b16 %v25
  %v142 = vunpack.c.l.b16 %v26
  %v143 = vunpack.c.h.b16 %v26
  %v144 = vunpack.c.l.b16 %v27
  %v145 = vunpack.c.h.b16 %v27
  %v146 = vunpack.c.l.b16 %v28
  %v147 = vunpack.c.h.b16 %v28
  %v148 = vunpack.c.l.b16 %v29
  %v149 = vunpack.c.h.b16 %v29
  %v150 = vunpack.c.l.b16 %v30
  %v151 = vunpack.c.h.b16 %v30
  %v152 = vunpack.c.l.b16 %v31
  %v153 = vunpack.c.h.b16 %v31
  %v154 = vunpack.c.l.b16 %v32
  %v155 = vunpack.c.h.b16 %v32
  %v156 = vunpack.c.l.b16 %v33
  %v157 = vunpack.c.h.b16 %v33
  %v158 = vunpack.c.l.b16 %v34
  %v159 = vunpack.c.h.b16 %v34
  %v160 = vunpack.c.l.b16 %v35
  %v161 = vunpack.c.h.b16 %v35
  %v162 = vunpack.c.l.b16 %v36
  %v163 = vunpack.c.h.b16 %v36
  %v164 = vunpack.c.l.b16 %v37
  %v165 = vunpack.c.h.b16 %v37
  %v166 = vunpack.c.l.b16 %v38
  %v167 = vunpack.c.h.b16 %v38
  %v168 = vunpack.c.l.b16 %v39
  %v169 = vunpack.c.h.b16 %v39
  %v170 = vunpack.c.l.b16 %v40
  %v171 = vunpack.c.h.b16 %v40
  %v172 = vunpack.c.l.b16 %v41
  %v173 = vunpack.c.h.b16 %v41
  %v174 = vunpack.c.l.b16 %v42
  %v175 = vunpack.c.h.b16 %v42
  %v176 = vunpack.c.l.b16 %v43
  %v177 = vunpack.c.h.b16 %v43
  %v178 = vunpack.c.l.b16 %v44
  %v179 = vunpack.c.h.b16 %v44
  %v180 = vunpack.c.l.b16 %v45
  %v181 = vunpack.c.h.b16 %v45
  %v182 = vunpack.c.l.b16 %v46
  %v183 = vunpack.c.h.b16 %v46
  %v184 = vunpack.c.l.b16 %v47
  %v185 = vunpack.c.h.b16 %v47
  %v186 = vunpack.c.l.b16 %v48
  %v187 = vunpack.c.h.b16 %v48
  %v188 = vunpack.c.l.b16 %v49
  %v189 = vunpack.c.h.b16 %v49
  %v190 = vunpack.c.l.b16 %v50
  %v191 = vunpack.c.h.b16 %v50
  %v192 = vunpack.c.l.b16 %v51
  %v193 = vunpack.c.h.b16 %v51
  %v194 = vunpack.c.l.b16 %v52
  %v195 = vunpack.c.h.b16 %v52
  %v196 = vunpack.c.l.b16 %v53
  %v197 = vunpack.c.h.b16 %v53
  %v198 = vunpack.c.l.b16 %v54
  %v199 = vunpack.c.h.b16 %v54
  %v200 = vunpack.c.l.b16 %v55
  %v201 = vunpack.c.h.b16 %v55
  %v202 = vunpack.c.l.b16 %v56
  %v203 = vunpack.c.h.b16 %v56
  %v204 = vunpack.c.l.b16 %v57
  %v205 = vunpack.c.h.b16 %v57
  %v206 = vunpack.c.l.b16 %v58
  %v207 = vunpack.c.h.b16 %v58
  %v208 = vunpack.c.l.b16 %v59
  %v209 = vunpack.c.h.b16 %v59
  %v210 = vunpack.c.l.b16 %v60
  %v211 = vunpack.c.h.b16 %v60
  %v212 = vunpack.c.l.b16 %v61
  %v213 = vunpack.c.h.b16 %v61
  %v214 = vunpack.c.l.b16 %v62
  %v215 = vunpack.c.h.b16 %v62
  %v216 = vunpack.c.l.b16 %v63
  %v217 = vunpack.c.h.b16 %v63
  %v218 = vunpack.c.l.b16 %v64
  %v219 = vunpack.c.h.b16 %v64
  %v220 = vunpack.c.l.b16 %v65
  %v221 = vunpack.c.h.b16 %v65
  %v222 = vunpack.c.l.b16 %v66
  %v223 = vunpack.c.h.b16 %v66
  %v224 = vunpack.c.l.b16 %v67
  %v225 = vunpack.c.h.b16 %v67
  %v226 = vunpack.c.l.b16 %v68
  %v227 = vunpack.c.h.b16 %v68
  %v228 = vunpack.c.l.b16 %v69
  %v229 = vunpack.c.h.b16 %v69
  %v230 = vpack.c.b16 %v136, %v134
  %v231 = vpack.c.b16 %v137, %v135
  %v232 = vpack.c.b16 %v140, %v138
  %v233 = vpack.c.b16 %v141, %v139
  %v234 = vpack.c.b16 %v144, %v142
  %v235 = vpack.c.b16 %v145, %v143
  %v236 = vpack.c.b16 %v148, %v146
  %v237 = vpack.c.b16 %v149, %v147
  %v238 = vpack.c.b16 %v152, %v150
  %v239 = vpack.c.b16 %v153, %v151
  %v240 = vpack.c.b16 %v156, %v154
  %v241 = vpack.c.b16 %v157, %v155
  %v242 = vpack.c.b16 %v160, %v158
  %v243 = vpack.c.b16 %v161, %v159
  %v244 = vpack.c.b16 %v164, %v162
  %v245 = vpack.c.b16 %v165, %v163
  %v246 = vpack.c.b16 %v168, %v166
  %v247 = vpack.c.b16 %v169, %v167
  %v248 = vpack.c.b16 %v172, %v170
  %v249 = vpack.c.b16 %v173, %v171
  %v250 = vpack.c.b16 %v176, %v174
  %v251 = vpack.c.b16 %v177, %v175
  %v252 = vpack.c.b16 %v180, %v178
  %v253 = vpack.c.b16 %v181, %v179
  %v254 = vpack.c.b16 %v184, %v182
  %v255 = vpack.c.b16 %v185, %v183
  %v256 = vpack.c.b16 %v188, %v186
  %v257 = vpack.c.b16 %v189, %v187
  %v258 = vpack.c.b16 %v192, %v190
  %v259 = vpack.c.b16 %v193, %v191
  %v260 = vpack.c.b16 %v196, %v194
  %v261 = vpack.c.b16 %v197, %v195
  %v262 = vpack.c.b16 %v200, %v198
  %v263 = vpack.c.b16 %v201, %v199
  %v264 = vpack.c.b16 %v204, %v202
  %v265 = vpack.c.b16 %v205, %v203
  %v266 = vpack.c.b16 %v208, %v206
  %v267 = vpack.c.b16 %v209, %v207
  %v268 = vpack.c.b16 %v212, %v210
  %v269 = vpack.c.b16 %v213, %v211
  %v270 = vpack.c.b16 %v216, %v214
  %v271 = vpack.c.b16 %v217, %v215
  %v272 = vpack.c.b16 %v220, %v218
  %v273 = vpack.c.b16 %v221, %v219
  %v274 = vpack.c.b16 %v224, %v222
  %v275 = vpack.c.b16 %v225, %v223
  %v276 = vpack.c.b16 %v228, %v226
  %v277 = vpack.c.b16 %v229, %v227
  %326 = vmatprep.subr.bf16.mxu0 %v231
  %327 = vmatpush1.bf16.msra.mxu0 %v230
  %328 = vmatprep.subr.bf16.mxu0 %v233
  %329 = vmatpush1.bf16.msra.mxu0 %v232
  %330 = vmatprep.subr.bf16.mxu0 %v235
  %331 = vmatpush1.bf16.msra.mxu0 %v234
  %332 = vmatprep.subr.bf16.mxu0 %v237
  %333 = vmatpush1.bf16.msra.mxu0 %v236
  %334 = vmatprep.subr.bf16.mxu0 %v239
  %335 = vmatpush1.bf16.msra.mxu0 %v238
  %336 = vmatprep.subr.bf16.mxu0 %v241
  %337 = vmatpush1.bf16.msra.mxu0 %v240
  %338 = vmatprep.subr.bf16.mxu0 %v243
  %339 = vmatpush1.bf16.msra.mxu0 %v242
  %340 = vmatprep.subr.bf16.mxu0 %v245
  %341 = vmatpush1.bf16.msra.mxu0 %v244
  %342 = vmatprep.subr.bf16.mxu0 %v247
  %343 = vmatpush1.bf16.msra.mxu0 %v246
  %344 = vmatprep.subr.bf16.mxu0 %v249
  %345 = vmatpush1.bf16.msra.mxu0 %v248
  %346 = vmatprep.subr.bf16.mxu0 %v251
  %347 = vmatpush1.bf16.msra.mxu0 %v250
  %348 = vmatprep.subr.bf16.mxu0 %v253
  %349 = vmatpush1.bf16.msra.mxu0 %v252
  %350 = vmatprep.subr.bf16.mxu0 %v255
  %351 = vmatpush1.bf16.msra.mxu0 %v254
  %352 = vmatprep.subr.bf16.mxu0 %v257
  %353 = vmatpush1.bf16.msra.mxu0 %v256
  %354 = vmatprep.subr.bf16.mxu0 %v259
  %355 = vmatpush1.bf16.msra.mxu0 %v258
  %356 = vmatprep.subr.bf16.mxu0 %v261
  %357 = vmatpush1.bf16.msra.mxu0 %v260
  %358 = vmatprep.mubr.bf16.mxu0 %v81
  %359 = vmatmul.mubr.bf16.gmra.mrb[0].mxu0 %v80
  %v360 = vpop.f32.mrb[0].mxu0
  %v361 = vadd.f32 0.0, %v360
  %v362 = vpop.f32.mrb[0].mxu0
  %v363 = vadd.f32 0.0, %v362
  %v364 = vpop.f32.mrb[0].mxu0
  %v365 = vadd.f32 0.0, %v364
  %v366 = vpop.f32.mrb[0].mxu0
  %v367 = vadd.f32 0.0, %v366
  %368 = vdwg.mxu0
  %369 = vmatprep.subr.bf16.mxu0 %v263
  %370 = vmatpush1.bf16.msra.mxu0 %v262
  %371 = vmatprep.subr.bf16.mxu0 %v265
  %372 = vmatpush1.bf16.msra.mxu0 %v264
  %373 = vmatprep.subr.bf16.mxu0 %v267
  %374 = vmatpush1.bf16.msra.mxu0 %v266
  %375 = vmatprep.subr.bf16.mxu0 %v269
  %376 = vmatpush1.bf16.msra.mxu0 %v268
  %377 = vmatprep.subr.bf16.mxu0 %v271
  %378 = vmatpush1.bf16.msra.mxu0 %v270
  %379 = vmatprep.subr.bf16.mxu0 %v273
  %380 = vmatpush1.bf16.msra.mxu0 %v272
  %381 = vmatprep.subr.bf16.mxu0 %v275
  %382 = vmatpush1.bf16.msra.mxu0 %v274
  %383 = vmatprep.subr.bf16.mxu0 %v277
  %384 = vmatpush1.bf16.msra.mxu0 %v276
  %385 = vmatprep.subr.bf16.mxu0 0
  %386 = vmatpush1.bf16.msra.mxu0 0
  %387 = vmatprep.subr.bf16.mxu0 0
  %388 = vmatpush1.bf16.msra.mxu0 0
  %389 = vmatprep.subr.bf16.mxu0 0
  %390 = vmatpush1.bf16.msra.mxu0 0
  %391 = vmatprep.subr.bf16.mxu0 0
  %392 = vmatpush1.bf16.msra.mxu0 0
  %393 = vmatprep.subr.bf16.mxu0 0
  %394 = vmatpush1.bf16.msra.mxu0 0
  %395 = vmatprep.subr.bf16.mxu0 0
  %396 = vmatpush1.bf16.msra.mxu0 0
  %397 = vmatprep.subr.bf16.mxu0 0
  %398 = vmatpush1.bf16.msra.mxu0 0
  %399 = vmatprep.subr.bf16.mxu0 0
  %400 = vmatpush1.bf16.msra.mxu0 0
  %401 = vmatprep.mubr.bf16.mxu0 0
  %402 = vmatmul.mubr.bf16.gmra.mrb[0].mxu0 %v82
  %v403 = vpop.f32.mrb[0].mxu0
  %v404 = vadd.f32 %v361, %v403
  %v405 = vpop.f32.mrb[0].mxu0
  %v406 = vadd.f32 %v363, %v405
  %v407 = vpop.f32.mrb[0].mxu0
  %v408 = vadd.f32 %v365, %v407
  %v409 = vpop.f32.mrb[0].mxu0
  %v410 = vadd.f32 %v367, %v409
  %411 = vdwg.mxu0
  %vm412 = vcmp.gt.f32.partialorder %v404, 0.0
  %vm413 = vcmp.gt.f32.partialorder %v406, 0.0
  %vm414 = vcmp.gt.f32.partialorder %v408, 0.0
  %vm415 = vcmp.gt.f32.partialorder %v410, 0.0
  %v416 = vmul.f32 %v404, 0.1
  %v417 = vmul.f32 %v406, 0.1
  %v418 = vmul.f32 %v408, 0.1
  %v419 = vmul.f32 %v410, 0.1
  %v420 = vsel %vm412, %v404, %v416
  %v421 = vsel %vm413, %v406, %v417
  %v422 = vsel %vm414, %v408, %v418
  %v423 = vsel %vm415, %v410, %v419
  %v424 = vpack.c.bf16 %v422, %v420
  %v425 = vpack.c.bf16 %v423, %v421
  %v426 = vld [vmem:[%s2] sm:$0xf]
  %v427 = vld [vmem:[%s2 + $0x4] sm:$0xf]
  %v428 = vld [vmem:[%s2 + $0x8] sm:$0xf]
  %v429 = vld [vmem:[%s2 + $0xc] sm:$0xf]
  %v430 = vld [vmem:[%s2 + $0x10] sm:$0xf]
  %v431 = vld [vmem:[%s2 + $0x14] sm:$0xf]
  %v432 = vld [vmem:[%s2 + $0x18] sm:$0xf]
  %v433 = vld [vmem:[%s2 + $0x1c] sm:$0xf]
  %v434 = vld [vmem:[%s2 + $0x20] sm:$0xf]
  %v435 = vld [vmem:[%s2 + $0x24] sm:$0xf]
  %v436 = vld [vmem:[%s2 + $0x28] sm:$0xf]
  %v437 = vld [vmem:[%s2 + $0x2c] sm:$0xf]
  %v438 = vld [vmem:[%s2 + $0x30] sm:$0xf]
  %v439 = vld [vmem:[%s2 + $0x34] sm:$0xf]
  %v440 = vld [vmem:[%s2 + $0x38] sm:$0xf]
  %v441 = vld [vmem:[%s2 + $0x3c] sm:$0xf]
  %v442 = vld [vmem:[%s2 + $0x40] sm:$0xf]
  %v443 = vld [vmem:[%s2 + $0x44] sm:$0xf]
  %v444 = vld [vmem:[%s2 + $0x48] sm:$0xf]
  %v445 = vld [vmem:[%s2 + $0x4c] sm:$0xf]
  %v446 = vld [vmem:[%s2 + $0x50] sm:$0xf]
  %v447 = vld [vmem:[%s2 + $0x54] sm:$0xf]
  %v448 = vld [vmem:[%s2 + $0x58] sm:$0xf]
  %v449 = vld [vmem:[%s2 + $0x5c] sm:$0xf]
  %v450 = vld [vmem:[%s2 + $0x60] sm:$0xf]
  %v451 = vld [vmem:[%s2 + $0x64] sm:$0xf]
  %v452 = vld [vmem:[%s2 + $0x68] sm:$0xf]
  %v453 = vld [vmem:[%s2 + $0x6c] sm:$0xf]
  %v454 = vld [vmem:[%s2 + $0x70] sm:$0xf]
  %v455 = vld [vmem:[%s2 + $0x74] sm:$0xf]
  %v456 = vld [vmem:[%s2 + $0x78] sm:$0xf]
  %v457 = vld [vmem:[%s2 + $0x7c] sm:$0xf]
  %v458 = vld [vmem:[%s3] sm:$0x1]
  %v460 = vlaneseq
  %v461 = vshrl.u32 %v460, 7
  %v462 = vsub.s32 0, %v461
  %v463 = vrot.slane %v458, %v462
  %v497 = vunpack.c.l.b16 %v426
  %v498 = vunpack.c.l.b16 %v427
  %v499 = vunpack.c.l.b16 %v428
  %v500 = vunpack.c.l.b16 %v429
  %v501 = vunpack.c.l.b16 %v430
  %v502 = vunpack.c.l.b16 %v431
  %v503 = vunpack.c.l.b16 %v432
  %v504 = vunpack.c.l.b16 %v433
  %v505 = vunpack.c.l.b16 %v434
  %v506 = vunpack.c.l.b16 %v435
  %v507 = vunpack.c.l.b16 %v436
  %v508 = vunpack.c.l.b16 %v437
  %v509 = vunpack.c.l.b16 %v438
  %v510 = vunpack.c.l.b16 %v439
  %v511 = vunpack.c.l.b16 %v440
  %v512 = vunpack.c.l.b16 %v441
  %v513 = vunpack.c.l.b16 %v442
  %v514 = vunpack.c.l.b16 %v443
  %v515 = vunpack.c.l.b16 %v444
  %v516 = vunpack.c.l.b16 %v445
  %v517 = vunpack.c.l.b16 %v446
  %v518 = vunpack.c.l.b16 %v447
  %v519 = vunpack.c.l.b16 %v448
  %v520 = vunpack.c.l.b16 %v449
  %v521 = vunpack.c.l.b16 %v450
  %v522 = vunpack.c.l.b16 %v451
  %v523 = vunpack.c.l.b16 %v452
  %v524 = vunpack.c.l.b16 %v453
  %v525 = vunpack.c.l.b16 %v454
  %v526 = vunpack.c.l.b16 %v455
  %v527 = vunpack.c.l.b16 %v456
  %v528 = vunpack.c.l.b16 %v457
  %v529 = vpack.c.b16 %v498, %v497
  %v530 = vpack.c.b16 %v500, %v499
  %v531 = vpack.c.b16 %v502, %v501
  %v532 = vpack.c.b16 %v504, %v503
  %v533 = vpack.c.b16 %v506, %v505
  %v534 = vpack.c.b16 %v508, %v507
  %v535 = vpack.c.b16 %v510, %v509
  %v536 = vpack.c.b16 %v512, %v511
  %v537 = vpack.c.b16 %v514, %v513
  %v538 = vpack.c.b16 %v516, %v515
  %v539 = vpack.c.b16 %v518, %v517
  %v540 = vpack.c.b16 %v520, %v519
  %v541 = vpack.c.b16 %v522, %v521
  %v542 = vpack.c.b16 %v524, %v523
  %v543 = vpack.c.b16 %v526, %v525
  %v544 = vpack.c.b16 %v528, %v527
  %561 = vmatprep.subr.bf16.mxu0 0
  %562 = vmatpush1.bf16.msra.mxu0 %v529
  %563 = vmatprep.subr.bf16.mxu0 0
  %564 = vmatpush1.bf16.msra.mxu0 %v530
  %565 = vmatprep.subr.bf16.mxu0 0
  %566 = vmatpush1.bf16.msra.mxu0 %v531
  %567 = vmatprep.subr.bf16.mxu0 0
  %568 = vmatpush1.bf16.msra.mxu0 %v532
  %569 = vmatprep.subr.bf16.mxu0 0
  %570 = vmatpush1.bf16.msra.mxu0 %v533
  %571 = vmatprep.subr.bf16.mxu0 0
  %572 = vmatpush1.bf16.msra.mxu0 %v534
  %573 = vmatprep.subr.bf16.mxu0 0
  %574 = vmatpush1.bf16.msra.mxu0 %v535
  %575 = vmatprep.subr.bf16.mxu0 0
  %576 = vmatpush1.bf16.msra.mxu0 %v536
  %577 = vmatprep.subr.bf16.mxu0 0
  %578 = vmatpush1.bf16.msra.mxu0 %v537
  %579 = vmatprep.subr.bf16.mxu0 0
  %580 = vmatpush1.bf16.msra.mxu0 %v538
  %581 = vmatprep.subr.bf16.mxu0 0
  %582 = vmatpush1.bf16.msra.mxu0 %v539
  %583 = vmatprep.subr.bf16.mxu0 0
  %584 = vmatpush1.bf16.msra.mxu0 %v540
  %585 = vmatprep.subr.bf16.mxu0 0
  %586 = vmatpush1.bf16.msra.mxu0 %v541
  %587 = vmatprep.subr.bf16.mxu0 0
  %588 = vmatpush1.bf16.msra.mxu0 %v542
  %589 = vmatprep.subr.bf16.mxu0 0
  %590 = vmatpush1.bf16.msra.mxu0 %v543
  %591 = vmatprep.subr.bf16.mxu0 0
  %592 = vmatpush1.bf16.msra.mxu0 %v544
  %593 = vmatprep.mubr.bf16.mxu0 %v425
  %594 = vmatmul.mubr.bf16.gmra.mrb[0].mxu0 %v424
  %v595 = vpop.f32.mrb[0].mxu0
  %v596 = vadd.f32 %v463, %v595
  %v597 = vpop.f32.mrb[0].mxu0
  %v598 = vpop.f32.mrb[0].mxu0
  %v599 = vadd.f32 %v463, %v598
  %v600 = vpop.f32.mrb[0].mxu0
  %601 = vdwg.mxu0
  %vm602 = vcmask 31744
  %603 = vst.msk [vmem:[%s4] sm:$0xff] %vm602, %v596
  %604 = vst.msk [vmem:[%s4 + $0x8] sm:$0xff] %vm602, %v599
  // Predicated region
  $region18: #{lnet_forward.23} parent=0 // pred_check
    _
  $region19: #{lnet_forward.23} parent=0 // pred_check_branch
    %606 = sbr.rel (0) target = $region21
  $region20: #{lnet_forward.23} parent=0 // pred_region
    _
  $region21: #{lnet_forward.23} parent=0 // pred_fallthru
    _
  // Predicated region
  $region22: #{lnet_forward.23} parent=0 // pred_check
    _
  $region23: #{lnet_forward.23} parent=0 // pred_check_branch
    %608 = sbr.rel (0) target = $region25
  $region24: #{lnet_forward.23} parent=0 // pred_region
    _
  $region25: #{lnet_forward.23} parent=0 // pred_fallthru
    _

// kernel: lnet_forward.18
$region0: #{lnet_forward.18}
  #allocation0 [shape = 'u32[]', space=smem, size = 0x4, offset = 0x4, fixed_abs, tag = 'smem constant byte address 0x4 - core index']
  #allocation1 [shape = 'u32[144,128]{1,0:T(1,128)}', space=vmem, size = 0x12000, scoped, tag = 'internal scratch']
  %s0 = inlined_call_operand.vmem [shape: bf16[16,2432], index: 0, kind: input, shape index: {}]
  %s1 = inlined_call_operand.vmem [shape: bf16[2432,256], index: 1, kind: input, shape index: {}]
  %s2 = inlined_call_operand.vmem [shape: bf16[16,256], index: 2, kind: output, shape index: {}]
  %s3 = sld [smem:[#allocation0]]
  $region18: #{lnet_forward.18} parent=0
    _
  %s5 = ssub.s32 1, %s3
  %s6 = scalar_select 0, %s5, %s3
  // Predicated region
  $region2: #{lnet_forward.18} parent=0 // pred_check
    _
  $region3: #{lnet_forward.18} parent=0 // pred_check_branch
    %8 = sbr.rel (0) target = $region5
  $region4: #{lnet_forward.18} parent=0 // pred_region
    _
  $region5: #{lnet_forward.18} parent=0 // pred_fallthru
    _
  // Predicated region
  $region6: #{lnet_forward.18} parent=0 // pred_check
    _
  $region7: #{lnet_forward.18} parent=0 // pred_check_branch
    %10 = sbr.rel (0) target = $region9
  $region8: #{lnet_forward.18} parent=0 // pred_region
    _
  $region9: #{lnet_forward.18} parent=0 // pred_fallthru
    _
  %v12 = vld [vmem:[%s0] sm:$0xff]
  %v13 = vld [vmem:[%s0 + $0x8] sm:$0xff]
  %v14 = vld [vmem:[%s0 + $0x10] sm:$0xff]
  %v15 = vld [vmem:[%s0 + $0x18] sm:$0xff]
  %v16 = vld [vmem:[%s0 + $0x20] sm:$0xff]
  %v17 = vld [vmem:[%s0 + $0x28] sm:$0xff]
  %v18 = vld [vmem:[%s0 + $0x30] sm:$0xff]
  %v19 = vld [vmem:[%s0 + $0x38] sm:$0xff]
  %v20 = vld [vmem:[%s0 + $0x40] sm:$0xff]
  %v21 = vld [vmem:[%s0 + $0x48] sm:$0xf]
  %v22 = vld [vmem:[%s0 + $0x4c] sm:$0xff]
  %v23 = vld [vmem:[%s0 + $0x54] sm:$0xff]
  %v24 = vld [vmem:[%s0 + $0x5c] sm:$0xff]
  %v25 = vld [vmem:[%s0 + $0x64] sm:$0xff]
  %v26 = vld [vmem:[%s0 + $0x6c] sm:$0xff]
  %v27 = vld [vmem:[%s0 + $0x74] sm:$0xff]
  %v28 = vld [vmem:[%s0 + $0x7c] sm:$0xff]
  %v29 = vld [vmem:[%s0 + $0x84] sm:$0xff]
  %v30 = vld [vmem:[%s0 + $0x8c] sm:$0xff]
  %v31 = vld [vmem:[%s0 + $0x94] sm:$0xf]
  %v32 = vld [vmem:[%s1] sm:$0xff]
  %v33 = vld [vmem:[%s1 + $0x8] sm:$0xff]
  %v34 = vld [vmem:[%s1 + $0x10] sm:$0xff]
  %v35 = vld [vmem:[%s1 + $0x18] sm:$0xff]
  %v36 = vld [vmem:[%s1 + $0x20] sm:$0xff]
  %v37 = vld [vmem:[%s1 + $0x28] sm:$0xff]
  %v38 = vld [vmem:[%s1 + $0x30] sm:$0xff]
  %v39 = vld [vmem:[%s1 + $0x38] sm:$0xff]
  %v40 = vld [vmem:[%s1 + $0x40] sm:$0xff]
  %v41 = vld [vmem:[%s1 + $0x48] sm:$0xff]
  %v42 = vld [vmem:[%s1 + $0x50] sm:$0xff]
  %v43 = vld [vmem:[%s1 + $0x58] sm:$0xff]
  %v44 = vld [vmem:[%s1 + $0x60] sm:$0xff]
  %v45 = vld [vmem:[%s1 + $0x68] sm:$0xff]
  %v46 = vld [vmem:[%s1 + $0x70] sm:$0xff]
  %v47 = vld [vmem:[%s1 + $0x78] sm:$0xff]
  %v48 = vld [vmem:[%s1 + $0x80] sm:$0xff]
  %v49 = vld [vmem:[%s1 + $0x88] sm:$0xff]
  %v50 = vld [vmem:[%s1 + $0x90] sm:$0xff]
  %v51 = vld [vmem:[%s1 + $0x98] sm:$0xff]
  %v52 = vld [vmem:[%s1 + $0xa0] sm:$0xff]
  %v53 = vld [vmem:[%s1 + $0xa8] sm:$0xff]
  %v54 = vld [vmem:[%s1 + $0xb0] sm:$0xff]
  %v55 = vld [vmem:[%s1 + $0xb8] sm:$0xff]
  %v56 = vld [vmem:[%s1 + $0xc0] sm:$0xff]
  %v57 = vld [vmem:[%s1 + $0xc8] sm:$0xff]
  %v58 = vld [vmem:[%s1 + $0xd0] sm:$0xff]
  %v59 = vld [vmem:[%s1 + $0xd8] sm:$0xff]
  %v60 = vld [vmem:[%s1 + $0xe0] sm:$0xff]
  %v61 = vld [vmem:[%s1 + $0xe8] sm:$0xff]
  %v62 = vld [vmem:[%s1 + $0xf0] sm:$0xff]
  %v63 = vld [vmem:[%s1 + $0xf8] sm:$0xff]
  %v64 = vld [vmem:[%s1 + $0x100] sm:$0xff]
  %v65 = vld [vmem:[%s1 + $0x108] sm:$0xff]
  %v66 = vld [vmem:[%s1 + $0x110] sm:$0xff]
  %v67 = vld [vmem:[%s1 + $0x118] sm:$0xff]
  %v68 = vld [vmem:[%s1 + $0x120] sm:$0xff]
  %v69 = vld [vmem:[%s1 + $0x128] sm:$0xff]
  %v70 = vld [vmem:[%s1 + $0x130] sm:$0xff]
  %v71 = vld [vmem:[%s1 + $0x138] sm:$0xff]
  %v72 = vld [vmem:[%s1 + $0x140] sm:$0xff]
  %v73 = vld [vmem:[%s1 + $0x148] sm:$0xff]
  %v74 = vld [vmem:[%s1 + $0x150] sm:$0xff]
  %v75 = vld [vmem:[%s1 + $0x158] sm:$0xff]
  %v76 = vld [vmem:[%s1 + $0x160] sm:$0xff]
  %v77 = vld [vmem:[%s1 + $0x168] sm:$0xff]
  %v78 = vld [vmem:[%s1 + $0x170] sm:$0xff]
  %v79 = vld [vmem:[%s1 + $0x178] sm:$0xff]
  %v80 = vld [vmem:[%s1 + $0x180] sm:$0xff]
  %v81 = vld [vmem:[%s1 + $0x188] sm:$0xff]
  %v82 = vld [vmem:[%s1 + $0x190] sm:$0xff]
  %v83 = vld [vmem:[%s1 + $0x198] sm:$0xff]
  %v84 = vld [vmem:[%s1 + $0x1a0] sm:$0xff]
  %v85 = vld [vmem:[%s1 + $0x1a8] sm:$0xff]
  %v86 = vld [vmem:[%s1 + $0x1b0] sm:$0xff]
  %v87 = vld [vmem:[%s1 + $0x1b8] sm:$0xff]
  %v88 = vld [vmem:[%s1 + $0x1c0] sm:$0xff]
  %v89 = vld [vmem:[%s1 + $0x1c8] sm:$0xff]
  %v90 = vld [vmem:[%s1 + $0x1d0] sm:$0xff]
  %v91 = vld [vmem:[%s1 + $0x1d8] sm:$0xff]
  %v92 = vld [vmem:[%s1 + $0x1e0] sm:$0xff]
  %v93 = vld [vmem:[%s1 + $0x1e8] sm:$0xff]
  %v94 = vld [vmem:[%s1 + $0x1f0] sm:$0xff]
  %v95 = vld [vmem:[%s1 + $0x1f8] sm:$0xff]
  %v96 = vld [vmem:[%s1 + $0x200] sm:$0xff]
  %v97 = vld [vmem:[%s1 + $0x208] sm:$0xff]
  %v98 = vld [vmem:[%s1 + $0x210] sm:$0xff]
  %v99 = vld [vmem:[%s1 + $0x218] sm:$0xff]
  %v100 = vld [vmem:[%s1 + $0x220] sm:$0xff]
  %v101 = vld [vmem:[%s1 + $0x228] sm:$0xff]
  %v102 = vld [vmem:[%s1 + $0x230] sm:$0xff]
  %v103 = vld [vmem:[%s1 + $0x238] sm:$0xff]
  %v104 = vld [vmem:[%s1 + $0x240] sm:$0xff]
  %v105 = vld [vmem:[%s1 + $0x248] sm:$0xff]
  %v106 = vld [vmem:[%s1 + $0x250] sm:$0xff]
  %v107 = vld [vmem:[%s1 + $0x258] sm:$0xff]
  %v108 = vld [vmem:[%s1 + $0x260] sm:$0xff]
  %v109 = vld [vmem:[%s1 + $0x268] sm:$0xff]
  %v110 = vld [vmem:[%s1 + $0x270] sm:$0xff]
  %v111 = vld [vmem:[%s1 + $0x278] sm:$0xff]
  %v112 = vld [vmem:[%s1 + $0x280] sm:$0xff]
  %v113 = vld [vmem:[%s1 + $0x288] sm:$0xff]
  %v114 = vld [vmem:[%s1 + $0x290] sm:$0xff]
  %v115 = vld [vmem:[%s1 + $0x298] sm:$0xff]
  %v116 = vld [vmem:[%s1 + $0x2a0] sm:$0xff]
  %v117 = vld [vmem:[%s1 + $0x2a8] sm:$0xff]
  %v118 = vld [vmem:[%s1 + $0x2b0] sm:$0xff]
  %v119 = vld [vmem:[%s1 + $0x2b8] sm:$0xff]
  %v120 = vld [vmem:[%s1 + $0x2c0] sm:$0xff]
  %v121 = vld [vmem:[%s1 + $0x2c8] sm:$0xff]
  %v122 = vld [vmem:[%s1 + $0x2d0] sm:$0xff]
  %v123 = vld [vmem:[%s1 + $0x2d8] sm:$0xff]
  %v124 = vld [vmem:[%s1 + $0x2e0] sm:$0xff]
  %v125 = vld [vmem:[%s1 + $0x2e8] sm:$0xff]
  %v126 = vld [vmem:[%s1 + $0x2f0] sm:$0xff]
  %v127 = vld [vmem:[%s1 + $0x2f8] sm:$0xff]
  %v128 = vld [vmem:[%s1 + $0x300] sm:$0xff]
  %v129 = vld [vmem:[%s1 + $0x308] sm:$0xff]
  %v130 = vld [vmem:[%s1 + $0x310] sm:$0xff]
  %v131 = vld [vmem:[%s1 + $0x318] sm:$0xff]
  %v132 = vld [vmem:[%s1 + $0x320] sm:$0xff]
  %v133 = vld [vmem:[%s1 + $0x328] sm:$0xff]
  %v134 = vld [vmem:[%s1 + $0x330] sm:$0xff]
  %v135 = vld [vmem:[%s1 + $0x338] sm:$0xff]
  %v136 = vld [vmem:[%s1 + $0x340] sm:$0xff]
  %v137 = vld [vmem:[%s1 + $0x348] sm:$0xff]
  %v138 = vld [vmem:[%s1 + $0x350] sm:$0xff]
  %v139 = vld [vmem:[%s1 + $0x358] sm:$0xff]
  %v140 = vld [vmem:[%s1 + $0x360] sm:$0xff]
  %v141 = vld [vmem:[%s1 + $0x368] sm:$0xff]
  %v142 = vld [vmem:[%s1 + $0x370] sm:$0xff]
  %v143 = vld [vmem:[%s1 + $0x378] sm:$0xff]
  %v144 = vld [vmem:[%s1 + $0x380] sm:$0xff]
  %v145 = vld [vmem:[%s1 + $0x388] sm:$0xff]
  %v146 = vld [vmem:[%s1 + $0x390] sm:$0xff]
  %v147 = vld [vmem:[%s1 + $0x398] sm:$0xff]
  %v148 = vld [vmem:[%s1 + $0x3a0] sm:$0xff]
  %v149 = vld [vmem:[%s1 + $0x3a8] sm:$0xff]
  %v150 = vld [vmem:[%s1 + $0x3b0] sm:$0xff]
  %v151 = vld [vmem:[%s1 + $0x3b8] sm:$0xff]
  %v152 = vld [vmem:[%s1 + $0x3c0] sm:$0xff]
  %v153 = vld [vmem:[%s1 + $0x3c8] sm:$0xff]
  %v154 = vld [vmem:[%s1 + $0x3d0] sm:$0xff]
  %v155 = vld [vmem:[%s1 + $0x3d8] sm:$0xff]
  %v156 = vld [vmem:[%s1 + $0x3e0] sm:$0xff]
  %v157 = vld [vmem:[%s1 + $0x3e8] sm:$0xff]
  %v158 = vld [vmem:[%s1 + $0x3f0] sm:$0xff]
  %v159 = vld [vmem:[%s1 + $0x3f8] sm:$0xff]
  %v160 = vld [vmem:[%s1 + $0x400] sm:$0xff]
  %v161 = vld [vmem:[%s1 + $0x408] sm:$0xff]
  %v162 = vld [vmem:[%s1 + $0x410] sm:$0xff]
  %v163 = vld [vmem:[%s1 + $0x418] sm:$0xff]
  %v164 = vld [vmem:[%s1 + $0x420] sm:$0xff]
  %v165 = vld [vmem:[%s1 + $0x428] sm:$0xff]
  %v166 = vld [vmem:[%s1 + $0x430] sm:$0xff]
  %v167 = vld [vmem:[%s1 + $0x438] sm:$0xff]
  %v168 = vld [vmem:[%s1 + $0x440] sm:$0xff]
  %v169 = vld [vmem:[%s1 + $0x448] sm:$0xff]
  %v170 = vld [vmem:[%s1 + $0x450] sm:$0xff]
  %v171 = vld [vmem:[%s1 + $0x458] sm:$0xff]
  %v172 = vld [vmem:[%s1 + $0x460] sm:$0xff]
  %v173 = vld [vmem:[%s1 + $0x468] sm:$0xff]
  %v174 = vld [vmem:[%s1 + $0x470] sm:$0xff]
  %v175 = vld [vmem:[%s1 + $0x478] sm:$0xff]
  %v176 = vld [vmem:[%s1 + $0x480] sm:$0xff]
  %v177 = vld [vmem:[%s1 + $0x488] sm:$0xff]
  %v178 = vld [vmem:[%s1 + $0x490] sm:$0xff]
  %v179 = vld [vmem:[%s1 + $0x498] sm:$0xff]
  %v180 = vld [vmem:[%s1 + $0x4a0] sm:$0xff]
  %v181 = vld [vmem:[%s1 + $0x4a8] sm:$0xff]
  %v182 = vld [vmem:[%s1 + $0x4b0] sm:$0xff]
  %v183 = vld [vmem:[%s1 + $0x4b8] sm:$0xff]
  %v184 = vld [vmem:[%s1 + $0x4c0] sm:$0xff]
  %v185 = vld [vmem:[%s1 + $0x4c8] sm:$0xff]
  %v186 = vld [vmem:[%s1 + $0x4d0] sm:$0xff]
  %v187 = vld [vmem:[%s1 + $0x4d8] sm:$0xff]
  %v188 = vld [vmem:[%s1 + $0x4e0] sm:$0xff]
  %v189 = vld [vmem:[%s1 + $0x4e8] sm:$0xff]
  %v190 = vld [vmem:[%s1 + $0x4f0] sm:$0xff]
  %v191 = vld [vmem:[%s1 + $0x4f8] sm:$0xff]
  %v192 = vld [vmem:[%s1 + $0x500] sm:$0xff]
  %v193 = vld [vmem:[%s1 + $0x508] sm:$0xff]
  %v194 = vld [vmem:[%s1 + $0x510] sm:$0xff]
  %v195 = vld [vmem:[%s1 + $0x518] sm:$0xff]
  %v196 = vld [vmem:[%s1 + $0x520] sm:$0xff]
  %v197 = vld [vmem:[%s1 + $0x528] sm:$0xff]
  %v198 = vld [vmem:[%s1 + $0x530] sm:$0xff]
  %v199 = vld [vmem:[%s1 + $0x538] sm:$0xff]
  %v200 = vld [vmem:[%s1 + $0x540] sm:$0xff]
  %v201 = vld [vmem:[%s1 + $0x548] sm:$0xff]
  %v202 = vld [vmem:[%s1 + $0x550] sm:$0xff]
  %v203 = vld [vmem:[%s1 + $0x558] sm:$0xff]
  %v204 = vld [vmem:[%s1 + $0x560] sm:$0xff]
  %v205 = vld [vmem:[%s1 + $0x568] sm:$0xff]
  %v206 = vld [vmem:[%s1 + $0x570] sm:$0xff]
  %v207 = vld [vmem:[%s1 + $0x578] sm:$0xff]
  %v208 = vld [vmem:[%s1 + $0x580] sm:$0xff]
  %v209 = vld [vmem:[%s1 + $0x588] sm:$0xff]
  %v210 = vld [vmem:[%s1 + $0x590] sm:$0xff]
  %v211 = vld [vmem:[%s1 + $0x598] sm:$0xff]
  %v212 = vld [vmem:[%s1 + $0x5a0] sm:$0xff]
  %v213 = vld [vmem:[%s1 + $0x5a8] sm:$0xff]
  %v214 = vld [vmem:[%s1 + $0x5b0] sm:$0xff]
  %v215 = vld [vmem:[%s1 + $0x5b8] sm:$0xff]
  %v216 = vld [vmem:[%s1 + $0x5c0] sm:$0xff]
  %v217 = vld [vmem:[%s1 + $0x5c8] sm:$0xff]
  %v218 = vld [vmem:[%s1 + $0x5d0] sm:$0xff]
  %v219 = vld [vmem:[%s1 + $0x5d8] sm:$0xff]
  %v220 = vld [vmem:[%s1 + $0x5e0] sm:$0xff]
  %v221 = vld [vmem:[%s1 + $0x5e8] sm:$0xff]
  %v222 = vld [vmem:[%s1 + $0x5f0] sm:$0xff]
  %v223 = vld [vmem:[%s1 + $0x5f8] sm:$0xff]
  %v224 = vld [vmem:[%s1 + $0x600] sm:$0xff]
  %v225 = vld [vmem:[%s1 + $0x608] sm:$0xff]
  %v226 = vld [vmem:[%s1 + $0x610] sm:$0xff]
  %v227 = vld [vmem:[%s1 + $0x618] sm:$0xff]
  %v228 = vld [vmem:[%s1 + $0x620] sm:$0xff]
  %v229 = vld [vmem:[%s1 + $0x628] sm:$0xff]
  %v230 = vld [vmem:[%s1 + $0x630] sm:$0xff]
  %v231 = vld [vmem:[%s1 + $0x638] sm:$0xff]
  %v232 = vld [vmem:[%s1 + $0x640] sm:$0xff]
  %v233 = vld [vmem:[%s1 + $0x648] sm:$0xff]
  %v234 = vld [vmem:[%s1 + $0x650] sm:$0xff]
  %v235 = vld [vmem:[%s1 + $0x658] sm:$0xff]
  %v236 = vld [vmem:[%s1 + $0x660] sm:$0xff]
  %v237 = vld [vmem:[%s1 + $0x668] sm:$0xff]
  %v238 = vld [vmem:[%s1 + $0x670] sm:$0xff]
  %v239 = vld [vmem:[%s1 + $0x678] sm:$0xff]
  %v240 = vld [vmem:[%s1 + $0x680] sm:$0xff]
  %v241 = vld [vmem:[%s1 + $0x688] sm:$0xff]
  %v242 = vld [vmem:[%s1 + $0x690] sm:$0xff]
  %v243 = vld [vmem:[%s1 + $0x698] sm:$0xff]
  %v244 = vld [vmem:[%s1 + $0x6a0] sm:$0xff]
  %v245 = vld [vmem:[%s1 + $0x6a8] sm:$0xff]
  %v246 = vld [vmem:[%s1 + $0x6b0] sm:$0xff]
  %v247 = vld [vmem:[%s1 + $0x6b8] sm:$0xff]
  %v248 = vld [vmem:[%s1 + $0x6c0] sm:$0xff]
  %v249 = vld [vmem:[%s1 + $0x6c8] sm:$0xff]
  %v250 = vld [vmem:[%s1 + $0x6d0] sm:$0xff]
  %v251 = vld [vmem:[%s1 + $0x6d8] sm:$0xff]
  %v252 = vld [vmem:[%s1 + $0x6e0] sm:$0xff]
  %v253 = vld [vmem:[%s1 + $0x6e8] sm:$0xff]
  %v254 = vld [vmem:[%s1 + $0x6f0] sm:$0xff]
  %v255 = vld [vmem:[%s1 + $0x6f8] sm:$0xff]
  %v256 = vld [vmem:[%s1 + $0x700] sm:$0xff]
  %v257 = vld [vmem:[%s1 + $0x708] sm:$0xff]
  %v258 = vld [vmem:[%s1 + $0x710] sm:$0xff]
  %v259 = vld [vmem:[%s1 + $0x718] sm:$0xff]
  %v260 = vld [vmem:[%s1 + $0x720] sm:$0xff]
  %v261 = vld [vmem:[%s1 + $0x728] sm:$0xff]
  %v262 = vld [vmem:[%s1 + $0x730] sm:$0xff]
  %v263 = vld [vmem:[%s1 + $0x738] sm:$0xff]
  %v264 = vld [vmem:[%s1 + $0x740] sm:$0xff]
  %v265 = vld [vmem:[%s1 + $0x748] sm:$0xff]
  %v266 = vld [vmem:[%s1 + $0x750] sm:$0xff]
  %v267 = vld [vmem:[%s1 + $0x758] sm:$0xff]
  %v268 = vld [vmem:[%s1 + $0x760] sm:$0xff]
  %v269 = vld [vmem:[%s1 + $0x768] sm:$0xff]
  %v270 = vld [vmem:[%s1 + $0x770] sm:$0xff]
  %v271 = vld [vmem:[%s1 + $0x778] sm:$0xff]
  %v272 = vld [vmem:[%s1 + $0x780] sm:$0xff]
  %v273 = vld [vmem:[%s1 + $0x788] sm:$0xff]
  %v274 = vld [vmem:[%s1 + $0x790] sm:$0xff]
  %v275 = vld [vmem:[%s1 + $0x798] sm:$0xff]
  %v276 = vld [vmem:[%s1 + $0x7a0] sm:$0xff]
  %v277 = vld [vmem:[%s1 + $0x7a8] sm:$0xff]
  %v278 = vld [vmem:[%s1 + $0x7b0] sm:$0xff]
  %v279 = vld [vmem:[%s1 + $0x7b8] sm:$0xff]
  %v280 = vld [vmem:[%s1 + $0x7c0] sm:$0xff]
  %v281 = vld [vmem:[%s1 + $0x7c8] sm:$0xff]
  %v282 = vld [vmem:[%s1 + $0x7d0] sm:$0xff]
  %v283 = vld [vmem:[%s1 + $0x7d8] sm:$0xff]
  %v284 = vld [vmem:[%s1 + $0x7e0] sm:$0xff]
  %v285 = vld [vmem:[%s1 + $0x7e8] sm:$0xff]
  %v286 = vld [vmem:[%s1 + $0x7f0] sm:$0xff]
  %v287 = vld [vmem:[%s1 + $0x7f8] sm:$0xff]
  %v288 = vld [vmem:[%s1 + $0x800] sm:$0xff]
  %v289 = vld [vmem:[%s1 + $0x808] sm:$0xff]
  %v290 = vld [vmem:[%s1 + $0x810] sm:$0xff]
  %v291 = vld [vmem:[%s1 + $0x818] sm:$0xff]
  %v292 = vld [vmem:[%s1 + $0x820] sm:$0xff]
  %v293 = vld [vmem:[%s1 + $0x828] sm:$0xff]
  %v294 = vld [vmem:[%s1 + $0x830] sm:$0xff]
  %v295 = vld [vmem:[%s1 + $0x838] sm:$0xff]
  %v296 = vld [vmem:[%s1 + $0x840] sm:$0xff]
  %v297 = vld [vmem:[%s1 + $0x848] sm:$0xff]
  %v298 = vld [vmem:[%s1 + $0x850] sm:$0xff]
  %v299 = vld [vmem:[%s1 + $0x858] sm:$0xff]
  %v300 = vld [vmem:[%s1 + $0x860] sm:$0xff]
  %v301 = vld [vmem:[%s1 + $0x868] sm:$0xff]
  %v302 = vld [vmem:[%s1 + $0x870] sm:$0xff]
  %v303 = vld [vmem:[%s1 + $0x878] sm:$0xff]
  %v304 = vld [vmem:[%s1 + $0x880] sm:$0xff]
  %v305 = vld [vmem:[%s1 + $0x888] sm:$0xff]
  %v306 = vld [vmem:[%s1 + $0x890] sm:$0xff]
  %v307 = vld [vmem:[%s1 + $0x898] sm:$0xff]
  %v308 = vld [vmem:[%s1 + $0x8a0] sm:$0xff]
  %v309 = vld [vmem:[%s1 + $0x8a8] sm:$0xff]
  %v310 = vld [vmem:[%s1 + $0x8b0] sm:$0xff]
  %v311 = vld [vmem:[%s1 + $0x8b8] sm:$0xff]
  %v312 = vld [vmem:[%s1 + $0x8c0] sm:$0xff]
  %v313 = vld [vmem:[%s1 + $0x8c8] sm:$0xff]
  %v314 = vld [vmem:[%s1 + $0x8d0] sm:$0xff]
  %v315 = vld [vmem:[%s1 + $0x8d8] sm:$0xff]
  %v316 = vld [vmem:[%s1 + $0x8e0] sm:$0xff]
  %v317 = vld [vmem:[%s1 + $0x8e8] sm:$0xff]
  %v318 = vld [vmem:[%s1 + $0x8f0] sm:$0xff]
  %v319 = vld [vmem:[%s1 + $0x8f8] sm:$0xff]
  %v320 = vld [vmem:[%s1 + $0x900] sm:$0xff]
  %v321 = vld [vmem:[%s1 + $0x908] sm:$0xff]
  %v322 = vld [vmem:[%s1 + $0x910] sm:$0xff]
  %v323 = vld [vmem:[%s1 + $0x918] sm:$0xff]
  %v324 = vld [vmem:[%s1 + $0x920] sm:$0xff]
  %v325 = vld [vmem:[%s1 + $0x928] sm:$0xff]
  %v326 = vld [vmem:[%s1 + $0x930] sm:$0xff]
  %v327 = vld [vmem:[%s1 + $0x938] sm:$0xff]
  %v328 = vld [vmem:[%s1 + $0x940] sm:$0xff]
  %v329 = vld [vmem:[%s1 + $0x948] sm:$0xff]
  %v330 = vld [vmem:[%s1 + $0x950] sm:$0xff]
  %v331 = vld [vmem:[%s1 + $0x958] sm:$0xff]
  %v332 = vld [vmem:[%s1 + $0x960] sm:$0xff]
  %v333 = vld [vmem:[%s1 + $0x968] sm:$0xff]
  %v334 = vld [vmem:[%s1 + $0x970] sm:$0xff]
  %v335 = vld [vmem:[%s1 + $0x978] sm:$0xff]
  %v356 = vunpack.c.l.b16 %v12
  %v357 = vunpack.c.h.b16 %v12
  %v358 = vunpack.c.l.b16 %v13
  %v359 = vunpack.c.h.b16 %v13
  %v360 = vunpack.c.l.b16 %v14
  %v361 = vunpack.c.h.b16 %v14
  %v362 = vunpack.c.l.b16 %v15
  %v363 = vunpack.c.h.b16 %v15
  %v364 = vunpack.c.l.b16 %v16
  %v365 = vunpack.c.h.b16 %v16
  %v366 = vunpack.c.l.b16 %v17
  %v367 = vunpack.c.h.b16 %v17
  %v368 = vunpack.c.l.b16 %v18
  %v369 = vunpack.c.h.b16 %v18
  %v370 = vunpack.c.l.b16 %v19
  %v371 = vunpack.c.h.b16 %v19
  %v372 = vunpack.c.l.b16 %v20
  %v373 = vunpack.c.h.b16 %v20
  %v374 = vunpack.c.l.b16 %v21
  %v375 = vunpack.c.l.b16 %v22
  %v376 = vunpack.c.h.b16 %v22
  %v377 = vunpack.c.l.b16 %v23
  %v378 = vunpack.c.h.b16 %v23
  %v379 = vunpack.c.l.b16 %v24
  %v380 = vunpack.c.h.b16 %v24
  %v381 = vunpack.c.l.b16 %v25
  %v382 = vunpack.c.h.b16 %v25
  %v383 = vunpack.c.l.b16 %v26
  %v384 = vunpack.c.h.b16 %v26
  %v385 = vunpack.c.l.b16 %v27
  %v386 = vunpack.c.h.b16 %v27
  %v387 = vunpack.c.l.b16 %v28
  %v388 = vunpack.c.h.b16 %v28
  %v389 = vunpack.c.l.b16 %v29
  %v390 = vunpack.c.h.b16 %v29
  %v391 = vunpack.c.l.b16 %v30
  %v392 = vunpack.c.h.b16 %v30
  %v393 = vunpack.c.l.b16 %v31
  %v394 = vpack.c.b16 %v375, %v356
  %v395 = vpack.c.b16 %v376, %v357
  %v396 = vpack.c.b16 %v377, %v358
  %v397 = vpack.c.b16 %v378, %v359
  %v398 = vpack.c.b16 %v379, %v360
  %v399 = vpack.c.b16 %v380, %v361
  %v400 = vpack.c.b16 %v381, %v362
  %v401 = vpack.c.b16 %v382, %v363
  %v402 = vpack.c.b16 %v383, %v364
  %v403 = vpack.c.b16 %v384, %v365
  %v404 = vpack.c.b16 %v385, %v366
  %v405 = vpack.c.b16 %v386, %v367
  %v406 = vpack.c.b16 %v387, %v368
  %v407 = vpack.c.b16 %v388, %v369
  %v408 = vpack.c.b16 %v389, %v370
  %v409 = vpack.c.b16 %v390, %v371
  %v410 = vpack.c.b16 %v391, %v372
  %v411 = vpack.c.b16 %v392, %v373
  %v412 = vpack.c.b16 %v393, %v374
  %v736 = vunpack.c.l.b16 %v32
  %v737 = vunpack.c.h.b16 %v32
  %v738 = vunpack.c.l.b16 %v33
  %v739 = vunpack.c.h.b16 %v33
  %v740 = vunpack.c.l.b16 %v34
  %v741 = vunpack.c.h.b16 %v34
  %v742 = vunpack.c.l.b16 %v35
  %v743 = vunpack.c.h.b16 %v35
  %v744 = vunpack.c.l.b16 %v36
  %v745 = vunpack.c.h.b16 %v36
  %v746 = vunpack.c.l.b16 %v37
  %v747 = vunpack.c.h.b16 %v37
  %v748 = vunpack.c.l.b16 %v38
  %v749 = vunpack.c.h.b16 %v38
  %v750 = vunpack.c.l.b16 %v39
  %v751 = vunpack.c.h.b16 %v39
  %v752 = vunpack.c.l.b16 %v40
  %v753 = vunpack.c.h.b16 %v40
  %v754 = vunpack.c.l.b16 %v41
  %v755 = vunpack.c.h.b16 %v41
  %v756 = vunpack.c.l.b16 %v42
  %v757 = vunpack.c.h.b16 %v42
  %v758 = vunpack.c.l.b16 %v43
  %v759 = vunpack.c.h.b16 %v43
  %v760 = vunpack.c.l.b16 %v44
  %v761 = vunpack.c.h.b16 %v44
  %v762 = vunpack.c.l.b16 %v45
  %v763 = vunpack.c.h.b16 %v45
  %v764 = vunpack.c.l.b16 %v46
  %v765 = vunpack.c.h.b16 %v46
  %v766 = vunpack.c.l.b16 %v47
  %v767 = vunpack.c.h.b16 %v47
  %v768 = vunpack.c.l.b16 %v48
  %v769 = vunpack.c.h.b16 %v48
  %v770 = vunpack.c.l.b16 %v49
  %v771 = vunpack.c.h.b16 %v49
  %v772 = vunpack.c.l.b16 %v50
  %v773 = vunpack.c.h.b16 %v50
  %v774 = vunpack.c.l.b16 %v51
  %v775 = vunpack.c.h.b16 %v51
  %v776 = vunpack.c.l.b16 %v52
  %v777 = vunpack.c.h.b16 %v52
  %v778 = vunpack.c.l.b16 %v53
  %v779 = vunpack.c.h.b16 %v53
  %v780 = vunpack.c.l.b16 %v54
  %v781 = vunpack.c.h.b16 %v54
  %v782 = vunpack.c.l.b16 %v55
  %v783 = vunpack.c.h.b16 %v55
  %v784 = vunpack.c.l.b16 %v56
  %v785 = vunpack.c.h.b16 %v56
  %v786 = vunpack.c.l.b16 %v57
  %v787 = vunpack.c.h.b16 %v57
  %v788 = vunpack.c.l.b16 %v58
  %v789 = vunpack.c.h.b16 %v58
  %v790 = vunpack.c.l.b16 %v59
  %v791 = vunpack.c.h.b16 %v59
  %v792 = vunpack.c.l.b16 %v60
  %v793 = vunpack.c.h.b16 %v60
  %v794 = vunpack.c.l.b16 %v61
  %v795 = vunpack.c.h.b16 %v61
  %v796 = vunpack.c.l.b16 %v62
  %v797 = vunpack.c.h.b16 %v62
  %v798 = vunpack.c.l.b16 %v63
  %v799 = vunpack.c.h.b16 %v63
  %v800 = vunpack.c.l.b16 %v64
  %v801 = vunpack.c.h.b16 %v64
  %v802 = vunpack.c.l.b16 %v65
  %v803 = vunpack.c.h.b16 %v65
  %v804 = vunpack.c.l.b16 %v66
  %v805 = vunpack.c.h.b16 %v66
  %v806 = vunpack.c.l.b16 %v67
  %v807 = vunpack.c.h.b16 %v67
  %v808 = vunpack.c.l.b16 %v68
  %v809 = vunpack.c.h.b16 %v68
  %v810 = vunpack.c.l.b16 %v69
  %v811 = vunpack.c.h.b16 %v69
  %v812 = vunpack.c.l.b16 %v70
  %v813 = vunpack.c.h.b16 %v70
  %v814 = vunpack.c.l.b16 %v71
  %v815 = vunpack.c.h.b16 %v71
  %v816 = vunpack.c.l.b16 %v72
  %v817 = vunpack.c.h.b16 %v72
  %v818 = vunpack.c.l.b16 %v73
  %v819 = vunpack.c.h.b16 %v73
  %v820 = vunpack.c.l.b16 %v74
  %v821 = vunpack.c.h.b16 %v74
  %v822 = vunpack.c.l.b16 %v75
  %v823 = vunpack.c.h.b16 %v75
  %v824 = vunpack.c.l.b16 %v76
  %v825 = vunpack.c.h.b16 %v76
  %v826 = vunpack.c.l.b16 %v77
  %v827 = vunpack.c.h.b16 %v77
  %v828 = vunpack.c.l.b16 %v78
  %v829 = vunpack.c.h.b16 %v78
  %v830 = vunpack.c.l.b16 %v79
  %v831 = vunpack.c.h.b16 %v79
  %v832 = vunpack.c.l.b16 %v80
  %v833 = vunpack.c.h.b16 %v80
  %v834 = vunpack.c.l.b16 %v81
  %v835 = vunpack.c.h.b16 %v81
  %v836 = vunpack.c.l.b16 %v82
  %v837 = vunpack.c.h.b16 %v82
  %v838 = vunpack.c.l.b16 %v83
  %v839 = vunpack.c.h.b16 %v83
  %v840 = vunpack.c.l.b16 %v84
  %v841 = vunpack.c.h.b16 %v84
  %v842 = vunpack.c.l.b16 %v85
  %v843 = vunpack.c.h.b16 %v85
  %v844 = vunpack.c.l.b16 %v86
  %v845 = vunpack.c.h.b16 %v86
  %v846 = vunpack.c.l.b16 %v87
  %v847 = vunpack.c.h.b16 %v87
  %v848 = vunpack.c.l.b16 %v88
  %v849 = vunpack.c.h.b16 %v88
  %v850 = vunpack.c.l.b16 %v89
  %v851 = vunpack.c.h.b16 %v89
  %v852 = vunpack.c.l.b16 %v90
  %v853 = vunpack.c.h.b16 %v90
  %v854 = vunpack.c.l.b16 %v91
  %v855 = vunpack.c.h.b16 %v91
  %v856 = vunpack.c.l.b16 %v92
  %v857 = vunpack.c.h.b16 %v92
  %v858 = vunpack.c.l.b16 %v93
  %v859 = vunpack.c.h.b16 %v93
  %v860 = vunpack.c.l.b16 %v94
  %v861 = vunpack.c.h.b16 %v94
  %v862 = vunpack.c.l.b16 %v95
  %v863 = vunpack.c.h.b16 %v95
  %v864 = vunpack.c.l.b16 %v96
  %v865 = vunpack.c.h.b16 %v96
  %v866 = vunpack.c.l.b16 %v97
  %v867 = vunpack.c.h.b16 %v97
  %v868 = vunpack.c.l.b16 %v98
  %v869 = vunpack.c.h.b16 %v98
  %v870 = vunpack.c.l.b16 %v99
  %v871 = vunpack.c.h.b16 %v99
  %v872 = vunpack.c.l.b16 %v100
  %v873 = vunpack.c.h.b16 %v100
  %v874 = vunpack.c.l.b16 %v101
  %v875 = vunpack.c.h.b16 %v101
  %v876 = vunpack.c.l.b16 %v102
  %v877 = vunpack.c.h.b16 %v102
  %v878 = vunpack.c.l.b16 %v103
  %v879 = vunpack.c.h.b16 %v103
  %v880 = vunpack.c.l.b16 %v104
  %v881 = vunpack.c.h.b16 %v104
  %v882 = vunpack.c.l.b16 %v105
  %v883 = vunpack.c.h.b16 %v105
  %v884 = vunpack.c.l.b16 %v106
  %v885 = vunpack.c.h.b16 %v106
  %v886 = vunpack.c.l.b16 %v107
  %v887 = vunpack.c.h.b16 %v107
  %v888 = vunpack.c.l.b16 %v108
  %v889 = vunpack.c.h.b16 %v108
  %v890 = vunpack.c.l.b16 %v109
  %v891 = vunpack.c.h.b16 %v109
  %v892 = vunpack.c.l.b16 %v110
  %v893 = vunpack.c.h.b16 %v110
  %v894 = vunpack.c.l.b16 %v111
  %v895 = vunpack.c.h.b16 %v111
  %v896 = vunpack.c.l.b16 %v112
  %v897 = vunpack.c.h.b16 %v112
  %v898 = vunpack.c.l.b16 %v113
  %v899 = vunpack.c.h.b16 %v113
  %v900 = vunpack.c.l.b16 %v114
  %v901 = vunpack.c.h.b16 %v114
  %v902 = vunpack.c.l.b16 %v115
  %v903 = vunpack.c.h.b16 %v115
  %v904 = vunpack.c.l.b16 %v116
  %v905 = vunpack.c.h.b16 %v116
  %v906 = vunpack.c.l.b16 %v117
  %v907 = vunpack.c.h.b16 %v117
  %v908 = vunpack.c.l.b16 %v118
  %v909 = vunpack.c.h.b16 %v118
  %v910 = vunpack.c.l.b16 %v119
  %v911 = vunpack.c.h.b16 %v119
  %v912 = vunpack.c.l.b16 %v120
  %v913 = vunpack.c.h.b16 %v120
  %v914 = vunpack.c.l.b16 %v121
  %v915 = vunpack.c.h.b16 %v121
  %v916 = vunpack.c.l.b16 %v122
  %v917 = vunpack.c.h.b16 %v122
  %v918 = vunpack.c.l.b16 %v123
  %v919 = vunpack.c.h.b16 %v123
  %v920 = vunpack.c.l.b16 %v124
  %v921 = vunpack.c.h.b16 %v124
  %v922 = vunpack.c.l.b16 %v125
  %v923 = vunpack.c.h.b16 %v125
  %v924 = vunpack.c.l.b16 %v126
  %v925 = vunpack.c.h.b16 %v126
  %v926 = vunpack.c.l.b16 %v127
  %v927 = vunpack.c.h.b16 %v127
  %v928 = vunpack.c.l.b16 %v128
  %v929 = vunpack.c.h.b16 %v128
  %v930 = vunpack.c.l.b16 %v129
  %v931 = vunpack.c.h.b16 %v129
  %v932 = vunpack.c.l.b16 %v130
  %v933 = vunpack.c.h.b16 %v130
  %v934 = vunpack.c.l.b16 %v131
  %v935 = vunpack.c.h.b16 %v131
  %v936 = vunpack.c.l.b16 %v132
  %v937 = vunpack.c.h.b16 %v132
  %v938 = vunpack.c.l.b16 %v133
  %v939 = vunpack.c.h.b16 %v133
  %v940 = vunpack.c.l.b16 %v134
  %v941 = vunpack.c.h.b16 %v134
  %v942 = vunpack.c.l.b16 %v135
  %v943 = vunpack.c.h.b16 %v135
  %v944 = vunpack.c.l.b16 %v136
  %v945 = vunpack.c.h.b16 %v136
  %v946 = vunpack.c.l.b16 %v137
  %v947 = vunpack.c.h.b16 %v137
  %v948 = vunpack.c.l.b16 %v138
  %v949 = vunpack.c.h.b16 %v138
  %v950 = vunpack.c.l.b16 %v139
  %v951 = vunpack.c.h.b16 %v139
  %v952 = vunpack.c.l.b16 %v140
  %v953 = vunpack.c.h.b16 %v140
  %v954 = vunpack.c.l.b16 %v141
  %v955 = vunpack.c.h.b16 %v141
  %v956 = vunpack.c.l.b16 %v142
  %v957 = vunpack.c.h.b16 %v142
  %v958 = vunpack.c.l.b16 %v143
  %v959 = vunpack.c.h.b16 %v143
  %v960 = vunpack.c.l.b16 %v144
  %v961 = vunpack.c.h.b16 %v144
  %v962 = vunpack.c.l.b16 %v145
  %v963 = vunpack.c.h.b16 %v145
  %v964 = vunpack.c.l.b16 %v146
  %v965 = vunpack.c.h.b16 %v146
  %v966 = vunpack.c.l.b16 %v147
  %v967 = vunpack.c.h.b16 %v147
  %v968 = vunpack.c.l.b16 %v148
  %v969 = vunpack.c.h.b16 %v148
  %v970 = vunpack.c.l.b16 %v149
  %v971 = vunpack.c.h.b16 %v149
  %v972 = vunpack.c.l.b16 %v150
  %v973 = vunpack.c.h.b16 %v150
  %v974 = vunpack.c.l.b16 %v151
  %v975 = vunpack.c.h.b16 %v151
  %v976 = vunpack.c.l.b16 %v152
  %v977 = vunpack.c.h.b16 %v152
  %v978 = vunpack.c.l.b16 %v153
  %v979 = vunpack.c.h.b16 %v153
  %v980 = vunpack.c.l.b16 %v154
  %v981 = vunpack.c.h.b16 %v154
  %v982 = vunpack.c.l.b16 %v155
  %v983 = vunpack.c.h.b16 %v155
  %v984 = vunpack.c.l.b16 %v156
  %v985 = vunpack.c.h.b16 %v156
  %v986 = vunpack.c.l.b16 %v157
  %v987 = vunpack.c.h.b16 %v157
  %v988 = vunpack.c.l.b16 %v158
  %v989 = vunpack.c.h.b16 %v158
  %v990 = vunpack.c.l.b16 %v159
  %v991 = vunpack.c.h.b16 %v159
  %v992 = vunpack.c.l.b16 %v160
  %v993 = vunpack.c.h.b16 %v160
  %v994 = vunpack.c.l.b16 %v161
  %v995 = vunpack.c.h.b16 %v161
  %v996 = vunpack.c.l.b16 %v162
  %v997 = vunpack.c.h.b16 %v162
  %v998 = vunpack.c.l.b16 %v163
  %v999 = vunpack.c.h.b16 %v163
  %v1000 = vunpack.c.l.b16 %v164
  %v1001 = vunpack.c.h.b16 %v164
  %v1002 = vunpack.c.l.b16 %v165
  %v1003 = vunpack.c.h.b16 %v165
  %v1004 = vunpack.c.l.b16 %v166
  %v1005 = vunpack.c.h.b16 %v166
  %v1006 = vunpack.c.l.b16 %v167
  %v1007 = vunpack.c.h.b16 %v167
  %v1008 = vunpack.c.l.b16 %v168
  %v1009 = vunpack.c.h.b16 %v168
  %v1010 = vunpack.c.l.b16 %v169
  %v1011 = vunpack.c.h.b16 %v169
  %v1012 = vunpack.c.l.b16 %v170
  %v1013 = vunpack.c.h.b16 %v170
  %v1014 = vunpack.c.l.b16 %v171
  %v1015 = vunpack.c.h.b16 %v171
  %v1016 = vunpack.c.l.b16 %v172
  %v1017 = vunpack.c.h.b16 %v172
  %v1018 = vunpack.c.l.b16 %v173
  %v1019 = vunpack.c.h.b16 %v173
  %v1020 = vunpack.c.l.b16 %v174
  %v1021 = vunpack.c.h.b16 %v174
  %v1022 = vunpack.c.l.b16 %v175
  %v1023 = vunpack.c.h.b16 %v175
  %v1024 = vunpack.c.l.b16 %v176
  %v1025 = vunpack.c.h.b16 %v176
  %v1026 = vunpack.c.l.b16 %v177
  %v1027 = vunpack.c.h.b16 %v177
  %v1028 = vunpack.c.l.b16 %v178
  %v1029 = vunpack.c.h.b16 %v178
  %v1030 = vunpack.c.l.b16 %v179
  %v1031 = vunpack.c.h.b16 %v179
  %v1032 = vunpack.c.l.b16 %v180
  %v1033 = vunpack.c.h.b16 %v180
  %v1034 = vunpack.c.l.b16 %v181
  %v1035 = vunpack.c.h.b16 %v181
  %v1036 = vunpack.c.l.b16 %v182
  %v1037 = vunpack.c.h.b16 %v182
  %v1038 = vunpack.c.l.b16 %v183
  %v1039 = vunpack.c.h.b16 %v183
  %v1040 = vunpack.c.l.b16 %v184
  %v1041 = vunpack.c.h.b16 %v184
  %v1042 = vunpack.c.l.b16 %v185
  %v1043 = vunpack.c.h.b16 %v185
  %v1044 = vunpack.c.l.b16 %v186
  %v1045 = vunpack.c.h.b16 %v186
  %v1046 = vunpack.c.l.b16 %v187
  %v1047 = vunpack.c.h.b16 %v187
  %v1048 = vunpack.c.l.b16 %v188
  %v1049 = vunpack.c.h.b16 %v188
  %v1050 = vunpack.c.l.b16 %v189
  %v1051 = vunpack.c.h.b16 %v189
  %v1052 = vunpack.c.l.b16 %v190
  %v1053 = vunpack.c.h.b16 %v190
  %v1054 = vunpack.c.l.b16 %v191
  %v1055 = vunpack.c.h.b16 %v191
  %v1056 = vunpack.c.l.b16 %v192
  %v1057 = vunpack.c.h.b16 %v192
  %v1058 = vunpack.c.l.b16 %v193
  %v1059 = vunpack.c.h.b16 %v193
  %v1060 = vunpack.c.l.b16 %v194
  %v1061 = vunpack.c.h.b16 %v194
  %v1062 = vunpack.c.l.b16 %v195
  %v1063 = vunpack.c.h.b16 %v195
  %v1064 = vunpack.c.l.b16 %v196
  %v1065 = vunpack.c.h.b16 %v196
  %v1066 = vunpack.c.l.b16 %v197
  %v1067 = vunpack.c.h.b16 %v197
  %v1068 = vunpack.c.l.b16 %v198
  %v1069 = vunpack.c.h.b16 %v198
  %v1070 = vunpack.c.l.b16 %v199
  %v1071 = vunpack.c.h.b16 %v199
  %v1072 = vunpack.c.l.b16 %v200
  %v1073 = vunpack.c.h.b16 %v200
  %v1074 = vunpack.c.l.b16 %v201
  %v1075 = vunpack.c.h.b16 %v201
  %v1076 = vunpack.c.l.b16 %v202
  %v1077 = vunpack.c.h.b16 %v202
  %v1078 = vunpack.c.l.b16 %v203
  %v1079 = vunpack.c.h.b16 %v203
  %v1080 = vunpack.c.l.b16 %v204
  %v1081 = vunpack.c.h.b16 %v204
  %v1082 = vunpack.c.l.b16 %v205
  %v1083 = vunpack.c.h.b16 %v205
  %v1084 = vunpack.c.l.b16 %v206
  %v1085 = vunpack.c.h.b16 %v206
  %v1086 = vunpack.c.l.b16 %v207
  %v1087 = vunpack.c.h.b16 %v207
  %v1088 = vunpack.c.l.b16 %v208
  %v1089 = vunpack.c.h.b16 %v208
  %v1090 = vunpack.c.l.b16 %v209
  %v1091 = vunpack.c.h.b16 %v209
  %v1092 = vunpack.c.l.b16 %v210
  %v1093 = vunpack.c.h.b16 %v210
  %v1094 = vunpack.c.l.b16 %v211
  %v1095 = vunpack.c.h.b16 %v211
  %v1096 = vunpack.c.l.b16 %v212
  %v1097 = vunpack.c.h.b16 %v212
  %v1098 = vunpack.c.l.b16 %v213
  %v1099 = vunpack.c.h.b16 %v213
  %v1100 = vunpack.c.l.b16 %v214
  %v1101 = vunpack.c.h.b16 %v214
  %v1102 = vunpack.c.l.b16 %v215
  %v1103 = vunpack.c.h.b16 %v215
  %v1104 = vunpack.c.l.b16 %v216
  %v1105 = vunpack.c.h.b16 %v216
  %v1106 = vunpack.c.l.b16 %v217
  %v1107 = vunpack.c.h.b16 %v217
  %v1108 = vunpack.c.l.b16 %v218
  %v1109 = vunpack.c.h.b16 %v218
  %v1110 = vunpack.c.l.b16 %v219
  %v1111 = vunpack.c.h.b16 %v219
  %v1112 = vunpack.c.l.b16 %v220
  %v1113 = vunpack.c.h.b16 %v220
  %v1114 = vunpack.c.l.b16 %v221
  %v1115 = vunpack.c.h.b16 %v221
  %v1116 = vunpack.c.l.b16 %v222
  %v1117 = vunpack.c.h.b16 %v222
  %v1118 = vunpack.c.l.b16 %v223
  %v1119 = vunpack.c.h.b16 %v223
  %v1120 = vunpack.c.l.b16 %v224
  %v1121 = vunpack.c.h.b16 %v224
  %v1122 = vunpack.c.l.b16 %v225
  %v1123 = vunpack.c.h.b16 %v225
  %v1124 = vunpack.c.l.b16 %v226
  %v1125 = vunpack.c.h.b16 %v226
  %v1126 = vunpack.c.l.b16 %v227
  %v1127 = vunpack.c.h.b16 %v227
  %v1128 = vunpack.c.l.b16 %v228
  %v1129 = vunpack.c.h.b16 %v228
  %v1130 = vunpack.c.l.b16 %v229
  %v1131 = vunpack.c.h.b16 %v229
  %v1132 = vunpack.c.l.b16 %v230
  %v1133 = vunpack.c.h.b16 %v230
  %v1134 = vunpack.c.l.b16 %v231
  %v1135 = vunpack.c.h.b16 %v231
  %v1136 = vunpack.c.l.b16 %v232
  %v1137 = vunpack.c.h.b16 %v232
  %v1138 = vunpack.c.l.b16 %v233
  %v1139 = vunpack.c.h.b16 %v233
  %v1140 = vunpack.c.l.b16 %v234
  %v1141 = vunpack.c.h.b16 %v234
  %v1142 = vunpack.c.l.b16 %v235
  %v1143 = vunpack.c.h.b16 %v235
  %v1144 = vunpack.c.l.b16 %v236
  %v1145 = vunpack.c.h.b16 %v236
  %v1146 = vunpack.c.l.b16 %v237
  %v1147 = vunpack.c.h.b16 %v237
  %v1148 = vunpack.c.l.b16 %v238
  %v1149 = vunpack.c.h.b16 %v238
  %v1150 = vunpack.c.l.b16 %v239
  %v1151 = vunpack.c.h.b16 %v239
  %v1152 = vunpack.c.l.b16 %v240
  %v1153 = vunpack.c.h.b16 %v240
  %v1154 = vunpack.c.l.b16 %v241
  %v1155 = vunpack.c.h.b16 %v241
  %v1156 = vunpack.c.l.b16 %v242
  %v1157 = vunpack.c.h.b16 %v242
  %v1158 = vunpack.c.l.b16 %v243
  %v1159 = vunpack.c.h.b16 %v243
  %v1160 = vunpack.c.l.b16 %v244
  %v1161 = vunpack.c.h.b16 %v244
  %v1162 = vunpack.c.l.b16 %v245
  %v1163 = vunpack.c.h.b16 %v245
  %v1164 = vunpack.c.l.b16 %v246
  %v1165 = vunpack.c.h.b16 %v246
  %v1166 = vunpack.c.l.b16 %v247
  %v1167 = vunpack.c.h.b16 %v247
  %v1168 = vunpack.c.l.b16 %v248
  %v1169 = vunpack.c.h.b16 %v248
  %v1170 = vunpack.c.l.b16 %v249
  %v1171 = vunpack.c.h.b16 %v249
  %v1172 = vunpack.c.l.b16 %v250
  %v1173 = vunpack.c.h.b16 %v250
  %v1174 = vunpack.c.l.b16 %v251
  %v1175 = vunpack.c.h.b16 %v251
  %v1176 = vunpack.c.l.b16 %v252
  %v1177 = vunpack.c.h.b16 %v252
  %v1178 = vunpack.c.l.b16 %v253
  %v1179 = vunpack.c.h.b16 %v253
  %v1180 = vunpack.c.l.b16 %v254
  %v1181 = vunpack.c.h.b16 %v254
  %v1182 = vunpack.c.l.b16 %v255
  %v1183 = vunpack.c.h.b16 %v255
  %v1184 = vunpack.c.l.b16 %v256
  %v1185 = vunpack.c.h.b16 %v256
  %v1186 = vunpack.c.l.b16 %v257
  %v1187 = vunpack.c.h.b16 %v257
  %v1188 = vunpack.c.l.b16 %v258
  %v1189 = vunpack.c.h.b16 %v258
  %v1190 = vunpack.c.l.b16 %v259
  %v1191 = vunpack.c.h.b16 %v259
  %v1192 = vunpack.c.l.b16 %v260
  %v1193 = vunpack.c.h.b16 %v260
  %v1194 = vunpack.c.l.b16 %v261
  %v1195 = vunpack.c.h.b16 %v261
  %v1196 = vunpack.c.l.b16 %v262
  %v1197 = vunpack.c.h.b16 %v262
  %v1198 = vunpack.c.l.b16 %v263
  %v1199 = vunpack.c.h.b16 %v263
  %v1200 = vunpack.c.l.b16 %v264
  %v1201 = vunpack.c.h.b16 %v264
  %v1202 = vunpack.c.l.b16 %v265
  %v1203 = vunpack.c.h.b16 %v265
  %v1204 = vunpack.c.l.b16 %v266
  %v1205 = vunpack.c.h.b16 %v266
  %v1206 = vunpack.c.l.b16 %v267
  %v1207 = vunpack.c.h.b16 %v267
  %v1208 = vunpack.c.l.b16 %v268
  %v1209 = vunpack.c.h.b16 %v268
  %v1210 = vunpack.c.l.b16 %v269
  %v1211 = vunpack.c.h.b16 %v269
  %v1212 = vunpack.c.l.b16 %v270
  %v1213 = vunpack.c.h.b16 %v270
  %v1214 = vunpack.c.l.b16 %v271
  %v1215 = vunpack.c.h.b16 %v271
  %v1216 = vunpack.c.l.b16 %v272
  %v1217 = vunpack.c.h.b16 %v272
  %v1218 = vunpack.c.l.b16 %v273
  %v1219 = vunpack.c.h.b16 %v273
  %v1220 = vunpack.c.l.b16 %v274
  %v1221 = vunpack.c.h.b16 %v274
  %v1222 = vunpack.c.l.b16 %v275
  %v1223 = vunpack.c.h.b16 %v275
  %v1224 = vunpack.c.l.b16 %v276
  %v1225 = vunpack.c.h.b16 %v276
  %v1226 = vunpack.c.l.b16 %v277
  %v1227 = vunpack.c.h.b16 %v277
  %v1228 = vunpack.c.l.b16 %v278
  %v1229 = vunpack.c.h.b16 %v278
  %v1230 = vunpack.c.l.b16 %v279
  %v1231 = vunpack.c.h.b16 %v279
  %v1232 = vunpack.c.l.b16 %v280
  %v1233 = vunpack.c.h.b16 %v280
  %v1234 = vunpack.c.l.b16 %v281
  %v1235 = vunpack.c.h.b16 %v281
  %v1236 = vunpack.c.l.b16 %v282
  %v1237 = vunpack.c.h.b16 %v282
  %v1238 = vunpack.c.l.b16 %v283
  %v1239 = vunpack.c.h.b16 %v283
  %v1240 = vunpack.c.l.b16 %v284
  %v1241 = vunpack.c.h.b16 %v284
  %v1242 = vunpack.c.l.b16 %v285
  %v1243 = vunpack.c.h.b16 %v285
  %v1244 = vunpack.c.l.b16 %v286
  %v1245 = vunpack.c.h.b16 %v286
  %v1246 = vunpack.c.l.b16 %v287
  %v1247 = vunpack.c.h.b16 %v287
  %v1248 = vunpack.c.l.b16 %v288
  %v1249 = vunpack.c.h.b16 %v288
  %v1250 = vunpack.c.l.b16 %v289
  %v1251 = vunpack.c.h.b16 %v289
  %v1252 = vunpack.c.l.b16 %v290
  %v1253 = vunpack.c.h.b16 %v290
  %v1254 = vunpack.c.l.b16 %v291
  %v1255 = vunpack.c.h.b16 %v291
  %v1256 = vunpack.c.l.b16 %v292
  %v1257 = vunpack.c.h.b16 %v292
  %v1258 = vunpack.c.l.b16 %v293
  %v1259 = vunpack.c.h.b16 %v293
  %v1260 = vunpack.c.l.b16 %v294
  %v1261 = vunpack.c.h.b16 %v294
  %v1262 = vunpack.c.l.b16 %v295
  %v1263 = vunpack.c.h.b16 %v295
  %v1264 = vunpack.c.l.b16 %v296
  %v1265 = vunpack.c.h.b16 %v296
  %v1266 = vunpack.c.l.b16 %v297
  %v1267 = vunpack.c.h.b16 %v297
  %v1268 = vunpack.c.l.b16 %v298
  %v1269 = vunpack.c.h.b16 %v298
  %v1270 = vunpack.c.l.b16 %v299
  %v1271 = vunpack.c.h.b16 %v299
  %v1272 = vunpack.c.l.b16 %v300
  %v1273 = vunpack.c.h.b16 %v300
  %v1274 = vunpack.c.l.b16 %v301
  %v1275 = vunpack.c.h.b16 %v301
  %v1276 = vunpack.c.l.b16 %v302
  %v1277 = vunpack.c.h.b16 %v302
  %v1278 = vunpack.c.l.b16 %v303
  %v1279 = vunpack.c.h.b16 %v303
  %v1280 = vunpack.c.l.b16 %v304
  %v1281 = vunpack.c.h.b16 %v304
  %v1282 = vunpack.c.l.b16 %v305
  %v1283 = vunpack.c.h.b16 %v305
  %v1284 = vunpack.c.l.b16 %v306
  %v1285 = vunpack.c.h.b16 %v306
  %v1286 = vunpack.c.l.b16 %v307
  %v1287 = vunpack.c.h.b16 %v307
  %v1288 = vunpack.c.l.b16 %v308
  %v1289 = vunpack.c.h.b16 %v308
  %v1290 = vunpack.c.l.b16 %v309
  %v1291 = vunpack.c.h.b16 %v309
  %v1292 = vunpack.c.l.b16 %v310
  %v1293 = vunpack.c.h.b16 %v310
  %v1294 = vunpack.c.l.b16 %v311
  %v1295 = vunpack.c.h.b16 %v311
  %v1296 = vunpack.c.l.b16 %v312
  %v1297 = vunpack.c.h.b16 %v312
  %v1298 = vunpack.c.l.b16 %v313
  %v1299 = vunpack.c.h.b16 %v313
  %v1300 = vunpack.c.l.b16 %v314
  %v1301 = vunpack.c.h.b16 %v314
  %v1302 = vunpack.c.l.b16 %v315
  %v1303 = vunpack.c.h.b16 %v315
  %v1304 = vunpack.c.l.b16 %v316
  %v1305 = vunpack.c.h.b16 %v316
  %v1306 = vunpack.c.l.b16 %v317
  %v1307 = vunpack.c.h.b16 %v317
  %v1308 = vunpack.c.l.b16 %v318
  %v1309 = vunpack.c.h.b16 %v318
  %v1310 = vunpack.c.l.b16 %v319
  %v1311 = vunpack.c.h.b16 %v319
  %v1312 = vunpack.c.l.b16 %v320
  %v1313 = vunpack.c.h.b16 %v320
  %v1314 = vunpack.c.l.b16 %v321
  %v1315 = vunpack.c.h.b16 %v321
  %v1316 = vunpack.c.l.b16 %v322
  %v1317 = vunpack.c.h.b16 %v322
  %v1318 = vunpack.c.l.b16 %v323
  %v1319 = vunpack.c.h.b16 %v323
  %v1320 = vunpack.c.l.b16 %v324
  %v1321 = vunpack.c.h.b16 %v324
  %v1322 = vunpack.c.l.b16 %v325
  %v1323 = vunpack.c.h.b16 %v325
  %v1324 = vunpack.c.l.b16 %v326
  %v1325 = vunpack.c.h.b16 %v326
  %v1326 = vunpack.c.l.b16 %v327
  %v1327 = vunpack.c.h.b16 %v327
  %v1328 = vunpack.c.l.b16 %v328
  %v1329 = vunpack.c.h.b16 %v328
  %v1330 = vunpack.c.l.b16 %v329
  %v1331 = vunpack.c.h.b16 %v329
  %v1332 = vunpack.c.l.b16 %v330
  %v1333 = vunpack.c.h.b16 %v330
  %v1334 = vunpack.c.l.b16 %v331
  %v1335 = vunpack.c.h.b16 %v331
  %v1336 = vunpack.c.l.b16 %v332
  %v1337 = vunpack.c.h.b16 %v332
  %v1338 = vunpack.c.l.b16 %v333
  %v1339 = vunpack.c.h.b16 %v333
  %v1340 = vunpack.c.l.b16 %v334
  %v1341 = vunpack.c.h.b16 %v334
  %v1342 = vunpack.c.l.b16 %v335
  %v1343 = vunpack.c.h.b16 %v335
  %v1344 = vpack.c.b16 %v738, %v736
  %v1345 = vpack.c.b16 %v739, %v737
  %v1346 = vpack.c.b16 %v742, %v740
  %v1347 = vpack.c.b16 %v743, %v741
  %v1348 = vpack.c.b16 %v746, %v744
  %v1349 = vpack.c.b16 %v747, %v745
  %v1350 = vpack.c.b16 %v750, %v748
  %v1351 = vpack.c.b16 %v751, %v749
  %v1352 = vpack.c.b16 %v754, %v752
  %v1353 = vpack.c.b16 %v755, %v753
  %v1354 = vpack.c.b16 %v758, %v756
  %v1355 = vpack.c.b16 %v759, %v757
  %v1356 = vpack.c.b16 %v762, %v760
  %v1357 = vpack.c.b16 %v763, %v761
  %v1358 = vpack.c.b16 %v766, %v764
  %v1359 = vpack.c.b16 %v767, %v765
  %v1360 = vpack.c.b16 %v770, %v768
  %v1361 = vpack.c.b16 %v771, %v769
  %v1362 = vpack.c.b16 %v774, %v772
  %v1363 = vpack.c.b16 %v775, %v773
  %v1364 = vpack.c.b16 %v778, %v776
  %v1365 = vpack.c.b16 %v779, %v777
  %v1366 = vpack.c.b16 %v782, %v780
  %v1367 = vpack.c.b16 %v783, %v781
  %v1368 = vpack.c.b16 %v786, %v784
  %v1369 = vpack.c.b16 %v787, %v785
  %v1370 = vpack.c.b16 %v790, %v788
  %v1371 = vpack.c.b16 %v791, %v789
  %v1372 = vpack.c.b16 %v794, %v792
  %v1373 = vpack.c.b16 %v795, %v793
  %v1374 = vpack.c.b16 %v798, %v796
  %v1375 = vpack.c.b16 %v799, %v797
  %v1376 = vpack.c.b16 %v802, %v800
  %v1377 = vpack.c.b16 %v803, %v801
  %v1378 = vpack.c.b16 %v806, %v804
  %v1379 = vpack.c.b16 %v807, %v805
  %v1380 = vpack.c.b16 %v810, %v808
  %v1381 = vpack.c.b16 %v811, %v809
  %v1382 = vpack.c.b16 %v814, %v812
  %v1383 = vpack.c.b16 %v815, %v813
  %v1384 = vpack.c.b16 %v818, %v816
  %v1385 = vpack.c.b16 %v819, %v817
  %v1386 = vpack.c.b16 %v822, %v820
  %v1387 = vpack.c.b16 %v823, %v821
  %v1388 = vpack.c.b16 %v826, %v824
  %v1389 = vpack.c.b16 %v827, %v825
  %v1390 = vpack.c.b16 %v830, %v828
  %v1391 = vpack.c.b16 %v831, %v829
  %v1392 = vpack.c.b16 %v834, %v832
  %v1393 = vpack.c.b16 %v835, %v833
  %v1394 = vpack.c.b16 %v838, %v836
  %v1395 = vpack.c.b16 %v839, %v837
  %v1396 = vpack.c.b16 %v842, %v840
  %v1397 = vpack.c.b16 %v843, %v841
  %v1398 = vpack.c.b16 %v846, %v844
  %v1399 = vpack.c.b16 %v847, %v845
  %v1400 = vpack.c.b16 %v850, %v848
  %v1401 = vpack.c.b16 %v851, %v849
  %v1402 = vpack.c.b16 %v854, %v852
  %v1403 = vpack.c.b16 %v855, %v853
  %v1404 = vpack.c.b16 %v858, %v856
  %v1405 = vpack.c.b16 %v859, %v857
  %v1406 = vpack.c.b16 %v862, %v860
  %v1407 = vpack.c.b16 %v863, %v861
  %v1408 = vpack.c.b16 %v866, %v864
  %v1409 = vpack.c.b16 %v867, %v865
  %v1410 = vpack.c.b16 %v870, %v868
  %v1411 = vpack.c.b16 %v871, %v869
  %v1412 = vpack.c.b16 %v874, %v872
  %v1413 = vpack.c.b16 %v875, %v873
  %v1414 = vpack.c.b16 %v878, %v876
  %v1415 = vpack.c.b16 %v879, %v877
  %v1416 = vpack.c.b16 %v882, %v880
  %v1417 = vpack.c.b16 %v883, %v881
  %v1418 = vpack.c.b16 %v886, %v884
  %v1419 = vpack.c.b16 %v887, %v885
  %v1420 = vpack.c.b16 %v890, %v888
  %v1421 = vpack.c.b16 %v891, %v889
  %v1422 = vpack.c.b16 %v894, %v892
  %v1423 = vpack.c.b16 %v895, %v893
  %v1424 = vpack.c.b16 %v898, %v896
  %v1425 = vpack.c.b16 %v899, %v897
  %v1426 = vpack.c.b16 %v902, %v900
  %v1427 = vpack.c.b16 %v903, %v901
  %v1428 = vpack.c.b16 %v906, %v904
  %v1429 = vpack.c.b16 %v907, %v905
  %v1430 = vpack.c.b16 %v910, %v908
  %v1431 = vpack.c.b16 %v911, %v909
  %v1432 = vpack.c.b16 %v914, %v912
  %v1433 = vpack.c.b16 %v915, %v913
  %v1434 = vpack.c.b16 %v918, %v916
  %v1435 = vpack.c.b16 %v919, %v917
  %v1436 = vpack.c.b16 %v922, %v920
  %v1437 = vpack.c.b16 %v923, %v921
  %v1438 = vpack.c.b16 %v926, %v924
  %v1439 = vpack.c.b16 %v927, %v925
  %v1440 = vpack.c.b16 %v930, %v928
  %v1441 = vpack.c.b16 %v931, %v929
  %v1442 = vpack.c.b16 %v934, %v932
  %v1443 = vpack.c.b16 %v935, %v933
  %v1444 = vpack.c.b16 %v938, %v936
  %v1445 = vpack.c.b16 %v939, %v937
  %v1446 = vpack.c.b16 %v942, %v940
  %v1447 = vpack.c.b16 %v943, %v941
  %v1448 = vpack.c.b16 %v946, %v944
  %v1449 = vpack.c.b16 %v947, %v945
  %v1450 = vpack.c.b16 %v950, %v948
  %v1451 = vpack.c.b16 %v951, %v949
  %v1452 = vpack.c.b16 %v954, %v952
  %v1453 = vpack.c.b16 %v955, %v953
  %v1454 = vpack.c.b16 %v958, %v956
  %v1455 = vpack.c.b16 %v959, %v957
  %v1456 = vpack.c.b16 %v962, %v960
  %v1457 = vpack.c.b16 %v963, %v961
  %v1458 = vpack.c.b16 %v966, %v964
  %v1459 = vpack.c.b16 %v967, %v965
  %v1460 = vpack.c.b16 %v970, %v968
  %v1461 = vpack.c.b16 %v971, %v969
  %v1462 = vpack.c.b16 %v974, %v972
  %v1463 = vpack.c.b16 %v975, %v973
  %v1464 = vpack.c.b16 %v978, %v976
  %v1465 = vpack.c.b16 %v979, %v977
  %v1466 = vpack.c.b16 %v982, %v980
  %v1467 = vpack.c.b16 %v983, %v981
  %v1468 = vpack.c.b16 %v986, %v984
  %v1469 = vpack.c.b16 %v987, %v985
  %v1470 = vpack.c.b16 %v990, %v988
  %v1471 = vpack.c.b16 %v991, %v989
  %v1472 = vpack.c.b16 %v994, %v992
  %v1473 = vpack.c.b16 %v995, %v993
  %v1474 = vpack.c.b16 %v998, %v996
  %v1475 = vpack.c.b16 %v999, %v997
  %v1476 = vpack.c.b16 %v1002, %v1000
  %v1477 = vpack.c.b16 %v1003, %v1001
  %v1478 = vpack.c.b16 %v1006, %v1004
  %v1479 = vpack.c.b16 %v1007, %v1005
  %v1480 = vpack.c.b16 %v1010, %v1008
  %v1481 = vpack.c.b16 %v1011, %v1009
  %v1482 = vpack.c.b16 %v1014, %v1012
  %v1483 = vpack.c.b16 %v1015, %v1013
  %v1484 = vpack.c.b16 %v1018, %v1016
  %v1485 = vpack.c.b16 %v1019, %v1017
  %v1486 = vpack.c.b16 %v1022, %v1020
  %v1487 = vpack.c.b16 %v1023, %v1021
  %v1488 = vpack.c.b16 %v1026, %v1024
  %v1489 = vpack.c.b16 %v1027, %v1025
  %v1490 = vpack.c.b16 %v1030, %v1028
  %v1491 = vpack.c.b16 %v1031, %v1029
  %v1492 = vpack.c.b16 %v1034, %v1032
  %v1493 = vpack.c.b16 %v1035, %v1033
  %v1494 = vpack.c.b16 %v1038, %v1036
  %v1495 = vpack.c.b16 %v1039, %v1037
  %v1496 = vpack.c.b16 %v1042, %v1040
  %v1497 = vpack.c.b16 %v1043, %v1041
  %v1498 = vpack.c.b16 %v1046, %v1044
  %v1499 = vpack.c.b16 %v1047, %v1045
  %v1500 = vpack.c.b16 %v1050, %v1048
  %v1501 = vpack.c.b16 %v1051, %v1049
  %v1502 = vpack.c.b16 %v1054, %v1052
  %v1503 = vpack.c.b16 %v1055, %v1053
  %v1504 = vpack.c.b16 %v1058, %v1056
  %v1505 = vpack.c.b16 %v1059, %v1057
  %v1506 = vpack.c.b16 %v1062, %v1060
  %v1507 = vpack.c.b16 %v1063, %v1061
  %v1508 = vpack.c.b16 %v1066, %v1064
  %v1509 = vpack.c.b16 %v1067, %v1065
  %v1510 = vpack.c.b16 %v1070, %v1068
  %v1511 = vpack.c.b16 %v1071, %v1069
  %v1512 = vpack.c.b16 %v1074, %v1072
  %v1513 = vpack.c.b16 %v1075, %v1073
  %v1514 = vpack.c.b16 %v1078, %v1076
  %v1515 = vpack.c.b16 %v1079, %v1077
  %v1516 = vpack.c.b16 %v1082, %v1080
  %v1517 = vpack.c.b16 %v1083, %v1081
  %v1518 = vpack.c.b16 %v1086, %v1084
  %v1519 = vpack.c.b16 %v1087, %v1085
  %v1520 = vpack.c.b16 %v1090, %v1088
  %v1521 = vpack.c.b16 %v1091, %v1089
  %v1522 = vpack.c.b16 %v1094, %v1092
  %v1523 = vpack.c.b16 %v1095, %v1093
  %v1524 = vpack.c.b16 %v1098, %v1096
  %v1525 = vpack.c.b16 %v1099, %v1097
  %v1526 = vpack.c.b16 %v1102, %v1100
  %v1527 = vpack.c.b16 %v1103, %v1101
  %v1528 = vpack.c.b16 %v1106, %v1104
  %v1529 = vpack.c.b16 %v1107, %v1105
  %v1530 = vpack.c.b16 %v1110, %v1108
  %v1531 = vpack.c.b16 %v1111, %v1109
  %v1532 = vpack.c.b16 %v1114, %v1112
  %v1533 = vpack.c.b16 %v1115, %v1113
  %v1534 = vpack.c.b16 %v1118, %v1116
  %v1535 = vpack.c.b16 %v1119, %v1117
  %v1536 = vpack.c.b16 %v1122, %v1120
  %v1537 = vpack.c.b16 %v1123, %v1121
  %v1538 = vpack.c.b16 %v1126, %v1124
  %v1539 = vpack.c.b16 %v1127, %v1125
  %v1540 = vpack.c.b16 %v1130, %v1128
  %v1541 = vpack.c.b16 %v1131, %v1129
  %v1542 = vpack.c.b16 %v1134, %v1132
  %v1543 = vpack.c.b16 %v1135, %v1133
  %v1544 = vpack.c.b16 %v1138, %v1136
  %v1545 = vpack.c.b16 %v1139, %v1137
  %v1546 = vpack.c.b16 %v1142, %v1140
  %v1547 = vpack.c.b16 %v1143, %v1141
  %v1548 = vpack.c.b16 %v1146, %v1144
  %v1549 = vpack.c.b16 %v1147, %v1145
  %v1550 = vpack.c.b16 %v1150, %v1148
  %v1551 = vpack.c.b16 %v1151, %v1149
  %v1552 = vpack.c.b16 %v1154, %v1152
  %v1553 = vpack.c.b16 %v1155, %v1153
  %v1554 = vpack.c.b16 %v1158, %v1156
  %v1555 = vpack.c.b16 %v1159, %v1157
  %v1556 = vpack.c.b16 %v1162, %v1160
  %v1557 = vpack.c.b16 %v1163, %v1161
  %v1558 = vpack.c.b16 %v1166, %v1164
  %v1559 = vpack.c.b16 %v1167, %v1165
  %v1560 = vpack.c.b16 %v1170, %v1168
  %v1561 = vpack.c.b16 %v1171, %v1169
  %v1562 = vpack.c.b16 %v1174, %v1172
  %v1563 = vpack.c.b16 %v1175, %v1173
  %v1564 = vpack.c.b16 %v1178, %v1176
  %v1565 = vpack.c.b16 %v1179, %v1177
  %v1566 = vpack.c.b16 %v1182, %v1180
  %v1567 = vpack.c.b16 %v1183, %v1181
  %v1568 = vpack.c.b16 %v1186, %v1184
  %v1569 = vpack.c.b16 %v1187, %v1185
  %v1570 = vpack.c.b16 %v1190, %v1188
  %v1571 = vpack.c.b16 %v1191, %v1189
  %v1572 = vpack.c.b16 %v1194, %v1192
  %v1573 = vpack.c.b16 %v1195, %v1193
  %v1574 = vpack.c.b16 %v1198, %v1196
  %v1575 = vpack.c.b16 %v1199, %v1197
  %v1576 = vpack.c.b16 %v1202, %v1200
  %v1577 = vpack.c.b16 %v1203, %v1201
  %v1578 = vpack.c.b16 %v1206, %v1204
  %v1579 = vpack.c.b16 %v1207, %v1205
  %v1580 = vpack.c.b16 %v1210, %v1208
  %v1581 = vpack.c.b16 %v1211, %v1209
  %v1582 = vpack.c.b16 %v1214, %v1212
  %v1583 = vpack.c.b16 %v1215, %v1213
  %v1584 = vpack.c.b16 %v1218, %v1216
  %v1585 = vpack.c.b16 %v1219, %v1217
  %v1586 = vpack.c.b16 %v1222, %v1220
  %v1587 = vpack.c.b16 %v1223, %v1221
  %v1588 = vpack.c.b16 %v1226, %v1224
  %v1589 = vpack.c.b16 %v1227, %v1225
  %v1590 = vpack.c.b16 %v1230, %v1228
  %v1591 = vpack.c.b16 %v1231, %v1229
  %v1592 = vpack.c.b16 %v1234, %v1232
  %v1593 = vpack.c.b16 %v1235, %v1233
  %v1594 = vpack.c.b16 %v1238, %v1236
  %v1595 = vpack.c.b16 %v1239, %v1237
  %v1596 = vpack.c.b16 %v1242, %v1240
  %v1597 = vpack.c.b16 %v1243, %v1241
  %v1598 = vpack.c.b16 %v1246, %v1244
  %v1599 = vpack.c.b16 %v1247, %v1245
  %v1600 = vpack.c.b16 %v1250, %v1248
  %v1601 = vpack.c.b16 %v1251, %v1249
  %v1602 = vpack.c.b16 %v1254, %v1252
  %v1603 = vpack.c.b16 %v1255, %v1253
  %v1604 = vpack.c.b16 %v1258, %v1256
  %v1605 = vpack.c.b16 %v1259, %v1257
  %v1606 = vpack.c.b16 %v1262, %v1260
  %v1607 = vpack.c.b16 %v1263, %v1261
  %v1608 = vpack.c.b16 %v1266, %v1264
  %v1609 = vpack.c.b16 %v1267, %v1265
  %v1610 = vpack.c.b16 %v1270, %v1268
  %v1611 = vpack.c.b16 %v1271, %v1269
  %v1612 = vpack.c.b16 %v1274, %v1272
  %v1613 = vpack.c.b16 %v1275, %v1273
  %v1614 = vpack.c.b16 %v1278, %v1276
  %v1615 = vpack.c.b16 %v1279, %v1277
  %v1616 = vpack.c.b16 %v1282, %v1280
  %v1617 = vpack.c.b16 %v1283, %v1281
  %v1618 = vpack.c.b16 %v1286, %v1284
  %v1619 = vpack.c.b16 %v1287, %v1285
  %v1620 = vpack.c.b16 %v1290, %v1288
  %v1621 = vpack.c.b16 %v1291, %v1289
  %v1622 = vpack.c.b16 %v1294, %v1292
  %v1623 = vpack.c.b16 %v1295, %v1293
  %v1624 = vpack.c.b16 %v1298, %v1296
  %v1625 = vpack.c.b16 %v1299, %v1297
  %v1626 = vpack.c.b16 %v1302, %v1300
  %v1627 = vpack.c.b16 %v1303, %v1301
  %v1628 = vpack.c.b16 %v1306, %v1304
  %v1629 = vpack.c.b16 %v1307, %v1305
  %v1630 = vpack.c.b16 %v1310, %v1308
  %v1631 = vpack.c.b16 %v1311, %v1309
  %v1632 = vpack.c.b16 %v1314, %v1312
  %v1633 = vpack.c.b16 %v1315, %v1313
  %v1634 = vpack.c.b16 %v1318, %v1316
  %v1635 = vpack.c.b16 %v1319, %v1317
  %v1636 = vpack.c.b16 %v1322, %v1320
  %v1637 = vpack.c.b16 %v1323, %v1321
  %v1638 = vpack.c.b16 %v1326, %v1324
  %v1639 = vpack.c.b16 %v1327, %v1325
  %v1640 = vpack.c.b16 %v1330, %v1328
  %v1641 = vpack.c.b16 %v1331, %v1329
  %v1642 = vpack.c.b16 %v1334, %v1332
  %v1643 = vpack.c.b16 %v1335, %v1333
  %v1644 = vpack.c.b16 %v1338, %v1336
  %v1645 = vpack.c.b16 %v1339, %v1337
  %v1646 = vpack.c.b16 %v1342, %v1340
  %v1647 = vpack.c.b16 %v1343, %v1341
  %1952 = vmatprep.subr.bf16.mxu0 %v1345
  %1953 = vmatpush1.bf16.msra.mxu0 %v1344
  %1954 = vmatprep.subr.bf16.mxu0 %v1347
  %1955 = vmatpush1.bf16.msra.mxu0 %v1346
  %1956 = vmatprep.subr.bf16.mxu0 %v1349
  %1957 = vmatpush1.bf16.msra.mxu0 %v1348
  %1958 = vmatprep.subr.bf16.mxu0 %v1351
  %1959 = vmatpush1.bf16.msra.mxu0 %v1350
  %1960 = vmatprep.subr.bf16.mxu0 %v1353
  %1961 = vmatpush1.bf16.msra.mxu0 %v1352
  %1962 = vmatprep.subr.bf16.mxu0 %v1355
  %1963 = vmatpush1.bf16.msra.mxu0 %v1354
  %1964 = vmatprep.subr.bf16.mxu0 %v1357
  %1965 = vmatpush1.bf16.msra.mxu0 %v1356
  %1966 = vmatprep.subr.bf16.mxu0 %v1359
  %1967 = vmatpush1.bf16.msra.mxu0 %v1358
  %1968 = vmatprep.subr.bf16.mxu0 %v1361
  %1969 = vmatpush1.bf16.msra.mxu0 %v1360
  %1970 = vmatprep.subr.bf16.mxu0 %v1363
  %1971 = vmatpush1.bf16.msra.mxu0 %v1362
  %1972 = vmatprep.subr.bf16.mxu0 %v1365
  %1973 = vmatpush1.bf16.msra.mxu0 %v1364
  %1974 = vmatprep.subr.bf16.mxu0 %v1367
  %1975 = vmatpush1.bf16.msra.mxu0 %v1366
  %1976 = vmatprep.subr.bf16.mxu0 %v1369
  %1977 = vmatpush1.bf16.msra.mxu0 %v1368
  %1978 = vmatprep.subr.bf16.mxu0 %v1371
  %1979 = vmatpush1.bf16.msra.mxu0 %v1370
  %1980 = vmatprep.subr.bf16.mxu0 %v1373
  %1981 = vmatpush1.bf16.msra.mxu0 %v1372
  %1982 = vmatprep.subr.bf16.mxu0 %v1375
  %1983 = vmatpush1.bf16.msra.mxu0 %v1374
  %1984 = vmatprep.mubr.bf16.mxu0 %v395
  %1985 = vmatmul.mubr.bf16.gmra.mrb[0].mxu0 %v394
  %v1986 = vpop.f32.mrb[0].mxu0
  %v1987 = vadd.f32 0.0, %v1986
  %v1988 = vpop.f32.mrb[0].mxu0
  %v1989 = vadd.f32 0.0, %v1988
  %v1990 = vpop.f32.mrb[0].mxu0
  %v1991 = vadd.f32 0.0, %v1990
  %v1992 = vpop.f32.mrb[0].mxu0
  %v1993 = vadd.f32 0.0, %v1992
  %1994 = vdwg.mxu0
  %1995 = vmatprep.subr.bf16.mxu0 %v1377
  %1996 = vmatpush1.bf16.msra.mxu0 %v1376
  %1997 = vmatprep.subr.bf16.mxu0 %v1379
  %1998 = vmatpush1.bf16.msra.mxu0 %v1378
  %1999 = vmatprep.subr.bf16.mxu0 %v1381
  %2000 = vmatpush1.bf16.msra.mxu0 %v1380
  %2001 = vmatprep.subr.bf16.mxu0 %v1383
  %2002 = vmatpush1.bf16.msra.mxu0 %v1382
  %2003 = vmatprep.subr.bf16.mxu0 %v1385
  %2004 = vmatpush1.bf16.msra.mxu0 %v1384
  %2005 = vmatprep.subr.bf16.mxu0 %v1387
  %2006 = vmatpush1.bf16.msra.mxu0 %v1386
  %2007 = vmatprep.subr.bf16.mxu0 %v1389
  %2008 = vmatpush1.bf16.msra.mxu0 %v1388
  %2009 = vmatprep.subr.bf16.mxu0 %v1391
  %2010 = vmatpush1.bf16.msra.mxu0 %v1390
  %2011 = vmatprep.subr.bf16.mxu0 %v1393
  %2012 = vmatpush1.bf16.msra.mxu0 %v1392
  %2013 = vmatprep.subr.bf16.mxu0 %v1395
  %2014 = vmatpush1.bf16.msra.mxu0 %v1394
  %2015 = vmatprep.subr.bf16.mxu0 %v1397
  %2016 = vmatpush1.bf16.msra.mxu0 %v1396
  %2017 = vmatprep.subr.bf16.mxu0 %v1399
  %2018 = vmatpush1.bf16.msra.mxu0 %v1398
  %2019 = vmatprep.subr.bf16.mxu0 %v1401
  %2020 = vmatpush1.bf16.msra.mxu0 %v1400
  %2021 = vmatprep.subr.bf16.mxu0 %v1403
  %2022 = vmatpush1.bf16.msra.mxu0 %v1402
  %2023 = vmatprep.subr.bf16.mxu0 %v1405
  %2024 = vmatpush1.bf16.msra.mxu0 %v1404
  %2025 = vmatprep.subr.bf16.mxu0 %v1407
  %2026 = vmatpush1.bf16.msra.mxu0 %v1406
  %2027 = vmatprep.mubr.bf16.mxu0 %v397
  %2028 = vmatmul.mubr.bf16.gmra.mrb[0].mxu0 %v396
  %v2029 = vpop.f32.mrb[0].mxu0
  %v2030 = vadd.f32 %v1987, %v2029
  %v2031 = vpop.f32.mrb[0].mxu0
  %v2032 = vadd.f32 %v1989, %v2031
  %v2033 = vpop.f32.mrb[0].mxu0
  %v2034 = vadd.f32 %v1991, %v2033
  %v2035 = vpop.f32.mrb[0].mxu0
  %v2036 = vadd.f32 %v1993, %v2035
  %2037 = vdwg.mxu0
  %2038 = vmatprep.subr.bf16.mxu0 %v1409
  %2039 = vmatpush1.bf16.msra.mxu0 %v1408
  %2040 = vmatprep.subr.bf16.mxu0 %v1411
  %2041 = vmatpush1.bf16.msra.mxu0 %v1410
  %2042 = vmatprep.subr.bf16.mxu0 %v1413
  %2043 = vmatpush1.bf16.msra.mxu0 %v1412
  %2044 = vmatprep.subr.bf16.mxu0 %v1415
  %2045 = vmatpush1.bf16.msra.mxu0 %v1414
  %2046 = vmatprep.subr.bf16.mxu0 %v1417
  %2047 = vmatpush1.bf16.msra.mxu0 %v1416
  %2048 = vmatprep.subr.bf16.mxu0 %v1419
  %2049 = vmatpush1.bf16.msra.mxu0 %v1418
  %2050 = vmatprep.subr.bf16.mxu0 %v1421
  %2051 = vmatpush1.bf16.msra.mxu0 %v1420
  %2052 = vmatprep.subr.bf16.mxu0 %v1423
  %2053 = vmatpush1.bf16.msra.mxu0 %v1422
  %2054 = vmatprep.subr.bf16.mxu0 %v1425
  %2055 = vmatpush1.bf16.msra.mxu0 %v1424
  %2056 = vmatprep.subr.bf16.mxu0 %v1427
  %2057 = vmatpush1.bf16.msra.mxu0 %v1426
  %2058 = vmatprep.subr.bf16.mxu0 %v1429
  %2059 = vmatpush1.bf16.msra.mxu0 %v1428
  %2060 = vmatprep.subr.bf16.mxu0 %v1431
  %2061 = vmatpush1.bf16.msra.mxu0 %v1430
  %2062 = vmatprep.subr.bf16.mxu0 %v1433
  %2063 = vmatpush1.bf16.msra.mxu0 %v1432
  %2064 = vmatprep.subr.bf16.mxu0 %v1435
  %2065 = vmatpush1.bf16.msra.mxu0 %v1434
  %2066 = vmatprep.subr.bf16.mxu0 %v1437
  %2067 = vmatpush1.bf16.msra.mxu0 %v1436
  %2068 = vmatprep.subr.bf16.mxu0 %v1439
  %2069 = vmatpush1.bf16.msra.mxu0 %v1438
  %2070 = vmatprep.mubr.bf16.mxu0 %v399
  %2071 = vmatmul.mubr.bf16.gmra.mrb[0].mxu0 %v398
  %v2072 = vpop.f32.mrb[0].mxu0
  %v2073 = vadd.f32 %v2030, %v2072
  %v2074 = vpop.f32.mrb[0].mxu0
  %v2075 = vadd.f32 %v2032, %v2074
  %v2076 = vpop.f32.mrb[0].mxu0
  %v2077 = vadd.f32 %v2034, %v2076
  %v2078 = vpop.f32.mrb[0].mxu0
  %v2079 = vadd.f32 %v2036, %v2078
  %2080 = vdwg.mxu0
  %2081 = vmatprep.subr.bf16.mxu0 %v1441
  %2082 = vmatpush1.bf16.msra.mxu0 %v1440
  %2083 = vmatprep.subr.bf16.mxu0 %v1443
  %2084 = vmatpush1.bf16.msra.mxu0 %v1442
  %2085 = vmatprep.subr.bf16.mxu0 %v1445
  %2086 = vmatpush1.bf16.msra.mxu0 %v1444
  %2087 = vmatprep.subr.bf16.mxu0 %v1447
  %2088 = vmatpush1.bf16.msra.mxu0 %v1446
  %2089 = vmatprep.subr.bf16.mxu0 %v1449
  %2090 = vmatpush1.bf16.msra.mxu0 %v1448
  %2091 = vmatprep.subr.bf16.mxu0 %v1451
  %2092 = vmatpush1.bf16.msra.mxu0 %v1450
  %2093 = vmatprep.subr.bf16.mxu0 %v1453
  %2094 = vmatpush1.bf16.msra.mxu0 %v1452
  %2095 = vmatprep.subr.bf16.mxu0 %v1455
  %2096 = vmatpush1.bf16.msra.mxu0 %v1454
  %2097 = vmatprep.subr.bf16.mxu0 %v1457
  %2098 = vmatpush1.bf16.msra.mxu0 %v1456
  %2099 = vmatprep.subr.bf16.mxu0 %v1459
  %2100 = vmatpush1.bf16.msra.mxu0 %v1458
  %2101 = vmatprep.subr.bf16.mxu0 %v1461
  %2102 = vmatpush1.bf16.msra.mxu0 %v1460
  %2103 = vmatprep.subr.bf16.mxu0 %v1463
  %2104 = vmatpush1.bf16.msra.mxu0 %v1462
  %2105 = vmatprep.subr.bf16.mxu0 %v1465
  %2106 = vmatpush1.bf16.msra.mxu0 %v1464
  %2107 = vmatprep.subr.bf16.mxu0 %v1467
  %2108 = vmatpush1.bf16.msra.mxu0 %v1466
  %2109 = vmatprep.subr.bf16.mxu0 %v1469
  %2110 = vmatpush1.bf16.msra.mxu0 %v1468
  %2111 = vmatprep.subr.bf16.mxu0 %v1471
  %2112 = vmatpush1.bf16.msra.mxu0 %v1470
  %2113 = vmatprep.mubr.bf16.mxu0 %v401
  %2114 = vmatmul.mubr.bf16.gmra.mrb[0].mxu0 %v400
  %v2115 = vpop.f32.mrb[0].mxu0
  %v2116 = vadd.f32 %v2073, %v2115
  %v2117 = vpop.f32.mrb[0].mxu0
  %v2118 = vadd.f32 %v2075, %v2117
  %v2119 = vpop.f32.mrb[0].mxu0
  %v2120 = vadd.f32 %v2077, %v2119
  %v2121 = vpop.f32.mrb[0].mxu0
  %v2122 = vadd.f32 %v2079, %v2121
  %2123 = vdwg.mxu0
  %2124 = vmatprep.subr.bf16.mxu0 %v1473
  %2125 = vmatpush1.bf16.msra.mxu0 %v1472
  %2126 = vmatprep.subr.bf16.mxu0 %v1475
  %2127 = vmatpush1.bf16.msra.mxu0 %v1474
  %2128 = vmatprep.subr.bf16.mxu0 %v1477
  %2129 = vmatpush1.bf16.msra.mxu0 %v1476
  %2130 = vmatprep.subr.bf16.mxu0 %v1479
  %2131 = vmatpush1.bf16.msra.mxu0 %v1478
  %2132 = vmatprep.subr.bf16.mxu0 %v1481
  %2133 = vmatpush1.bf16.msra.mxu0 %v1480
  %2134 = vmatprep.subr.bf16.mxu0 %v1483
  %2135 = vmatpush1.bf16.msra.mxu0 %v1482
  %2136 = vmatprep.subr.bf16.mxu0 %v1485
  %2137 = vmatpush1.bf16.msra.mxu0 %v1484
  %2138 = vmatprep.subr.bf16.mxu0 %v1487
  %2139 = vmatpush1.bf16.msra.mxu0 %v1486
  %2140 = vmatprep.subr.bf16.mxu0 %v1489
  %2141 = vmatpush1.bf16.msra.mxu0 %v1488
  %2142 = vmatprep.subr.bf16.mxu0 %v1491
  %2143 = vmatpush1.bf16.msra.mxu0 %v1490
  %2144 = vmatprep.subr.bf16.mxu0 %v1493
  %2145 = vmatpush1.bf16.msra.mxu0 %v1492
  %2146 = vmatprep.subr.bf16.mxu0 %v1495
  %2147 = vmatpush1.bf16.msra.mxu0 %v1494
  %2148 = vmatprep.subr.bf16.mxu0 %v1497
  %2149 = vmatpush1.bf16.msra.mxu0 %v1496
  %2150 = vmatprep.subr.bf16.mxu0 %v1499
  %2151 = vmatpush1.bf16.msra.mxu0 %v1498
  %2152 = vmatprep.subr.bf16.mxu0 %v1501
  %2153 = vmatpush1.bf16.msra.mxu0 %v1500
  %2154 = vmatprep.subr.bf16.mxu0 %v1503
  %2155 = vmatpush1.bf16.msra.mxu0 %v1502
  %2156 = vmatprep.mubr.bf16.mxu0 %v403
  %2157 = vmatmul.mubr.bf16.gmra.mrb[0].mxu0 %v402
  %v2158 = vpop.f32.mrb[0].mxu0
  %v2159 = vadd.f32 %v2116, %v2158
  %v2160 = vpop.f32.mrb[0].mxu0
  %v2161 = vadd.f32 %v2118, %v2160
  %v2162 = vpop.f32.mrb[0].mxu0
  %v2163 = vadd.f32 %v2120, %v2162
  %v2164 = vpop.f32.mrb[0].mxu0
  %v2165 = vadd.f32 %v2122, %v2164
  %2166 = vdwg.mxu0
  %2167 = vmatprep.subr.bf16.mxu0 %v1505
  %2168 = vmatpush1.bf16.msra.mxu0 %v1504
  %2169 = vmatprep.subr.bf16.mxu0 %v1507
  %2170 = vmatpush1.bf16.msra.mxu0 %v1506
  %2171 = vmatprep.subr.bf16.mxu0 %v1509
  %2172 = vmatpush1.bf16.msra.mxu0 %v1508
  %2173 = vmatprep.subr.bf16.mxu0 %v1511
  %2174 = vmatpush1.bf16.msra.mxu0 %v1510
  %2175 = vmatprep.subr.bf16.mxu0 %v1513
  %2176 = vmatpush1.bf16.msra.mxu0 %v1512
  %2177 = vmatprep.subr.bf16.mxu0 %v1515
  %2178 = vmatpush1.bf16.msra.mxu0 %v1514
  %2179 = vmatprep.subr.bf16.mxu0 %v1517
  %2180 = vmatpush1.bf16.msra.mxu0 %v1516
  %2181 = vmatprep.subr.bf16.mxu0 %v1519
  %2182 = vmatpush1.bf16.msra.mxu0 %v1518
  %2183 = vmatprep.subr.bf16.mxu0 %v1521
  %2184 = vmatpush1.bf16.msra.mxu0 %v1520
  %2185 = vmatprep.subr.bf16.mxu0 %v1523
  %2186 = vmatpush1.bf16.msra.mxu0 %v1522
  %2187 = vmatprep.subr.bf16.mxu0 %v1525
  %2188 = vmatpush1.bf16.msra.mxu0 %v1524
  %2189 = vmatprep.subr.bf16.mxu0 %v1527
  %2190 = vmatpush1.bf16.msra.mxu0 %v1526
  %2191 = vmatprep.subr.bf16.mxu0 %v1529
  %2192 = vmatpush1.bf16.msra.mxu0 %v1528
  %2193 = vmatprep.subr.bf16.mxu0 %v1531
  %2194 = vmatpush1.bf16.msra.mxu0 %v1530
  %2195 = vmatprep.subr.bf16.mxu0 %v1533
  %2196 = vmatpush1.bf16.msra.mxu0 %v1532
  %2197 = vmatprep.subr.bf16.mxu0 %v1535
  %2198 = vmatpush1.bf16.msra.mxu0 %v1534
  %2199 = vmatprep.mubr.bf16.mxu0 %v405
  %2200 = vmatmul.mubr.bf16.gmra.mrb[0].mxu0 %v404
  %v2201 = vpop.f32.mrb[0].mxu0
  %v2202 = vadd.f32 %v2159, %v2201
  %v2203 = vpop.f32.mrb[0].mxu0
  %v2204 = vadd.f32 %v2161, %v2203
  %v2205 = vpop.f32.mrb[0].mxu0
  %v2206 = vadd.f32 %v2163, %v2205
  %v2207 = vpop.f32.mrb[0].mxu0
  %v2208 = vadd.f32 %v2165, %v2207
  %2209 = vdwg.mxu0
  %2210 = vmatprep.subr.bf16.mxu0 %v1537
  %2211 = vmatpush1.bf16.msra.mxu0 %v1536
  %2212 = vmatprep.subr.bf16.mxu0 %v1539
  %2213 = vmatpush1.bf16.msra.mxu0 %v1538
  %2214 = vmatprep.subr.bf16.mxu0 %v1541
  %2215 = vmatpush1.bf16.msra.mxu0 %v1540
  %2216 = vmatprep.subr.bf16.mxu0 %v1543
  %2217 = vmatpush1.bf16.msra.mxu0 %v1542
  %2218 = vmatprep.subr.bf16.mxu0 %v1545
  %2219 = vmatpush1.bf16.msra.mxu0 %v1544
  %2220 = vmatprep.subr.bf16.mxu0 %v1547
  %2221 = vmatpush1.bf16.msra.mxu0 %v1546
  %2222 = vmatprep.subr.bf16.mxu0 %v1549
  %2223 = vmatpush1.bf16.msra.mxu0 %v1548
  %2224 = vmatprep.subr.bf16.mxu0 %v1551
  %2225 = vmatpush1.bf16.msra.mxu0 %v1550
  %2226 = vmatprep.subr.bf16.mxu0 %v1553
  %2227 = vmatpush1.bf16.msra.mxu0 %v1552
  %2228 = vmatprep.subr.bf16.mxu0 %v1555
  %2229 = vmatpush1.bf16.msra.mxu0 %v1554
  %2230 = vmatprep.subr.bf16.mxu0 %v1557
  %2231 = vmatpush1.bf16.msra.mxu0 %v1556
  %2232 = vmatprep.subr.bf16.mxu0 %v1559
  %2233 = vmatpush1.bf16.msra.mxu0 %v1558
  %2234 = vmatprep.subr.bf16.mxu0 %v1561
  %2235 = vmatpush1.bf16.msra.mxu0 %v1560
  %2236 = vmatprep.subr.bf16.mxu0 %v1563
  %2237 = vmatpush1.bf16.msra.mxu0 %v1562
  %2238 = vmatprep.subr.bf16.mxu0 %v1565
  %2239 = vmatpush1.bf16.msra.mxu0 %v1564
  %2240 = vmatprep.subr.bf16.mxu0 %v1567
  %2241 = vmatpush1.bf16.msra.mxu0 %v1566
  %2242 = vmatprep.mubr.bf16.mxu0 %v407
  %2243 = vmatmul.mubr.bf16.gmra.mrb[0].mxu0 %v406
  %v2244 = vpop.f32.mrb[0].mxu0
  %v2245 = vadd.f32 %v2202, %v2244
  %v2246 = vpop.f32.mrb[0].mxu0
  %v2247 = vadd.f32 %v2204, %v2246
  %v2248 = vpop.f32.mrb[0].mxu0
  %v2249 = vadd.f32 %v2206, %v2248
  %v2250 = vpop.f32.mrb[0].mxu0
  %v2251 = vadd.f32 %v2208, %v2250
  %2252 = vdwg.mxu0
  %2253 = vmatprep.subr.bf16.mxu0 %v1569
  %2254 = vmatpush1.bf16.msra.mxu0 %v1568
  %2255 = vmatprep.subr.bf16.mxu0 %v1571
  %2256 = vmatpush1.bf16.msra.mxu0 %v1570
  %2257 = vmatprep.subr.bf16.mxu0 %v1573
  %2258 = vmatpush1.bf16.msra.mxu0 %v1572
  %2259 = vmatprep.subr.bf16.mxu0 %v1575
  %2260 = vmatpush1.bf16.msra.mxu0 %v1574
  %2261 = vmatprep.subr.bf16.mxu0 %v1577
  %2262 = vmatpush1.bf16.msra.mxu0 %v1576
  %2263 = vmatprep.subr.bf16.mxu0 %v1579
  %2264 = vmatpush1.bf16.msra.mxu0 %v1578
  %2265 = vmatprep.subr.bf16.mxu0 %v1581
  %2266 = vmatpush1.bf16.msra.mxu0 %v1580
  %2267 = vmatprep.subr.bf16.mxu0 %v1583
  %2268 = vmatpush1.bf16.msra.mxu0 %v1582
  %2269 = vmatprep.subr.bf16.mxu0 %v1585
  %2270 = vmatpush1.bf16.msra.mxu0 %v1584
  %2271 = vmatprep.subr.bf16.mxu0 %v1587
  %2272 = vmatpush1.bf16.msra.mxu0 %v1586
  %2273 = vmatprep.subr.bf16.mxu0 %v1589
  %2274 = vmatpush1.bf16.msra.mxu0 %v1588
  %2275 = vmatprep.subr.bf16.mxu0 %v1591
  %2276 = vmatpush1.bf16.msra.mxu0 %v1590
  %2277 = vmatprep.subr.bf16.mxu0 %v1593
  %2278 = vmatpush1.bf16.msra.mxu0 %v1592
  %2279 = vmatprep.subr.bf16.mxu0 %v1595
  %2280 = vmatpush1.bf16.msra.mxu0 %v1594
  %2281 = vmatprep.subr.bf16.mxu0 %v1597
  %2282 = vmatpush1.bf16.msra.mxu0 %v1596
  %2283 = vmatprep.subr.bf16.mxu0 %v1599
  %2284 = vmatpush1.bf16.msra.mxu0 %v1598
  %2285 = vmatprep.mubr.bf16.mxu0 %v409
  %2286 = vmatmul.mubr.bf16.gmra.mrb[0].mxu0 %v408
  %v2287 = vpop.f32.mrb[0].mxu0
  %v2288 = vadd.f32 %v2245, %v2287
  %v2289 = vpop.f32.mrb[0].mxu0
  %v2290 = vadd.f32 %v2247, %v2289
  %v2291 = vpop.f32.mrb[0].mxu0
  %v2292 = vadd.f32 %v2249, %v2291
  %v2293 = vpop.f32.mrb[0].mxu0
  %v2294 = vadd.f32 %v2251, %v2293
  %2295 = vdwg.mxu0
  %2296 = vmatprep.subr.bf16.mxu0 %v1601
  %2297 = vmatpush1.bf16.msra.mxu0 %v1600
  %2298 = vmatprep.subr.bf16.mxu0 %v1603
  %2299 = vmatpush1.bf16.msra.mxu0 %v1602
  %2300 = vmatprep.subr.bf16.mxu0 %v1605
  %2301 = vmatpush1.bf16.msra.mxu0 %v1604
  %2302 = vmatprep.subr.bf16.mxu0 %v1607
  %2303 = vmatpush1.bf16.msra.mxu0 %v1606
  %2304 = vmatprep.subr.bf16.mxu0 %v1609
  %2305 = vmatpush1.bf16.msra.mxu0 %v1608
  %2306 = vmatprep.subr.bf16.mxu0 %v1611
  %2307 = vmatpush1.bf16.msra.mxu0 %v1610
  %2308 = vmatprep.subr.bf16.mxu0 %v1613
  %2309 = vmatpush1.bf16.msra.mxu0 %v1612
  %2310 = vmatprep.subr.bf16.mxu0 %v1615
  %2311 = vmatpush1.bf16.msra.mxu0 %v1614
  %2312 = vmatprep.subr.bf16.mxu0 %v1617
  %2313 = vmatpush1.bf16.msra.mxu0 %v1616
  %2314 = vmatprep.subr.bf16.mxu0 %v1619
  %2315 = vmatpush1.bf16.msra.mxu0 %v1618
  %2316 = vmatprep.subr.bf16.mxu0 %v1621
  %2317 = vmatpush1.bf16.msra.mxu0 %v1620
  %2318 = vmatprep.subr.bf16.mxu0 %v1623
  %2319 = vmatpush1.bf16.msra.mxu0 %v1622
  %2320 = vmatprep.subr.bf16.mxu0 %v1625
  %2321 = vmatpush1.bf16.msra.mxu0 %v1624
  %2322 = vmatprep.subr.bf16.mxu0 %v1627
  %2323 = vmatpush1.bf16.msra.mxu0 %v1626
  %2324 = vmatprep.subr.bf16.mxu0 %v1629
  %2325 = vmatpush1.bf16.msra.mxu0 %v1628
  %2326 = vmatprep.subr.bf16.mxu0 %v1631
  %2327 = vmatpush1.bf16.msra.mxu0 %v1630
  %2328 = vmatprep.mubr.bf16.mxu0 %v411
  %2329 = vmatmul.mubr.bf16.gmra.mrb[0].mxu0 %v410
  %v2330 = vpop.f32.mrb[0].mxu0
  %v2331 = vadd.f32 %v2288, %v2330
  %v2332 = vpop.f32.mrb[0].mxu0
  %v2333 = vadd.f32 %v2290, %v2332
  %v2334 = vpop.f32.mrb[0].mxu0
  %v2335 = vadd.f32 %v2292, %v2334
  %v2336 = vpop.f32.mrb[0].mxu0
  %v2337 = vadd.f32 %v2294, %v2336
  %2338 = vdwg.mxu0
  %2339 = vmatprep.subr.bf16.mxu0 %v1633
  %2340 = vmatpush1.bf16.msra.mxu0 %v1632
  %2341 = vmatprep.subr.bf16.mxu0 %v1635
  %2342 = vmatpush1.bf16.msra.mxu0 %v1634
  %2343 = vmatprep.subr.bf16.mxu0 %v1637
  %2344 = vmatpush1.bf16.msra.mxu0 %v1636
  %2345 = vmatprep.subr.bf16.mxu0 %v1639
  %2346 = vmatpush1.bf16.msra.mxu0 %v1638
  %2347 = vmatprep.subr.bf16.mxu0 %v1641
  %2348 = vmatpush1.bf16.msra.mxu0 %v1640
  %2349 = vmatprep.subr.bf16.mxu0 %v1643
  %2350 = vmatpush1.bf16.msra.mxu0 %v1642
  %2351 = vmatprep.subr.bf16.mxu0 %v1645
  %2352 = vmatpush1.bf16.msra.mxu0 %v1644
  %2353 = vmatprep.subr.bf16.mxu0 %v1647
  %2354 = vmatpush1.bf16.msra.mxu0 %v1646
  %2355 = vmatprep.subr.bf16.mxu0 0
  %2356 = vmatpush1.bf16.msra.mxu0 0
  %2357 = vmatprep.subr.bf16.mxu0 0
  %2358 = vmatpush1.bf16.msra.mxu0 0
  %2359 = vmatprep.subr.bf16.mxu0 0
  %2360 = vmatpush1.bf16.msra.mxu0 0
  %2361 = vmatprep.subr.bf16.mxu0 0
  %2362 = vmatpush1.bf16.msra.mxu0 0
  %2363 = vmatprep.subr.bf16.mxu0 0
  %2364 = vmatpush1.bf16.msra.mxu0 0
  %2365 = vmatprep.subr.bf16.mxu0 0
  %2366 = vmatpush1.bf16.msra.mxu0 0
  %2367 = vmatprep.subr.bf16.mxu0 0
  %2368 = vmatpush1.bf16.msra.mxu0 0
  %2369 = vmatprep.subr.bf16.mxu0 0
  %2370 = vmatpush1.bf16.msra.mxu0 0
  %2371 = vmatprep.mubr.bf16.mxu0 0
  %2372 = vmatmul.mubr.bf16.gmra.mrb[0].mxu0 %v412
  %v2373 = vpop.f32.mrb[0].mxu0
  %v2374 = vadd.f32 %v2331, %v2373
  %v2375 = vpop.f32.mrb[0].mxu0
  %v2376 = vadd.f32 %v2333, %v2375
  %v2377 = vpop.f32.mrb[0].mxu0
  %v2378 = vadd.f32 %v2335, %v2377
  %v2379 = vpop.f32.mrb[0].mxu0
  %v2380 = vadd.f32 %v2337, %v2379
  %2381 = vdwg.mxu0
  %vm2382 = vcmp.gt.f32.partialorder %v2374, 0.0
  %vm2383 = vcmp.gt.f32.partialorder %v2376, 0.0
  %vm2384 = vcmp.gt.f32.partialorder %v2378, 0.0
  %vm2385 = vcmp.gt.f32.partialorder %v2380, 0.0
  %v2386 = vmul.f32 %v2374, 0.1
  %v2387 = vmul.f32 %v2376, 0.1
  %v2388 = vmul.f32 %v2378, 0.1
  %v2389 = vmul.f32 %v2380, 0.1
  %v2390 = vsel %vm2382, %v2374, %v2386
  %v2391 = vsel %vm2383, %v2376, %v2387
  %v2392 = vsel %vm2384, %v2378, %v2388
  %v2393 = vsel %vm2385, %v2380, %v2389
  %v2394 = vpack.c.bf16 %v2392, %v2390
  %v2395 = vpack.c.bf16 %v2393, %v2391
  %v2398 = vunpack.c.l.b16 %v2394
  %v2399 = vunpack.c.l.b16 %v2395
  %v2400 = vunpack.c.h.b16 %v2394
  %v2401 = vunpack.c.h.b16 %v2395
  %v2402 = vpack.c.b16 %v2399, %v2398
  %v2403 = vpack.c.b16 %v2401, %v2400
  %2406 = vst [vmem:[%s2] sm:$0xff] %v2402
  %2407 = vst [vmem:[%s2 + $0x8] sm:$0xff] %v2403
  // Predicated region
  $region10: #{lnet_forward.18} parent=0 // pred_check
    _
  $region11: #{lnet_forward.18} parent=0 // pred_check_branch
    %2409 = sbr.rel (0) target = $region13
  $region12: #{lnet_forward.18} parent=0 // pred_region
    _
  $region13: #{lnet_forward.18} parent=0 // pred_fallthru
    _
  // Predicated region
  $region14: #{lnet_forward.18} parent=0 // pred_check
    _
  $region15: #{lnet_forward.18} parent=0 // pred_check_branch
    %2411 = sbr.rel (0) target = $region17
  $region16: #{lnet_forward.18} parent=0 // pred_region
    _
  $region17: #{lnet_forward.18} parent=0 // pred_fallthru
    _

</llo_original>
